<compile_context>
chip_gen: v7x
topology: tpu7x:2x2x1
jax: 0.10.0
libtpu: 0.0.40
codegen_flags: <defaults>
</compile_context>

<pallas_src>
import functools
from math import sqrt

import jax
import jax.numpy as jnp
from jax import lax
from jax.experimental import pallas as pl
from jax.experimental.pallas import tpu as pltpu


def _round_up(x, m):
    return (x + m - 1) // m * m


# -----------------------------------------------------------------------------
# Fused forward kernel (one batch *chunk*, folded into lanes, per grid step)
# -----------------------------------------------------------------------------
def _espcn_fused_kernel(x_ref, w1_ref, b1_ref, w2_ref, b2_ref, w3_ref, b3_ref,
                        mask_ref, o_ref, plane_ref, col1_ref, *, Wp, n_cols):
    # x_ref    : (1, 1, n_cols)        flattened zero-padded input planes
    # w1_ref   : (64, 25)              conv1 weights, tap-major (C_in == 1)
    # w2_ref   : (9, 32, 64)           conv2 per-tap weights (tap, C_out, C_in)
    # w3_ref   : (9, r2, 32)           conv3 per-tap weights
    # b*_ref   : (C_out, 1)
    # mask_ref : (2, n_cols)           validity masks for conv1 / conv2 outputs
    # o_ref    : (1, r2, n_cols)       lane-dense conv3 output (offset 0)
    # plane_ref: (64, w_buf)  VMEM     current activation plane (flattened)
    # col1_ref : (32, n_cols) VMEM     tiny im2col for conv1 only (K = 25)
    f32 = jnp.float32

    # Zero only the slice-headroom tail [n_cols, w_buf).  It is never written
    # by any activation store but is read by shifted slices at masked/invalid
    # output columns, so it must be finite.  [0, n_cols) is fully overwritten
    # (x write row 0, masked conv writes rows 0..63) before it is read.
    head = plane_ref.shape[1] - n_cols
    plane_ref[:, n_cols:] = jnp.zeros((plane_ref.shape[0], head), f32)

    # Input image plane(s) (1 channel), already flattened/padded by wrapper.
    plane_ref[0:1, 0:n_cols] = x_ref[0]

    # ---- conv1: 1 -> 64, 5x5, pad 2, tanh (activation lands at offset 2) ----
    # C_in == 1, so im2col is just 25 shifted copies of one row (tiny); a
    # single K=25 MXU matmul then produces all 64 output channels.
    for kh in range(5):
        for kw in range(5):
            tap = kh * 5 + kw
            d = kh * Wp + kw
            col1_ref[tap:tap + 1, :] = plane_ref[0:1, d:d + n_cols]
    act = jnp.dot(w1_ref[...], col1_ref[0:25, :],
                  preferred_element_type=f32) + b1_ref[...]
    act = jnp.tanh(act)
    plane_ref[0:64, 0:n_cols] = act * mask_ref[0:1, :]

    # Per-tap accumulated 3x3 conv: no im2col materialization, 9 MXU matmuls
    # accumulating into one f32 value (MRB-friendly on v7x).
    def conv3x3_pertap(c_in, w_ref, b_ref):
        acc = None
        for kh in range(3):
            for kw in range(3):
                tap = kh * 3 + kw
                d = kh * Wp + kw
                part = jnp.dot(w_ref[tap],
                               plane_ref[0:c_in, d:d + n_cols],
                               preferred_element_type=f32)
                acc = part if acc is None else acc + part
        return acc + b_ref[...]

    # ---- conv2: 64 -> 32, 3x3, pad 1, tanh (activation at offset 1) ----
    act = jnp.tanh(conv3x3_pertap(64, w2_ref, b2_ref))
    plane_ref[0:32, 0:n_cols] = act * mask_ref[1:2, :]

    # ---- conv3: 32 -> r^2, 3x3, pad 1, no tanh (output at offset 0) ----
    r2 = w3_ref.shape[1]
    acc = conv3x3_pertap(32, w3_ref, b3_ref)
    o_ref[...] = acc.reshape(1, r2, n_cols)


# -----------------------------------------------------------------------------
# PixelShuffle (pure layout glue on a tiny tensor, plain JAX)
# -----------------------------------------------------------------------------
def pixel_shuffle(x, r):
    # (N, C*r*r, H, W) -> (N, C, H*r, W*r)   (here C == 1)
    N, Crr, H, W = x.shape
    C = Crr // (r * r)
    x = x.reshape(N, C, r, r, H, W)
    x = jnp.transpose(x, (0, 1, 4, 2, 5, 3))
    return x.reshape(N, C, H * r, W * r)


# -----------------------------------------------------------------------------
# Fused forward wrapper
# -----------------------------------------------------------------------------
def espcn_forward(params, x, upscale_factor, images_per_step=None):
    (w1, b1), (w2, b2), (w3, b3) = params
    N, c_in0, H, W = x.shape
    assert c_in0 == 1
    r2 = upscale_factor ** 2

    # Common zero-bordered plane: image enters at offset 4, each conv's
    # top-left-aligned output shifts the activation offset by its padding:
    # 4 -> 2 -> 1 -> 0.
    Hp, Wp = H + 6, W + 6
    L = Hp * Wp
    Cb = _round_up(L, 128)                    # lane block owned by one image

    if images_per_step is None:
        images_per_step = N                   # fold whole batch into lanes
    assert N % images_per_step == 0
    num_steps = N // images_per_step
    n_cols = images_per_step * Cb             # lane width per grid step
    d_max = 4 * Wp + 4                        # largest tap shift (5x5 conv)
    w_buf = _round_up(n_cols + d_max, 128)    # plane width incl. headroom

    # ---- host-side packing (tiny, one-time layout work on small tensors) ----
    xp = jnp.pad(x[:, 0].astype(jnp.float32),
                 ((0, 0), (4, Hp - H - 4), (4, Wp - W - 4)))
    xf = jnp.pad(xp.reshape(N, L), ((0, 0), (0, Cb - L)))
    xf = xf.reshape(num_steps, 1, n_cols)

    def pack_w_tapmajor(w):   # (Co, 1, KH, KW) -> (Co, KH*KW)  (conv1, Ci==1)
        co = w.shape[0]
        return w.reshape(co, -1).astype(jnp.float32)

    def pack_w_pertap(w):     # (Co, Ci, KH, KW) -> (KH*KW, Co, Ci)
        co, ci, kh, kw = w.shape
        return (jnp.transpose(w, (2, 3, 0, 1))
                .reshape(kh * kw, co, ci).astype(jnp.float32))

    w1p = pack_w_tapmajor(w1)                 # (64, 25)
    w2p = pack_w_pertap(w2)                   # (9, 32, 64)
    w3p = pack_w_pertap(w3)                   # (9, r2, 32)
    b1c = b1.reshape(-1, 1).astype(jnp.float32)
    b2c = b2.reshape(-1, 1).astype(jnp.float32)
    b3c = b3.reshape(-1, 1).astype(jnp.float32)

    # Validity masks for conv1 / conv2 outputs (offsets 2, 1), per image block,
    # tiled across the images folded into this step's lanes.
    q = jnp.arange(Cb)
    row, col = q // Wp, q % Wp

    def interior(off):
        return ((row >= off) & (row < off + H) &
                (col >= off) & (col < off + W) & (q < L)).astype(jnp.float32)

    masks = jnp.tile(jnp.stack([interior(2), interior(1)]),
                     (1, images_per_step))                       # (2, n_cols)

    kernel = functools.partial(_espcn_fused_kernel, Wp=Wp, n_cols=n_cols)

    # Advisory cost estimate so XLA overlaps surrounding glue with the kernel.
    flops = 2 * (64 * 25 + 32 * 64 * 9 + r2 * 32 * 9) * Cb * N
    transcendentals = (64 + 32) * Cb * N
    bytes_accessed = 4 * (xf.size + num_steps * r2 * n_cols + w1p.size
                          + w2p.size + w3p.size + b1c.size + b2c.size
                          + b3c.size + masks.size)
    ce = pl.CostEstimate(flops=flops, transcendentals=transcendentals,
                         bytes_accessed=bytes_accessed)

    out_full = pl.pallas_call(
        kernel,
        out_shape=jax.ShapeDtypeStruct((num_steps, r2, n_cols), jnp.float32),
        grid_spec=pltpu.PrefetchScalarGridSpec(
            num_scalar_prefetch=0,
            grid=(num_steps,),
            in_specs=[
                pl.BlockSpec((1, 1, n_cols), lambda s: (s, 0, 0)),   # x planes
                pl.BlockSpec(w1p.shape, lambda s: (0, 0)),           # w1
                pl.BlockSpec(b1c.shape, lambda s: (0, 0)),           # b1
                pl.BlockSpec(w2p.shape, lambda s: (0, 0, 0)),        # w2 per-tap
                pl.BlockSpec(b2c.shape, lambda s: (0, 0)),           # b2
                pl.BlockSpec(w3p.shape, lambda s: (0, 0, 0)),        # w3 per-tap
                pl.BlockSpec(b3c.shape, lambda s: (0, 0)),           # b3
                pl.BlockSpec(masks.shape, lambda s: (0, 0)),         # masks
            ],
            out_specs=pl.BlockSpec((1, r2, n_cols), lambda s: (s, 0, 0)),
            scratch_shapes=[
                pltpu.VMEM((64, w_buf), jnp.float32),    # activation plane
                pltpu.VMEM((32, n_cols), jnp.float32),   # conv1 im2col (K=25)
            ],
        ),
        compiler_params=pltpu.CompilerParams(
            dimension_semantics=("arbitrary",)),
        cost_estimate=ce,
    )(xf, w1p, b1c, w2p, b2c, w3p, b3c, masks)

    # Unfold lanes back to (N, r2, Cb), crop to (H, W), PixelShuffle.
    out = out_full.reshape(num_steps, r2, images_per_step, Cb)
    out = jnp.transpose(out, (0, 2, 1, 3)).reshape(N, r2, Cb)
    out = out[:, :, :L].reshape(N, r2, Hp, Wp)[:, :, :H, :W]
    return pixel_shuffle(out, upscale_factor)


# -----------------------------------------------------------------------------
# Parameters (deterministic init mirroring PyTorch ESPCN._initialize_weights)
# -----------------------------------------------------------------------------
def init_espcn_params(key, upscale_factor):
    k1, k2, k3 = jax.random.split(key, 3)
    r2 = upscale_factor ** 2

    std1 = sqrt(2.0 / (64 * 5 * 5))          # conv1: in_channels != 32
    w1 = jax.random.normal(k1, (64, 1, 5, 5), jnp.float32) * std1
    b1 = jnp.zeros((64,), jnp.float32)

    std2 = sqrt(2.0 / (32 * 3 * 3))          # conv2: in_channels != 32
    w2 = jax.random.normal(k2, (32, 64, 3, 3), jnp.float32) * std2
    b2 = jnp.zeros((32,), jnp.float32)

    w3 = jax.random.normal(k3, (r2, 32, 3, 3), jnp.float32) * 0.001  # in==32
    b3 = jnp.zeros((r2,), jnp.float32)

    return (w1, b1), (w2, b2), (w3, b3)


# -----------------------------------------------------------------------------
# Pure-JAX reference (lax conv) for correctness check
# -----------------------------------------------------------------------------
def _ref_conv(x, w, b, pad, tanh):
    out = lax.conv_general_dilated(
        x, w, window_strides=(1, 1), padding=[(pad, pad), (pad, pad)],
        dimension_numbers=("NCHW", "OIHW", "NCHW"))
    out = out + b.reshape(1, -1, 1, 1)
    return jnp.tanh(out) if tanh else out


def espcn_reference(params, x, upscale_factor):
    (w1, b1), (w2, b2), (w3, b3) = params
    out = _ref_conv(x, w1, b1, 2, True)
    out = _ref_conv(out, w2, b2, 1, True)
    out = _ref_conv(out, w3, b3, 1, False)
    return pixel_shuffle(out, upscale_factor)


if __name__ == "__main__":
    upscale_factor = 3
    key = jax.random.PRNGKey(0)
    pkey, xkey = jax.random.split(key)

    params = init_espcn_params(pkey, upscale_factor)

    # Input: batch=2, channels=1 (grayscale, as in ESPCN), 16x16 spatial.
    x = jax.random.normal(xkey, (2, 1, 16, 16), jnp.float32)

    out = jax.block_until_ready(espcn_forward(params, x, upscale_factor))
    ref = jax.block_until_ready(espcn_reference(params, x, upscale_factor))

    assert out.shape == (2, 1, 16 * upscale_factor, 16 * upscale_factor), out.shape
    assert jnp.allclose(out, ref, atol=1e-4, rtol=1e-4), \
        float(jnp.max(jnp.abs(out - ref)))

    print("KERNEL_OK")
</pallas_src>

<mosaic_0001>
module attributes {stable_mosaic.version = 11 : i64} {
  func.func @_espcn_fused_kernel(%arg0: i32, %arg1: memref<1x1x1024xf32, #tpu.memory_space<vmem>>, %arg2: memref<64x25xf32, #tpu.memory_space<vmem>>, %arg3: memref<64x1xf32, #tpu.memory_space<vmem>>, %arg4: memref<9x32x64xf32, #tpu.memory_space<vmem>>, %arg5: memref<32x1xf32, #tpu.memory_space<vmem>>, %arg6: memref<9x9x32xf32, #tpu.memory_space<vmem>>, %arg7: memref<9x1xf32, #tpu.memory_space<vmem>>, %arg8: memref<2x1024xf32, #tpu.memory_space<vmem>>, %arg9: memref<1x9x1024xf32, #tpu.memory_space<vmem>>, %arg10: memref<64x1152xf32, #tpu.memory_space<vmem>>, %arg11: memref<32x1024xf32, #tpu.memory_space<vmem>>) attributes {dimension_semantics = [#tpu.dimension_semantics<arbitrary>], iteration_bounds = array<i64: 1>, scalar_prefetch = 0 : i64, scratch_operands = 2 : i64, tpu.core_type = #tpu.core_type<tc>, window_params = [{transform_indices = @transform_0, window_bounds = array<i64: 1, 1, 1024>}, {pipeline_mode = #tpu.pipeline_mode<synchronous>, transform_indices = @transform_1, window_bounds = array<i64: 64, 25>}, {pipeline_mode = #tpu.pipeline_mode<synchronous>, transform_indices = @transform_2, window_bounds = array<i64: 64, 1>}, {pipeline_mode = #tpu.pipeline_mode<synchronous>, transform_indices = @transform_3, window_bounds = array<i64: 9, 32, 64>}, {pipeline_mode = #tpu.pipeline_mode<synchronous>, transform_indices = @transform_4, window_bounds = array<i64: 32, 1>}, {pipeline_mode = #tpu.pipeline_mode<synchronous>, transform_indices = @transform_5, window_bounds = array<i64: 9, 9, 32>}, {pipeline_mode = #tpu.pipeline_mode<synchronous>, transform_indices = @transform_6, window_bounds = array<i64: 9, 1>}, {pipeline_mode = #tpu.pipeline_mode<synchronous>, transform_indices = @transform_7, window_bounds = array<i64: 2, 1024>}, {transform_indices = @transform_8, window_bounds = array<i64: 1, 9, 1024>}]} {
    %cst = arith.constant 0.000000e+00 : f32
    %0 = vector.broadcast %cst : f32 to vector<64x128xf32>
    %c0 = arith.constant 0 : index
    %c1024 = arith.constant 1024 : index
    %1 = vector.load %arg10[%c0, %c1024] : memref<64x1152xf32, #tpu.memory_space<vmem>>, vector<64x128xf32>
    tpu.vector_store %arg10[%c0, %c1024], %0 {strides = array<i32>} : memref<64x1152xf32, #tpu.memory_space<vmem>>, vector<64x128xf32>,
    %c0_0 = arith.constant 0 : index
    %c0_1 = arith.constant 0 : index
    %c0_2 = arith.constant 0 : index
    %2 = vector.load %arg1[%c0_0, %c0_1, %c0_2] : memref<1x1x1024xf32, #tpu.memory_space<vmem>>, vector<1x1x1024xf32>
    %3 = vector.shape_cast %2 : vector<1x1x1024xf32> to vector<1x1024xf32>
    %c0_3 = arith.constant 0 : index
    %c0_4 = arith.constant 0 : index
    %4 = vector.load %arg10[%c0_3, %c0_4] : memref<64x1152xf32, #tpu.memory_space<vmem>>, vector<1x1024xf32>
    tpu.vector_store %arg10[%c0_3, %c0_4], %3 {strides = array<i32>} : memref<64x1152xf32, #tpu.memory_space<vmem>>, vector<1x1024xf32>,
    %c0_5 = arith.constant 0 : index
    %c0_6 = arith.constant 0 : index
    %5 = vector.load %arg10[%c0_5, %c0_6] : memref<64x1152xf32, #tpu.memory_space<vmem>>, vector<1x1024xf32>
    %c0_7 = arith.constant 0 : index
    %c0_8 = arith.constant 0 : index
    %6 = vector.load %arg11[%c0_7, %c0_8] : memref<32x1024xf32, #tpu.memory_space<vmem>>, vector<1x1024xf32>
    tpu.vector_store %arg11[%c0_7, %c0_8], %5 {strides = array<i32>} : memref<32x1024xf32, #tpu.memory_space<vmem>>, vector<1x1024xf32>,
    %c0_9 = arith.constant 0 : index
    %c1 = arith.constant 1 : index
    %7 = vector.load %arg10[%c0_9, %c1] : memref<64x1152xf32, #tpu.memory_space<vmem>>, vector<1x1024xf32>
    %c1_10 = arith.constant 1 : index
    %c0_11 = arith.constant 0 : index
    %8 = vector.load %arg11[%c1_10, %c0_11] : memref<32x1024xf32, #tpu.memory_space<vmem>>, vector<1x1024xf32>
    tpu.vector_store %arg11[%c1_10, %c0_11], %7 {strides = array<i32>} : memref<32x1024xf32, #tpu.memory_space<vmem>>, vector<1x1024xf32>,
    %c0_12 = arith.constant 0 : index
    %c2 = arith.constant 2 : index
    %9 = vector.load %arg10[%c0_12, %c2] : memref<64x1152xf32, #tpu.memory_space<vmem>>, vector<1x1024xf32>
    %c2_13 = arith.constant 2 : index
    %c0_14 = arith.constant 0 : index
    %10 = vector.load %arg11[%c2_13, %c0_14] : memref<32x1024xf32, #tpu.memory_space<vmem>>, vector<1x1024xf32>
    tpu.vector_store %arg11[%c2_13, %c0_14], %9 {strides = array<i32>} : memref<32x1024xf32, #tpu.memory_space<vmem>>, vector<1x1024xf32>,
    %c0_15 = arith.constant 0 : index
    %c3 = arith.constant 3 : index
    %11 = vector.load %arg10[%c0_15, %c3] : memref<64x1152xf32, #tpu.memory_space<vmem>>, vector<1x1024xf32>
    %c3_16 = arith.constant 3 : index
    %c0_17 = arith.constant 0 : index
    %12 = vector.load %arg11[%c3_16, %c0_17] : memref<32x1024xf32, #tpu.memory_space<vmem>>, vector<1x1024xf32>
    tpu.vector_store %arg11[%c3_16, %c0_17], %11 {strides = array<i32>} : memref<32x1024xf32, #tpu.memory_space<vmem>>, vector<1x1024xf32>,
    %c0_18 = arith.constant 0 : index
    %c4 = arith.constant 4 : index
    %13 = vector.load %arg10[%c0_18, %c4] : memref<64x1152xf32, #tpu.memory_space<vmem>>, vector<1x1024xf32>
    %c4_19 = arith.constant 4 : index
    %c0_20 = arith.constant 0 : index
    %14 = vector.load %arg11[%c4_19, %c0_20] : memref<32x1024xf32, #tpu.memory_space<vmem>>, vector<1x1024xf32>
    tpu.vector_store %arg11[%c4_19, %c0_20], %13 {strides = array<i32>} : memref<32x1024xf32, #tpu.memory_space<vmem>>, vector<1x1024xf32>,
    %c0_21 = arith.constant 0 : index
    %c22 = arith.constant 22 : index
    %15 = vector.load %arg10[%c0_21, %c22] : memref<64x1152xf32, #tpu.memory_space<vmem>>, vector<1x1024xf32>
    %c5 = arith.constant 5 : index
    %c0_22 = arith.constant 0 : index
    %16 = vector.load %arg11[%c5, %c0_22] : memref<32x1024xf32, #tpu.memory_space<vmem>>, vector<1x1024xf32>
    tpu.vector_store %arg11[%c5, %c0_22], %15 {strides = array<i32>} : memref<32x1024xf32, #tpu.memory_space<vmem>>, vector<1x1024xf32>,
    %c0_23 = arith.constant 0 : index
    %c23 = arith.constant 23 : index
    %17 = vector.load %arg10[%c0_23, %c23] : memref<64x1152xf32, #tpu.memory_space<vmem>>, vector<1x1024xf32>
    %c6 = arith.constant 6 : index
    %c0_24 = arith.constant 0 : index
    %18 = vector.load %arg11[%c6, %c0_24] : memref<32x1024xf32, #tpu.memory_space<vmem>>, vector<1x1024xf32>
    tpu.vector_store %arg11[%c6, %c0_24], %17 {strides = array<i32>} : memref<32x1024xf32, #tpu.memory_space<vmem>>, vector<1x1024xf32>,
    %c0_25 = arith.constant 0 : index
    %c24 = arith.constant 24 : index
    %19 = vector.load %arg10[%c0_25, %c24] : memref<64x1152xf32, #tpu.memory_space<vmem>>, vector<1x1024xf32>
    %c7 = arith.constant 7 : index
    %c0_26 = arith.constant 0 : index
    %20 = vector.load %arg11[%c7, %c0_26] : memref<32x1024xf32, #tpu.memory_space<vmem>>, vector<1x1024xf32>
    tpu.vector_store %arg11[%c7, %c0_26], %19 {strides = array<i32>} : memref<32x1024xf32, #tpu.memory_space<vmem>>, vector<1x1024xf32>,
    %c0_27 = arith.constant 0 : index
    %c25 = arith.constant 25 : index
    %21 = vector.load %arg10[%c0_27, %c25] : memref<64x1152xf32, #tpu.memory_space<vmem>>, vector<1x1024xf32>
    %c8 = arith.constant 8 : index
    %c0_28 = arith.constant 0 : index
    %22 = vector.load %arg11[%c8, %c0_28] : memref<32x1024xf32, #tpu.memory_space<vmem>>, vector<1x1024xf32>
    tpu.vector_store %arg11[%c8, %c0_28], %21 {strides = array<i32>} : memref<32x1024xf32, #tpu.memory_space<vmem>>, vector<1x1024xf32>,
    %c0_29 = arith.constant 0 : index
    %c26 = arith.constant 26 : index
    %23 = vector.load %arg10[%c0_29, %c26] : memref<64x1152xf32, #tpu.memory_space<vmem>>, vector<1x1024xf32>
    %c9 = arith.constant 9 : index
    %c0_30 = arith.constant 0 : index
    %24 = vector.load %arg11[%c9, %c0_30] : memref<32x1024xf32, #tpu.memory_space<vmem>>, vector<1x1024xf32>
    tpu.vector_store %arg11[%c9, %c0_30], %23 {strides = array<i32>} : memref<32x1024xf32, #tpu.memory_space<vmem>>, vector<1x1024xf32>,
    %c0_31 = arith.constant 0 : index
    %c44 = arith.constant 44 : index
    %25 = vector.load %arg10[%c0_31, %c44] : memref<64x1152xf32, #tpu.memory_space<vmem>>, vector<1x1024xf32>
    %c10 = arith.constant 10 : index
    %c0_32 = arith.constant 0 : index
    %26 = vector.load %arg11[%c10, %c0_32] : memref<32x1024xf32, #tpu.memory_space<vmem>>, vector<1x1024xf32>
    tpu.vector_store %arg11[%c10, %c0_32], %25 {strides = array<i32>} : memref<32x1024xf32, #tpu.memory_space<vmem>>, vector<1x1024xf32>,
    %c0_33 = arith.constant 0 : index
    %c45 = arith.constant 45 : index
    %27 = vector.load %arg10[%c0_33, %c45] : memref<64x1152xf32, #tpu.memory_space<vmem>>, vector<1x1024xf32>
    %c11 = arith.constant 11 : index
    %c0_34 = arith.constant 0 : index
    %28 = vector.load %arg11[%c11, %c0_34] : memref<32x1024xf32, #tpu.memory_space<vmem>>, vector<1x1024xf32>
    tpu.vector_store %arg11[%c11, %c0_34], %27 {strides = array<i32>} : memref<32x1024xf32, #tpu.memory_space<vmem>>, vector<1x1024xf32>,
    %c0_35 = arith.constant 0 : index
    %c46 = arith.constant 46 : index
    %29 = vector.load %arg10[%c0_35, %c46] : memref<64x1152xf32, #tpu.memory_space<vmem>>, vector<1x1024xf32>
    %c12 = arith.constant 12 : index
    %c0_36 = arith.constant 0 : index
    %30 = vector.load %arg11[%c12, %c0_36] : memref<32x1024xf32, #tpu.memory_space<vmem>>, vector<1x1024xf32>
    tpu.vector_store %arg11[%c12, %c0_36], %29 {strides = array<i32>} : memref<32x1024xf32, #tpu.memory_space<vmem>>, vector<1x1024xf32>,
    %c0_37 = arith.constant 0 : index
    %c47 = arith.constant 47 : index
    %31 = vector.load %arg10[%c0_37, %c47] : memref<64x1152xf32, #tpu.memory_space<vmem>>, vector<1x1024xf32>
    %c13 = arith.constant 13 : index
    %c0_38 = arith.constant 0 : index
    %32 = vector.load %arg11[%c13, %c0_38] : memref<32x1024xf32, #tpu.memory_space<vmem>>, vector<1x1024xf32>
    tpu.vector_store %arg11[%c13, %c0_38], %31 {strides = array<i32>} : memref<32x1024xf32, #tpu.memory_space<vmem>>, vector<1x1024xf32>,
    %c0_39 = arith.constant 0 : index
    %c48 = arith.constant 48 : index
    %33 = vector.load %arg10[%c0_39, %c48] : memref<64x1152xf32, #tpu.memory_space<vmem>>, vector<1x1024xf32>
    %c14 = arith.constant 14 : index
    %c0_40 = arith.constant 0 : index
    %34 = vector.load %arg11[%c14, %c0_40] : memref<32x1024xf32, #tpu.memory_space<vmem>>, vector<1x1024xf32>
    tpu.vector_store %arg11[%c14, %c0_40], %33 {strides = array<i32>} : memref<32x1024xf32, #tpu.memory_space<vmem>>, vector<1x1024xf32>,
    %c0_41 = arith.constant 0 : index
    %c66 = arith.constant 66 : index
    %35 = vector.load %arg10[%c0_41, %c66] : memref<64x1152xf32, #tpu.memory_space<vmem>>, vector<1x1024xf32>
    %c15 = arith.constant 15 : index
    %c0_42 = arith.constant 0 : index
    %36 = vector.load %arg11[%c15, %c0_42] : memref<32x1024xf32, #tpu.memory_space<vmem>>, vector<1x1024xf32>
    tpu.vector_store %arg11[%c15, %c0_42], %35 {strides = array<i32>} : memref<32x1024xf32, #tpu.memory_space<vmem>>, vector<1x1024xf32>,
    %c0_43 = arith.constant 0 : index
    %c67 = arith.constant 67 : index
    %37 = vector.load %arg10[%c0_43, %c67] : memref<64x1152xf32, #tpu.memory_space<vmem>>, vector<1x1024xf32>
    %c16 = arith.constant 16 : index
    %c0_44 = arith.constant 0 : index
    %38 = vector.load %arg11[%c16, %c0_44] : memref<32x1024xf32, #tpu.memory_space<vmem>>, vector<1x1024xf32>
    tpu.vector_store %arg11[%c16, %c0_44], %37 {strides = array<i32>} : memref<32x1024xf32, #tpu.memory_space<vmem>>, vector<1x1024xf32>,
    %c0_45 = arith.constant 0 : index
    %c68 = arith.constant 68 : index
    %39 = vector.load %arg10[%c0_45, %c68] : memref<64x1152xf32, #tpu.memory_space<vmem>>, vector<1x1024xf32>
    %c17 = arith.constant 17 : index
    %c0_46 = arith.constant 0 : index
    %40 = vector.load %arg11[%c17, %c0_46] : memref<32x1024xf32, #tpu.memory_space<vmem>>, vector<1x1024xf32>
    tpu.vector_store %arg11[%c17, %c0_46], %39 {strides = array<i32>} : memref<32x1024xf32, #tpu.memory_space<vmem>>, vector<1x1024xf32>,
    %c0_47 = arith.constant 0 : index
    %c69 = arith.constant 69 : index
    %41 = vector.load %arg10[%c0_47, %c69] : memref<64x1152xf32, #tpu.memory_space<vmem>>, vector<1x1024xf32>
    %c18 = arith.constant 18 : index
    %c0_48 = arith.constant 0 : index
    %42 = vector.load %arg11[%c18, %c0_48] : memref<32x1024xf32, #tpu.memory_space<vmem>>, vector<1x1024xf32>
    tpu.vector_store %arg11[%c18, %c0_48], %41 {strides = array<i32>} : memref<32x1024xf32, #tpu.memory_space<vmem>>, vector<1x1024xf32>,
    %c0_49 = arith.constant 0 : index
    %c70 = arith.constant 70 : index
    %43 = vector.load %arg10[%c0_49, %c70] : memref<64x1152xf32, #tpu.memory_space<vmem>>, vector<1x1024xf32>
    %c19 = arith.constant 19 : index
    %c0_50 = arith.constant 0 : index
    %44 = vector.load %arg11[%c19, %c0_50] : memref<32x1024xf32, #tpu.memory_space<vmem>>, vector<1x1024xf32>
    tpu.vector_store %arg11[%c19, %c0_50], %43 {strides = array<i32>} : memref<32x1024xf32, #tpu.memory_space<vmem>>, vector<1x1024xf32>,
    %c0_51 = arith.constant 0 : index
    %c88 = arith.constant 88 : index
    %45 = vector.load %arg10[%c0_51, %c88] : memref<64x1152xf32, #tpu.memory_space<vmem>>, vector<1x1024xf32>
    %c20 = arith.constant 20 : index
    %c0_52 = arith.constant 0 : index
    %46 = vector.load %arg11[%c20, %c0_52] : memref<32x1024xf32, #tpu.memory_space<vmem>>, vector<1x1024xf32>
    tpu.vector_store %arg11[%c20, %c0_52], %45 {strides = array<i32>} : memref<32x1024xf32, #tpu.memory_space<vmem>>, vector<1x1024xf32>,
    %c0_53 = arith.constant 0 : index
    %c89 = arith.constant 89 : index
    %47 = vector.load %arg10[%c0_53, %c89] : memref<64x1152xf32, #tpu.memory_space<vmem>>, vector<1x1024xf32>
    %c21 = arith.constant 21 : index
    %c0_54 = arith.constant 0 : index
    %48 = vector.load %arg11[%c21, %c0_54] : memref<32x1024xf32, #tpu.memory_space<vmem>>, vector<1x1024xf32>
    tpu.vector_store %arg11[%c21, %c0_54], %47 {strides = array<i32>} : memref<32x1024xf32, #tpu.memory_space<vmem>>, vector<1x1024xf32>,
    %c0_55 = arith.constant 0 : index
    %c90 = arith.constant 90 : index
    %49 = vector.load %arg10[%c0_55, %c90] : memref<64x1152xf32, #tpu.memory_space<vmem>>, vector<1x1024xf32>
    %c22_56 = arith.constant 22 : index
    %c0_57 = arith.constant 0 : index
    %50 = vector.load %arg11[%c22_56, %c0_57] : memref<32x1024xf32, #tpu.memory_space<vmem>>, vector<1x1024xf32>
    tpu.vector_store %arg11[%c22_56, %c0_57], %49 {strides = array<i32>} : memref<32x1024xf32, #tpu.memory_space<vmem>>, vector<1x1024xf32>,
    %c0_58 = arith.constant 0 : index
    %c91 = arith.constant 91 : index
    %51 = vector.load %arg10[%c0_58, %c91] : memref<64x1152xf32, #tpu.memory_space<vmem>>, vector<1x1024xf32>
    %c23_59 = arith.constant 23 : index
    %c0_60 = arith.constant 0 : index
    %52 = vector.load %arg11[%c23_59, %c0_60] : memref<32x1024xf32, #tpu.memory_space<vmem>>, vector<1x1024xf32>
    tpu.vector_store %arg11[%c23_59, %c0_60], %51 {strides = array<i32>} : memref<32x1024xf32, #tpu.memory_space<vmem>>, vector<1x1024xf32>,
    %c0_61 = arith.constant 0 : index
    %c92 = arith.constant 92 : index
    %53 = vector.load %arg10[%c0_61, %c92] : memref<64x1152xf32, #tpu.memory_space<vmem>>, vector<1x1024xf32>
    %c24_62 = arith.constant 24 : index
    %c0_63 = arith.constant 0 : index
    %54 = vector.load %arg11[%c24_62, %c0_63] : memref<32x1024xf32, #tpu.memory_space<vmem>>, vector<1x1024xf32>
    tpu.vector_store %arg11[%c24_62, %c0_63], %53 {strides = array<i32>} : memref<32x1024xf32, #tpu.memory_space<vmem>>, vector<1x1024xf32>,
    %c0_64 = arith.constant 0 : index
    %c0_65 = arith.constant 0 : index
    %55 = vector.load %arg2[%c0_64, %c0_65] : memref<64x25xf32, #tpu.memory_space<vmem>>, vector<64x25xf32>
    %c0_66 = arith.constant 0 : index
    %c0_67 = arith.constant 0 : index
    %56 = vector.load %arg11[%c0_66, %c0_67] : memref<32x1024xf32, #tpu.memory_space<vmem>>, vector<25x1024xf32>
    %cst_68 = arith.constant dense<0.000000e+00> : vector<64x1024xf32>
    %57 = tpu.matmul %55, %56, %cst_68 {dimension_numbers = #tpu.dot_dimension_numbers<[1], [0], [0], [1], [0, 0, 1, 1], [], []>} : vector<64x25xf32>, vector<25x1024xf32>, vector<64x1024xf32> -> vector<64x1024xf32>
    %c0_69 = arith.constant 0 : index
    %c0_70 = arith.constant 0 : index
    %58 = vector.load %arg3[%c0_69, %c0_70] : memref<64x1xf32, #tpu.memory_space<vmem>>, vector<64x1xf32>
    %59 = vector.broadcast %58 : vector<64x1xf32> to vector<64x1024xf32>
    %60 = arith.addf %57, %59 : vector<64x1024xf32>
    %61 = math.tanh %60 : vector<64x1024xf32>
    %c0_71 = arith.constant 0 : index
    %c0_72 = arith.constant 0 : index
    %62 = vector.load %arg8[%c0_71, %c0_72] : memref<2x1024xf32, #tpu.memory_space<vmem>>, vector<1x1024xf32>
    %63 = vector.broadcast %62 : vector<1x1024xf32> to vector<64x1024xf32>
    %64 = arith.mulf %61, %63 : vector<64x1024xf32>
    %c0_73 = arith.constant 0 : index
    %c0_74 = arith.constant 0 : index
    %65 = vector.load %arg10[%c0_73, %c0_74] : memref<64x1152xf32, #tpu.memory_space<vmem>>, vector<64x1024xf32>
    tpu.vector_store %arg10[%c0_73, %c0_74], %64 {strides = array<i32>} : memref<64x1152xf32, #tpu.memory_space<vmem>>, vector<64x1024xf32>,
    %c0_75 = arith.constant 0 : index
    %c0_76 = arith.constant 0 : index
    %c0_77 = arith.constant 0 : index
    %66 = vector.load %arg4[%c0_75, %c0_76, %c0_77] : memref<9x32x64xf32, #tpu.memory_space<vmem>>, vector<1x32x64xf32>
    %67 = vector.shape_cast %66 : vector<1x32x64xf32> to vector<32x64xf32>
    %c0_78 = arith.constant 0 : index
    %c0_79 = arith.constant 0 : index
    %68 = vector.load %arg10[%c0_78, %c0_79] : memref<64x1152xf32, #tpu.memory_space<vmem>>, vector<64x1024xf32>
    %cst_80 = arith.constant dense<0.000000e+00> : vector<32x1024xf32>
    %69 = tpu.matmul %67, %68, %cst_80 {dimension_numbers = #tpu.dot_dimension_numbers<[1], [0], [0], [1], [0, 0, 1, 1], [], []>} : vector<32x64xf32>, vector<64x1024xf32>, vector<32x1024xf32> -> vector<32x1024xf32>
    %c1_81 = arith.constant 1 : index
    %c0_82 = arith.constant 0 : index
    %c0_83 = arith.constant 0 : index
    %70 = vector.load %arg4[%c1_81, %c0_82, %c0_83] : memref<9x32x64xf32, #tpu.memory_space<vmem>>, vector<1x32x64xf32>
    %71 = vector.shape_cast %70 : vector<1x32x64xf32> to vector<32x64xf32>
    %c0_84 = arith.constant 0 : index
    %c1_85 = arith.constant 1 : index
    %72 = vector.load %arg10[%c0_84, %c1_85] : memref<64x1152xf32, #tpu.memory_space<vmem>>, vector<64x1024xf32>
    %cst_86 = arith.constant dense<0.000000e+00> : vector<32x1024xf32>
    %73 = tpu.matmul %71, %72, %cst_86 {dimension_numbers = #tpu.dot_dimension_numbers<[1], [0], [0], [1], [0, 0, 1, 1], [], []>} : vector<32x64xf32>, vector<64x1024xf32>, vector<32x1024xf32> -> vector<32x1024xf32>
    %74 = arith.addf %69, %73 : vector<32x1024xf32>
    %c2_87 = arith.constant 2 : index
    %c0_88 = arith.constant 0 : index
    %c0_89 = arith.constant 0 : index
    %75 = vector.load %arg4[%c2_87, %c0_88, %c0_89] : memref<9x32x64xf32, #tpu.memory_space<vmem>>, vector<1x32x64xf32>
    %76 = vector.shape_cast %75 : vector<1x32x64xf32> to vector<32x64xf32>
    %c0_90 = arith.constant 0 : index
    %c2_91 = arith.constant 2 : index
    %77 = vector.load %arg10[%c0_90, %c2_91] : memref<64x1152xf32, #tpu.memory_space<vmem>>, vector<64x1024xf32>
    %cst_92 = arith.constant dense<0.000000e+00> : vector<32x1024xf32>
    %78 = tpu.matmul %76, %77, %cst_92 {dimension_numbers = #tpu.dot_dimension_numbers<[1], [0], [0], [1], [0, 0, 1, 1], [], []>} : vector<32x64xf32>, vector<64x1024xf32>, vector<32x1024xf32> -> vector<32x1024xf32>
    %79 = arith.addf %74, %78 : vector<32x1024xf32>
    %c3_93 = arith.constant 3 : index
    %c0_94 = arith.constant 0 : index
    %c0_95 = arith.constant 0 : index
    %80 = vector.load %arg4[%c3_93, %c0_94, %c0_95] : memref<9x32x64xf32, #tpu.memory_space<vmem>>, vector<1x32x64xf32>
    %81 = vector.shape_cast %80 : vector<1x32x64xf32> to vector<32x64xf32>
    %c0_96 = arith.constant 0 : index
    %c22_97 = arith.constant 22 : index
    %82 = vector.load %arg10[%c0_96, %c22_97] : memref<64x1152xf32, #tpu.memory_space<vmem>>, vector<64x1024xf32>
    %cst_98 = arith.constant dense<0.000000e+00> : vector<32x1024xf32>
    %83 = tpu.matmul %81, %82, %cst_98 {dimension_numbers = #tpu.dot_dimension_numbers<[1], [0], [0], [1], [0, 0, 1, 1], [], []>} : vector<32x64xf32>, vector<64x1024xf32>, vector<32x1024xf32> -> vector<32x1024xf32>
    %84 = arith.addf %79, %83 : vector<32x1024xf32>
    %c4_99 = arith.constant 4 : index
    %c0_100 = arith.constant 0 : index
    %c0_101 = arith.constant 0 : index
    %85 = vector.load %arg4[%c4_99, %c0_100, %c0_101] : memref<9x32x64xf32, #tpu.memory_space<vmem>>, vector<1x32x64xf32>
    %86 = vector.shape_cast %85 : vector<1x32x64xf32> to vector<32x64xf32>
    %c0_102 = arith.constant 0 : index
    %c23_103 = arith.constant 23 : index
    %87 = vector.load %arg10[%c0_102, %c23_103] : memref<64x1152xf32, #tpu.memory_space<vmem>>, vector<64x1024xf32>
    %cst_104 = arith.constant dense<0.000000e+00> : vector<32x1024xf32>
    %88 = tpu.matmul %86, %87, %cst_104 {dimension_numbers = #tpu.dot_dimension_numbers<[1], [0], [0], [1], [0, 0, 1, 1], [], []>} : vector<32x64xf32>, vector<64x1024xf32>, vector<32x1024xf32> -> vector<32x1024xf32>
    %89 = arith.addf %84, %88 : vector<32x1024xf32>
    %c5_105 = arith.constant 5 : index
    %c0_106 = arith.constant 0 : index
    %c0_107 = arith.constant 0 : index
    %90 = vector.load %arg4[%c5_105, %c0_106, %c0_107] : memref<9x32x64xf32, #tpu.memory_space<vmem>>, vector<1x32x64xf32>
    %91 = vector.shape_cast %90 : vector<1x32x64xf32> to vector<32x64xf32>
    %c0_108 = arith.constant 0 : index
    %c24_109 = arith.constant 24 : index
    %92 = vector.load %arg10[%c0_108, %c24_109] : memref<64x1152xf32, #tpu.memory_space<vmem>>, vector<64x1024xf32>
    %cst_110 = arith.constant dense<0.000000e+00> : vector<32x1024xf32>
    %93 = tpu.matmul %91, %92, %cst_110 {dimension_numbers = #tpu.dot_dimension_numbers<[1], [0], [0], [1], [0, 0, 1, 1], [], []>} : vector<32x64xf32>, vector<64x1024xf32>, vector<32x1024xf32> -> vector<32x1024xf32>
    %94 = arith.addf %89, %93 : vector<32x1024xf32>
    %c6_111 = arith.constant 6 : index
    %c0_112 = arith.constant 0 : index
    %c0_113 = arith.constant 0 : index
    %95 = vector.load %arg4[%c6_111, %c0_112, %c0_113] : memref<9x32x64xf32, #tpu.memory_space<vmem>>, vector<1x32x64xf32>
    %96 = vector.shape_cast %95 : vector<1x32x64xf32> to vector<32x64xf32>
    %c0_114 = arith.constant 0 : index
    %c44_115 = arith.constant 44 : index
    %97 = vector.load %arg10[%c0_114, %c44_115] : memref<64x1152xf32, #tpu.memory_space<vmem>>, vector<64x1024xf32>
    %cst_116 = arith.constant dense<0.000000e+00> : vector<32x1024xf32>
    %98 = tpu.matmul %96, %97, %cst_116 {dimension_numbers = #tpu.dot_dimension_numbers<[1], [0], [0], [1], [0, 0, 1, 1], [], []>} : vector<32x64xf32>, vector<64x1024xf32>, vector<32x1024xf32> -> vector<32x1024xf32>
    %99 = arith.addf %94, %98 : vector<32x1024xf32>
    %c7_117 = arith.constant 7 : index
    %c0_118 = arith.constant 0 : index
    %c0_119 = arith.constant 0 : index
    %100 = vector.load %arg4[%c7_117, %c0_118, %c0_119] : memref<9x32x64xf32, #tpu.memory_space<vmem>>, vector<1x32x64xf32>
    %101 = vector.shape_cast %100 : vector<1x32x64xf32> to vector<32x64xf32>
    %c0_120 = arith.constant 0 : index
    %c45_121 = arith.constant 45 : index
    %102 = vector.load %arg10[%c0_120, %c45_121] : memref<64x1152xf32, #tpu.memory_space<vmem>>, vector<64x1024xf32>
    %cst_122 = arith.constant dense<0.000000e+00> : vector<32x1024xf32>
    %103 = tpu.matmul %101, %102, %cst_122 {dimension_numbers = #tpu.dot_dimension_numbers<[1], [0], [0], [1], [0, 0, 1, 1], [], []>} : vector<32x64xf32>, vector<64x1024xf32>, vector<32x1024xf32> -> vector<32x1024xf32>
    %104 = arith.addf %99, %103 : vector<32x1024xf32>
    %c8_123 = arith.constant 8 : index
    %c0_124 = arith.constant 0 : index
    %c0_125 = arith.constant 0 : index
    %105 = vector.load %arg4[%c8_123, %c0_124, %c0_125] : memref<9x32x64xf32, #tpu.memory_space<vmem>>, vector<1x32x64xf32>
    %106 = vector.shape_cast %105 : vector<1x32x64xf32> to vector<32x64xf32>
    %c0_126 = arith.constant 0 : index
    %c46_127 = arith.constant 46 : index
    %107 = vector.load %arg10[%c0_126, %c46_127] : memref<64x1152xf32, #tpu.memory_space<vmem>>, vector<64x1024xf32>
    %cst_128 = arith.constant dense<0.000000e+00> : vector<32x1024xf32>
    %108 = tpu.matmul %106, %107, %cst_128 {dimension_numbers = #tpu.dot_dimension_numbers<[1], [0], [0], [1], [0, 0, 1, 1], [], []>} : vector<32x64xf32>, vector<64x1024xf32>, vector<32x1024xf32> -> vector<32x1024xf32>
    %109 = arith.addf %104, %108 : vector<32x1024xf32>
    %c0_129 = arith.constant 0 : index
    %c0_130 = arith.constant 0 : index
    %110 = vector.load %arg5[%c0_129, %c0_130] : memref<32x1xf32, #tpu.memory_space<vmem>>, vector<32x1xf32>
    %111 = vector.broadcast %110 : vector<32x1xf32> to vector<32x1024xf32>
    %112 = arith.addf %109, %111 : vector<32x1024xf32>
    %113 = math.tanh %112 : vector<32x1024xf32>
    %c1_131 = arith.constant 1 : index
    %c0_132 = arith.constant 0 : index
    %114 = vector.load %arg8[%c1_131, %c0_132] : memref<2x1024xf32, #tpu.memory_space<vmem>>, vector<1x1024xf32>
    %115 = vector.broadcast %114 : vector<1x1024xf32> to vector<32x1024xf32>
    %116 = arith.mulf %113, %115 : vector<32x1024xf32>
    %c0_133 = arith.constant 0 : index
    %c0_134 = arith.constant 0 : index
    %117 = vector.load %arg10[%c0_133, %c0_134] : memref<64x1152xf32, #tpu.memory_space<vmem>>, vector<32x1024xf32>
    tpu.vector_store %arg10[%c0_133, %c0_134], %116 {strides = array<i32>} : memref<64x1152xf32, #tpu.memory_space<vmem>>, vector<32x1024xf32>,
    %c0_135 = arith.constant 0 : index
    %c0_136 = arith.constant 0 : index
    %c0_137 = arith.constant 0 : index
    %118 = vector.load %arg6[%c0_135, %c0_136, %c0_137] : memref<9x9x32xf32, #tpu.memory_space<vmem>>, vector<1x9x32xf32>
    %119 = vector.shape_cast %118 : vector<1x9x32xf32> to vector<9x32xf32>
    %c0_138 = arith.constant 0 : index
    %c0_139 = arith.constant 0 : index
    %120 = vector.load %arg10[%c0_138, %c0_139] : memref<64x1152xf32, #tpu.memory_space<vmem>>, vector<32x1024xf32>
    %cst_140 = arith.constant dense<0.000000e+00> : vector<9x1024xf32>
    %121 = tpu.matmul %119, %120, %cst_140 {dimension_numbers = #tpu.dot_dimension_numbers<[1], [0], [0], [1], [0, 0, 1, 1], [], []>} : vector<9x32xf32>, vector<32x1024xf32>, vector<9x1024xf32> -> vector<9x1024xf32>
    %c1_141 = arith.constant 1 : index
    %c0_142 = arith.constant 0 : index
    %c0_143 = arith.constant 0 : index
    %122 = vector.load %arg6[%c1_141, %c0_142, %c0_143] : memref<9x9x32xf32, #tpu.memory_space<vmem>>, vector<1x9x32xf32>
    %123 = vector.shape_cast %122 : vector<1x9x32xf32> to vector<9x32xf32>
    %c0_144 = arith.constant 0 : index
    %c1_145 = arith.constant 1 : index
    %124 = vector.load %arg10[%c0_144, %c1_145] : memref<64x1152xf32, #tpu.memory_space<vmem>>, vector<32x1024xf32>
    %cst_146 = arith.constant dense<0.000000e+00> : vector<9x1024xf32>
    %125 = tpu.matmul %123, %124, %cst_146 {dimension_numbers = #tpu.dot_dimension_numbers<[1], [0], [0], [1], [0, 0, 1, 1], [], []>} : vector<9x32xf32>, vector<32x1024xf32>, vector<9x1024xf32> -> vector<9x1024xf32>
    %126 = arith.addf %121, %125 : vector<9x1024xf32>
    %c2_147 = arith.constant 2 : index
    %c0_148 = arith.constant 0 : index
    %c0_149 = arith.constant 0 : index
    %127 = vector.load %arg6[%c2_147, %c0_148, %c0_149] : memref<9x9x32xf32, #tpu.memory_space<vmem>>, vector<1x9x32xf32>
    %128 = vector.shape_cast %127 : vector<1x9x32xf32> to vector<9x32xf32>
    %c0_150 = arith.constant 0 : index
    %c2_151 = arith.constant 2 : index
    %129 = vector.load %arg10[%c0_150, %c2_151] : memref<64x1152xf32, #tpu.memory_space<vmem>>, vector<32x1024xf32>
    %cst_152 = arith.constant dense<0.000000e+00> : vector<9x1024xf32>
    %130 = tpu.matmul %128, %129, %cst_152 {dimension_numbers = #tpu.dot_dimension_numbers<[1], [0], [0], [1], [0, 0, 1, 1], [], []>} : vector<9x32xf32>, vector<32x1024xf32>, vector<9x1024xf32> -> vector<9x1024xf32>
    %131 = arith.addf %126, %130 : vector<9x1024xf32>
    %c3_153 = arith.constant 3 : index
    %c0_154 = arith.constant 0 : index
    %c0_155 = arith.constant 0 : index
    %132 = vector.load %arg6[%c3_153, %c0_154, %c0_155] : memref<9x9x32xf32, #tpu.memory_space<vmem>>, vector<1x9x32xf32>
    %133 = vector.shape_cast %132 : vector<1x9x32xf32> to vector<9x32xf32>
    %c0_156 = arith.constant 0 : index
    %c22_157 = arith.constant 22 : index
    %134 = vector.load %arg10[%c0_156, %c22_157] : memref<64x1152xf32, #tpu.memory_space<vmem>>, vector<32x1024xf32>
    %cst_158 = arith.constant dense<0.000000e+00> : vector<9x1024xf32>
    %135 = tpu.matmul %133, %134, %cst_158 {dimension_numbers = #tpu.dot_dimension_numbers<[1], [0], [0], [1], [0, 0, 1, 1], [], []>} : vector<9x32xf32>, vector<32x1024xf32>, vector<9x1024xf32> -> vector<9x1024xf32>
    %136 = arith.addf %131, %135 : vector<9x1024xf32>
    %c4_159 = arith.constant 4 : index
    %c0_160 = arith.constant 0 : index
    %c0_161 = arith.constant 0 : index
    %137 = vector.load %arg6[%c4_159, %c0_160, %c0_161] : memref<9x9x32xf32, #tpu.memory_space<vmem>>, vector<1x9x32xf32>
    %138 = vector.shape_cast %137 : vector<1x9x32xf32> to vector<9x32xf32>
    %c0_162 = arith.constant 0 : index
    %c23_163 = arith.constant 23 : index
    %139 = vector.load %arg10[%c0_162, %c23_163] : memref<64x1152xf32, #tpu.memory_space<vmem>>, vector<32x1024xf32>
    %cst_164 = arith.constant dense<0.000000e+00> : vector<9x1024xf32>
    %140 = tpu.matmul %138, %139, %cst_164 {dimension_numbers = #tpu.dot_dimension_numbers<[1], [0], [0], [1], [0, 0, 1, 1], [], []>} : vector<9x32xf32>, vector<32x1024xf32>, vector<9x1024xf32> -> vector<9x1024xf32>
    %141 = arith.addf %136, %140 : vector<9x1024xf32>
    %c5_165 = arith.constant 5 : index
    %c0_166 = arith.constant 0 : index
    %c0_167 = arith.constant 0 : index
    %142 = vector.load %arg6[%c5_165, %c0_166, %c0_167] : memref<9x9x32xf32, #tpu.memory_space<vmem>>, vector<1x9x32xf32>
    %143 = vector.shape_cast %142 : vector<1x9x32xf32> to vector<9x32xf32>
    %c0_168 = arith.constant 0 : index
    %c24_169 = arith.constant 24 : index
    %144 = vector.load %arg10[%c0_168, %c24_169] : memref<64x1152xf32, #tpu.memory_space<vmem>>, vector<32x1024xf32>
    %cst_170 = arith.constant dense<0.000000e+00> : vector<9x1024xf32>
    %145 = tpu.matmul %143, %144, %cst_170 {dimension_numbers = #tpu.dot_dimension_numbers<[1], [0], [0], [1], [0, 0, 1, 1], [], []>} : vector<9x32xf32>, vector<32x1024xf32>, vector<9x1024xf32> -> vector<9x1024xf32>
    %146 = arith.addf %141, %145 : vector<9x1024xf32>
    %c6_171 = arith.constant 6 : index
    %c0_172 = arith.constant 0 : index
    %c0_173 = arith.constant 0 : index
    %147 = vector.load %arg6[%c6_171, %c0_172, %c0_173] : memref<9x9x32xf32, #tpu.memory_space<vmem>>, vector<1x9x32xf32>
    %148 = vector.shape_cast %147 : vector<1x9x32xf32> to vector<9x32xf32>
    %c0_174 = arith.constant 0 : index
    %c44_175 = arith.constant 44 : index
    %149 = vector.load %arg10[%c0_174, %c44_175] : memref<64x1152xf32, #tpu.memory_space<vmem>>, vector<32x1024xf32>
    %cst_176 = arith.constant dense<0.000000e+00> : vector<9x1024xf32>
    %150 = tpu.matmul %148, %149, %cst_176 {dimension_numbers = #tpu.dot_dimension_numbers<[1], [0], [0], [1], [0, 0, 1, 1], [], []>} : vector<9x32xf32>, vector<32x1024xf32>, vector<9x1024xf32> -> vector<9x1024xf32>
    %151 = arith.addf %146, %150 : vector<9x1024xf32>
    %c7_177 = arith.constant 7 : index
    %c0_178 = arith.constant 0 : index
    %c0_179 = arith.constant 0 : index
    %152 = vector.load %arg6[%c7_177, %c0_178, %c0_179] : memref<9x9x32xf32, #tpu.memory_space<vmem>>, vector<1x9x32xf32>
    %153 = vector.shape_cast %152 : vector<1x9x32xf32> to vector<9x32xf32>
    %c0_180 = arith.constant 0 : index
    %c45_181 = arith.constant 45 : index
    %154 = vector.load %arg10[%c0_180, %c45_181] : memref<64x1152xf32, #tpu.memory_space<vmem>>, vector<32x1024xf32>
    %cst_182 = arith.constant dense<0.000000e+00> : vector<9x1024xf32>
    %155 = tpu.matmul %153, %154, %cst_182 {dimension_numbers = #tpu.dot_dimension_numbers<[1], [0], [0], [1], [0, 0, 1, 1], [], []>} : vector<9x32xf32>, vector<32x1024xf32>, vector<9x1024xf32> -> vector<9x1024xf32>
    %156 = arith.addf %151, %155 : vector<9x1024xf32>
    %c8_183 = arith.constant 8 : index
    %c0_184 = arith.constant 0 : index
    %c0_185 = arith.constant 0 : index
    %157 = vector.load %arg6[%c8_183, %c0_184, %c0_185] : memref<9x9x32xf32, #tpu.memory_space<vmem>>, vector<1x9x32xf32>
    %158 = vector.shape_cast %157 : vector<1x9x32xf32> to vector<9x32xf32>
    %c0_186 = arith.constant 0 : index
    %c46_187 = arith.constant 46 : index
    %159 = vector.load %arg10[%c0_186, %c46_187] : memref<64x1152xf32, #tpu.memory_space<vmem>>, vector<32x1024xf32>
    %cst_188 = arith.constant dense<0.000000e+00> : vector<9x1024xf32>
    %160 = tpu.matmul %158, %159, %cst_188 {dimension_numbers = #tpu.dot_dimension_numbers<[1], [0], [0], [1], [0, 0, 1, 1], [], []>} : vector<9x32xf32>, vector<32x1024xf32>, vector<9x1024xf32> -> vector<9x1024xf32>
    %161 = arith.addf %156, %160 : vector<9x1024xf32>
    %c0_189 = arith.constant 0 : index
    %c0_190 = arith.constant 0 : index
    %162 = vector.load %arg7[%c0_189, %c0_190] : memref<9x1xf32, #tpu.memory_space<vmem>>, vector<9x1xf32>
    %163 = vector.broadcast %162 : vector<9x1xf32> to vector<9x1024xf32>
    %164 = arith.addf %161, %163 : vector<9x1024xf32>
    %165 = vector.shape_cast %164 : vector<9x1024xf32> to vector<1x9x1024xf32>
    %c0_191 = arith.constant 0 : index
    %c0_192 = arith.constant 0 : index
    %c0_193 = arith.constant 0 : index
    %166 = vector.load %arg9[%c0_191, %c0_192, %c0_193] : memref<1x9x1024xf32, #tpu.memory_space<vmem>>, vector<1x9x1024xf32>
    tpu.vector_store %arg9[%c0_191, %c0_192, %c0_193], %165 {strides = array<i32>} : memref<1x9x1024xf32, #tpu.memory_space<vmem>>, vector<1x9x1024xf32>,
    return
  }
  func.func @transform_0(%arg0: i32) -> (i32, i32, i32) {
    %c0_i32 = arith.constant 0 : i32
    %c0_i32_0 = arith.constant 0 : i32
    %c0_i32_1 = arith.constant 0 : i32
    return %arg0, %c0_i32, %c0_i32_0 : i32, i32, i32
  }
  func.func @transform_1(%arg0: i32) -> (i32, i32) {
    %c0_i32 = arith.constant 0 : i32
    %c0_i32_0 = arith.constant 0 : i32
    %c0_i32_1 = arith.constant 0 : i32
    return %c0_i32, %c0_i32_0 : i32, i32
  }
  func.func @transform_2(%arg0: i32) -> (i32, i32) {
    %c0_i32 = arith.constant 0 : i32
    %c0_i32_0 = arith.constant 0 : i32
    %c0_i32_1 = arith.constant 0 : i32
    return %c0_i32, %c0_i32_0 : i32, i32
  }
  func.func @transform_3(%arg0: i32) -> (i32, i32, i32) {
    %c0_i32 = arith.constant 0 : i32
    %c0_i32_0 = arith.constant 0 : i32
    %c0_i32_1 = arith.constant 0 : i32
    %c0_i32_2 = arith.constant 0 : i32
    return %c0_i32, %c0_i32_0, %c0_i32_1 : i32, i32, i32
  }
  func.func @transform_4(%arg0: i32) -> (i32, i32) {
    %c0_i32 = arith.constant 0 : i32
    %c0_i32_0 = arith.constant 0 : i32
    %c0_i32_1 = arith.constant 0 : i32
    return %c0_i32, %c0_i32_0 : i32, i32
  }
  func.func @transform_5(%arg0: i32) -> (i32, i32, i32) {
    %c0_i32 = arith.constant 0 : i32
    %c0_i32_0 = arith.constant 0 : i32
    %c0_i32_1 = arith.constant 0 : i32
    %c0_i32_2 = arith.constant 0 : i32
    return %c0_i32, %c0_i32_0, %c0_i32_1 : i32, i32, i32
  }
  func.func @transform_6(%arg0: i32) -> (i32, i32) {
    %c0_i32 = arith.constant 0 : i32
    %c0_i32_0 = arith.constant 0 : i32
    %c0_i32_1 = arith.constant 0 : i32
    return %c0_i32, %c0_i32_0 : i32, i32
  }
  func.func @transform_7(%arg0: i32) -> (i32, i32) {
    %c0_i32 = arith.constant 0 : i32
    %c0_i32_0 = arith.constant 0 : i32
    %c0_i32_1 = arith.constant 0 : i32
    return %c0_i32, %c0_i32_0 : i32, i32
  }
  func.func @transform_8(%arg0: i32) -> (i32, i32, i32) {
    %c0_i32 = arith.constant 0 : i32
    %c0_i32_0 = arith.constant 0 : i32
    %c0_i32_1 = arith.constant 0 : i32
    return %arg0, %c0_i32, %c0_i32_0 : i32, i32, i32
  }
}

</mosaic_0001>

<llo_original>
// kernel: tpu_custom_call.1
$region0: #{tpu_custom_call.1}
  #allocation0 [shape = 'u32[]', space=smem, size = 0x4, offset = 0x4, fixed_abs, tag = 'smem constant byte address 0x4 - core index']
  #allocation1 [shape = 'u32[144,128]{1,0:T(1,128)}', space=vmem, size = 0x12000, scoped, tag = 'internal scratch']
  #allocation2 [shape = 'f32[64,1152]{1,0:T(8,128)}', space=vmem, size = 0x48000, scoped, tag = 'scratch operand']
  #allocation3 [shape = 'f32[32,1024]{1,0:T(8,128)}', space=vmem, size = 0x20000, scoped, tag = 'scratch operand']
  %s0 = inlined_call_operand.vmem [shape: f32[1,1,1024], index: 0, kind: input, shape index: {}]
  %s1 = inlined_call_operand.vmem [shape: f32[64,25], index: 1, kind: input, shape index: {}]
  %s2 = inlined_call_operand.vmem [shape: f32[64,1], index: 2, kind: input, shape index: {}]
  %s3 = inlined_call_operand.hbm [shape: f32[9,32,64], index: 3, kind: input, shape index: {}]
  %s4 = inlined_call_operand.vmem [shape: f32[32,1], index: 4, kind: input, shape index: {}]
  %s5 = inlined_call_operand.vmem [shape: f32[9,9,32], index: 5, kind: input, shape index: {}]
  %s6 = inlined_call_operand.vmem [shape: f32[9,1], index: 6, kind: input, shape index: {}]
  %s7 = inlined_call_operand.vmem [shape: f32[2,1024], index: 7, kind: input, shape index: {}]
  %s8 = inlined_call_operand.vmem [shape: f32[1,9,1024], index: 8, kind: output, shape index: {}]
  %s9 = sld [smem:[#allocation0]]
  $region46: #{tpu_custom_call.1} parent=0
    _
  %s11 = ssub.s32 1, %s9
  %s12 = scalar_select 0, %s11, %s9
  $region1: #{tpu_custom_call.1} parent=0
    #allocation4 [shape = 'u8[147456]{0}', space=vmem, size = 0x24000, scoped, tag = 'input window, operand 3, single buffered']
    #allocation5 [shape = 's32[1]{0}', space=sflag, size = 0x4, scoped, tag = 'scoped memory for tpu_custom_call.1']
    %13 = vsyncpa [#allocation5], 0
    // Predicated region
    $region2: #{tpu_custom_call.1} parent=1 // pred_check
      _
    $region3: #{tpu_custom_call.1} parent=1 // pred_check_branch
      %15 = sbr.rel (0) target = $region5
    $region4: #{tpu_custom_call.1} parent=1 // pred_region
      _
    $region5: #{tpu_custom_call.1} parent=1 // pred_fallthru
      _
    // Predicated region
    $region6: #{tpu_custom_call.1} parent=1 // pred_check
      _
    $region7: #{tpu_custom_call.1} parent=1 // pred_check_branch
      %17 = sbr.rel (0) target = $region9
    $region8: #{tpu_custom_call.1} parent=1 // pred_region
      _
    $region9: #{tpu_custom_call.1} parent=1 // pred_fallthru
      _
    // Predicated region
    $region10: #{tpu_custom_call.1} parent=1 // pred_check
      _
    $region11: #{tpu_custom_call.1} parent=1 // pred_check_branch
      %19 = sbr.rel (0) target = $region13
    $region12: #{tpu_custom_call.1} parent=1 // pred_region
      _
    $region13: #{tpu_custom_call.1} parent=1 // pred_fallthru
      _
    // Predicated region
    $region14: #{tpu_custom_call.1} parent=1 // pred_check
      _
    $region15: #{tpu_custom_call.1} parent=1 // pred_check_branch
      %21 = sbr.rel (0) target = $region17
    $region16: #{tpu_custom_call.1} parent=1 // pred_region
      %s23 = ssub.s32 4608, 4608
      %24 = vsyncadd [#allocation5], %s23
      %s25 = sshll.u32 [#allocation4], 4
      %s26 = int_to_ptr.vmem [resolvable:$true] %s25
      %31 = dma.hbm_to_vmem [thread:$0]  %s3, 4608, %s26, [#allocation5], 128, 128, 8
    $region17: #{tpu_custom_call.1} parent=1 // pred_fallthru
      _
    // Predicated region
    $region18: #{tpu_custom_call.1} parent=1 // pred_check
      _
    $region19: #{tpu_custom_call.1} parent=1 // pred_check_branch
      %33 = sbr.rel (0) target = $region21
    $region20: #{tpu_custom_call.1} parent=1 // pred_region
      _
    $region21: #{tpu_custom_call.1} parent=1 // pred_fallthru
      _
    // Predicated region
    $region22: #{tpu_custom_call.1} parent=1 // pred_check
      _
    $region23: #{tpu_custom_call.1} parent=1 // pred_check_branch
      %35 = sbr.rel (0) target = $region25
    $region24: #{tpu_custom_call.1} parent=1 // pred_region
      _
    $region25: #{tpu_custom_call.1} parent=1 // pred_fallthru
      _
    // Predicated region
    $region26: #{tpu_custom_call.1} parent=1 // pred_check
      _
    $region27: #{tpu_custom_call.1} parent=1 // pred_check_branch
      %37 = sbr.rel (0) target = $region29
    $region28: #{tpu_custom_call.1} parent=1 // pred_region
      _
    $region29: #{tpu_custom_call.1} parent=1 // pred_fallthru
      _
    // Predicated region
    $region30: #{tpu_custom_call.1} parent=1 // pred_check
      _
    $region31: #{tpu_custom_call.1} parent=1 // pred_check_branch
      %39 = sbr.rel (0) target = $region33
    $region32: #{tpu_custom_call.1} parent=1 // pred_region
      _
    $region33: #{tpu_custom_call.1} parent=1 // pred_fallthru
      _
    // Predicated region
    $region34: #{tpu_custom_call.1} parent=1 // pred_check
      _
    $region35: #{tpu_custom_call.1} parent=1 // pred_check_branch
      %41 = sbr.rel (0) target = $region37
    $region36: #{tpu_custom_call.1} parent=1 // pred_region
      %42 = dma.done [#allocation5], 4608
    $region37: #{tpu_custom_call.1} parent=1 // pred_fallthru
      _
    %43 = vst [vmem:[#allocation2 + $0x40] sm:$0xff] 0.0
    %44 = vst [vmem:[#allocation2 + $0x88] sm:$0xff] 0.0
    %45 = vst [vmem:[#allocation2 + $0xd0] sm:$0xff] 0.0
    %46 = vst [vmem:[#allocation2 + $0x118] sm:$0xff] 0.0
    %47 = vst [vmem:[#allocation2 + $0x160] sm:$0xff] 0.0
    %48 = vst [vmem:[#allocation2 + $0x1a8] sm:$0xff] 0.0
    %49 = vst [vmem:[#allocation2 + $0x1f0] sm:$0xff] 0.0
    %50 = vst [vmem:[#allocation2 + $0x238] sm:$0xff] 0.0
    %v51 = vld [vmem:[%s0] sm:$0xff]
    %52 = vst [vmem:[#allocation2] ss:$8 sm:$0xf] %v51
    %53 = vst [vmem:[#allocation2] ss:$8 sm:$0xf0] %v51
    %v54 = vld [vmem:[#allocation2] ss:$8 sm:$0xf]
    %v55 = vld [vmem:[#allocation2] ss:$8 sm:$0xf0]
    %v56 = vor.u32 %v54, %v55
    %57 = vst [vmem:[#allocation3] ss:$8 sm:$0xf] %v56
    %58 = vst [vmem:[#allocation3] ss:$8 sm:$0xf0] %v56
    %v59 = vld [vmem:[#allocation2] ss:$8 sm:$0xf]
    %v60 = vld [vmem:[#allocation2] ss:$8 sm:$0xf0]
    %v61 = vor.u32 %v59, %v60
    %s62 = scalar_lea.vmem [#allocation2], 64
    %v63 = vld [vmem:[%s62] ss:$8 sm:$0x1]
    %66 = vrot.lane.b32.xlu0 %v61, 127
    %v67 = vpop.permute.xlu0 %66
    %68 = vrot.lane.b32.xlu0 %v63, 127
    %v69 = vpop.permute.xlu0 %68
    %v70 = vrot.slane %v67, 1
    %v71 = vrot.slane %v69, 1
    %vm72 = vcmask 1046528
    %v73 = vsel %vm72, %v70, %v71
    %vm74 = vcmask 1039360
    %v75 = vsel %vm74, %v67, %v73
    %s77 = scalar_lea.vmem [#allocation3], 1
    %78 = vst [vmem:[%s77] ss:$8 sm:$0xf] %v75
    %79 = vst [vmem:[%s77] ss:$8 sm:$0xf0] %v75
    %v80 = vld [vmem:[#allocation2] ss:$8 sm:$0xf]
    %v81 = vld [vmem:[#allocation2] ss:$8 sm:$0xf0]
    %v82 = vor.u32 %v80, %v81
    %v83 = vld [vmem:[%s62] ss:$8 sm:$0x1]
    %86 = vrot.lane.b32.xlu0 %v82, 126
    %v87 = vpop.permute.xlu0 %86
    %88 = vrot.lane.b32.xlu0 %v83, 126
    %v89 = vpop.permute.xlu0 %88
    %v90 = vrot.slane %v87, 1
    %v91 = vrot.slane %v89, 1
    %v92 = vsel %vm72, %v90, %v91
    %vm93 = vcmask 1031168
    %v94 = vsel %vm93, %v87, %v92
    %s96 = scalar_lea.vmem [#allocation3], 2
    %97 = vst [vmem:[%s96] ss:$8 sm:$0xf] %v94
    %98 = vst [vmem:[%s96] ss:$8 sm:$0xf0] %v94
    %v99 = vld [vmem:[#allocation2] ss:$8 sm:$0xf]
    %v100 = vld [vmem:[#allocation2] ss:$8 sm:$0xf0]
    %v101 = vor.u32 %v99, %v100
    %v102 = vld [vmem:[%s62] ss:$8 sm:$0x1]
    %105 = vrot.lane.b32.xlu0 %v101, 125
    %v106 = vpop.permute.xlu0 %105
    %107 = vrot.lane.b32.xlu0 %v102, 125
    %v108 = vpop.permute.xlu0 %107
    %v109 = vrot.slane %v106, 1
    %v110 = vrot.slane %v108, 1
    %v111 = vsel %vm72, %v109, %v110
    %vm112 = vcmask 1022976
    %v113 = vsel %vm112, %v106, %v111
    %s115 = scalar_lea.vmem [#allocation3], 3
    %116 = vst [vmem:[%s115] ss:$8 sm:$0xf] %v113
    %117 = vst [vmem:[%s115] ss:$8 sm:$0xf0] %v113
    %v118 = vld [vmem:[#allocation2] ss:$8 sm:$0xf]
    %v119 = vld [vmem:[#allocation2] ss:$8 sm:$0xf0]
    %v120 = vor.u32 %v118, %v119
    %v121 = vld [vmem:[%s62] ss:$8 sm:$0x1]
    %124 = vrot.lane.b32.xlu0 %v120, 124
    %v125 = vpop.permute.xlu0 %124
    %126 = vrot.lane.b32.xlu0 %v121, 124
    %v127 = vpop.permute.xlu0 %126
    %v128 = vrot.slane %v125, 1
    %v129 = vrot.slane %v127, 1
    %v130 = vsel %vm72, %v128, %v129
    %vm131 = vcmask 1014784
    %v132 = vsel %vm131, %v125, %v130
    %s134 = scalar_lea.vmem [#allocation3], 4
    %135 = vst [vmem:[%s134] ss:$8 sm:$0xf] %v132
    %136 = vst [vmem:[%s134] ss:$8 sm:$0xf0] %v132
    %v137 = vld [vmem:[#allocation2] ss:$8 sm:$0xf]
    %v138 = vld [vmem:[#allocation2] ss:$8 sm:$0xf0]
    %v139 = vor.u32 %v137, %v138
    %v140 = vld [vmem:[%s62] ss:$8 sm:$0x1]
    %143 = vrot.lane.b32.xlu0 %v139, 106
    %v144 = vpop.permute.xlu0 %143
    %145 = vrot.lane.b32.xlu0 %v140, 106
    %v146 = vpop.permute.xlu0 %145
    %v147 = vrot.slane %v144, 1
    %v148 = vrot.slane %v146, 1
    %v149 = vsel %vm72, %v147, %v148
    %vm150 = vcmask 867328
    %v151 = vsel %vm150, %v144, %v149
    %s153 = scalar_lea.vmem [#allocation3], 5
    %154 = vst [vmem:[%s153] ss:$8 sm:$0xf] %v151
    %155 = vst [vmem:[%s153] ss:$8 sm:$0xf0] %v151
    %v156 = vld [vmem:[#allocation2] ss:$8 sm:$0xf]
    %v157 = vld [vmem:[#allocation2] ss:$8 sm:$0xf0]
    %v158 = vor.u32 %v156, %v157
    %v159 = vld [vmem:[%s62] ss:$8 sm:$0x1]
    %162 = vrot.lane.b32.xlu0 %v158, 105
    %v163 = vpop.permute.xlu0 %162
    %164 = vrot.lane.b32.xlu0 %v159, 105
    %v165 = vpop.permute.xlu0 %164
    %v166 = vrot.slane %v163, 1
    %v167 = vrot.slane %v165, 1
    %v168 = vsel %vm72, %v166, %v167
    %vm169 = vcmask 859136
    %v170 = vsel %vm169, %v163, %v168
    %s172 = scalar_lea.vmem [#allocation3], 6
    %173 = vst [vmem:[%s172] ss:$8 sm:$0xf] %v170
    %174 = vst [vmem:[%s172] ss:$8 sm:$0xf0] %v170
    %v175 = vld [vmem:[#allocation2] ss:$8 sm:$0xf]
    %v176 = vld [vmem:[#allocation2] ss:$8 sm:$0xf0]
    %v177 = vor.u32 %v175, %v176
    %v178 = vld [vmem:[%s62] ss:$8 sm:$0x1]
    %181 = vrot.lane.b32.xlu0 %v177, 104
    %v182 = vpop.permute.xlu0 %181
    %183 = vrot.lane.b32.xlu0 %v178, 104
    %v184 = vpop.permute.xlu0 %183
    %v185 = vrot.slane %v182, 1
    %v186 = vrot.slane %v184, 1
    %v187 = vsel %vm72, %v185, %v186
    %vm188 = vcmask 850944
    %v189 = vsel %vm188, %v182, %v187
    %s191 = scalar_lea.vmem [#allocation3], 7
    %192 = vst [vmem:[%s191] ss:$8 sm:$0xf] %v189
    %193 = vst [vmem:[%s191] ss:$8 sm:$0xf0] %v189
    %v194 = vld [vmem:[#allocation2] ss:$8 sm:$0xf]
    %v195 = vld [vmem:[#allocation2] ss:$8 sm:$0xf0]
    %v196 = vor.u32 %v194, %v195
    %v197 = vld [vmem:[%s62] ss:$8 sm:$0x1]
    %200 = vrot.lane.b32.xlu0 %v196, 103
    %v201 = vpop.permute.xlu0 %200
    %202 = vrot.lane.b32.xlu0 %v197, 103
    %v203 = vpop.permute.xlu0 %202
    %v204 = vrot.slane %v201, 1
    %v205 = vrot.slane %v203, 1
    %v206 = vsel %vm72, %v204, %v205
    %vm207 = vcmask 842752
    %v208 = vsel %vm207, %v201, %v206
    %s210 = scalar_lea.vmem [#allocation3], 64
    %211 = vst [vmem:[%s210] ss:$8 sm:$0xf] %v208
    %212 = vst [vmem:[%s210] ss:$8 sm:$0xf0] %v208
    %v213 = vld [vmem:[#allocation2] ss:$8 sm:$0xf]
    %v214 = vld [vmem:[#allocation2] ss:$8 sm:$0xf0]
    %v215 = vor.u32 %v213, %v214
    %v216 = vld [vmem:[%s62] ss:$8 sm:$0x1]
    %219 = vrot.lane.b32.xlu0 %v215, 102
    %v220 = vpop.permute.xlu0 %219
    %221 = vrot.lane.b32.xlu0 %v216, 102
    %v222 = vpop.permute.xlu0 %221
    %v223 = vrot.slane %v220, 1
    %v224 = vrot.slane %v222, 1
    %v225 = vsel %vm72, %v223, %v224
    %vm226 = vcmask 834560
    %v227 = vsel %vm226, %v220, %v225
    %s229 = scalar_lea.vmem [#allocation3], 65
    %230 = vst [vmem:[%s229] ss:$8 sm:$0xf] %v227
    %231 = vst [vmem:[%s229] ss:$8 sm:$0xf0] %v227
    %v232 = vld [vmem:[#allocation2] ss:$8 sm:$0xf]
    %v233 = vld [vmem:[#allocation2] ss:$8 sm:$0xf0]
    %v234 = vor.u32 %v232, %v233
    %v235 = vld [vmem:[%s62] ss:$8 sm:$0x1]
    %238 = vrot.lane.b32.xlu0 %v234, 84
    %v239 = vpop.permute.xlu0 %238
    %240 = vrot.lane.b32.xlu0 %v235, 84
    %v241 = vpop.permute.xlu0 %240
    %v242 = vrot.slane %v239, 1
    %v243 = vrot.slane %v241, 1
    %v244 = vsel %vm72, %v242, %v243
    %vm245 = vcmask 687104
    %v246 = vsel %vm245, %v239, %v244
    %s248 = scalar_lea.vmem [#allocation3], 66
    %249 = vst [vmem:[%s248] ss:$8 sm:$0xf] %v246
    %250 = vst [vmem:[%s248] ss:$8 sm:$0xf0] %v246
    %v251 = vld [vmem:[#allocation2] ss:$8 sm:$0xf]
    %v252 = vld [vmem:[#allocation2] ss:$8 sm:$0xf0]
    %v253 = vor.u32 %v251, %v252
    %v254 = vld [vmem:[%s62] ss:$8 sm:$0x1]
    %257 = vrot.lane.b32.xlu0 %v253, 83
    %v258 = vpop.permute.xlu0 %257
    %259 = vrot.lane.b32.xlu0 %v254, 83
    %v260 = vpop.permute.xlu0 %259
    %v261 = vrot.slane %v258, 1
    %v262 = vrot.slane %v260, 1
    %v263 = vsel %vm72, %v261, %v262
    %vm264 = vcmask 678912
    %v265 = vsel %vm264, %v258, %v263
    %s267 = scalar_lea.vmem [#allocation3], 67
    %268 = vst [vmem:[%s267] ss:$8 sm:$0xf] %v265
    %269 = vst [vmem:[%s267] ss:$8 sm:$0xf0] %v265
    %v270 = vld [vmem:[#allocation2] ss:$8 sm:$0xf]
    %v271 = vld [vmem:[#allocation2] ss:$8 sm:$0xf0]
    %v272 = vor.u32 %v270, %v271
    %v273 = vld [vmem:[%s62] ss:$8 sm:$0x1]
    %276 = vrot.lane.b32.xlu0 %v272, 82
    %v277 = vpop.permute.xlu0 %276
    %278 = vrot.lane.b32.xlu0 %v273, 82
    %v279 = vpop.permute.xlu0 %278
    %v280 = vrot.slane %v277, 1
    %v281 = vrot.slane %v279, 1
    %v282 = vsel %vm72, %v280, %v281
    %vm283 = vcmask 670720
    %v284 = vsel %vm283, %v277, %v282
    %s286 = scalar_lea.vmem [#allocation3], 68
    %287 = vst [vmem:[%s286] ss:$8 sm:$0xf] %v284
    %288 = vst [vmem:[%s286] ss:$8 sm:$0xf0] %v284
    %v289 = vld [vmem:[#allocation2] ss:$8 sm:$0xf]
    %v290 = vld [vmem:[#allocation2] ss:$8 sm:$0xf0]
    %v291 = vor.u32 %v289, %v290
    %v292 = vld [vmem:[%s62] ss:$8 sm:$0x1]
    %295 = vrot.lane.b32.xlu0 %v291, 81
    %v296 = vpop.permute.xlu0 %295
    %297 = vrot.lane.b32.xlu0 %v292, 81
    %v298 = vpop.permute.xlu0 %297
    %v299 = vrot.slane %v296, 1
    %v300 = vrot.slane %v298, 1
    %v301 = vsel %vm72, %v299, %v300
    %vm302 = vcmask 662528
    %v303 = vsel %vm302, %v296, %v301
    %s305 = scalar_lea.vmem [#allocation3], 69
    %306 = vst [vmem:[%s305] ss:$8 sm:$0xf] %v303
    %307 = vst [vmem:[%s305] ss:$8 sm:$0xf0] %v303
    %v308 = vld [vmem:[#allocation2] ss:$8 sm:$0xf]
    %v309 = vld [vmem:[#allocation2] ss:$8 sm:$0xf0]
    %v310 = vor.u32 %v308, %v309
    %v311 = vld [vmem:[%s62] ss:$8 sm:$0x1]
    %314 = vrot.lane.b32.xlu0 %v310, 80
    %v315 = vpop.permute.xlu0 %314
    %316 = vrot.lane.b32.xlu0 %v311, 80
    %v317 = vpop.permute.xlu0 %316
    %v318 = vrot.slane %v315, 1
    %v319 = vrot.slane %v317, 1
    %v320 = vsel %vm72, %v318, %v319
    %vm321 = vcmask 654336
    %v322 = vsel %vm321, %v315, %v320
    %s324 = scalar_lea.vmem [#allocation3], 70
    %325 = vst [vmem:[%s324] ss:$8 sm:$0xf] %v322
    %326 = vst [vmem:[%s324] ss:$8 sm:$0xf0] %v322
    %v327 = vld [vmem:[#allocation2] ss:$8 sm:$0xf]
    %v328 = vld [vmem:[#allocation2] ss:$8 sm:$0xf0]
    %v329 = vor.u32 %v327, %v328
    %v330 = vld [vmem:[%s62] ss:$8 sm:$0x1]
    %333 = vrot.lane.b32.xlu0 %v329, 62
    %v334 = vpop.permute.xlu0 %333
    %335 = vrot.lane.b32.xlu0 %v330, 62
    %v336 = vpop.permute.xlu0 %335
    %v337 = vrot.slane %v334, 1
    %v338 = vrot.slane %v336, 1
    %v339 = vsel %vm72, %v337, %v338
    %vm340 = vcmask 506880
    %v341 = vsel %vm340, %v334, %v339
    %s343 = scalar_lea.vmem [#allocation3], 71
    %344 = vst [vmem:[%s343] ss:$8 sm:$0xf] %v341
    %345 = vst [vmem:[%s343] ss:$8 sm:$0xf0] %v341
    %v346 = vld [vmem:[#allocation2] ss:$8 sm:$0xf]
    %v347 = vld [vmem:[#allocation2] ss:$8 sm:$0xf0]
    %v348 = vor.u32 %v346, %v347
    %v349 = vld [vmem:[%s62] ss:$8 sm:$0x1]
    %352 = vrot.lane.b32.xlu0 %v348, 61
    %v353 = vpop.permute.xlu0 %352
    %354 = vrot.lane.b32.xlu0 %v349, 61
    %v355 = vpop.permute.xlu0 %354
    %v356 = vrot.slane %v353, 1
    %v357 = vrot.slane %v355, 1
    %v358 = vsel %vm72, %v356, %v357
    %vm359 = vcmask 498688
    %v360 = vsel %vm359, %v353, %v358
    %s362 = scalar_lea.vmem [#allocation3], 128
    %363 = vst [vmem:[%s362] ss:$8 sm:$0xf] %v360
    %364 = vst [vmem:[%s362] ss:$8 sm:$0xf0] %v360
    %v365 = vld [vmem:[#allocation2] ss:$8 sm:$0xf]
    %v366 = vld [vmem:[#allocation2] ss:$8 sm:$0xf0]
    %v367 = vor.u32 %v365, %v366
    %v368 = vld [vmem:[%s62] ss:$8 sm:$0x1]
    %371 = vrot.lane.b32.xlu0 %v367, 60
    %v372 = vpop.permute.xlu0 %371
    %373 = vrot.lane.b32.xlu0 %v368, 60
    %v374 = vpop.permute.xlu0 %373
    %v375 = vrot.slane %v372, 1
    %v376 = vrot.slane %v374, 1
    %v377 = vsel %vm72, %v375, %v376
    %vm378 = vcmask 490496
    %v379 = vsel %vm378, %v372, %v377
    %s381 = scalar_lea.vmem [#allocation3], 129
    %382 = vst [vmem:[%s381] ss:$8 sm:$0xf] %v379
    %383 = vst [vmem:[%s381] ss:$8 sm:$0xf0] %v379
    %v384 = vld [vmem:[#allocation2] ss:$8 sm:$0xf]
    %v385 = vld [vmem:[#allocation2] ss:$8 sm:$0xf0]
    %v386 = vor.u32 %v384, %v385
    %v387 = vld [vmem:[%s62] ss:$8 sm:$0x1]
    %390 = vrot.lane.b32.xlu0 %v386, 59
    %v391 = vpop.permute.xlu0 %390
    %392 = vrot.lane.b32.xlu0 %v387, 59
    %v393 = vpop.permute.xlu0 %392
    %v394 = vrot.slane %v391, 1
    %v395 = vrot.slane %v393, 1
    %v396 = vsel %vm72, %v394, %v395
    %vm397 = vcmask 482304
    %v398 = vsel %vm397, %v391, %v396
    %s400 = scalar_lea.vmem [#allocation3], 130
    %401 = vst [vmem:[%s400] ss:$8 sm:$0xf] %v398
    %402 = vst [vmem:[%s400] ss:$8 sm:$0xf0] %v398
    %v403 = vld [vmem:[#allocation2] ss:$8 sm:$0xf]
    %v404 = vld [vmem:[#allocation2] ss:$8 sm:$0xf0]
    %v405 = vor.u32 %v403, %v404
    %v406 = vld [vmem:[%s62] ss:$8 sm:$0x1]
    %409 = vrot.lane.b32.xlu0 %v405, 58
    %v410 = vpop.permute.xlu0 %409
    %411 = vrot.lane.b32.xlu0 %v406, 58
    %v412 = vpop.permute.xlu0 %411
    %v413 = vrot.slane %v410, 1
    %v414 = vrot.slane %v412, 1
    %v415 = vsel %vm72, %v413, %v414
    %vm416 = vcmask 474112
    %v417 = vsel %vm416, %v410, %v415
    %s419 = scalar_lea.vmem [#allocation3], 131
    %420 = vst [vmem:[%s419] ss:$8 sm:$0xf] %v417
    %421 = vst [vmem:[%s419] ss:$8 sm:$0xf0] %v417
    %v422 = vld [vmem:[#allocation2] ss:$8 sm:$0xf]
    %v423 = vld [vmem:[#allocation2] ss:$8 sm:$0xf0]
    %v424 = vor.u32 %v422, %v423
    %v425 = vld [vmem:[%s62] ss:$8 sm:$0x1]
    %428 = vrot.lane.b32.xlu0 %v424, 40
    %v429 = vpop.permute.xlu0 %428
    %430 = vrot.lane.b32.xlu0 %v425, 40
    %v431 = vpop.permute.xlu0 %430
    %v432 = vrot.slane %v429, 1
    %v433 = vrot.slane %v431, 1
    %v434 = vsel %vm72, %v432, %v433
    %vm435 = vcmask 326656
    %v436 = vsel %vm435, %v429, %v434
    %s438 = scalar_lea.vmem [#allocation3], 132
    %439 = vst [vmem:[%s438] ss:$8 sm:$0xf] %v436
    %440 = vst [vmem:[%s438] ss:$8 sm:$0xf0] %v436
    %v441 = vld [vmem:[#allocation2] ss:$8 sm:$0xf]
    %v442 = vld [vmem:[#allocation2] ss:$8 sm:$0xf0]
    %v443 = vor.u32 %v441, %v442
    %v444 = vld [vmem:[%s62] ss:$8 sm:$0x1]
    %447 = vrot.lane.b32.xlu0 %v443, 39
    %v448 = vpop.permute.xlu0 %447
    %449 = vrot.lane.b32.xlu0 %v444, 39
    %v450 = vpop.permute.xlu0 %449
    %v451 = vrot.slane %v448, 1
    %v452 = vrot.slane %v450, 1
    %v453 = vsel %vm72, %v451, %v452
    %vm454 = vcmask 318464
    %v455 = vsel %vm454, %v448, %v453
    %s457 = scalar_lea.vmem [#allocation3], 133
    %458 = vst [vmem:[%s457] ss:$8 sm:$0xf] %v455
    %459 = vst [vmem:[%s457] ss:$8 sm:$0xf0] %v455
    %v460 = vld [vmem:[#allocation2] ss:$8 sm:$0xf]
    %v461 = vld [vmem:[#allocation2] ss:$8 sm:$0xf0]
    %v462 = vor.u32 %v460, %v461
    %v463 = vld [vmem:[%s62] ss:$8 sm:$0x1]
    %466 = vrot.lane.b32.xlu0 %v462, 38
    %v467 = vpop.permute.xlu0 %466
    %468 = vrot.lane.b32.xlu0 %v463, 38
    %v469 = vpop.permute.xlu0 %468
    %v470 = vrot.slane %v467, 1
    %v471 = vrot.slane %v469, 1
    %v472 = vsel %vm72, %v470, %v471
    %vm473 = vcmask 310272
    %v474 = vsel %vm473, %v467, %v472
    %s476 = scalar_lea.vmem [#allocation3], 134
    %477 = vst [vmem:[%s476] ss:$8 sm:$0xf] %v474
    %478 = vst [vmem:[%s476] ss:$8 sm:$0xf0] %v474
    %v479 = vld [vmem:[#allocation2] ss:$8 sm:$0xf]
    %v480 = vld [vmem:[#allocation2] ss:$8 sm:$0xf0]
    %v481 = vor.u32 %v479, %v480
    %v482 = vld [vmem:[%s62] ss:$8 sm:$0x1]
    %485 = vrot.lane.b32.xlu0 %v481, 37
    %v486 = vpop.permute.xlu0 %485
    %487 = vrot.lane.b32.xlu0 %v482, 37
    %v488 = vpop.permute.xlu0 %487
    %v489 = vrot.slane %v486, 1
    %v490 = vrot.slane %v488, 1
    %v491 = vsel %vm72, %v489, %v490
    %vm492 = vcmask 302080
    %v493 = vsel %vm492, %v486, %v491
    %s495 = scalar_lea.vmem [#allocation3], 135
    %496 = vst [vmem:[%s495] ss:$8 sm:$0xf] %v493
    %497 = vst [vmem:[%s495] ss:$8 sm:$0xf0] %v493
    %v498 = vld [vmem:[#allocation2] ss:$8 sm:$0xf]
    %v499 = vld [vmem:[#allocation2] ss:$8 sm:$0xf0]
    %v500 = vor.u32 %v498, %v499
    %v501 = vld [vmem:[%s62] ss:$8 sm:$0x1]
    %504 = vrot.lane.b32.xlu0 %v500, 36
    %v505 = vpop.permute.xlu0 %504
    %506 = vrot.lane.b32.xlu0 %v501, 36
    %v507 = vpop.permute.xlu0 %506
    %v508 = vrot.slane %v505, 1
    %v509 = vrot.slane %v507, 1
    %v510 = vsel %vm72, %v508, %v509
    %vm511 = vcmask 293888
    %v512 = vsel %vm511, %v505, %v510
    %s514 = scalar_lea.vmem [#allocation3], 192
    %515 = vst [vmem:[%s514] ss:$8 sm:$0xf] %v512
    %516 = vst [vmem:[%s514] ss:$8 sm:$0xf0] %v512
    %v517 = vld [vmem:[%s1] sm:$0xff]
    %v518 = vld [vmem:[%s1 + $0x8] sm:$0xff]
    %v519 = vld [vmem:[%s1 + $0x10] sm:$0xff]
    %v520 = vld [vmem:[%s1 + $0x18] sm:$0xff]
    %v521 = vld [vmem:[%s1 + $0x20] sm:$0xff]
    %v522 = vld [vmem:[%s1 + $0x28] sm:$0xff]
    %v523 = vld [vmem:[%s1 + $0x30] sm:$0xff]
    %v524 = vld [vmem:[%s1 + $0x38] sm:$0xff]
    %v525 = vld [vmem:[#allocation3] sm:$0xff]
    %v526 = vld [vmem:[#allocation3 + $0x8] sm:$0xff]
    %v527 = vld [vmem:[#allocation3 + $0x10] sm:$0xff]
    %v528 = vld [vmem:[#allocation3 + $0x18] sm:$0xff]
    %v529 = vld [vmem:[#allocation3 + $0x20] sm:$0xff]
    %v530 = vld [vmem:[#allocation3 + $0x28] sm:$0xff]
    %v531 = vld [vmem:[#allocation3 + $0x30] sm:$0xff]
    %v532 = vld [vmem:[#allocation3 + $0x38] sm:$0xff]
    %v533 = vld [vmem:[#allocation3 + $0x40] sm:$0xff]
    %v534 = vld [vmem:[#allocation3 + $0x48] sm:$0xff]
    %v535 = vld [vmem:[#allocation3 + $0x50] sm:$0xff]
    %v536 = vld [vmem:[#allocation3 + $0x58] sm:$0xff]
    %v537 = vld [vmem:[#allocation3 + $0x60] sm:$0xff]
    %v538 = vld [vmem:[#allocation3 + $0x68] sm:$0xff]
    %v539 = vld [vmem:[#allocation3 + $0x70] sm:$0xff]
    %v540 = vld [vmem:[#allocation3 + $0x78] sm:$0xff]
    %v541 = vld [vmem:[#allocation3 + $0x80] sm:$0xff]
    %v542 = vld [vmem:[#allocation3 + $0x88] sm:$0xff]
    %v543 = vld [vmem:[#allocation3 + $0x90] sm:$0xff]
    %v544 = vld [vmem:[#allocation3 + $0x98] sm:$0xff]
    %v545 = vld [vmem:[#allocation3 + $0xa0] sm:$0xff]
    %v546 = vld [vmem:[#allocation3 + $0xa8] sm:$0xff]
    %v547 = vld [vmem:[#allocation3 + $0xb0] sm:$0xff]
    %v548 = vld [vmem:[#allocation3 + $0xb8] sm:$0xff]
    %v549 = vld [vmem:[#allocation3 + $0xc0] sm:$0x1]
    %v550 = vld [vmem:[#allocation3 + $0xc8] sm:$0x1]
    %v551 = vld [vmem:[#allocation3 + $0xd0] sm:$0x1]
    %v552 = vld [vmem:[#allocation3 + $0xd8] sm:$0x1]
    %v553 = vld [vmem:[#allocation3 + $0xe0] sm:$0x1]
    %v554 = vld [vmem:[#allocation3 + $0xe8] sm:$0x1]
    %v555 = vld [vmem:[#allocation3 + $0xf0] sm:$0x1]
    %v556 = vld [vmem:[#allocation3 + $0xf8] sm:$0x1]
    %v557 = vld [vmem:[%s2] sm:$0xff]
    %v558 = vld [vmem:[%s2 + $0x8] sm:$0xff]
    %v559 = vld [vmem:[%s2 + $0x10] sm:$0xff]
    %v560 = vld [vmem:[%s2 + $0x18] sm:$0xff]
    %v561 = vld [vmem:[%s2 + $0x20] sm:$0xff]
    %v562 = vld [vmem:[%s2 + $0x28] sm:$0xff]
    %v563 = vld [vmem:[%s2 + $0x30] sm:$0xff]
    %v564 = vld [vmem:[%s2 + $0x38] sm:$0xff]
    %566 = vset.pattern.permute.xlu0 0
    %567 = vperm.xlu0 %566, %v557
    %v568 = vpop.permute.xlu0 %567
    %571 = vset.pattern.permute.xlu0 0
    %572 = vperm.xlu0 %571, %v558
    %v573 = vpop.permute.xlu0 %572
    %576 = vset.pattern.permute.xlu0 0
    %577 = vperm.xlu0 %576, %v559
    %v578 = vpop.permute.xlu0 %577
    %581 = vset.pattern.permute.xlu0 0
    %582 = vperm.xlu0 %581, %v560
    %v583 = vpop.permute.xlu0 %582
    %586 = vset.pattern.permute.xlu0 0
    %587 = vperm.xlu0 %586, %v561
    %v588 = vpop.permute.xlu0 %587
    %591 = vset.pattern.permute.xlu0 0
    %592 = vperm.xlu0 %591, %v562
    %v593 = vpop.permute.xlu0 %592
    %596 = vset.pattern.permute.xlu0 0
    %597 = vperm.xlu0 %596, %v563
    %v598 = vpop.permute.xlu0 %597
    %601 = vset.pattern.permute.xlu0 0
    %602 = vperm.xlu0 %601, %v564
    %v603 = vpop.permute.xlu0 %602
    %vm605 = vcmask 203776
    %v607 = vsel %vm605, %v517, 0
    %v610 = vsel %vm605, %v518, 0
    %v613 = vsel %vm605, %v519, 0
    %v616 = vsel %vm605, %v520, 0
    %v619 = vsel %vm605, %v521, 0
    %v622 = vsel %vm605, %v522, 0
    %v625 = vsel %vm605, %v523, 0
    %v628 = vsel %vm605, %v524, 0
    %vm630 = vcmask 1040384
    %v632 = vsel %vm630, %v549, 0
    %v635 = vsel %vm630, %v550, 0
    %v638 = vsel %vm630, %v551, 0
    %v641 = vsel %vm630, %v552, 0
    %v644 = vsel %vm630, %v553, 0
    %v647 = vsel %vm630, %v554, 0
    %v650 = vsel %vm630, %v555, 0
    %v653 = vsel %vm630, %v556, 0
    %655 = vmatprep.subr.mxu0 %v526
    %656 = vmatpush1.msra.mxu0 %v525
    %657 = vmatprep.subr.mxu0 %v534
    %658 = vmatpush1.msra.mxu0 %v533
    %659 = vmatprep.subr.mxu0 %v542
    %660 = vmatpush1.msra.mxu0 %v541
    %661 = vmatprep.subr.mxu0 %v635
    %662 = vmatpush1.msra.mxu0 %v632
    %663 = vmatprep.subr.mxu0 0.0
    %664 = vmatpush1.msra.mxu0 0.0
    %665 = vmatprep.subr.mxu0 0.0
    %666 = vmatpush1.msra.mxu0 0.0
    %667 = vmatprep.subr.mxu0 0.0
    %668 = vmatpush1.msra.mxu0 0.0
    %669 = vmatprep.subr.mxu0 0.0
    %670 = vmatpush1.msra.mxu0 0.0
    %671 = vmatprep.subr.mxu0 0.0
    %672 = vmatpush1.msra.mxu0 0.0
    %673 = vmatprep.subr.mxu0 0.0
    %674 = vmatpush1.msra.mxu0 0.0
    %675 = vmatprep.subr.mxu0 0.0
    %676 = vmatpush1.msra.mxu0 0.0
    %677 = vmatprep.subr.mxu0 0.0
    %678 = vmatpush1.msra.mxu0 0.0
    %679 = vmatprep.subr.mxu0 0.0
    %680 = vmatpush1.msra.mxu0 0.0
    %681 = vmatprep.subr.mxu0 0.0
    %682 = vmatpush1.msra.mxu0 0.0
    %683 = vmatprep.subr.mxu0 0.0
    %684 = vmatpush1.msra.mxu0 0.0
    %685 = vmatprep.subr.mxu0 0.0
    %686 = vmatpush1.msra.mxu0 0.0
    %687 = vmatprep.subr.mxu0 0.0
    %688 = vmatpush1.msra.mxu0 0.0
    %689 = vmatprep.subr.mxu0 0.0
    %690 = vmatpush1.msra.mxu0 0.0
    %691 = vmatprep.subr.mxu0 0.0
    %692 = vmatpush1.msra.mxu0 0.0
    %693 = vmatprep.subr.mxu0 0.0
    %694 = vmatpush1.msra.mxu0 0.0
    %695 = vmatprep.subr.mxu0 0.0
    %696 = vmatpush1.msra.mxu0 0.0
    %697 = vmatprep.subr.mxu0 0.0
    %698 = vmatpush1.msra.mxu0 0.0
    %699 = vmatprep.subr.mxu0 0.0
    %700 = vmatpush1.msra.mxu0 0.0
    %701 = vmatprep.subr.mxu0 0.0
    %702 = vmatpush1.msra.mxu0 0.0
    %703 = vmatprep.subr.mxu0 0.0
    %704 = vmatpush1.msra.mxu0 0.0
    %705 = vmatprep.subr.mxu0 0.0
    %706 = vmatpush1.msra.mxu0 0.0
    %707 = vmatprep.subr.mxu0 0.0
    %708 = vmatpush1.msra.mxu0 0.0
    %709 = vmatprep.subr.mxu0 0.0
    %710 = vmatpush1.msra.mxu0 0.0
    %711 = vmatprep.subr.mxu0 0.0
    %712 = vmatpush1.msra.mxu0 0.0
    %713 = vmatprep.subr.mxu0 0.0
    %714 = vmatpush1.msra.mxu0 0.0
    %715 = vmatprep.subr.mxu0 0.0
    %716 = vmatpush1.msra.mxu0 0.0
    %717 = vmatprep.subr.mxu0 0.0
    %718 = vmatpush1.msra.mxu0 0.0
    %719 = vmatprep.mubr.f32.mxu0 0.0
    %720 = vmatmul.mubr.f32.gmra.mrb[0].mxu0 %v607
    %v721 = vpop.f32.mrb[0].mxu0
    %v722 = vadd.f32 %v568, %v721
    %v723 = vpop.f32.mrb[0].mxu0
    %v724 = vadd.f32 %v568, %v723
    %725 = vmatprep.mubr.f32.mxu0 0.0
    %726 = vmatmul.mubr.f32.gmra.mrb[0].mxu0 %v610
    %v727 = vpop.f32.mrb[0].mxu0
    %v728 = vadd.f32 %v573, %v727
    %v729 = vpop.f32.mrb[0].mxu0
    %v730 = vadd.f32 %v573, %v729
    %731 = vmatprep.mubr.f32.mxu0 0.0
    %732 = vmatmul.mubr.f32.gmra.mrb[0].mxu0 %v613
    %v733 = vpop.f32.mrb[0].mxu0
    %v734 = vadd.f32 %v578, %v733
    %v735 = vpop.f32.mrb[0].mxu0
    %v736 = vadd.f32 %v578, %v735
    %737 = vmatprep.mubr.f32.mxu0 0.0
    %738 = vmatmul.mubr.f32.gmra.mrb[0].mxu0 %v616
    %v739 = vpop.f32.mrb[0].mxu0
    %v740 = vadd.f32 %v583, %v739
    %v741 = vpop.f32.mrb[0].mxu0
    %v742 = vadd.f32 %v583, %v741
    %743 = vmatprep.mubr.f32.mxu0 0.0
    %744 = vmatmul.mubr.f32.gmra.mrb[0].mxu0 %v619
    %v745 = vpop.f32.mrb[0].mxu0
    %v746 = vadd.f32 %v588, %v745
    %v747 = vpop.f32.mrb[0].mxu0
    %v748 = vadd.f32 %v588, %v747
    %749 = vmatprep.mubr.f32.mxu0 0.0
    %750 = vmatmul.mubr.f32.gmra.mrb[0].mxu0 %v622
    %v751 = vpop.f32.mrb[0].mxu0
    %v752 = vadd.f32 %v593, %v751
    %v753 = vpop.f32.mrb[0].mxu0
    %v754 = vadd.f32 %v593, %v753
    %755 = vmatprep.mubr.f32.mxu0 0.0
    %756 = vmatmul.mubr.f32.gmra.mrb[0].mxu0 %v625
    %v757 = vpop.f32.mrb[0].mxu0
    %v758 = vadd.f32 %v598, %v757
    %v759 = vpop.f32.mrb[0].mxu0
    %v760 = vadd.f32 %v598, %v759
    %761 = vmatprep.mubr.f32.mxu0 0.0
    %762 = vmatmul.mubr.f32.gmra.mrb[0].mxu0 %v628
    %v763 = vpop.f32.mrb[0].mxu0
    %v764 = vadd.f32 %v603, %v763
    %v765 = vpop.f32.mrb[0].mxu0
    %v766 = vadd.f32 %v603, %v765
    %767 = vdwg.mxu0
    %768 = vmatprep.subr.mxu0 %v528
    %769 = vmatpush1.msra.mxu0 %v527
    %770 = vmatprep.subr.mxu0 %v536
    %771 = vmatpush1.msra.mxu0 %v535
    %772 = vmatprep.subr.mxu0 %v544
    %773 = vmatpush1.msra.mxu0 %v543
    %774 = vmatprep.subr.mxu0 %v641
    %775 = vmatpush1.msra.mxu0 %v638
    %776 = vmatprep.subr.mxu0 0.0
    %777 = vmatpush1.msra.mxu0 0.0
    %778 = vmatprep.subr.mxu0 0.0
    %779 = vmatpush1.msra.mxu0 0.0
    %780 = vmatprep.subr.mxu0 0.0
    %781 = vmatpush1.msra.mxu0 0.0
    %782 = vmatprep.subr.mxu0 0.0
    %783 = vmatpush1.msra.mxu0 0.0
    %784 = vmatprep.subr.mxu0 0.0
    %785 = vmatpush1.msra.mxu0 0.0
    %786 = vmatprep.subr.mxu0 0.0
    %787 = vmatpush1.msra.mxu0 0.0
    %788 = vmatprep.subr.mxu0 0.0
    %789 = vmatpush1.msra.mxu0 0.0
    %790 = vmatprep.subr.mxu0 0.0
    %791 = vmatpush1.msra.mxu0 0.0
    %792 = vmatprep.subr.mxu0 0.0
    %793 = vmatpush1.msra.mxu0 0.0
    %794 = vmatprep.subr.mxu0 0.0
    %795 = vmatpush1.msra.mxu0 0.0
    %796 = vmatprep.subr.mxu0 0.0
    %797 = vmatpush1.msra.mxu0 0.0
    %798 = vmatprep.subr.mxu0 0.0
    %799 = vmatpush1.msra.mxu0 0.0
    %800 = vmatprep.subr.mxu0 0.0
    %801 = vmatpush1.msra.mxu0 0.0
    %802 = vmatprep.subr.mxu0 0.0
    %803 = vmatpush1.msra.mxu0 0.0
    %804 = vmatprep.subr.mxu0 0.0
    %805 = vmatpush1.msra.mxu0 0.0
    %806 = vmatprep.subr.mxu0 0.0
    %807 = vmatpush1.msra.mxu0 0.0
    %808 = vmatprep.subr.mxu0 0.0
    %809 = vmatpush1.msra.mxu0 0.0
    %810 = vmatprep.subr.mxu0 0.0
    %811 = vmatpush1.msra.mxu0 0.0
    %812 = vmatprep.subr.mxu0 0.0
    %813 = vmatpush1.msra.mxu0 0.0
    %814 = vmatprep.subr.mxu0 0.0
    %815 = vmatpush1.msra.mxu0 0.0
    %816 = vmatprep.subr.mxu0 0.0
    %817 = vmatpush1.msra.mxu0 0.0
    %818 = vmatprep.subr.mxu0 0.0
    %819 = vmatpush1.msra.mxu0 0.0
    %820 = vmatprep.subr.mxu0 0.0
    %821 = vmatpush1.msra.mxu0 0.0
    %822 = vmatprep.subr.mxu0 0.0
    %823 = vmatpush1.msra.mxu0 0.0
    %824 = vmatprep.subr.mxu0 0.0
    %825 = vmatpush1.msra.mxu0 0.0
    %826 = vmatprep.subr.mxu0 0.0
    %827 = vmatpush1.msra.mxu0 0.0
    %828 = vmatprep.subr.mxu0 0.0
    %829 = vmatpush1.msra.mxu0 0.0
    %830 = vmatprep.subr.mxu0 0.0
    %831 = vmatpush1.msra.mxu0 0.0
    %832 = vmatprep.mubr.f32.mxu0 0.0
    %833 = vmatmul.mubr.f32.gmra.mrb[0].mxu0 %v607
    %v834 = vpop.f32.mrb[0].mxu0
    %v835 = vadd.f32 %v568, %v834
    %v836 = vpop.f32.mrb[0].mxu0
    %v837 = vadd.f32 %v568, %v836
    %838 = vmatprep.mubr.f32.mxu0 0.0
    %839 = vmatmul.mubr.f32.gmra.mrb[0].mxu0 %v610
    %v840 = vpop.f32.mrb[0].mxu0
    %v841 = vadd.f32 %v573, %v840
    %v842 = vpop.f32.mrb[0].mxu0
    %v843 = vadd.f32 %v573, %v842
    %844 = vmatprep.mubr.f32.mxu0 0.0
    %845 = vmatmul.mubr.f32.gmra.mrb[0].mxu0 %v613
    %v846 = vpop.f32.mrb[0].mxu0
    %v847 = vadd.f32 %v578, %v846
    %v848 = vpop.f32.mrb[0].mxu0
    %v849 = vadd.f32 %v578, %v848
    %850 = vmatprep.mubr.f32.mxu0 0.0
    %851 = vmatmul.mubr.f32.gmra.mrb[0].mxu0 %v616
    %v852 = vpop.f32.mrb[0].mxu0
    %v853 = vadd.f32 %v583, %v852
    %v854 = vpop.f32.mrb[0].mxu0
    %v855 = vadd.f32 %v583, %v854
    %856 = vmatprep.mubr.f32.mxu0 0.0
    %857 = vmatmul.mubr.f32.gmra.mrb[0].mxu0 %v619
    %v858 = vpop.f32.mrb[0].mxu0
    %v859 = vadd.f32 %v588, %v858
    %v860 = vpop.f32.mrb[0].mxu0
    %v861 = vadd.f32 %v588, %v860
    %862 = vmatprep.mubr.f32.mxu0 0.0
    %863 = vmatmul.mubr.f32.gmra.mrb[0].mxu0 %v622
    %v864 = vpop.f32.mrb[0].mxu0
    %v865 = vadd.f32 %v593, %v864
    %v866 = vpop.f32.mrb[0].mxu0
    %v867 = vadd.f32 %v593, %v866
    %868 = vmatprep.mubr.f32.mxu0 0.0
    %869 = vmatmul.mubr.f32.gmra.mrb[0].mxu0 %v625
    %v870 = vpop.f32.mrb[0].mxu0
    %v871 = vadd.f32 %v598, %v870
    %v872 = vpop.f32.mrb[0].mxu0
    %v873 = vadd.f32 %v598, %v872
    %874 = vmatprep.mubr.f32.mxu0 0.0
    %875 = vmatmul.mubr.f32.gmra.mrb[0].mxu0 %v628
    %v876 = vpop.f32.mrb[0].mxu0
    %v877 = vadd.f32 %v603, %v876
    %v878 = vpop.f32.mrb[0].mxu0
    %v879 = vadd.f32 %v603, %v878
    %880 = vdwg.mxu0
    %881 = vmatprep.subr.mxu0 %v530
    %882 = vmatpush1.msra.mxu0 %v529
    %883 = vmatprep.subr.mxu0 %v538
    %884 = vmatpush1.msra.mxu0 %v537
    %885 = vmatprep.subr.mxu0 %v546
    %886 = vmatpush1.msra.mxu0 %v545
    %887 = vmatprep.subr.mxu0 %v647
    %888 = vmatpush1.msra.mxu0 %v644
    %889 = vmatprep.subr.mxu0 0.0
    %890 = vmatpush1.msra.mxu0 0.0
    %891 = vmatprep.subr.mxu0 0.0
    %892 = vmatpush1.msra.mxu0 0.0
    %893 = vmatprep.subr.mxu0 0.0
    %894 = vmatpush1.msra.mxu0 0.0
    %895 = vmatprep.subr.mxu0 0.0
    %896 = vmatpush1.msra.mxu0 0.0
    %897 = vmatprep.subr.mxu0 0.0
    %898 = vmatpush1.msra.mxu0 0.0
    %899 = vmatprep.subr.mxu0 0.0
    %900 = vmatpush1.msra.mxu0 0.0
    %901 = vmatprep.subr.mxu0 0.0
    %902 = vmatpush1.msra.mxu0 0.0
    %903 = vmatprep.subr.mxu0 0.0
    %904 = vmatpush1.msra.mxu0 0.0
    %905 = vmatprep.subr.mxu0 0.0
    %906 = vmatpush1.msra.mxu0 0.0
    %907 = vmatprep.subr.mxu0 0.0
    %908 = vmatpush1.msra.mxu0 0.0
    %909 = vmatprep.subr.mxu0 0.0
    %910 = vmatpush1.msra.mxu0 0.0
    %911 = vmatprep.subr.mxu0 0.0
    %912 = vmatpush1.msra.mxu0 0.0
    %913 = vmatprep.subr.mxu0 0.0
    %914 = vmatpush1.msra.mxu0 0.0
    %915 = vmatprep.subr.mxu0 0.0
    %916 = vmatpush1.msra.mxu0 0.0
    %917 = vmatprep.subr.mxu0 0.0
    %918 = vmatpush1.msra.mxu0 0.0
    %919 = vmatprep.subr.mxu0 0.0
    %920 = vmatpush1.msra.mxu0 0.0
    %921 = vmatprep.subr.mxu0 0.0
    %922 = vmatpush1.msra.mxu0 0.0
    %923 = vmatprep.subr.mxu0 0.0
    %924 = vmatpush1.msra.mxu0 0.0
    %925 = vmatprep.subr.mxu0 0.0
    %926 = vmatpush1.msra.mxu0 0.0
    %927 = vmatprep.subr.mxu0 0.0
    %928 = vmatpush1.msra.mxu0 0.0
    %929 = vmatprep.subr.mxu0 0.0
    %930 = vmatpush1.msra.mxu0 0.0
    %931 = vmatprep.subr.mxu0 0.0
    %932 = vmatpush1.msra.mxu0 0.0
    %933 = vmatprep.subr.mxu0 0.0
    %934 = vmatpush1.msra.mxu0 0.0
    %935 = vmatprep.subr.mxu0 0.0
    %936 = vmatpush1.msra.mxu0 0.0
    %937 = vmatprep.subr.mxu0 0.0
    %938 = vmatpush1.msra.mxu0 0.0
    %939 = vmatprep.subr.mxu0 0.0
    %940 = vmatpush1.msra.mxu0 0.0
    %941 = vmatprep.subr.mxu0 0.0
    %942 = vmatpush1.msra.mxu0 0.0
    %943 = vmatprep.subr.mxu0 0.0
    %944 = vmatpush1.msra.mxu0 0.0
    %945 = vmatprep.mubr.f32.mxu0 0.0
    %946 = vmatmul.mubr.f32.gmra.mrb[0].mxu0 %v607
    %v947 = vpop.f32.mrb[0].mxu0
    %v948 = vadd.f32 %v568, %v947
    %v949 = vpop.f32.mrb[0].mxu0
    %v950 = vadd.f32 %v568, %v949
    %951 = vmatprep.mubr.f32.mxu0 0.0
    %952 = vmatmul.mubr.f32.gmra.mrb[0].mxu0 %v610
    %v953 = vpop.f32.mrb[0].mxu0
    %v954 = vadd.f32 %v573, %v953
    %v955 = vpop.f32.mrb[0].mxu0
    %v956 = vadd.f32 %v573, %v955
    %957 = vmatprep.mubr.f32.mxu0 0.0
    %958 = vmatmul.mubr.f32.gmra.mrb[0].mxu0 %v613
    %v959 = vpop.f32.mrb[0].mxu0
    %v960 = vadd.f32 %v578, %v959
    %v961 = vpop.f32.mrb[0].mxu0
    %v962 = vadd.f32 %v578, %v961
    %963 = vmatprep.mubr.f32.mxu0 0.0
    %964 = vmatmul.mubr.f32.gmra.mrb[0].mxu0 %v616
    %v965 = vpop.f32.mrb[0].mxu0
    %v966 = vadd.f32 %v583, %v965
    %v967 = vpop.f32.mrb[0].mxu0
    %v968 = vadd.f32 %v583, %v967
    %969 = vmatprep.mubr.f32.mxu0 0.0
    %970 = vmatmul.mubr.f32.gmra.mrb[0].mxu0 %v619
    %v971 = vpop.f32.mrb[0].mxu0
    %v972 = vadd.f32 %v588, %v971
    %v973 = vpop.f32.mrb[0].mxu0
    %v974 = vadd.f32 %v588, %v973
    %975 = vmatprep.mubr.f32.mxu0 0.0
    %976 = vmatmul.mubr.f32.gmra.mrb[0].mxu0 %v622
    %v977 = vpop.f32.mrb[0].mxu0
    %v978 = vadd.f32 %v593, %v977
    %v979 = vpop.f32.mrb[0].mxu0
    %v980 = vadd.f32 %v593, %v979
    %981 = vmatprep.mubr.f32.mxu0 0.0
    %982 = vmatmul.mubr.f32.gmra.mrb[0].mxu0 %v625
    %v983 = vpop.f32.mrb[0].mxu0
    %v984 = vadd.f32 %v598, %v983
    %v985 = vpop.f32.mrb[0].mxu0
    %v986 = vadd.f32 %v598, %v985
    %987 = vmatprep.mubr.f32.mxu0 0.0
    %988 = vmatmul.mubr.f32.gmra.mrb[0].mxu0 %v628
    %v989 = vpop.f32.mrb[0].mxu0
    %v990 = vadd.f32 %v603, %v989
    %v991 = vpop.f32.mrb[0].mxu0
    %v992 = vadd.f32 %v603, %v991
    %993 = vdwg.mxu0
    %994 = vmatprep.subr.mxu0 %v532
    %995 = vmatpush1.msra.mxu0 %v531
    %996 = vmatprep.subr.mxu0 %v540
    %997 = vmatpush1.msra.mxu0 %v539
    %998 = vmatprep.subr.mxu0 %v548
    %999 = vmatpush1.msra.mxu0 %v547
    %1000 = vmatprep.subr.mxu0 %v653
    %1001 = vmatpush1.msra.mxu0 %v650
    %1002 = vmatprep.subr.mxu0 0.0
    %1003 = vmatpush1.msra.mxu0 0.0
    %1004 = vmatprep.subr.mxu0 0.0
    %1005 = vmatpush1.msra.mxu0 0.0
    %1006 = vmatprep.subr.mxu0 0.0
    %1007 = vmatpush1.msra.mxu0 0.0
    %1008 = vmatprep.subr.mxu0 0.0
    %1009 = vmatpush1.msra.mxu0 0.0
    %1010 = vmatprep.subr.mxu0 0.0
    %1011 = vmatpush1.msra.mxu0 0.0
    %1012 = vmatprep.subr.mxu0 0.0
    %1013 = vmatpush1.msra.mxu0 0.0
    %1014 = vmatprep.subr.mxu0 0.0
    %1015 = vmatpush1.msra.mxu0 0.0
    %1016 = vmatprep.subr.mxu0 0.0
    %1017 = vmatpush1.msra.mxu0 0.0
    %1018 = vmatprep.subr.mxu0 0.0
    %1019 = vmatpush1.msra.mxu0 0.0
    %1020 = vmatprep.subr.mxu0 0.0
    %1021 = vmatpush1.msra.mxu0 0.0
    %1022 = vmatprep.subr.mxu0 0.0
    %1023 = vmatpush1.msra.mxu0 0.0
    %1024 = vmatprep.subr.mxu0 0.0
    %1025 = vmatpush1.msra.mxu0 0.0
    %1026 = vmatprep.subr.mxu0 0.0
    %1027 = vmatpush1.msra.mxu0 0.0
    %1028 = vmatprep.subr.mxu0 0.0
    %1029 = vmatpush1.msra.mxu0 0.0
    %1030 = vmatprep.subr.mxu0 0.0
    %1031 = vmatpush1.msra.mxu0 0.0
    %1032 = vmatprep.subr.mxu0 0.0
    %1033 = vmatpush1.msra.mxu0 0.0
    %1034 = vmatprep.subr.mxu0 0.0
    %1035 = vmatpush1.msra.mxu0 0.0
    %1036 = vmatprep.subr.mxu0 0.0
    %1037 = vmatpush1.msra.mxu0 0.0
    %1038 = vmatprep.subr.mxu0 0.0
    %1039 = vmatpush1.msra.mxu0 0.0
    %1040 = vmatprep.subr.mxu0 0.0
    %1041 = vmatpush1.msra.mxu0 0.0
    %1042 = vmatprep.subr.mxu0 0.0
    %1043 = vmatpush1.msra.mxu0 0.0
    %1044 = vmatprep.subr.mxu0 0.0
    %1045 = vmatpush1.msra.mxu0 0.0
    %1046 = vmatprep.subr.mxu0 0.0
    %1047 = vmatpush1.msra.mxu0 0.0
    %1048 = vmatprep.subr.mxu0 0.0
    %1049 = vmatpush1.msra.mxu0 0.0
    %1050 = vmatprep.subr.mxu0 0.0
    %1051 = vmatpush1.msra.mxu0 0.0
    %1052 = vmatprep.subr.mxu0 0.0
    %1053 = vmatpush1.msra.mxu0 0.0
    %1054 = vmatprep.subr.mxu0 0.0
    %1055 = vmatpush1.msra.mxu0 0.0
    %1056 = vmatprep.subr.mxu0 0.0
    %1057 = vmatpush1.msra.mxu0 0.0
    %1058 = vmatprep.mubr.f32.mxu0 0.0
    %1059 = vmatmul.mubr.f32.gmra.mrb[0].mxu0 %v607
    %v1060 = vpop.f32.mrb[0].mxu0
    %v1061 = vadd.f32 %v568, %v1060
    %v1062 = vpop.f32.mrb[0].mxu0
    %v1063 = vadd.f32 %v568, %v1062
    %1064 = vmatprep.mubr.f32.mxu0 0.0
    %1065 = vmatmul.mubr.f32.gmra.mrb[0].mxu0 %v610
    %v1066 = vpop.f32.mrb[0].mxu0
    %v1067 = vadd.f32 %v573, %v1066
    %v1068 = vpop.f32.mrb[0].mxu0
    %v1069 = vadd.f32 %v573, %v1068
    %1070 = vmatprep.mubr.f32.mxu0 0.0
    %1071 = vmatmul.mubr.f32.gmra.mrb[0].mxu0 %v613
    %v1072 = vpop.f32.mrb[0].mxu0
    %v1073 = vadd.f32 %v578, %v1072
    %v1074 = vpop.f32.mrb[0].mxu0
    %v1075 = vadd.f32 %v578, %v1074
    %1076 = vmatprep.mubr.f32.mxu0 0.0
    %1077 = vmatmul.mubr.f32.gmra.mrb[0].mxu0 %v616
    %v1078 = vpop.f32.mrb[0].mxu0
    %v1079 = vadd.f32 %v583, %v1078
    %v1080 = vpop.f32.mrb[0].mxu0
    %v1081 = vadd.f32 %v583, %v1080
    %1082 = vmatprep.mubr.f32.mxu0 0.0
    %1083 = vmatmul.mubr.f32.gmra.mrb[0].mxu0 %v619
    %v1084 = vpop.f32.mrb[0].mxu0
    %v1085 = vadd.f32 %v588, %v1084
    %v1086 = vpop.f32.mrb[0].mxu0
    %v1087 = vadd.f32 %v588, %v1086
    %1088 = vmatprep.mubr.f32.mxu0 0.0
    %1089 = vmatmul.mubr.f32.gmra.mrb[0].mxu0 %v622
    %v1090 = vpop.f32.mrb[0].mxu0
    %v1091 = vadd.f32 %v593, %v1090
    %v1092 = vpop.f32.mrb[0].mxu0
    %v1093 = vadd.f32 %v593, %v1092
    %1094 = vmatprep.mubr.f32.mxu0 0.0
    %1095 = vmatmul.mubr.f32.gmra.mrb[0].mxu0 %v625
    %v1096 = vpop.f32.mrb[0].mxu0
    %v1097 = vadd.f32 %v598, %v1096
    %v1098 = vpop.f32.mrb[0].mxu0
    %v1099 = vadd.f32 %v598, %v1098
    %1100 = vmatprep.mubr.f32.mxu0 0.0
    %1101 = vmatmul.mubr.f32.gmra.mrb[0].mxu0 %v628
    %v1102 = vpop.f32.mrb[0].mxu0
    %v1103 = vadd.f32 %v603, %v1102
    %v1104 = vpop.f32.mrb[0].mxu0
    %v1105 = vadd.f32 %v603, %v1104
    %1106 = vdwg.mxu0
    %v1107 = vtanh.pop %v722
    %v1108 = vtanh.pop %v724
    %v1109 = vtanh.pop %v835
    %v1110 = vtanh.pop %v837
    %v1111 = vtanh.pop %v948
    %v1112 = vtanh.pop %v950
    %v1113 = vtanh.pop %v1061
    %v1114 = vtanh.pop %v1063
    %v1115 = vtanh.pop %v728
    %v1116 = vtanh.pop %v730
    %v1117 = vtanh.pop %v841
    %v1118 = vtanh.pop %v843
    %v1119 = vtanh.pop %v954
    %v1120 = vtanh.pop %v956
    %v1121 = vtanh.pop %v1067
    %v1122 = vtanh.pop %v1069
    %v1123 = vtanh.pop %v734
    %v1124 = vtanh.pop %v736
    %v1125 = vtanh.pop %v847
    %v1126 = vtanh.pop %v849
    %v1127 = vtanh.pop %v960
    %v1128 = vtanh.pop %v962
    %v1129 = vtanh.pop %v1073
    %v1130 = vtanh.pop %v1075
    %v1131 = vtanh.pop %v740
    %v1132 = vtanh.pop %v742
    %v1133 = vtanh.pop %v853
    %v1134 = vtanh.pop %v855
    %v1135 = vtanh.pop %v966
    %v1136 = vtanh.pop %v968
    %v1137 = vtanh.pop %v1079
    %v1138 = vtanh.pop %v1081
    %v1139 = vtanh.pop %v746
    %v1140 = vtanh.pop %v748
    %v1141 = vtanh.pop %v859
    %v1142 = vtanh.pop %v861
    %v1143 = vtanh.pop %v972
    %v1144 = vtanh.pop %v974
    %v1145 = vtanh.pop %v1085
    %v1146 = vtanh.pop %v1087
    %v1147 = vtanh.pop %v752
    %v1148 = vtanh.pop %v754
    %v1149 = vtanh.pop %v865
    %v1150 = vtanh.pop %v867
    %v1151 = vtanh.pop %v978
    %v1152 = vtanh.pop %v980
    %v1153 = vtanh.pop %v1091
    %v1154 = vtanh.pop %v1093
    %v1155 = vtanh.pop %v758
    %v1156 = vtanh.pop %v760
    %v1157 = vtanh.pop %v871
    %v1158 = vtanh.pop %v873
    %v1159 = vtanh.pop %v984
    %v1160 = vtanh.pop %v986
    %v1161 = vtanh.pop %v1097
    %v1162 = vtanh.pop %v1099
    %v1163 = vtanh.pop %v764
    %v1164 = vtanh.pop %v766
    %v1165 = vtanh.pop %v877
    %v1166 = vtanh.pop %v879
    %v1167 = vtanh.pop %v990
    %v1168 = vtanh.pop %v992
    %v1169 = vtanh.pop %v1103
    %v1170 = vtanh.pop %v1105
    %v1171 = vld [vmem:[%s7] ss:$2 sm:$0xff]
    %v1173 = vlaneseq
    %v1174 = vshrl.u32 %v1173, 7
    %v1175 = vsub.s32 0, %v1174
    %v1176 = vrot.slane %v1171, %v1175
    %v1177 = vlaneseq
    %v1178 = vshrl.u32 %v1177, 7
    %v1179 = vsub.s32 1, %v1178
    %v1180 = vrot.slane %v1171, %v1179
    %v1181 = vlaneseq
    %v1182 = vshrl.u32 %v1181, 7
    %v1183 = vsub.s32 2, %v1182
    %v1184 = vrot.slane %v1171, %v1183
    %v1185 = vlaneseq
    %v1186 = vshrl.u32 %v1185, 7
    %v1187 = vsub.s32 3, %v1186
    %v1188 = vrot.slane %v1171, %v1187
    %v1189 = vlaneseq
    %v1190 = vshrl.u32 %v1189, 7
    %v1191 = vsub.s32 4, %v1190
    %v1192 = vrot.slane %v1171, %v1191
    %v1193 = vlaneseq
    %v1194 = vshrl.u32 %v1193, 7
    %v1195 = vsub.s32 5, %v1194
    %v1196 = vrot.slane %v1171, %v1195
    %v1197 = vlaneseq
    %v1198 = vshrl.u32 %v1197, 7
    %v1199 = vsub.s32 6, %v1198
    %v1200 = vrot.slane %v1171, %v1199
    %v1201 = vlaneseq
    %v1202 = vshrl.u32 %v1201, 7
    %v1203 = vsub.s32 7, %v1202
    %v1204 = vrot.slane %v1171, %v1203
    %v1213 = vmul.f32 %v1107, %v1176
    %v1214 = vmul.f32 %v1108, %v1180
    %v1215 = vmul.f32 %v1109, %v1184
    %v1216 = vmul.f32 %v1110, %v1188
    %v1217 = vmul.f32 %v1111, %v1192
    %v1218 = vmul.f32 %v1112, %v1196
    %v1219 = vmul.f32 %v1113, %v1200
    %v1220 = vmul.f32 %v1114, %v1204
    %v1221 = vmul.f32 %v1115, %v1176
    %v1222 = vmul.f32 %v1116, %v1180
    %v1223 = vmul.f32 %v1117, %v1184
    %v1224 = vmul.f32 %v1118, %v1188
    %v1225 = vmul.f32 %v1119, %v1192
    %v1226 = vmul.f32 %v1120, %v1196
    %v1227 = vmul.f32 %v1121, %v1200
    %v1228 = vmul.f32 %v1122, %v1204
    %v1229 = vmul.f32 %v1123, %v1176
    %v1230 = vmul.f32 %v1124, %v1180
    %v1231 = vmul.f32 %v1125, %v1184
    %v1232 = vmul.f32 %v1126, %v1188
    %v1233 = vmul.f32 %v1127, %v1192
    %v1234 = vmul.f32 %v1128, %v1196
    %v1235 = vmul.f32 %v1129, %v1200
    %v1236 = vmul.f32 %v1130, %v1204
    %v1237 = vmul.f32 %v1131, %v1176
    %v1238 = vmul.f32 %v1132, %v1180
    %v1239 = vmul.f32 %v1133, %v1184
    %v1240 = vmul.f32 %v1134, %v1188
    %v1241 = vmul.f32 %v1135, %v1192
    %v1242 = vmul.f32 %v1136, %v1196
    %v1243 = vmul.f32 %v1137, %v1200
    %v1244 = vmul.f32 %v1138, %v1204
    %v1245 = vmul.f32 %v1139, %v1176
    %v1246 = vmul.f32 %v1140, %v1180
    %v1247 = vmul.f32 %v1141, %v1184
    %v1248 = vmul.f32 %v1142, %v1188
    %v1249 = vmul.f32 %v1143, %v1192
    %v1250 = vmul.f32 %v1144, %v1196
    %v1251 = vmul.f32 %v1145, %v1200
    %v1252 = vmul.f32 %v1146, %v1204
    %v1253 = vmul.f32 %v1147, %v1176
    %v1254 = vmul.f32 %v1148, %v1180
    %v1255 = vmul.f32 %v1149, %v1184
    %v1256 = vmul.f32 %v1150, %v1188
    %v1257 = vmul.f32 %v1151, %v1192
    %v1258 = vmul.f32 %v1152, %v1196
    %v1259 = vmul.f32 %v1153, %v1200
    %v1260 = vmul.f32 %v1154, %v1204
    %v1261 = vmul.f32 %v1155, %v1176
    %v1262 = vmul.f32 %v1156, %v1180
    %v1263 = vmul.f32 %v1157, %v1184
    %v1264 = vmul.f32 %v1158, %v1188
    %v1265 = vmul.f32 %v1159, %v1192
    %v1266 = vmul.f32 %v1160, %v1196
    %v1267 = vmul.f32 %v1161, %v1200
    %v1268 = vmul.f32 %v1162, %v1204
    %v1269 = vmul.f32 %v1163, %v1176
    %v1270 = vmul.f32 %v1164, %v1180
    %v1271 = vmul.f32 %v1165, %v1184
    %v1272 = vmul.f32 %v1166, %v1188
    %v1273 = vmul.f32 %v1167, %v1192
    %v1274 = vmul.f32 %v1168, %v1196
    %v1275 = vmul.f32 %v1169, %v1200
    %v1276 = vmul.f32 %v1170, %v1204
    %1277 = vst [vmem:[#allocation2] sm:$0xff] %v1213
    %1278 = vst [vmem:[#allocation2 + $0x8] sm:$0xff] %v1214
    %1279 = vst [vmem:[#allocation2 + $0x10] sm:$0xff] %v1215
    %1280 = vst [vmem:[#allocation2 + $0x18] sm:$0xff] %v1216
    %1281 = vst [vmem:[#allocation2 + $0x20] sm:$0xff] %v1217
    %1282 = vst [vmem:[#allocation2 + $0x28] sm:$0xff] %v1218
    %1283 = vst [vmem:[#allocation2 + $0x30] sm:$0xff] %v1219
    %1284 = vst [vmem:[#allocation2 + $0x38] sm:$0xff] %v1220
    %1285 = vst [vmem:[#allocation2 + $0x48] sm:$0xff] %v1221
    %1286 = vst [vmem:[#allocation2 + $0x50] sm:$0xff] %v1222
    %1287 = vst [vmem:[#allocation2 + $0x58] sm:$0xff] %v1223
    %1288 = vst [vmem:[#allocation2 + $0x60] sm:$0xff] %v1224
    %1289 = vst [vmem:[#allocation2 + $0x68] sm:$0xff] %v1225
    %1290 = vst [vmem:[#allocation2 + $0x70] sm:$0xff] %v1226
    %1291 = vst [vmem:[#allocation2 + $0x78] sm:$0xff] %v1227
    %1292 = vst [vmem:[#allocation2 + $0x80] sm:$0xff] %v1228
    %1293 = vst [vmem:[#allocation2 + $0x90] sm:$0xff] %v1229
    %1294 = vst [vmem:[#allocation2 + $0x98] sm:$0xff] %v1230
    %1295 = vst [vmem:[#allocation2 + $0xa0] sm:$0xff] %v1231
    %1296 = vst [vmem:[#allocation2 + $0xa8] sm:$0xff] %v1232
    %1297 = vst [vmem:[#allocation2 + $0xb0] sm:$0xff] %v1233
    %1298 = vst [vmem:[#allocation2 + $0xb8] sm:$0xff] %v1234
    %1299 = vst [vmem:[#allocation2 + $0xc0] sm:$0xff] %v1235
    %1300 = vst [vmem:[#allocation2 + $0xc8] sm:$0xff] %v1236
    %1301 = vst [vmem:[#allocation2 + $0xd8] sm:$0xff] %v1237
    %1302 = vst [vmem:[#allocation2 + $0xe0] sm:$0xff] %v1238
    %1303 = vst [vmem:[#allocation2 + $0xe8] sm:$0xff] %v1239
    %1304 = vst [vmem:[#allocation2 + $0xf0] sm:$0xff] %v1240
    %1305 = vst [vmem:[#allocation2 + $0xf8] sm:$0xff] %v1241
    %1306 = vst [vmem:[#allocation2 + $0x100] sm:$0xff] %v1242
    %1307 = vst [vmem:[#allocation2 + $0x108] sm:$0xff] %v1243
    %1308 = vst [vmem:[#allocation2 + $0x110] sm:$0xff] %v1244
    %1309 = vst [vmem:[#allocation2 + $0x120] sm:$0xff] %v1245
    %1310 = vst [vmem:[#allocation2 + $0x128] sm:$0xff] %v1246
    %1311 = vst [vmem:[#allocation2 + $0x130] sm:$0xff] %v1247
    %1312 = vst [vmem:[#allocation2 + $0x138] sm:$0xff] %v1248
    %1313 = vst [vmem:[#allocation2 + $0x140] sm:$0xff] %v1249
    %1314 = vst [vmem:[#allocation2 + $0x148] sm:$0xff] %v1250
    %1315 = vst [vmem:[#allocation2 + $0x150] sm:$0xff] %v1251
    %1316 = vst [vmem:[#allocation2 + $0x158] sm:$0xff] %v1252
    %1317 = vst [vmem:[#allocation2 + $0x168] sm:$0xff] %v1253
    %1318 = vst [vmem:[#allocation2 + $0x170] sm:$0xff] %v1254
    %1319 = vst [vmem:[#allocation2 + $0x178] sm:$0xff] %v1255
    %1320 = vst [vmem:[#allocation2 + $0x180] sm:$0xff] %v1256
    %1321 = vst [vmem:[#allocation2 + $0x188] sm:$0xff] %v1257
    %1322 = vst [vmem:[#allocation2 + $0x190] sm:$0xff] %v1258
    %1323 = vst [vmem:[#allocation2 + $0x198] sm:$0xff] %v1259
    %1324 = vst [vmem:[#allocation2 + $0x1a0] sm:$0xff] %v1260
    %1325 = vst [vmem:[#allocation2 + $0x1b0] sm:$0xff] %v1261
    %1326 = vst [vmem:[#allocation2 + $0x1b8] sm:$0xff] %v1262
    %1327 = vst [vmem:[#allocation2 + $0x1c0] sm:$0xff] %v1263
    %1328 = vst [vmem:[#allocation2 + $0x1c8] sm:$0xff] %v1264
    %1329 = vst [vmem:[#allocation2 + $0x1d0] sm:$0xff] %v1265
    %1330 = vst [vmem:[#allocation2 + $0x1d8] sm:$0xff] %v1266
    %1331 = vst [vmem:[#allocation2 + $0x1e0] sm:$0xff] %v1267
    %1332 = vst [vmem:[#allocation2 + $0x1e8] sm:$0xff] %v1268
    %1333 = vst [vmem:[#allocation2 + $0x1f8] sm:$0xff] %v1269
    %1334 = vst [vmem:[#allocation2 + $0x200] sm:$0xff] %v1270
    %1335 = vst [vmem:[#allocation2 + $0x208] sm:$0xff] %v1271
    %1336 = vst [vmem:[#allocation2 + $0x210] sm:$0xff] %v1272
    %1337 = vst [vmem:[#allocation2 + $0x218] sm:$0xff] %v1273
    %1338 = vst [vmem:[#allocation2 + $0x220] sm:$0xff] %v1274
    %1339 = vst [vmem:[#allocation2 + $0x228] sm:$0xff] %v1275
    %1340 = vst [vmem:[#allocation2 + $0x230] sm:$0xff] %v1276
    %v1341 = vld [vmem:[#allocation4] sm:$0xff]
    %v1342 = vld [vmem:[#allocation4 + $0x8] sm:$0xff]
    %v1343 = vld [vmem:[#allocation4 + $0x10] sm:$0xff]
    %v1344 = vld [vmem:[#allocation4 + $0x18] sm:$0xff]
    %v1345 = vld [vmem:[#allocation2] sm:$0xff]
    %v1346 = vld [vmem:[#allocation2 + $0x8] sm:$0xff]
    %v1347 = vld [vmem:[#allocation2 + $0x10] sm:$0xff]
    %v1348 = vld [vmem:[#allocation2 + $0x18] sm:$0xff]
    %v1349 = vld [vmem:[#allocation2 + $0x20] sm:$0xff]
    %v1350 = vld [vmem:[#allocation2 + $0x28] sm:$0xff]
    %v1351 = vld [vmem:[#allocation2 + $0x30] sm:$0xff]
    %v1352 = vld [vmem:[#allocation2 + $0x38] sm:$0xff]
    %v1353 = vld [vmem:[#allocation2 + $0x48] sm:$0xff]
    %v1354 = vld [vmem:[#allocation2 + $0x50] sm:$0xff]
    %v1355 = vld [vmem:[#allocation2 + $0x58] sm:$0xff]
    %v1356 = vld [vmem:[#allocation2 + $0x60] sm:$0xff]
    %v1357 = vld [vmem:[#allocation2 + $0x68] sm:$0xff]
    %v1358 = vld [vmem:[#allocation2 + $0x70] sm:$0xff]
    %v1359 = vld [vmem:[#allocation2 + $0x78] sm:$0xff]
    %v1360 = vld [vmem:[#allocation2 + $0x80] sm:$0xff]
    %v1361 = vld [vmem:[#allocation2 + $0x90] sm:$0xff]
    %v1362 = vld [vmem:[#allocation2 + $0x98] sm:$0xff]
    %v1363 = vld [vmem:[#allocation2 + $0xa0] sm:$0xff]
    %v1364 = vld [vmem:[#allocation2 + $0xa8] sm:$0xff]
    %v1365 = vld [vmem:[#allocation2 + $0xb0] sm:$0xff]
    %v1366 = vld [vmem:[#allocation2 + $0xb8] sm:$0xff]
    %v1367 = vld [vmem:[#allocation2 + $0xc0] sm:$0xff]
    %v1368 = vld [vmem:[#allocation2 + $0xc8] sm:$0xff]
    %v1369 = vld [vmem:[#allocation2 + $0xd8] sm:$0xff]
    %v1370 = vld [vmem:[#allocation2 + $0xe0] sm:$0xff]
    %v1371 = vld [vmem:[#allocation2 + $0xe8] sm:$0xff]
    %v1372 = vld [vmem:[#allocation2 + $0xf0] sm:$0xff]
    %v1373 = vld [vmem:[#allocation2 + $0xf8] sm:$0xff]
    %v1374 = vld [vmem:[#allocation2 + $0x100] sm:$0xff]
    %v1375 = vld [vmem:[#allocation2 + $0x108] sm:$0xff]
    %v1376 = vld [vmem:[#allocation2 + $0x110] sm:$0xff]
    %v1377 = vld [vmem:[#allocation2 + $0x120] sm:$0xff]
    %v1378 = vld [vmem:[#allocation2 + $0x128] sm:$0xff]
    %v1379 = vld [vmem:[#allocation2 + $0x130] sm:$0xff]
    %v1380 = vld [vmem:[#allocation2 + $0x138] sm:$0xff]
    %v1381 = vld [vmem:[#allocation2 + $0x140] sm:$0xff]
    %v1382 = vld [vmem:[#allocation2 + $0x148] sm:$0xff]
    %v1383 = vld [vmem:[#allocation2 + $0x150] sm:$0xff]
    %v1384 = vld [vmem:[#allocation2 + $0x158] sm:$0xff]
    %v1385 = vld [vmem:[#allocation2 + $0x168] sm:$0xff]
    %v1386 = vld [vmem:[#allocation2 + $0x170] sm:$0xff]
    %v1387 = vld [vmem:[#allocation2 + $0x178] sm:$0xff]
    %v1388 = vld [vmem:[#allocation2 + $0x180] sm:$0xff]
    %v1389 = vld [vmem:[#allocation2 + $0x188] sm:$0xff]
    %v1390 = vld [vmem:[#allocation2 + $0x190] sm:$0xff]
    %v1391 = vld [vmem:[#allocation2 + $0x198] sm:$0xff]
    %v1392 = vld [vmem:[#allocation2 + $0x1a0] sm:$0xff]
    %v1393 = vld [vmem:[#allocation2 + $0x1b0] sm:$0xff]
    %v1394 = vld [vmem:[#allocation2 + $0x1b8] sm:$0xff]
    %v1395 = vld [vmem:[#allocation2 + $0x1c0] sm:$0xff]
    %v1396 = vld [vmem:[#allocation2 + $0x1c8] sm:$0xff]
    %v1397 = vld [vmem:[#allocation2 + $0x1d0] sm:$0xff]
    %v1398 = vld [vmem:[#allocation2 + $0x1d8] sm:$0xff]
    %v1399 = vld [vmem:[#allocation2 + $0x1e0] sm:$0xff]
    %v1400 = vld [vmem:[#allocation2 + $0x1e8] sm:$0xff]
    %v1401 = vld [vmem:[#allocation2 + $0x1f8] sm:$0xff]
    %v1402 = vld [vmem:[#allocation2 + $0x200] sm:$0xff]
    %v1403 = vld [vmem:[#allocation2 + $0x208] sm:$0xff]
    %v1404 = vld [vmem:[#allocation2 + $0x210] sm:$0xff]
    %v1405 = vld [vmem:[#allocation2 + $0x218] sm:$0xff]
    %v1406 = vld [vmem:[#allocation2 + $0x220] sm:$0xff]
    %v1407 = vld [vmem:[#allocation2 + $0x228] sm:$0xff]
    %v1408 = vld [vmem:[#allocation2 + $0x230] sm:$0xff]
    %s1409 = scalar_lea.vmem [#allocation4], 32
    %v1410 = vld [vmem:[%s1409] sm:$0xff]
    %v1411 = vld [vmem:[%s1409 + $0x8] sm:$0xff]
    %v1412 = vld [vmem:[%s1409 + $0x10] sm:$0xff]
    %v1413 = vld [vmem:[%s1409 + $0x18] sm:$0xff]
    %v1414 = vld [vmem:[#allocation2] sm:$0xff]
    %v1415 = vld [vmem:[#allocation2 + $0x8] sm:$0xff]
    %v1416 = vld [vmem:[#allocation2 + $0x10] sm:$0xff]
    %v1417 = vld [vmem:[#allocation2 + $0x18] sm:$0xff]
    %v1418 = vld [vmem:[#allocation2 + $0x20] sm:$0xff]
    %v1419 = vld [vmem:[#allocation2 + $0x28] sm:$0xff]
    %v1420 = vld [vmem:[#allocation2 + $0x30] sm:$0xff]
    %v1421 = vld [vmem:[#allocation2 + $0x38] sm:$0xff]
    %v1422 = vld [vmem:[#allocation2 + $0x40] sm:$0xff]
    %v1423 = vld [vmem:[#allocation2 + $0x48] sm:$0xff]
    %v1424 = vld [vmem:[#allocation2 + $0x50] sm:$0xff]
    %v1425 = vld [vmem:[#allocation2 + $0x58] sm:$0xff]
    %v1426 = vld [vmem:[#allocation2 + $0x60] sm:$0xff]
    %v1427 = vld [vmem:[#allocation2 + $0x68] sm:$0xff]
    %v1428 = vld [vmem:[#allocation2 + $0x70] sm:$0xff]
    %v1429 = vld [vmem:[#allocation2 + $0x78] sm:$0xff]
    %v1430 = vld [vmem:[#allocation2 + $0x80] sm:$0xff]
    %v1431 = vld [vmem:[#allocation2 + $0x88] sm:$0xff]
    %v1432 = vld [vmem:[#allocation2 + $0x90] sm:$0xff]
    %v1433 = vld [vmem:[#allocation2 + $0x98] sm:$0xff]
    %v1434 = vld [vmem:[#allocation2 + $0xa0] sm:$0xff]
    %v1435 = vld [vmem:[#allocation2 + $0xa8] sm:$0xff]
    %v1436 = vld [vmem:[#allocation2 + $0xb0] sm:$0xff]
    %v1437 = vld [vmem:[#allocation2 + $0xb8] sm:$0xff]
    %v1438 = vld [vmem:[#allocation2 + $0xc0] sm:$0xff]
    %v1439 = vld [vmem:[#allocation2 + $0xc8] sm:$0xff]
    %v1440 = vld [vmem:[#allocation2 + $0xd0] sm:$0xff]
    %v1441 = vld [vmem:[#allocation2 + $0xd8] sm:$0xff]
    %v1442 = vld [vmem:[#allocation2 + $0xe0] sm:$0xff]
    %v1443 = vld [vmem:[#allocation2 + $0xe8] sm:$0xff]
    %v1444 = vld [vmem:[#allocation2 + $0xf0] sm:$0xff]
    %v1445 = vld [vmem:[#allocation2 + $0xf8] sm:$0xff]
    %v1446 = vld [vmem:[#allocation2 + $0x100] sm:$0xff]
    %v1447 = vld [vmem:[#allocation2 + $0x108] sm:$0xff]
    %v1448 = vld [vmem:[#allocation2 + $0x110] sm:$0xff]
    %v1449 = vld [vmem:[#allocation2 + $0x118] sm:$0xff]
    %v1450 = vld [vmem:[#allocation2 + $0x120] sm:$0xff]
    %v1451 = vld [vmem:[#allocation2 + $0x128] sm:$0xff]
    %v1452 = vld [vmem:[#allocation2 + $0x130] sm:$0xff]
    %v1453 = vld [vmem:[#allocation2 + $0x138] sm:$0xff]
    %v1454 = vld [vmem:[#allocation2 + $0x140] sm:$0xff]
    %v1455 = vld [vmem:[#allocation2 + $0x148] sm:$0xff]
    %v1456 = vld [vmem:[#allocation2 + $0x150] sm:$0xff]
    %v1457 = vld [vmem:[#allocation2 + $0x158] sm:$0xff]
    %v1458 = vld [vmem:[#allocation2 + $0x160] sm:$0xff]
    %v1459 = vld [vmem:[#allocation2 + $0x168] sm:$0xff]
    %v1460 = vld [vmem:[#allocation2 + $0x170] sm:$0xff]
    %v1461 = vld [vmem:[#allocation2 + $0x178] sm:$0xff]
    %v1462 = vld [vmem:[#allocation2 + $0x180] sm:$0xff]
    %v1463 = vld [vmem:[#allocation2 + $0x188] sm:$0xff]
    %v1464 = vld [vmem:[#allocation2 + $0x190] sm:$0xff]
    %v1465 = vld [vmem:[#allocation2 + $0x198] sm:$0xff]
    %v1466 = vld [vmem:[#allocation2 + $0x1a0] sm:$0xff]
    %v1467 = vld [vmem:[#allocation2 + $0x1a8] sm:$0xff]
    %v1468 = vld [vmem:[#allocation2 + $0x1b0] sm:$0xff]
    %v1469 = vld [vmem:[#allocation2 + $0x1b8] sm:$0xff]
    %v1470 = vld [vmem:[#allocation2 + $0x1c0] sm:$0xff]
    %v1471 = vld [vmem:[#allocation2 + $0x1c8] sm:$0xff]
    %v1472 = vld [vmem:[#allocation2 + $0x1d0] sm:$0xff]
    %v1473 = vld [vmem:[#allocation2 + $0x1d8] sm:$0xff]
    %v1474 = vld [vmem:[#allocation2 + $0x1e0] sm:$0xff]
    %v1475 = vld [vmem:[#allocation2 + $0x1e8] sm:$0xff]
    %v1476 = vld [vmem:[#allocation2 + $0x1f0] sm:$0xff]
    %v1477 = vld [vmem:[#allocation2 + $0x1f8] sm:$0xff]
    %v1478 = vld [vmem:[#allocation2 + $0x200] sm:$0xff]
    %v1479 = vld [vmem:[#allocation2 + $0x208] sm:$0xff]
    %v1480 = vld [vmem:[#allocation2 + $0x210] sm:$0xff]
    %v1481 = vld [vmem:[#allocation2 + $0x218] sm:$0xff]
    %v1482 = vld [vmem:[#allocation2 + $0x220] sm:$0xff]
    %v1483 = vld [vmem:[#allocation2 + $0x228] sm:$0xff]
    %v1484 = vld [vmem:[#allocation2 + $0x230] sm:$0xff]
    %v1485 = vld [vmem:[#allocation2 + $0x238] sm:$0xff]
    %1558 = vrot.lane.b32.xlu0 %v1414, 127
    %v1559 = vpop.permute.xlu0 %1558
    %1560 = vrot.lane.b32.xlu0 %v1415, 127
    %v1561 = vpop.permute.xlu0 %1560
    %1562 = vrot.lane.b32.xlu0 %v1416, 127
    %v1563 = vpop.permute.xlu0 %1562
    %1564 = vrot.lane.b32.xlu0 %v1417, 127
    %v1565 = vpop.permute.xlu0 %1564
    %1566 = vrot.lane.b32.xlu0 %v1418, 127
    %v1567 = vpop.permute.xlu0 %1566
    %1568 = vrot.lane.b32.xlu0 %v1419, 127
    %v1569 = vpop.permute.xlu0 %1568
    %1570 = vrot.lane.b32.xlu0 %v1420, 127
    %v1571 = vpop.permute.xlu0 %1570
    %1572 = vrot.lane.b32.xlu0 %v1421, 127
    %v1573 = vpop.permute.xlu0 %1572
    %1574 = vrot.lane.b32.xlu0 %v1422, 127
    %v1575 = vpop.permute.xlu0 %1574
    %1576 = vrot.lane.b32.xlu0 %v1423, 127
    %v1577 = vpop.permute.xlu0 %1576
    %1578 = vrot.lane.b32.xlu0 %v1424, 127
    %v1579 = vpop.permute.xlu0 %1578
    %1580 = vrot.lane.b32.xlu0 %v1425, 127
    %v1581 = vpop.permute.xlu0 %1580
    %1582 = vrot.lane.b32.xlu0 %v1426, 127
    %v1583 = vpop.permute.xlu0 %1582
    %1584 = vrot.lane.b32.xlu0 %v1427, 127
    %v1585 = vpop.permute.xlu0 %1584
    %1586 = vrot.lane.b32.xlu0 %v1428, 127
    %v1587 = vpop.permute.xlu0 %1586
    %1588 = vrot.lane.b32.xlu0 %v1429, 127
    %v1589 = vpop.permute.xlu0 %1588
    %1590 = vrot.lane.b32.xlu0 %v1430, 127
    %v1591 = vpop.permute.xlu0 %1590
    %1592 = vrot.lane.b32.xlu0 %v1431, 127
    %v1593 = vpop.permute.xlu0 %1592
    %1594 = vrot.lane.b32.xlu0 %v1432, 127
    %v1595 = vpop.permute.xlu0 %1594
    %1596 = vrot.lane.b32.xlu0 %v1433, 127
    %v1597 = vpop.permute.xlu0 %1596
    %1598 = vrot.lane.b32.xlu0 %v1434, 127
    %v1599 = vpop.permute.xlu0 %1598
    %1600 = vrot.lane.b32.xlu0 %v1435, 127
    %v1601 = vpop.permute.xlu0 %1600
    %1602 = vrot.lane.b32.xlu0 %v1436, 127
    %v1603 = vpop.permute.xlu0 %1602
    %1604 = vrot.lane.b32.xlu0 %v1437, 127
    %v1605 = vpop.permute.xlu0 %1604
    %1606 = vrot.lane.b32.xlu0 %v1438, 127
    %v1607 = vpop.permute.xlu0 %1606
    %1608 = vrot.lane.b32.xlu0 %v1439, 127
    %v1609 = vpop.permute.xlu0 %1608
    %1610 = vrot.lane.b32.xlu0 %v1440, 127
    %v1611 = vpop.permute.xlu0 %1610
    %1612 = vrot.lane.b32.xlu0 %v1441, 127
    %v1613 = vpop.permute.xlu0 %1612
    %1614 = vrot.lane.b32.xlu0 %v1442, 127
    %v1615 = vpop.permute.xlu0 %1614
    %1616 = vrot.lane.b32.xlu0 %v1443, 127
    %v1617 = vpop.permute.xlu0 %1616
    %1618 = vrot.lane.b32.xlu0 %v1444, 127
    %v1619 = vpop.permute.xlu0 %1618
    %1620 = vrot.lane.b32.xlu0 %v1445, 127
    %v1621 = vpop.permute.xlu0 %1620
    %1622 = vrot.lane.b32.xlu0 %v1446, 127
    %v1623 = vpop.permute.xlu0 %1622
    %1624 = vrot.lane.b32.xlu0 %v1447, 127
    %v1625 = vpop.permute.xlu0 %1624
    %1626 = vrot.lane.b32.xlu0 %v1448, 127
    %v1627 = vpop.permute.xlu0 %1626
    %1628 = vrot.lane.b32.xlu0 %v1449, 127
    %v1629 = vpop.permute.xlu0 %1628
    %1630 = vrot.lane.b32.xlu0 %v1450, 127
    %v1631 = vpop.permute.xlu0 %1630
    %1632 = vrot.lane.b32.xlu0 %v1451, 127
    %v1633 = vpop.permute.xlu0 %1632
    %1634 = vrot.lane.b32.xlu0 %v1452, 127
    %v1635 = vpop.permute.xlu0 %1634
    %1636 = vrot.lane.b32.xlu0 %v1453, 127
    %v1637 = vpop.permute.xlu0 %1636
    %1638 = vrot.lane.b32.xlu0 %v1454, 127
    %v1639 = vpop.permute.xlu0 %1638
    %1640 = vrot.lane.b32.xlu0 %v1455, 127
    %v1641 = vpop.permute.xlu0 %1640
    %1642 = vrot.lane.b32.xlu0 %v1456, 127
    %v1643 = vpop.permute.xlu0 %1642
    %1644 = vrot.lane.b32.xlu0 %v1457, 127
    %v1645 = vpop.permute.xlu0 %1644
    %1646 = vrot.lane.b32.xlu0 %v1458, 127
    %v1647 = vpop.permute.xlu0 %1646
    %1648 = vrot.lane.b32.xlu0 %v1459, 127
    %v1649 = vpop.permute.xlu0 %1648
    %1650 = vrot.lane.b32.xlu0 %v1460, 127
    %v1651 = vpop.permute.xlu0 %1650
    %1652 = vrot.lane.b32.xlu0 %v1461, 127
    %v1653 = vpop.permute.xlu0 %1652
    %1654 = vrot.lane.b32.xlu0 %v1462, 127
    %v1655 = vpop.permute.xlu0 %1654
    %1656 = vrot.lane.b32.xlu0 %v1463, 127
    %v1657 = vpop.permute.xlu0 %1656
    %1658 = vrot.lane.b32.xlu0 %v1464, 127
    %v1659 = vpop.permute.xlu0 %1658
    %1660 = vrot.lane.b32.xlu0 %v1465, 127
    %v1661 = vpop.permute.xlu0 %1660
    %1662 = vrot.lane.b32.xlu0 %v1466, 127
    %v1663 = vpop.permute.xlu0 %1662
    %1664 = vrot.lane.b32.xlu0 %v1467, 127
    %v1665 = vpop.permute.xlu0 %1664
    %1666 = vrot.lane.b32.xlu0 %v1468, 127
    %v1667 = vpop.permute.xlu0 %1666
    %1668 = vrot.lane.b32.xlu0 %v1469, 127
    %v1669 = vpop.permute.xlu0 %1668
    %1670 = vrot.lane.b32.xlu0 %v1470, 127
    %v1671 = vpop.permute.xlu0 %1670
    %1672 = vrot.lane.b32.xlu0 %v1471, 127
    %v1673 = vpop.permute.xlu0 %1672
    %1674 = vrot.lane.b32.xlu0 %v1472, 127
    %v1675 = vpop.permute.xlu0 %1674
    %1676 = vrot.lane.b32.xlu0 %v1473, 127
    %v1677 = vpop.permute.xlu0 %1676
    %1678 = vrot.lane.b32.xlu0 %v1474, 127
    %v1679 = vpop.permute.xlu0 %1678
    %1680 = vrot.lane.b32.xlu0 %v1475, 127
    %v1681 = vpop.permute.xlu0 %1680
    %1682 = vrot.lane.b32.xlu0 %v1476, 127
    %v1683 = vpop.permute.xlu0 %1682
    %1684 = vrot.lane.b32.xlu0 %v1477, 127
    %v1685 = vpop.permute.xlu0 %1684
    %1686 = vrot.lane.b32.xlu0 %v1478, 127
    %v1687 = vpop.permute.xlu0 %1686
    %1688 = vrot.lane.b32.xlu0 %v1479, 127
    %v1689 = vpop.permute.xlu0 %1688
    %1690 = vrot.lane.b32.xlu0 %v1480, 127
    %v1691 = vpop.permute.xlu0 %1690
    %1692 = vrot.lane.b32.xlu0 %v1481, 127
    %v1693 = vpop.permute.xlu0 %1692
    %1694 = vrot.lane.b32.xlu0 %v1482, 127
    %v1695 = vpop.permute.xlu0 %1694
    %1696 = vrot.lane.b32.xlu0 %v1483, 127
    %v1697 = vpop.permute.xlu0 %1696
    %1698 = vrot.lane.b32.xlu0 %v1484, 127
    %v1699 = vpop.permute.xlu0 %1698
    %1700 = vrot.lane.b32.xlu0 %v1485, 127
    %v1701 = vpop.permute.xlu0 %1700
    %v1702 = vsel %vm74, %v1559, %v1561
    %v1703 = vsel %vm74, %v1561, %v1563
    %v1704 = vsel %vm74, %v1563, %v1565
    %v1705 = vsel %vm74, %v1565, %v1567
    %v1706 = vsel %vm74, %v1567, %v1569
    %v1707 = vsel %vm74, %v1569, %v1571
    %v1708 = vsel %vm74, %v1571, %v1573
    %v1709 = vsel %vm74, %v1573, %v1575
    %v1710 = vsel %vm74, %v1577, %v1579
    %v1711 = vsel %vm74, %v1579, %v1581
    %v1712 = vsel %vm74, %v1581, %v1583
    %v1713 = vsel %vm74, %v1583, %v1585
    %v1714 = vsel %vm74, %v1585, %v1587
    %v1715 = vsel %vm74, %v1587, %v1589
    %v1716 = vsel %vm74, %v1589, %v1591
    %v1717 = vsel %vm74, %v1591, %v1593
    %v1718 = vsel %vm74, %v1595, %v1597
    %v1719 = vsel %vm74, %v1597, %v1599
    %v1720 = vsel %vm74, %v1599, %v1601
    %v1721 = vsel %vm74, %v1601, %v1603
    %v1722 = vsel %vm74, %v1603, %v1605
    %v1723 = vsel %vm74, %v1605, %v1607
    %v1724 = vsel %vm74, %v1607, %v1609
    %v1725 = vsel %vm74, %v1609, %v1611
    %v1726 = vsel %vm74, %v1613, %v1615
    %v1727 = vsel %vm74, %v1615, %v1617
    %v1728 = vsel %vm74, %v1617, %v1619
    %v1729 = vsel %vm74, %v1619, %v1621
    %v1730 = vsel %vm74, %v1621, %v1623
    %v1731 = vsel %vm74, %v1623, %v1625
    %v1732 = vsel %vm74, %v1625, %v1627
    %v1733 = vsel %vm74, %v1627, %v1629
    %v1734 = vsel %vm74, %v1631, %v1633
    %v1735 = vsel %vm74, %v1633, %v1635
    %v1736 = vsel %vm74, %v1635, %v1637
    %v1737 = vsel %vm74, %v1637, %v1639
    %v1738 = vsel %vm74, %v1639, %v1641
    %v1739 = vsel %vm74, %v1641, %v1643
    %v1740 = vsel %vm74, %v1643, %v1645
    %v1741 = vsel %vm74, %v1645, %v1647
    %v1742 = vsel %vm74, %v1649, %v1651
    %v1743 = vsel %vm74, %v1651, %v1653
    %v1744 = vsel %vm74, %v1653, %v1655
    %v1745 = vsel %vm74, %v1655, %v1657
    %v1746 = vsel %vm74, %v1657, %v1659
    %v1747 = vsel %vm74, %v1659, %v1661
    %v1748 = vsel %vm74, %v1661, %v1663
    %v1749 = vsel %vm74, %v1663, %v1665
    %v1750 = vsel %vm74, %v1667, %v1669
    %v1751 = vsel %vm74, %v1669, %v1671
    %v1752 = vsel %vm74, %v1671, %v1673
    %v1753 = vsel %vm74, %v1673, %v1675
    %v1754 = vsel %vm74, %v1675, %v1677
    %v1755 = vsel %vm74, %v1677, %v1679
    %v1756 = vsel %vm74, %v1679, %v1681
    %v1757 = vsel %vm74, %v1681, %v1683
    %v1758 = vsel %vm74, %v1685, %v1687
    %v1759 = vsel %vm74, %v1687, %v1689
    %v1760 = vsel %vm74, %v1689, %v1691
    %v1761 = vsel %vm74, %v1691, %v1693
    %v1762 = vsel %vm74, %v1693, %v1695
    %v1763 = vsel %vm74, %v1695, %v1697
    %v1764 = vsel %vm74, %v1697, %v1699
    %v1765 = vsel %vm74, %v1699, %v1701
    %vm1830 = vcmask 523264
    %v1832 = vsel %vm1830, %v1410, 0
    %v1835 = vsel %vm1830, %v1411, 0
    %v1838 = vsel %vm1830, %v1412, 0
    %v1841 = vsel %vm1830, %v1413, 0
    %1843 = vmatprep.subr.mxu0 %v1703
    %1844 = vmatpush1.msra.mxu0 %v1702
    %1845 = vmatprep.subr.mxu0 %v1711
    %1846 = vmatpush1.msra.mxu0 %v1710
    %1847 = vmatprep.subr.mxu0 %v1719
    %1848 = vmatpush1.msra.mxu0 %v1718
    %1849 = vmatprep.subr.mxu0 %v1727
    %1850 = vmatpush1.msra.mxu0 %v1726
    %1851 = vmatprep.subr.mxu0 %v1735
    %1852 = vmatpush1.msra.mxu0 %v1734
    %1853 = vmatprep.subr.mxu0 %v1743
    %1854 = vmatpush1.msra.mxu0 %v1742
    %1855 = vmatprep.subr.mxu0 %v1751
    %1856 = vmatpush1.msra.mxu0 %v1750
    %1857 = vmatprep.subr.mxu0 %v1759
    %1858 = vmatpush1.msra.mxu0 %v1758
    %1859 = vmatprep.subr.mxu0 0.0
    %1860 = vmatpush1.msra.mxu0 0.0
    %1861 = vmatprep.subr.mxu0 0.0
    %1862 = vmatpush1.msra.mxu0 0.0
    %1863 = vmatprep.subr.mxu0 0.0
    %1864 = vmatpush1.msra.mxu0 0.0
    %1865 = vmatprep.subr.mxu0 0.0
    %1866 = vmatpush1.msra.mxu0 0.0
    %1867 = vmatprep.subr.mxu0 0.0
    %1868 = vmatpush1.msra.mxu0 0.0
    %1869 = vmatprep.subr.mxu0 0.0
    %1870 = vmatpush1.msra.mxu0 0.0
    %1871 = vmatprep.subr.mxu0 0.0
    %1872 = vmatpush1.msra.mxu0 0.0
    %1873 = vmatprep.subr.mxu0 0.0
    %1874 = vmatpush1.msra.mxu0 0.0
    %1875 = vmatprep.subr.mxu0 0.0
    %1876 = vmatpush1.msra.mxu0 0.0
    %1877 = vmatprep.subr.mxu0 0.0
    %1878 = vmatpush1.msra.mxu0 0.0
    %1879 = vmatprep.subr.mxu0 0.0
    %1880 = vmatpush1.msra.mxu0 0.0
    %1881 = vmatprep.subr.mxu0 0.0
    %1882 = vmatpush1.msra.mxu0 0.0
    %1883 = vmatprep.subr.mxu0 0.0
    %1884 = vmatpush1.msra.mxu0 0.0
    %1885 = vmatprep.subr.mxu0 0.0
    %1886 = vmatpush1.msra.mxu0 0.0
    %1887 = vmatprep.subr.mxu0 0.0
    %1888 = vmatpush1.msra.mxu0 0.0
    %1889 = vmatprep.subr.mxu0 0.0
    %1890 = vmatpush1.msra.mxu0 0.0
    %1891 = vmatprep.subr.mxu0 0.0
    %1892 = vmatpush1.msra.mxu0 0.0
    %1893 = vmatprep.subr.mxu0 0.0
    %1894 = vmatpush1.msra.mxu0 0.0
    %1895 = vmatprep.subr.mxu0 0.0
    %1896 = vmatpush1.msra.mxu0 0.0
    %1897 = vmatprep.subr.mxu0 0.0
    %1898 = vmatpush1.msra.mxu0 0.0
    %1899 = vmatprep.subr.mxu0 0.0
    %1900 = vmatpush1.msra.mxu0 0.0
    %1901 = vmatprep.subr.mxu0 0.0
    %1902 = vmatpush1.msra.mxu0 0.0
    %1903 = vmatprep.subr.mxu0 0.0
    %1904 = vmatpush1.msra.mxu0 0.0
    %1905 = vmatprep.subr.mxu0 0.0
    %1906 = vmatpush1.msra.mxu0 0.0
    %1907 = vmatprep.mubr.f32.mxu0 0.0
    %1908 = vmatmul.mubr.f32.gmra.mrb[0].mxu0 %v1832
    %v1909 = vpop.f32.mrb[0].mxu0
    %v1910 = vadd.f32 0.0, %v1909
    %v1911 = vpop.f32.mrb[0].mxu0
    %v1912 = vadd.f32 0.0, %v1911
    %1913 = vmatprep.mubr.f32.mxu0 0.0
    %1914 = vmatmul.mubr.f32.gmra.mrb[0].mxu0 %v1835
    %v1915 = vpop.f32.mrb[0].mxu0
    %v1916 = vadd.f32 0.0, %v1915
    %v1917 = vpop.f32.mrb[0].mxu0
    %v1918 = vadd.f32 0.0, %v1917
    %1919 = vmatprep.mubr.f32.mxu0 0.0
    %1920 = vmatmul.mubr.f32.gmra.mrb[0].mxu0 %v1838
    %v1921 = vpop.f32.mrb[0].mxu0
    %v1922 = vadd.f32 0.0, %v1921
    %v1923 = vpop.f32.mrb[0].mxu0
    %v1924 = vadd.f32 0.0, %v1923
    %1925 = vmatprep.mubr.f32.mxu0 0.0
    %1926 = vmatmul.mubr.f32.gmra.mrb[0].mxu0 %v1841
    %v1927 = vpop.f32.mrb[0].mxu0
    %v1928 = vadd.f32 0.0, %v1927
    %v1929 = vpop.f32.mrb[0].mxu0
    %v1930 = vadd.f32 0.0, %v1929
    %1931 = vdwg.mxu0
    %1932 = vmatprep.subr.mxu0 %v1705
    %1933 = vmatpush1.msra.mxu0 %v1704
    %1934 = vmatprep.subr.mxu0 %v1713
    %1935 = vmatpush1.msra.mxu0 %v1712
    %1936 = vmatprep.subr.mxu0 %v1721
    %1937 = vmatpush1.msra.mxu0 %v1720
    %1938 = vmatprep.subr.mxu0 %v1729
    %1939 = vmatpush1.msra.mxu0 %v1728
    %1940 = vmatprep.subr.mxu0 %v1737
    %1941 = vmatpush1.msra.mxu0 %v1736
    %1942 = vmatprep.subr.mxu0 %v1745
    %1943 = vmatpush1.msra.mxu0 %v1744
    %1944 = vmatprep.subr.mxu0 %v1753
    %1945 = vmatpush1.msra.mxu0 %v1752
    %1946 = vmatprep.subr.mxu0 %v1761
    %1947 = vmatpush1.msra.mxu0 %v1760
    %1948 = vmatprep.subr.mxu0 0.0
    %1949 = vmatpush1.msra.mxu0 0.0
    %1950 = vmatprep.subr.mxu0 0.0
    %1951 = vmatpush1.msra.mxu0 0.0
    %1952 = vmatprep.subr.mxu0 0.0
    %1953 = vmatpush1.msra.mxu0 0.0
    %1954 = vmatprep.subr.mxu0 0.0
    %1955 = vmatpush1.msra.mxu0 0.0
    %1956 = vmatprep.subr.mxu0 0.0
    %1957 = vmatpush1.msra.mxu0 0.0
    %1958 = vmatprep.subr.mxu0 0.0
    %1959 = vmatpush1.msra.mxu0 0.0
    %1960 = vmatprep.subr.mxu0 0.0
    %1961 = vmatpush1.msra.mxu0 0.0
    %1962 = vmatprep.subr.mxu0 0.0
    %1963 = vmatpush1.msra.mxu0 0.0
    %1964 = vmatprep.subr.mxu0 0.0
    %1965 = vmatpush1.msra.mxu0 0.0
    %1966 = vmatprep.subr.mxu0 0.0
    %1967 = vmatpush1.msra.mxu0 0.0
    %1968 = vmatprep.subr.mxu0 0.0
    %1969 = vmatpush1.msra.mxu0 0.0
    %1970 = vmatprep.subr.mxu0 0.0
    %1971 = vmatpush1.msra.mxu0 0.0
    %1972 = vmatprep.subr.mxu0 0.0
    %1973 = vmatpush1.msra.mxu0 0.0
    %1974 = vmatprep.subr.mxu0 0.0
    %1975 = vmatpush1.msra.mxu0 0.0
    %1976 = vmatprep.subr.mxu0 0.0
    %1977 = vmatpush1.msra.mxu0 0.0
    %1978 = vmatprep.subr.mxu0 0.0
    %1979 = vmatpush1.msra.mxu0 0.0
    %1980 = vmatprep.subr.mxu0 0.0
    %1981 = vmatpush1.msra.mxu0 0.0
    %1982 = vmatprep.subr.mxu0 0.0
    %1983 = vmatpush1.msra.mxu0 0.0
    %1984 = vmatprep.subr.mxu0 0.0
    %1985 = vmatpush1.msra.mxu0 0.0
    %1986 = vmatprep.subr.mxu0 0.0
    %1987 = vmatpush1.msra.mxu0 0.0
    %1988 = vmatprep.subr.mxu0 0.0
    %1989 = vmatpush1.msra.mxu0 0.0
    %1990 = vmatprep.subr.mxu0 0.0
    %1991 = vmatpush1.msra.mxu0 0.0
    %1992 = vmatprep.subr.mxu0 0.0
    %1993 = vmatpush1.msra.mxu0 0.0
    %1994 = vmatprep.subr.mxu0 0.0
    %1995 = vmatpush1.msra.mxu0 0.0
    %1996 = vmatprep.mubr.f32.mxu0 0.0
    %1997 = vmatmul.mubr.f32.gmra.mrb[0].mxu0 %v1832
    %v1998 = vpop.f32.mrb[0].mxu0
    %v1999 = vadd.f32 0.0, %v1998
    %v2000 = vpop.f32.mrb[0].mxu0
    %v2001 = vadd.f32 0.0, %v2000
    %2002 = vmatprep.mubr.f32.mxu0 0.0
    %2003 = vmatmul.mubr.f32.gmra.mrb[0].mxu0 %v1835
    %v2004 = vpop.f32.mrb[0].mxu0
    %v2005 = vadd.f32 0.0, %v2004
    %v2006 = vpop.f32.mrb[0].mxu0
    %v2007 = vadd.f32 0.0, %v2006
    %2008 = vmatprep.mubr.f32.mxu0 0.0
    %2009 = vmatmul.mubr.f32.gmra.mrb[0].mxu0 %v1838
    %v2010 = vpop.f32.mrb[0].mxu0
    %v2011 = vadd.f32 0.0, %v2010
    %v2012 = vpop.f32.mrb[0].mxu0
    %v2013 = vadd.f32 0.0, %v2012
    %2014 = vmatprep.mubr.f32.mxu0 0.0
    %2015 = vmatmul.mubr.f32.gmra.mrb[0].mxu0 %v1841
    %v2016 = vpop.f32.mrb[0].mxu0
    %v2017 = vadd.f32 0.0, %v2016
    %v2018 = vpop.f32.mrb[0].mxu0
    %v2019 = vadd.f32 0.0, %v2018
    %2020 = vdwg.mxu0
    %2021 = vmatprep.subr.mxu0 %v1707
    %2022 = vmatpush1.msra.mxu0 %v1706
    %2023 = vmatprep.subr.mxu0 %v1715
    %2024 = vmatpush1.msra.mxu0 %v1714
    %2025 = vmatprep.subr.mxu0 %v1723
    %2026 = vmatpush1.msra.mxu0 %v1722
    %2027 = vmatprep.subr.mxu0 %v1731
    %2028 = vmatpush1.msra.mxu0 %v1730
    %2029 = vmatprep.subr.mxu0 %v1739
    %2030 = vmatpush1.msra.mxu0 %v1738
    %2031 = vmatprep.subr.mxu0 %v1747
    %2032 = vmatpush1.msra.mxu0 %v1746
    %2033 = vmatprep.subr.mxu0 %v1755
    %2034 = vmatpush1.msra.mxu0 %v1754
    %2035 = vmatprep.subr.mxu0 %v1763
    %2036 = vmatpush1.msra.mxu0 %v1762
    %2037 = vmatprep.subr.mxu0 0.0
    %2038 = vmatpush1.msra.mxu0 0.0
    %2039 = vmatprep.subr.mxu0 0.0
    %2040 = vmatpush1.msra.mxu0 0.0
    %2041 = vmatprep.subr.mxu0 0.0
    %2042 = vmatpush1.msra.mxu0 0.0
    %2043 = vmatprep.subr.mxu0 0.0
    %2044 = vmatpush1.msra.mxu0 0.0
    %2045 = vmatprep.subr.mxu0 0.0
    %2046 = vmatpush1.msra.mxu0 0.0
    %2047 = vmatprep.subr.mxu0 0.0
    %2048 = vmatpush1.msra.mxu0 0.0
    %2049 = vmatprep.subr.mxu0 0.0
    %2050 = vmatpush1.msra.mxu0 0.0
    %2051 = vmatprep.subr.mxu0 0.0
    %2052 = vmatpush1.msra.mxu0 0.0
    %2053 = vmatprep.subr.mxu0 0.0
    %2054 = vmatpush1.msra.mxu0 0.0
    %2055 = vmatprep.subr.mxu0 0.0
    %2056 = vmatpush1.msra.mxu0 0.0
    %2057 = vmatprep.subr.mxu0 0.0
    %2058 = vmatpush1.msra.mxu0 0.0
    %2059 = vmatprep.subr.mxu0 0.0
    %2060 = vmatpush1.msra.mxu0 0.0
    %2061 = vmatprep.subr.mxu0 0.0
    %2062 = vmatpush1.msra.mxu0 0.0
    %2063 = vmatprep.subr.mxu0 0.0
    %2064 = vmatpush1.msra.mxu0 0.0
    %2065 = vmatprep.subr.mxu0 0.0
    %2066 = vmatpush1.msra.mxu0 0.0
    %2067 = vmatprep.subr.mxu0 0.0
    %2068 = vmatpush1.msra.mxu0 0.0
    %2069 = vmatprep.subr.mxu0 0.0
    %2070 = vmatpush1.msra.mxu0 0.0
    %2071 = vmatprep.subr.mxu0 0.0
    %2072 = vmatpush1.msra.mxu0 0.0
    %2073 = vmatprep.subr.mxu0 0.0
    %2074 = vmatpush1.msra.mxu0 0.0
    %2075 = vmatprep.subr.mxu0 0.0
    %2076 = vmatpush1.msra.mxu0 0.0
    %2077 = vmatprep.subr.mxu0 0.0
    %2078 = vmatpush1.msra.mxu0 0.0
    %2079 = vmatprep.subr.mxu0 0.0
    %2080 = vmatpush1.msra.mxu0 0.0
    %2081 = vmatprep.subr.mxu0 0.0
    %2082 = vmatpush1.msra.mxu0 0.0
    %2083 = vmatprep.subr.mxu0 0.0
    %2084 = vmatpush1.msra.mxu0 0.0
    %2085 = vmatprep.mubr.f32.mxu0 0.0
    %2086 = vmatmul.mubr.f32.gmra.mrb[0].mxu0 %v1832
    %v2087 = vpop.f32.mrb[0].mxu0
    %v2088 = vadd.f32 0.0, %v2087
    %v2089 = vpop.f32.mrb[0].mxu0
    %v2090 = vadd.f32 0.0, %v2089
    %2091 = vmatprep.mubr.f32.mxu0 0.0
    %2092 = vmatmul.mubr.f32.gmra.mrb[0].mxu0 %v1835
    %v2093 = vpop.f32.mrb[0].mxu0
    %v2094 = vadd.f32 0.0, %v2093
    %v2095 = vpop.f32.mrb[0].mxu0
    %v2096 = vadd.f32 0.0, %v2095
    %2097 = vmatprep.mubr.f32.mxu0 0.0
    %2098 = vmatmul.mubr.f32.gmra.mrb[0].mxu0 %v1838
    %v2099 = vpop.f32.mrb[0].mxu0
    %v2100 = vadd.f32 0.0, %v2099
    %v2101 = vpop.f32.mrb[0].mxu0
    %v2102 = vadd.f32 0.0, %v2101
    %2103 = vmatprep.mubr.f32.mxu0 0.0
    %2104 = vmatmul.mubr.f32.gmra.mrb[0].mxu0 %v1841
    %v2105 = vpop.f32.mrb[0].mxu0
    %v2106 = vadd.f32 0.0, %v2105
    %v2107 = vpop.f32.mrb[0].mxu0
    %v2108 = vadd.f32 0.0, %v2107
    %2109 = vdwg.mxu0
    %2110 = vmatprep.subr.mxu0 %v1709
    %2111 = vmatpush1.msra.mxu0 %v1708
    %2112 = vmatprep.subr.mxu0 %v1717
    %2113 = vmatpush1.msra.mxu0 %v1716
    %2114 = vmatprep.subr.mxu0 %v1725
    %2115 = vmatpush1.msra.mxu0 %v1724
    %2116 = vmatprep.subr.mxu0 %v1733
    %2117 = vmatpush1.msra.mxu0 %v1732
    %2118 = vmatprep.subr.mxu0 %v1741
    %2119 = vmatpush1.msra.mxu0 %v1740
    %2120 = vmatprep.subr.mxu0 %v1749
    %2121 = vmatpush1.msra.mxu0 %v1748
    %2122 = vmatprep.subr.mxu0 %v1757
    %2123 = vmatpush1.msra.mxu0 %v1756
    %2124 = vmatprep.subr.mxu0 %v1765
    %2125 = vmatpush1.msra.mxu0 %v1764
    %2126 = vmatprep.subr.mxu0 0.0
    %2127 = vmatpush1.msra.mxu0 0.0
    %2128 = vmatprep.subr.mxu0 0.0
    %2129 = vmatpush1.msra.mxu0 0.0
    %2130 = vmatprep.subr.mxu0 0.0
    %2131 = vmatpush1.msra.mxu0 0.0
    %2132 = vmatprep.subr.mxu0 0.0
    %2133 = vmatpush1.msra.mxu0 0.0
    %2134 = vmatprep.subr.mxu0 0.0
    %2135 = vmatpush1.msra.mxu0 0.0
    %2136 = vmatprep.subr.mxu0 0.0
    %2137 = vmatpush1.msra.mxu0 0.0
    %2138 = vmatprep.subr.mxu0 0.0
    %2139 = vmatpush1.msra.mxu0 0.0
    %2140 = vmatprep.subr.mxu0 0.0
    %2141 = vmatpush1.msra.mxu0 0.0
    %2142 = vmatprep.subr.mxu0 0.0
    %2143 = vmatpush1.msra.mxu0 0.0
    %2144 = vmatprep.subr.mxu0 0.0
    %2145 = vmatpush1.msra.mxu0 0.0
    %2146 = vmatprep.subr.mxu0 0.0
    %2147 = vmatpush1.msra.mxu0 0.0
    %2148 = vmatprep.subr.mxu0 0.0
    %2149 = vmatpush1.msra.mxu0 0.0
    %2150 = vmatprep.subr.mxu0 0.0
    %2151 = vmatpush1.msra.mxu0 0.0
    %2152 = vmatprep.subr.mxu0 0.0
    %2153 = vmatpush1.msra.mxu0 0.0
    %2154 = vmatprep.subr.mxu0 0.0
    %2155 = vmatpush1.msra.mxu0 0.0
    %2156 = vmatprep.subr.mxu0 0.0
    %2157 = vmatpush1.msra.mxu0 0.0
    %2158 = vmatprep.subr.mxu0 0.0
    %2159 = vmatpush1.msra.mxu0 0.0
    %2160 = vmatprep.subr.mxu0 0.0
    %2161 = vmatpush1.msra.mxu0 0.0
    %2162 = vmatprep.subr.mxu0 0.0
    %2163 = vmatpush1.msra.mxu0 0.0
    %2164 = vmatprep.subr.mxu0 0.0
    %2165 = vmatpush1.msra.mxu0 0.0
    %2166 = vmatprep.subr.mxu0 0.0
    %2167 = vmatpush1.msra.mxu0 0.0
    %2168 = vmatprep.subr.mxu0 0.0
    %2169 = vmatpush1.msra.mxu0 0.0
    %2170 = vmatprep.subr.mxu0 0.0
    %2171 = vmatpush1.msra.mxu0 0.0
    %2172 = vmatprep.subr.mxu0 0.0
    %2173 = vmatpush1.msra.mxu0 0.0
    %2174 = vmatprep.mubr.f32.mxu0 0.0
    %2175 = vmatmul.mubr.f32.gmra.mrb[0].mxu0 %v1832
    %v2176 = vpop.f32.mrb[0].mxu0
    %v2177 = vadd.f32 0.0, %v2176
    %v2178 = vpop.f32.mrb[0].mxu0
    %v2179 = vadd.f32 0.0, %v2178
    %2180 = vmatprep.mubr.f32.mxu0 0.0
    %2181 = vmatmul.mubr.f32.gmra.mrb[0].mxu0 %v1835
    %v2182 = vpop.f32.mrb[0].mxu0
    %v2183 = vadd.f32 0.0, %v2182
    %v2184 = vpop.f32.mrb[0].mxu0
    %v2185 = vadd.f32 0.0, %v2184
    %2186 = vmatprep.mubr.f32.mxu0 0.0
    %2187 = vmatmul.mubr.f32.gmra.mrb[0].mxu0 %v1838
    %v2188 = vpop.f32.mrb[0].mxu0
    %v2189 = vadd.f32 0.0, %v2188
    %v2190 = vpop.f32.mrb[0].mxu0
    %v2191 = vadd.f32 0.0, %v2190
    %2192 = vmatprep.mubr.f32.mxu0 0.0
    %2193 = vmatmul.mubr.f32.gmra.mrb[0].mxu0 %v1841
    %v2194 = vpop.f32.mrb[0].mxu0
    %v2195 = vadd.f32 0.0, %v2194
    %v2196 = vpop.f32.mrb[0].mxu0
    %v2197 = vadd.f32 0.0, %v2196
    %2198 = vdwg.mxu0
    %v2200 = vsel %vm1830, %v1341, 0
    %v2203 = vsel %vm1830, %v1342, 0
    %v2206 = vsel %vm1830, %v1343, 0
    %v2209 = vsel %vm1830, %v1344, 0
    %2211 = vmatprep.subr.mxu0 %v1346
    %2212 = vmatpush1.msra.mxu0 %v1345
    %2213 = vmatprep.subr.mxu0 %v1354
    %2214 = vmatpush1.msra.mxu0 %v1353
    %2215 = vmatprep.subr.mxu0 %v1362
    %2216 = vmatpush1.msra.mxu0 %v1361
    %2217 = vmatprep.subr.mxu0 %v1370
    %2218 = vmatpush1.msra.mxu0 %v1369
    %2219 = vmatprep.subr.mxu0 %v1378
    %2220 = vmatpush1.msra.mxu0 %v1377
    %2221 = vmatprep.subr.mxu0 %v1386
    %2222 = vmatpush1.msra.mxu0 %v1385
    %2223 = vmatprep.subr.mxu0 %v1394
    %2224 = vmatpush1.msra.mxu0 %v1393
    %2225 = vmatprep.subr.mxu0 %v1402
    %2226 = vmatpush1.msra.mxu0 %v1401
    %2227 = vmatprep.subr.mxu0 0.0
    %2228 = vmatpush1.msra.mxu0 0.0
    %2229 = vmatprep.subr.mxu0 0.0
    %2230 = vmatpush1.msra.mxu0 0.0
    %2231 = vmatprep.subr.mxu0 0.0
    %2232 = vmatpush1.msra.mxu0 0.0
    %2233 = vmatprep.subr.mxu0 0.0
    %2234 = vmatpush1.msra.mxu0 0.0
    %2235 = vmatprep.subr.mxu0 0.0
    %2236 = vmatpush1.msra.mxu0 0.0
    %2237 = vmatprep.subr.mxu0 0.0
    %2238 = vmatpush1.msra.mxu0 0.0
    %2239 = vmatprep.subr.mxu0 0.0
    %2240 = vmatpush1.msra.mxu0 0.0
    %2241 = vmatprep.subr.mxu0 0.0
    %2242 = vmatpush1.msra.mxu0 0.0
    %2243 = vmatprep.subr.mxu0 0.0
    %2244 = vmatpush1.msra.mxu0 0.0
    %2245 = vmatprep.subr.mxu0 0.0
    %2246 = vmatpush1.msra.mxu0 0.0
    %2247 = vmatprep.subr.mxu0 0.0
    %2248 = vmatpush1.msra.mxu0 0.0
    %2249 = vmatprep.subr.mxu0 0.0
    %2250 = vmatpush1.msra.mxu0 0.0
    %2251 = vmatprep.subr.mxu0 0.0
    %2252 = vmatpush1.msra.mxu0 0.0
    %2253 = vmatprep.subr.mxu0 0.0
    %2254 = vmatpush1.msra.mxu0 0.0
    %2255 = vmatprep.subr.mxu0 0.0
    %2256 = vmatpush1.msra.mxu0 0.0
    %2257 = vmatprep.subr.mxu0 0.0
    %2258 = vmatpush1.msra.mxu0 0.0
    %2259 = vmatprep.subr.mxu0 0.0
    %2260 = vmatpush1.msra.mxu0 0.0
    %2261 = vmatprep.subr.mxu0 0.0
    %2262 = vmatpush1.msra.mxu0 0.0
    %2263 = vmatprep.subr.mxu0 0.0
    %2264 = vmatpush1.msra.mxu0 0.0
    %2265 = vmatprep.subr.mxu0 0.0
    %2266 = vmatpush1.msra.mxu0 0.0
    %2267 = vmatprep.subr.mxu0 0.0
    %2268 = vmatpush1.msra.mxu0 0.0
    %2269 = vmatprep.subr.mxu0 0.0
    %2270 = vmatpush1.msra.mxu0 0.0
    %2271 = vmatprep.subr.mxu0 0.0
    %2272 = vmatpush1.msra.mxu0 0.0
    %2273 = vmatprep.subr.mxu0 0.0
    %2274 = vmatpush1.msra.mxu0 0.0
    %2275 = vmatprep.mubr.f32.mxu0 0.0
    %2276 = vmatmul.mubr.f32.gmra.mrb[0].mxu0 %v2200
    %v2277 = vpop.f32.mrb[0].mxu0
    %v2278 = vadd.f32 %v1910, %v2277
    %v2279 = vpop.f32.mrb[0].mxu0
    %v2280 = vadd.f32 %v1912, %v2279
    %2281 = vmatprep.mubr.f32.mxu0 0.0
    %2282 = vmatmul.mubr.f32.gmra.mrb[0].mxu0 %v2203
    %v2283 = vpop.f32.mrb[0].mxu0
    %v2284 = vadd.f32 %v1916, %v2283
    %v2285 = vpop.f32.mrb[0].mxu0
    %v2286 = vadd.f32 %v1918, %v2285
    %2287 = vmatprep.mubr.f32.mxu0 0.0
    %2288 = vmatmul.mubr.f32.gmra.mrb[0].mxu0 %v2206
    %v2289 = vpop.f32.mrb[0].mxu0
    %v2290 = vadd.f32 %v1922, %v2289
    %v2291 = vpop.f32.mrb[0].mxu0
    %v2292 = vadd.f32 %v1924, %v2291
    %2293 = vmatprep.mubr.f32.mxu0 0.0
    %2294 = vmatmul.mubr.f32.gmra.mrb[0].mxu0 %v2209
    %v2295 = vpop.f32.mrb[0].mxu0
    %v2296 = vadd.f32 %v1928, %v2295
    %v2297 = vpop.f32.mrb[0].mxu0
    %v2298 = vadd.f32 %v1930, %v2297
    %2299 = vdwg.mxu0
    %2300 = vmatprep.subr.mxu0 %v1348
    %2301 = vmatpush1.msra.mxu0 %v1347
    %2302 = vmatprep.subr.mxu0 %v1356
    %2303 = vmatpush1.msra.mxu0 %v1355
    %2304 = vmatprep.subr.mxu0 %v1364
    %2305 = vmatpush1.msra.mxu0 %v1363
    %2306 = vmatprep.subr.mxu0 %v1372
    %2307 = vmatpush1.msra.mxu0 %v1371
    %2308 = vmatprep.subr.mxu0 %v1380
    %2309 = vmatpush1.msra.mxu0 %v1379
    %2310 = vmatprep.subr.mxu0 %v1388
    %2311 = vmatpush1.msra.mxu0 %v1387
    %2312 = vmatprep.subr.mxu0 %v1396
    %2313 = vmatpush1.msra.mxu0 %v1395
    %2314 = vmatprep.subr.mxu0 %v1404
    %2315 = vmatpush1.msra.mxu0 %v1403
    %2316 = vmatprep.subr.mxu0 0.0
    %2317 = vmatpush1.msra.mxu0 0.0
    %2318 = vmatprep.subr.mxu0 0.0
    %2319 = vmatpush1.msra.mxu0 0.0
    %2320 = vmatprep.subr.mxu0 0.0
    %2321 = vmatpush1.msra.mxu0 0.0
    %2322 = vmatprep.subr.mxu0 0.0
    %2323 = vmatpush1.msra.mxu0 0.0
    %2324 = vmatprep.subr.mxu0 0.0
    %2325 = vmatpush1.msra.mxu0 0.0
    %2326 = vmatprep.subr.mxu0 0.0
    %2327 = vmatpush1.msra.mxu0 0.0
    %2328 = vmatprep.subr.mxu0 0.0
    %2329 = vmatpush1.msra.mxu0 0.0
    %2330 = vmatprep.subr.mxu0 0.0
    %2331 = vmatpush1.msra.mxu0 0.0
    %2332 = vmatprep.subr.mxu0 0.0
    %2333 = vmatpush1.msra.mxu0 0.0
    %2334 = vmatprep.subr.mxu0 0.0
    %2335 = vmatpush1.msra.mxu0 0.0
    %2336 = vmatprep.subr.mxu0 0.0
    %2337 = vmatpush1.msra.mxu0 0.0
    %2338 = vmatprep.subr.mxu0 0.0
    %2339 = vmatpush1.msra.mxu0 0.0
    %2340 = vmatprep.subr.mxu0 0.0
    %2341 = vmatpush1.msra.mxu0 0.0
    %2342 = vmatprep.subr.mxu0 0.0
    %2343 = vmatpush1.msra.mxu0 0.0
    %2344 = vmatprep.subr.mxu0 0.0
    %2345 = vmatpush1.msra.mxu0 0.0
    %2346 = vmatprep.subr.mxu0 0.0
    %2347 = vmatpush1.msra.mxu0 0.0
    %2348 = vmatprep.subr.mxu0 0.0
    %2349 = vmatpush1.msra.mxu0 0.0
    %2350 = vmatprep.subr.mxu0 0.0
    %2351 = vmatpush1.msra.mxu0 0.0
    %2352 = vmatprep.subr.mxu0 0.0
    %2353 = vmatpush1.msra.mxu0 0.0
    %2354 = vmatprep.subr.mxu0 0.0
    %2355 = vmatpush1.msra.mxu0 0.0
    %2356 = vmatprep.subr.mxu0 0.0
    %2357 = vmatpush1.msra.mxu0 0.0
    %2358 = vmatprep.subr.mxu0 0.0
    %2359 = vmatpush1.msra.mxu0 0.0
    %2360 = vmatprep.subr.mxu0 0.0
    %2361 = vmatpush1.msra.mxu0 0.0
    %2362 = vmatprep.subr.mxu0 0.0
    %2363 = vmatpush1.msra.mxu0 0.0
    %2364 = vmatprep.mubr.f32.mxu0 0.0
    %2365 = vmatmul.mubr.f32.gmra.mrb[0].mxu0 %v2200
    %v2366 = vpop.f32.mrb[0].mxu0
    %v2367 = vadd.f32 %v1999, %v2366
    %v2368 = vpop.f32.mrb[0].mxu0
    %v2369 = vadd.f32 %v2001, %v2368
    %2370 = vmatprep.mubr.f32.mxu0 0.0
    %2371 = vmatmul.mubr.f32.gmra.mrb[0].mxu0 %v2203
    %v2372 = vpop.f32.mrb[0].mxu0
    %v2373 = vadd.f32 %v2005, %v2372
    %v2374 = vpop.f32.mrb[0].mxu0
    %v2375 = vadd.f32 %v2007, %v2374
    %2376 = vmatprep.mubr.f32.mxu0 0.0
    %2377 = vmatmul.mubr.f32.gmra.mrb[0].mxu0 %v2206
    %v2378 = vpop.f32.mrb[0].mxu0
    %v2379 = vadd.f32 %v2011, %v2378
    %v2380 = vpop.f32.mrb[0].mxu0
    %v2381 = vadd.f32 %v2013, %v2380
    %2382 = vmatprep.mubr.f32.mxu0 0.0
    %2383 = vmatmul.mubr.f32.gmra.mrb[0].mxu0 %v2209
    %v2384 = vpop.f32.mrb[0].mxu0
    %v2385 = vadd.f32 %v2017, %v2384
    %v2386 = vpop.f32.mrb[0].mxu0
    %v2387 = vadd.f32 %v2019, %v2386
    %2388 = vdwg.mxu0
    %2389 = vmatprep.subr.mxu0 %v1350
    %2390 = vmatpush1.msra.mxu0 %v1349
    %2391 = vmatprep.subr.mxu0 %v1358
    %2392 = vmatpush1.msra.mxu0 %v1357
    %2393 = vmatprep.subr.mxu0 %v1366
    %2394 = vmatpush1.msra.mxu0 %v1365
    %2395 = vmatprep.subr.mxu0 %v1374
    %2396 = vmatpush1.msra.mxu0 %v1373
    %2397 = vmatprep.subr.mxu0 %v1382
    %2398 = vmatpush1.msra.mxu0 %v1381
    %2399 = vmatprep.subr.mxu0 %v1390
    %2400 = vmatpush1.msra.mxu0 %v1389
    %2401 = vmatprep.subr.mxu0 %v1398
    %2402 = vmatpush1.msra.mxu0 %v1397
    %2403 = vmatprep.subr.mxu0 %v1406
    %2404 = vmatpush1.msra.mxu0 %v1405
    %2405 = vmatprep.subr.mxu0 0.0
    %2406 = vmatpush1.msra.mxu0 0.0
    %2407 = vmatprep.subr.mxu0 0.0
    %2408 = vmatpush1.msra.mxu0 0.0
    %2409 = vmatprep.subr.mxu0 0.0
    %2410 = vmatpush1.msra.mxu0 0.0
    %2411 = vmatprep.subr.mxu0 0.0
    %2412 = vmatpush1.msra.mxu0 0.0
    %2413 = vmatprep.subr.mxu0 0.0
    %2414 = vmatpush1.msra.mxu0 0.0
    %2415 = vmatprep.subr.mxu0 0.0
    %2416 = vmatpush1.msra.mxu0 0.0
    %2417 = vmatprep.subr.mxu0 0.0
    %2418 = vmatpush1.msra.mxu0 0.0
    %2419 = vmatprep.subr.mxu0 0.0
    %2420 = vmatpush1.msra.mxu0 0.0
    %2421 = vmatprep.subr.mxu0 0.0
    %2422 = vmatpush1.msra.mxu0 0.0
    %2423 = vmatprep.subr.mxu0 0.0
    %2424 = vmatpush1.msra.mxu0 0.0
    %2425 = vmatprep.subr.mxu0 0.0
    %2426 = vmatpush1.msra.mxu0 0.0
    %2427 = vmatprep.subr.mxu0 0.0
    %2428 = vmatpush1.msra.mxu0 0.0
    %2429 = vmatprep.subr.mxu0 0.0
    %2430 = vmatpush1.msra.mxu0 0.0
    %2431 = vmatprep.subr.mxu0 0.0
    %2432 = vmatpush1.msra.mxu0 0.0
    %2433 = vmatprep.subr.mxu0 0.0
    %2434 = vmatpush1.msra.mxu0 0.0
    %2435 = vmatprep.subr.mxu0 0.0
    %2436 = vmatpush1.msra.mxu0 0.0
    %2437 = vmatprep.subr.mxu0 0.0
    %2438 = vmatpush1.msra.mxu0 0.0
    %2439 = vmatprep.subr.mxu0 0.0
    %2440 = vmatpush1.msra.mxu0 0.0
    %2441 = vmatprep.subr.mxu0 0.0
    %2442 = vmatpush1.msra.mxu0 0.0
    %2443 = vmatprep.subr.mxu0 0.0
    %2444 = vmatpush1.msra.mxu0 0.0
    %2445 = vmatprep.subr.mxu0 0.0
    %2446 = vmatpush1.msra.mxu0 0.0
    %2447 = vmatprep.subr.mxu0 0.0
    %2448 = vmatpush1.msra.mxu0 0.0
    %2449 = vmatprep.subr.mxu0 0.0
    %2450 = vmatpush1.msra.mxu0 0.0
    %2451 = vmatprep.subr.mxu0 0.0
    %2452 = vmatpush1.msra.mxu0 0.0
    %2453 = vmatprep.mubr.f32.mxu0 0.0
    %2454 = vmatmul.mubr.f32.gmra.mrb[0].mxu0 %v2200
    %v2455 = vpop.f32.mrb[0].mxu0
    %v2456 = vadd.f32 %v2088, %v2455
    %v2457 = vpop.f32.mrb[0].mxu0
    %v2458 = vadd.f32 %v2090, %v2457
    %2459 = vmatprep.mubr.f32.mxu0 0.0
    %2460 = vmatmul.mubr.f32.gmra.mrb[0].mxu0 %v2203
    %v2461 = vpop.f32.mrb[0].mxu0
    %v2462 = vadd.f32 %v2094, %v2461
    %v2463 = vpop.f32.mrb[0].mxu0
    %v2464 = vadd.f32 %v2096, %v2463
    %2465 = vmatprep.mubr.f32.mxu0 0.0
    %2466 = vmatmul.mubr.f32.gmra.mrb[0].mxu0 %v2206
    %v2467 = vpop.f32.mrb[0].mxu0
    %v2468 = vadd.f32 %v2100, %v2467
    %v2469 = vpop.f32.mrb[0].mxu0
    %v2470 = vadd.f32 %v2102, %v2469
    %2471 = vmatprep.mubr.f32.mxu0 0.0
    %2472 = vmatmul.mubr.f32.gmra.mrb[0].mxu0 %v2209
    %v2473 = vpop.f32.mrb[0].mxu0
    %v2474 = vadd.f32 %v2106, %v2473
    %v2475 = vpop.f32.mrb[0].mxu0
    %v2476 = vadd.f32 %v2108, %v2475
    %2477 = vdwg.mxu0
    %2478 = vmatprep.subr.mxu0 %v1352
    %2479 = vmatpush1.msra.mxu0 %v1351
    %2480 = vmatprep.subr.mxu0 %v1360
    %2481 = vmatpush1.msra.mxu0 %v1359
    %2482 = vmatprep.subr.mxu0 %v1368
    %2483 = vmatpush1.msra.mxu0 %v1367
    %2484 = vmatprep.subr.mxu0 %v1376
    %2485 = vmatpush1.msra.mxu0 %v1375
    %2486 = vmatprep.subr.mxu0 %v1384
    %2487 = vmatpush1.msra.mxu0 %v1383
    %2488 = vmatprep.subr.mxu0 %v1392
    %2489 = vmatpush1.msra.mxu0 %v1391
    %2490 = vmatprep.subr.mxu0 %v1400
    %2491 = vmatpush1.msra.mxu0 %v1399
    %2492 = vmatprep.subr.mxu0 %v1408
    %2493 = vmatpush1.msra.mxu0 %v1407
    %2494 = vmatprep.subr.mxu0 0.0
    %2495 = vmatpush1.msra.mxu0 0.0
    %2496 = vmatprep.subr.mxu0 0.0
    %2497 = vmatpush1.msra.mxu0 0.0
    %2498 = vmatprep.subr.mxu0 0.0
    %2499 = vmatpush1.msra.mxu0 0.0
    %2500 = vmatprep.subr.mxu0 0.0
    %2501 = vmatpush1.msra.mxu0 0.0
    %2502 = vmatprep.subr.mxu0 0.0
    %2503 = vmatpush1.msra.mxu0 0.0
    %2504 = vmatprep.subr.mxu0 0.0
    %2505 = vmatpush1.msra.mxu0 0.0
    %2506 = vmatprep.subr.mxu0 0.0
    %2507 = vmatpush1.msra.mxu0 0.0
    %2508 = vmatprep.subr.mxu0 0.0
    %2509 = vmatpush1.msra.mxu0 0.0
    %2510 = vmatprep.subr.mxu0 0.0
    %2511 = vmatpush1.msra.mxu0 0.0
    %2512 = vmatprep.subr.mxu0 0.0
    %2513 = vmatpush1.msra.mxu0 0.0
    %2514 = vmatprep.subr.mxu0 0.0
    %2515 = vmatpush1.msra.mxu0 0.0
    %2516 = vmatprep.subr.mxu0 0.0
    %2517 = vmatpush1.msra.mxu0 0.0
    %2518 = vmatprep.subr.mxu0 0.0
    %2519 = vmatpush1.msra.mxu0 0.0
    %2520 = vmatprep.subr.mxu0 0.0
    %2521 = vmatpush1.msra.mxu0 0.0
    %2522 = vmatprep.subr.mxu0 0.0
    %2523 = vmatpush1.msra.mxu0 0.0
    %2524 = vmatprep.subr.mxu0 0.0
    %2525 = vmatpush1.msra.mxu0 0.0
    %2526 = vmatprep.subr.mxu0 0.0
    %2527 = vmatpush1.msra.mxu0 0.0
    %2528 = vmatprep.subr.mxu0 0.0
    %2529 = vmatpush1.msra.mxu0 0.0
    %2530 = vmatprep.subr.mxu0 0.0
    %2531 = vmatpush1.msra.mxu0 0.0
    %2532 = vmatprep.subr.mxu0 0.0
    %2533 = vmatpush1.msra.mxu0 0.0
    %2534 = vmatprep.subr.mxu0 0.0
    %2535 = vmatpush1.msra.mxu0 0.0
    %2536 = vmatprep.subr.mxu0 0.0
    %2537 = vmatpush1.msra.mxu0 0.0
    %2538 = vmatprep.subr.mxu0 0.0
    %2539 = vmatpush1.msra.mxu0 0.0
    %2540 = vmatprep.subr.mxu0 0.0
    %2541 = vmatpush1.msra.mxu0 0.0
    %2542 = vmatprep.mubr.f32.mxu0 0.0
    %2543 = vmatmul.mubr.f32.gmra.mrb[0].mxu0 %v2200
    %v2544 = vpop.f32.mrb[0].mxu0
    %v2545 = vadd.f32 %v2177, %v2544
    %v2546 = vpop.f32.mrb[0].mxu0
    %v2547 = vadd.f32 %v2179, %v2546
    %2548 = vmatprep.mubr.f32.mxu0 0.0
    %2549 = vmatmul.mubr.f32.gmra.mrb[0].mxu0 %v2203
    %v2550 = vpop.f32.mrb[0].mxu0
    %v2551 = vadd.f32 %v2183, %v2550
    %v2552 = vpop.f32.mrb[0].mxu0
    %v2553 = vadd.f32 %v2185, %v2552
    %2554 = vmatprep.mubr.f32.mxu0 0.0
    %2555 = vmatmul.mubr.f32.gmra.mrb[0].mxu0 %v2206
    %v2556 = vpop.f32.mrb[0].mxu0
    %v2557 = vadd.f32 %v2189, %v2556
    %v2558 = vpop.f32.mrb[0].mxu0
    %v2559 = vadd.f32 %v2191, %v2558
    %2560 = vmatprep.mubr.f32.mxu0 0.0
    %2561 = vmatmul.mubr.f32.gmra.mrb[0].mxu0 %v2209
    %v2562 = vpop.f32.mrb[0].mxu0
    %v2563 = vadd.f32 %v2195, %v2562
    %v2564 = vpop.f32.mrb[0].mxu0
    %v2565 = vadd.f32 %v2197, %v2564
    %2566 = vdwg.mxu0
    %s2567 = scalar_lea.vmem [#allocation4], 64
    %v2568 = vld [vmem:[%s2567] sm:$0xff]
    %v2569 = vld [vmem:[%s2567 + $0x8] sm:$0xff]
    %v2570 = vld [vmem:[%s2567 + $0x10] sm:$0xff]
    %v2571 = vld [vmem:[%s2567 + $0x18] sm:$0xff]
    %2572 = vrot.lane.b32.xlu0 %v1414, 126
    %v2573 = vpop.permute.xlu0 %2572
    %2574 = vrot.lane.b32.xlu0 %v1415, 126
    %v2575 = vpop.permute.xlu0 %2574
    %2576 = vrot.lane.b32.xlu0 %v1416, 126
    %v2577 = vpop.permute.xlu0 %2576
    %2578 = vrot.lane.b32.xlu0 %v1417, 126
    %v2579 = vpop.permute.xlu0 %2578
    %2580 = vrot.lane.b32.xlu0 %v1418, 126
    %v2581 = vpop.permute.xlu0 %2580
    %2582 = vrot.lane.b32.xlu0 %v1419, 126
    %v2583 = vpop.permute.xlu0 %2582
    %2584 = vrot.lane.b32.xlu0 %v1420, 126
    %v2585 = vpop.permute.xlu0 %2584
    %2586 = vrot.lane.b32.xlu0 %v1421, 126
    %v2587 = vpop.permute.xlu0 %2586
    %2588 = vrot.lane.b32.xlu0 %v1422, 126
    %v2589 = vpop.permute.xlu0 %2588
    %2590 = vrot.lane.b32.xlu0 %v1423, 126
    %v2591 = vpop.permute.xlu0 %2590
    %2592 = vrot.lane.b32.xlu0 %v1424, 126
    %v2593 = vpop.permute.xlu0 %2592
    %2594 = vrot.lane.b32.xlu0 %v1425, 126
    %v2595 = vpop.permute.xlu0 %2594
    %2596 = vrot.lane.b32.xlu0 %v1426, 126
    %v2597 = vpop.permute.xlu0 %2596
    %2598 = vrot.lane.b32.xlu0 %v1427, 126
    %v2599 = vpop.permute.xlu0 %2598
    %2600 = vrot.lane.b32.xlu0 %v1428, 126
    %v2601 = vpop.permute.xlu0 %2600
    %2602 = vrot.lane.b32.xlu0 %v1429, 126
    %v2603 = vpop.permute.xlu0 %2602
    %2604 = vrot.lane.b32.xlu0 %v1430, 126
    %v2605 = vpop.permute.xlu0 %2604
    %2606 = vrot.lane.b32.xlu0 %v1431, 126
    %v2607 = vpop.permute.xlu0 %2606
    %2608 = vrot.lane.b32.xlu0 %v1432, 126
    %v2609 = vpop.permute.xlu0 %2608
    %2610 = vrot.lane.b32.xlu0 %v1433, 126
    %v2611 = vpop.permute.xlu0 %2610
    %2612 = vrot.lane.b32.xlu0 %v1434, 126
    %v2613 = vpop.permute.xlu0 %2612
    %2614 = vrot.lane.b32.xlu0 %v1435, 126
    %v2615 = vpop.permute.xlu0 %2614
    %2616 = vrot.lane.b32.xlu0 %v1436, 126
    %v2617 = vpop.permute.xlu0 %2616
    %2618 = vrot.lane.b32.xlu0 %v1437, 126
    %v2619 = vpop.permute.xlu0 %2618
    %2620 = vrot.lane.b32.xlu0 %v1438, 126
    %v2621 = vpop.permute.xlu0 %2620
    %2622 = vrot.lane.b32.xlu0 %v1439, 126
    %v2623 = vpop.permute.xlu0 %2622
    %2624 = vrot.lane.b32.xlu0 %v1440, 126
    %v2625 = vpop.permute.xlu0 %2624
    %2626 = vrot.lane.b32.xlu0 %v1441, 126
    %v2627 = vpop.permute.xlu0 %2626
    %2628 = vrot.lane.b32.xlu0 %v1442, 126
    %v2629 = vpop.permute.xlu0 %2628
    %2630 = vrot.lane.b32.xlu0 %v1443, 126
    %v2631 = vpop.permute.xlu0 %2630
    %2632 = vrot.lane.b32.xlu0 %v1444, 126
    %v2633 = vpop.permute.xlu0 %2632
    %2634 = vrot.lane.b32.xlu0 %v1445, 126
    %v2635 = vpop.permute.xlu0 %2634
    %2636 = vrot.lane.b32.xlu0 %v1446, 126
    %v2637 = vpop.permute.xlu0 %2636
    %2638 = vrot.lane.b32.xlu0 %v1447, 126
    %v2639 = vpop.permute.xlu0 %2638
    %2640 = vrot.lane.b32.xlu0 %v1448, 126
    %v2641 = vpop.permute.xlu0 %2640
    %2642 = vrot.lane.b32.xlu0 %v1449, 126
    %v2643 = vpop.permute.xlu0 %2642
    %2644 = vrot.lane.b32.xlu0 %v1450, 126
    %v2645 = vpop.permute.xlu0 %2644
    %2646 = vrot.lane.b32.xlu0 %v1451, 126
    %v2647 = vpop.permute.xlu0 %2646
    %2648 = vrot.lane.b32.xlu0 %v1452, 126
    %v2649 = vpop.permute.xlu0 %2648
    %2650 = vrot.lane.b32.xlu0 %v1453, 126
    %v2651 = vpop.permute.xlu0 %2650
    %2652 = vrot.lane.b32.xlu0 %v1454, 126
    %v2653 = vpop.permute.xlu0 %2652
    %2654 = vrot.lane.b32.xlu0 %v1455, 126
    %v2655 = vpop.permute.xlu0 %2654
    %2656 = vrot.lane.b32.xlu0 %v1456, 126
    %v2657 = vpop.permute.xlu0 %2656
    %2658 = vrot.lane.b32.xlu0 %v1457, 126
    %v2659 = vpop.permute.xlu0 %2658
    %2660 = vrot.lane.b32.xlu0 %v1458, 126
    %v2661 = vpop.permute.xlu0 %2660
    %2662 = vrot.lane.b32.xlu0 %v1459, 126
    %v2663 = vpop.permute.xlu0 %2662
    %2664 = vrot.lane.b32.xlu0 %v1460, 126
    %v2665 = vpop.permute.xlu0 %2664
    %2666 = vrot.lane.b32.xlu0 %v1461, 126
    %v2667 = vpop.permute.xlu0 %2666
    %2668 = vrot.lane.b32.xlu0 %v1462, 126
    %v2669 = vpop.permute.xlu0 %2668
    %2670 = vrot.lane.b32.xlu0 %v1463, 126
    %v2671 = vpop.permute.xlu0 %2670
    %2672 = vrot.lane.b32.xlu0 %v1464, 126
    %v2673 = vpop.permute.xlu0 %2672
    %2674 = vrot.lane.b32.xlu0 %v1465, 126
    %v2675 = vpop.permute.xlu0 %2674
    %2676 = vrot.lane.b32.xlu0 %v1466, 126
    %v2677 = vpop.permute.xlu0 %2676
    %2678 = vrot.lane.b32.xlu0 %v1467, 126
    %v2679 = vpop.permute.xlu0 %2678
    %2680 = vrot.lane.b32.xlu0 %v1468, 126
    %v2681 = vpop.permute.xlu0 %2680
    %2682 = vrot.lane.b32.xlu0 %v1469, 126
    %v2683 = vpop.permute.xlu0 %2682
    %2684 = vrot.lane.b32.xlu0 %v1470, 126
    %v2685 = vpop.permute.xlu0 %2684
    %2686 = vrot.lane.b32.xlu0 %v1471, 126
    %v2687 = vpop.permute.xlu0 %2686
    %2688 = vrot.lane.b32.xlu0 %v1472, 126
    %v2689 = vpop.permute.xlu0 %2688
    %2690 = vrot.lane.b32.xlu0 %v1473, 126
    %v2691 = vpop.permute.xlu0 %2690
    %2692 = vrot.lane.b32.xlu0 %v1474, 126
    %v2693 = vpop.permute.xlu0 %2692
    %2694 = vrot.lane.b32.xlu0 %v1475, 126
    %v2695 = vpop.permute.xlu0 %2694
    %2696 = vrot.lane.b32.xlu0 %v1476, 126
    %v2697 = vpop.permute.xlu0 %2696
    %2698 = vrot.lane.b32.xlu0 %v1477, 126
    %v2699 = vpop.permute.xlu0 %2698
    %2700 = vrot.lane.b32.xlu0 %v1478, 126
    %v2701 = vpop.permute.xlu0 %2700
    %2702 = vrot.lane.b32.xlu0 %v1479, 126
    %v2703 = vpop.permute.xlu0 %2702
    %2704 = vrot.lane.b32.xlu0 %v1480, 126
    %v2705 = vpop.permute.xlu0 %2704
    %2706 = vrot.lane.b32.xlu0 %v1481, 126
    %v2707 = vpop.permute.xlu0 %2706
    %2708 = vrot.lane.b32.xlu0 %v1482, 126
    %v2709 = vpop.permute.xlu0 %2708
    %2710 = vrot.lane.b32.xlu0 %v1483, 126
    %v2711 = vpop.permute.xlu0 %2710
    %2712 = vrot.lane.b32.xlu0 %v1484, 126
    %v2713 = vpop.permute.xlu0 %2712
    %2714 = vrot.lane.b32.xlu0 %v1485, 126
    %v2715 = vpop.permute.xlu0 %2714
    %v2716 = vsel %vm93, %v2573, %v2575
    %v2717 = vsel %vm93, %v2575, %v2577
    %v2718 = vsel %vm93, %v2577, %v2579
    %v2719 = vsel %vm93, %v2579, %v2581
    %v2720 = vsel %vm93, %v2581, %v2583
    %v2721 = vsel %vm93, %v2583, %v2585
    %v2722 = vsel %vm93, %v2585, %v2587
    %v2723 = vsel %vm93, %v2587, %v2589
    %v2724 = vsel %vm93, %v2591, %v2593
    %v2725 = vsel %vm93, %v2593, %v2595
    %v2726 = vsel %vm93, %v2595, %v2597
    %v2727 = vsel %vm93, %v2597, %v2599
    %v2728 = vsel %vm93, %v2599, %v2601
    %v2729 = vsel %vm93, %v2601, %v2603
    %v2730 = vsel %vm93, %v2603, %v2605
    %v2731 = vsel %vm93, %v2605, %v2607
    %v2732 = vsel %vm93, %v2609, %v2611
    %v2733 = vsel %vm93, %v2611, %v2613
    %v2734 = vsel %vm93, %v2613, %v2615
    %v2735 = vsel %vm93, %v2615, %v2617
    %v2736 = vsel %vm93, %v2617, %v2619
    %v2737 = vsel %vm93, %v2619, %v2621
    %v2738 = vsel %vm93, %v2621, %v2623
    %v2739 = vsel %vm93, %v2623, %v2625
    %v2740 = vsel %vm93, %v2627, %v2629
    %v2741 = vsel %vm93, %v2629, %v2631
    %v2742 = vsel %vm93, %v2631, %v2633
    %v2743 = vsel %vm93, %v2633, %v2635
    %v2744 = vsel %vm93, %v2635, %v2637
    %v2745 = vsel %vm93, %v2637, %v2639
    %v2746 = vsel %vm93, %v2639, %v2641
    %v2747 = vsel %vm93, %v2641, %v2643
    %v2748 = vsel %vm93, %v2645, %v2647
    %v2749 = vsel %vm93, %v2647, %v2649
    %v2750 = vsel %vm93, %v2649, %v2651
    %v2751 = vsel %vm93, %v2651, %v2653
    %v2752 = vsel %vm93, %v2653, %v2655
    %v2753 = vsel %vm93, %v2655, %v2657
    %v2754 = vsel %vm93, %v2657, %v2659
    %v2755 = vsel %vm93, %v2659, %v2661
    %v2756 = vsel %vm93, %v2663, %v2665
    %v2757 = vsel %vm93, %v2665, %v2667
    %v2758 = vsel %vm93, %v2667, %v2669
    %v2759 = vsel %vm93, %v2669, %v2671
    %v2760 = vsel %vm93, %v2671, %v2673
    %v2761 = vsel %vm93, %v2673, %v2675
    %v2762 = vsel %vm93, %v2675, %v2677
    %v2763 = vsel %vm93, %v2677, %v2679
    %v2764 = vsel %vm93, %v2681, %v2683
    %v2765 = vsel %vm93, %v2683, %v2685
    %v2766 = vsel %vm93, %v2685, %v2687
    %v2767 = vsel %vm93, %v2687, %v2689
    %v2768 = vsel %vm93, %v2689, %v2691
    %v2769 = vsel %vm93, %v2691, %v2693
    %v2770 = vsel %vm93, %v2693, %v2695
    %v2771 = vsel %vm93, %v2695, %v2697
    %v2772 = vsel %vm93, %v2699, %v2701
    %v2773 = vsel %vm93, %v2701, %v2703
    %v2774 = vsel %vm93, %v2703, %v2705
    %v2775 = vsel %vm93, %v2705, %v2707
    %v2776 = vsel %vm93, %v2707, %v2709
    %v2777 = vsel %vm93, %v2709, %v2711
    %v2778 = vsel %vm93, %v2711, %v2713
    %v2779 = vsel %vm93, %v2713, %v2715
    %v2845 = vsel %vm1830, %v2568, 0
    %v2848 = vsel %vm1830, %v2569, 0
    %v2851 = vsel %vm1830, %v2570, 0
    %v2854 = vsel %vm1830, %v2571, 0
    %2856 = vmatprep.subr.mxu0 %v2717
    %2857 = vmatpush1.msra.mxu0 %v2716
    %2858 = vmatprep.subr.mxu0 %v2725
    %2859 = vmatpush1.msra.mxu0 %v2724
    %2860 = vmatprep.subr.mxu0 %v2733
    %2861 = vmatpush1.msra.mxu0 %v2732
    %2862 = vmatprep.subr.mxu0 %v2741
    %2863 = vmatpush1.msra.mxu0 %v2740
    %2864 = vmatprep.subr.mxu0 %v2749
    %2865 = vmatpush1.msra.mxu0 %v2748
    %2866 = vmatprep.subr.mxu0 %v2757
    %2867 = vmatpush1.msra.mxu0 %v2756
    %2868 = vmatprep.subr.mxu0 %v2765
    %2869 = vmatpush1.msra.mxu0 %v2764
    %2870 = vmatprep.subr.mxu0 %v2773
    %2871 = vmatpush1.msra.mxu0 %v2772
    %2872 = vmatprep.subr.mxu0 0.0
    %2873 = vmatpush1.msra.mxu0 0.0
    %2874 = vmatprep.subr.mxu0 0.0
    %2875 = vmatpush1.msra.mxu0 0.0
    %2876 = vmatprep.subr.mxu0 0.0
    %2877 = vmatpush1.msra.mxu0 0.0
    %2878 = vmatprep.subr.mxu0 0.0
    %2879 = vmatpush1.msra.mxu0 0.0
    %2880 = vmatprep.subr.mxu0 0.0
    %2881 = vmatpush1.msra.mxu0 0.0
    %2882 = vmatprep.subr.mxu0 0.0
    %2883 = vmatpush1.msra.mxu0 0.0
    %2884 = vmatprep.subr.mxu0 0.0
    %2885 = vmatpush1.msra.mxu0 0.0
    %2886 = vmatprep.subr.mxu0 0.0
    %2887 = vmatpush1.msra.mxu0 0.0
    %2888 = vmatprep.subr.mxu0 0.0
    %2889 = vmatpush1.msra.mxu0 0.0
    %2890 = vmatprep.subr.mxu0 0.0
    %2891 = vmatpush1.msra.mxu0 0.0
    %2892 = vmatprep.subr.mxu0 0.0
    %2893 = vmatpush1.msra.mxu0 0.0
    %2894 = vmatprep.subr.mxu0 0.0
    %2895 = vmatpush1.msra.mxu0 0.0
    %2896 = vmatprep.subr.mxu0 0.0
    %2897 = vmatpush1.msra.mxu0 0.0
    %2898 = vmatprep.subr.mxu0 0.0
    %2899 = vmatpush1.msra.mxu0 0.0
    %2900 = vmatprep.subr.mxu0 0.0
    %2901 = vmatpush1.msra.mxu0 0.0
    %2902 = vmatprep.subr.mxu0 0.0
    %2903 = vmatpush1.msra.mxu0 0.0
    %2904 = vmatprep.subr.mxu0 0.0
    %2905 = vmatpush1.msra.mxu0 0.0
    %2906 = vmatprep.subr.mxu0 0.0
    %2907 = vmatpush1.msra.mxu0 0.0
    %2908 = vmatprep.subr.mxu0 0.0
    %2909 = vmatpush1.msra.mxu0 0.0
    %2910 = vmatprep.subr.mxu0 0.0
    %2911 = vmatpush1.msra.mxu0 0.0
    %2912 = vmatprep.subr.mxu0 0.0
    %2913 = vmatpush1.msra.mxu0 0.0
    %2914 = vmatprep.subr.mxu0 0.0
    %2915 = vmatpush1.msra.mxu0 0.0
    %2916 = vmatprep.subr.mxu0 0.0
    %2917 = vmatpush1.msra.mxu0 0.0
    %2918 = vmatprep.subr.mxu0 0.0
    %2919 = vmatpush1.msra.mxu0 0.0
    %2920 = vmatprep.mubr.f32.mxu0 0.0
    %2921 = vmatmul.mubr.f32.gmra.mrb[0].mxu0 %v2845
    %v2922 = vpop.f32.mrb[0].mxu0
    %v2923 = vadd.f32 0.0, %v2922
    %v2924 = vpop.f32.mrb[0].mxu0
    %v2925 = vadd.f32 0.0, %v2924
    %2926 = vmatprep.mubr.f32.mxu0 0.0
    %2927 = vmatmul.mubr.f32.gmra.mrb[0].mxu0 %v2848
    %v2928 = vpop.f32.mrb[0].mxu0
    %v2929 = vadd.f32 0.0, %v2928
    %v2930 = vpop.f32.mrb[0].mxu0
    %v2931 = vadd.f32 0.0, %v2930
    %2932 = vmatprep.mubr.f32.mxu0 0.0
    %2933 = vmatmul.mubr.f32.gmra.mrb[0].mxu0 %v2851
    %v2934 = vpop.f32.mrb[0].mxu0
    %v2935 = vadd.f32 0.0, %v2934
    %v2936 = vpop.f32.mrb[0].mxu0
    %v2937 = vadd.f32 0.0, %v2936
    %2938 = vmatprep.mubr.f32.mxu0 0.0
    %2939 = vmatmul.mubr.f32.gmra.mrb[0].mxu0 %v2854
    %v2940 = vpop.f32.mrb[0].mxu0
    %v2941 = vadd.f32 0.0, %v2940
    %v2942 = vpop.f32.mrb[0].mxu0
    %v2943 = vadd.f32 0.0, %v2942
    %2944 = vdwg.mxu0
    %2945 = vmatprep.subr.mxu0 %v2719
    %2946 = vmatpush1.msra.mxu0 %v2718
    %2947 = vmatprep.subr.mxu0 %v2727
    %2948 = vmatpush1.msra.mxu0 %v2726
    %2949 = vmatprep.subr.mxu0 %v2735
    %2950 = vmatpush1.msra.mxu0 %v2734
    %2951 = vmatprep.subr.mxu0 %v2743
    %2952 = vmatpush1.msra.mxu0 %v2742
    %2953 = vmatprep.subr.mxu0 %v2751
    %2954 = vmatpush1.msra.mxu0 %v2750
    %2955 = vmatprep.subr.mxu0 %v2759
    %2956 = vmatpush1.msra.mxu0 %v2758
    %2957 = vmatprep.subr.mxu0 %v2767
    %2958 = vmatpush1.msra.mxu0 %v2766
    %2959 = vmatprep.subr.mxu0 %v2775
    %2960 = vmatpush1.msra.mxu0 %v2774
    %2961 = vmatprep.subr.mxu0 0.0
    %2962 = vmatpush1.msra.mxu0 0.0
    %2963 = vmatprep.subr.mxu0 0.0
    %2964 = vmatpush1.msra.mxu0 0.0
    %2965 = vmatprep.subr.mxu0 0.0
    %2966 = vmatpush1.msra.mxu0 0.0
    %2967 = vmatprep.subr.mxu0 0.0
    %2968 = vmatpush1.msra.mxu0 0.0
    %2969 = vmatprep.subr.mxu0 0.0
    %2970 = vmatpush1.msra.mxu0 0.0
    %2971 = vmatprep.subr.mxu0 0.0
    %2972 = vmatpush1.msra.mxu0 0.0
    %2973 = vmatprep.subr.mxu0 0.0
    %2974 = vmatpush1.msra.mxu0 0.0
    %2975 = vmatprep.subr.mxu0 0.0
    %2976 = vmatpush1.msra.mxu0 0.0
    %2977 = vmatprep.subr.mxu0 0.0
    %2978 = vmatpush1.msra.mxu0 0.0
    %2979 = vmatprep.subr.mxu0 0.0
    %2980 = vmatpush1.msra.mxu0 0.0
    %2981 = vmatprep.subr.mxu0 0.0
    %2982 = vmatpush1.msra.mxu0 0.0
    %2983 = vmatprep.subr.mxu0 0.0
    %2984 = vmatpush1.msra.mxu0 0.0
    %2985 = vmatprep.subr.mxu0 0.0
    %2986 = vmatpush1.msra.mxu0 0.0
    %2987 = vmatprep.subr.mxu0 0.0
    %2988 = vmatpush1.msra.mxu0 0.0
    %2989 = vmatprep.subr.mxu0 0.0
    %2990 = vmatpush1.msra.mxu0 0.0
    %2991 = vmatprep.subr.mxu0 0.0
    %2992 = vmatpush1.msra.mxu0 0.0
    %2993 = vmatprep.subr.mxu0 0.0
    %2994 = vmatpush1.msra.mxu0 0.0
    %2995 = vmatprep.subr.mxu0 0.0
    %2996 = vmatpush1.msra.mxu0 0.0
    %2997 = vmatprep.subr.mxu0 0.0
    %2998 = vmatpush1.msra.mxu0 0.0
    %2999 = vmatprep.subr.mxu0 0.0
    %3000 = vmatpush1.msra.mxu0 0.0
    %3001 = vmatprep.subr.mxu0 0.0
    %3002 = vmatpush1.msra.mxu0 0.0
    %3003 = vmatprep.subr.mxu0 0.0
    %3004 = vmatpush1.msra.mxu0 0.0
    %3005 = vmatprep.subr.mxu0 0.0
    %3006 = vmatpush1.msra.mxu0 0.0
    %3007 = vmatprep.subr.mxu0 0.0
    %3008 = vmatpush1.msra.mxu0 0.0
    %3009 = vmatprep.mubr.f32.mxu0 0.0
    %3010 = vmatmul.mubr.f32.gmra.mrb[0].mxu0 %v2845
    %v3011 = vpop.f32.mrb[0].mxu0
    %v3012 = vadd.f32 0.0, %v3011
    %v3013 = vpop.f32.mrb[0].mxu0
    %v3014 = vadd.f32 0.0, %v3013
    %3015 = vmatprep.mubr.f32.mxu0 0.0
    %3016 = vmatmul.mubr.f32.gmra.mrb[0].mxu0 %v2848
    %v3017 = vpop.f32.mrb[0].mxu0
    %v3018 = vadd.f32 0.0, %v3017
    %v3019 = vpop.f32.mrb[0].mxu0
    %v3020 = vadd.f32 0.0, %v3019
    %3021 = vmatprep.mubr.f32.mxu0 0.0
    %3022 = vmatmul.mubr.f32.gmra.mrb[0].mxu0 %v2851
    %v3023 = vpop.f32.mrb[0].mxu0
    %v3024 = vadd.f32 0.0, %v3023
    %v3025 = vpop.f32.mrb[0].mxu0
    %v3026 = vadd.f32 0.0, %v3025
    %3027 = vmatprep.mubr.f32.mxu0 0.0
    %3028 = vmatmul.mubr.f32.gmra.mrb[0].mxu0 %v2854
    %v3029 = vpop.f32.mrb[0].mxu0
    %v3030 = vadd.f32 0.0, %v3029
    %v3031 = vpop.f32.mrb[0].mxu0
    %v3032 = vadd.f32 0.0, %v3031
    %3033 = vdwg.mxu0
    %3034 = vmatprep.subr.mxu0 %v2721
    %3035 = vmatpush1.msra.mxu0 %v2720
    %3036 = vmatprep.subr.mxu0 %v2729
    %3037 = vmatpush1.msra.mxu0 %v2728
    %3038 = vmatprep.subr.mxu0 %v2737
    %3039 = vmatpush1.msra.mxu0 %v2736
    %3040 = vmatprep.subr.mxu0 %v2745
    %3041 = vmatpush1.msra.mxu0 %v2744
    %3042 = vmatprep.subr.mxu0 %v2753
    %3043 = vmatpush1.msra.mxu0 %v2752
    %3044 = vmatprep.subr.mxu0 %v2761
    %3045 = vmatpush1.msra.mxu0 %v2760
    %3046 = vmatprep.subr.mxu0 %v2769
    %3047 = vmatpush1.msra.mxu0 %v2768
    %3048 = vmatprep.subr.mxu0 %v2777
    %3049 = vmatpush1.msra.mxu0 %v2776
    %3050 = vmatprep.subr.mxu0 0.0
    %3051 = vmatpush1.msra.mxu0 0.0
    %3052 = vmatprep.subr.mxu0 0.0
    %3053 = vmatpush1.msra.mxu0 0.0
    %3054 = vmatprep.subr.mxu0 0.0
    %3055 = vmatpush1.msra.mxu0 0.0
    %3056 = vmatprep.subr.mxu0 0.0
    %3057 = vmatpush1.msra.mxu0 0.0
    %3058 = vmatprep.subr.mxu0 0.0
    %3059 = vmatpush1.msra.mxu0 0.0
    %3060 = vmatprep.subr.mxu0 0.0
    %3061 = vmatpush1.msra.mxu0 0.0
    %3062 = vmatprep.subr.mxu0 0.0
    %3063 = vmatpush1.msra.mxu0 0.0
    %3064 = vmatprep.subr.mxu0 0.0
    %3065 = vmatpush1.msra.mxu0 0.0
    %3066 = vmatprep.subr.mxu0 0.0
    %3067 = vmatpush1.msra.mxu0 0.0
    %3068 = vmatprep.subr.mxu0 0.0
    %3069 = vmatpush1.msra.mxu0 0.0
    %3070 = vmatprep.subr.mxu0 0.0
    %3071 = vmatpush1.msra.mxu0 0.0
    %3072 = vmatprep.subr.mxu0 0.0
    %3073 = vmatpush1.msra.mxu0 0.0
    %3074 = vmatprep.subr.mxu0 0.0
    %3075 = vmatpush1.msra.mxu0 0.0
    %3076 = vmatprep.subr.mxu0 0.0
    %3077 = vmatpush1.msra.mxu0 0.0
    %3078 = vmatprep.subr.mxu0 0.0
    %3079 = vmatpush1.msra.mxu0 0.0
    %3080 = vmatprep.subr.mxu0 0.0
    %3081 = vmatpush1.msra.mxu0 0.0
    %3082 = vmatprep.subr.mxu0 0.0
    %3083 = vmatpush1.msra.mxu0 0.0
    %3084 = vmatprep.subr.mxu0 0.0
    %3085 = vmatpush1.msra.mxu0 0.0
    %3086 = vmatprep.subr.mxu0 0.0
    %3087 = vmatpush1.msra.mxu0 0.0
    %3088 = vmatprep.subr.mxu0 0.0
    %3089 = vmatpush1.msra.mxu0 0.0
    %3090 = vmatprep.subr.mxu0 0.0
    %3091 = vmatpush1.msra.mxu0 0.0
    %3092 = vmatprep.subr.mxu0 0.0
    %3093 = vmatpush1.msra.mxu0 0.0
    %3094 = vmatprep.subr.mxu0 0.0
    %3095 = vmatpush1.msra.mxu0 0.0
    %3096 = vmatprep.subr.mxu0 0.0
    %3097 = vmatpush1.msra.mxu0 0.0
    %3098 = vmatprep.mubr.f32.mxu0 0.0
    %3099 = vmatmul.mubr.f32.gmra.mrb[0].mxu0 %v2845
    %v3100 = vpop.f32.mrb[0].mxu0
    %v3101 = vadd.f32 0.0, %v3100
    %v3102 = vpop.f32.mrb[0].mxu0
    %v3103 = vadd.f32 0.0, %v3102
    %3104 = vmatprep.mubr.f32.mxu0 0.0
    %3105 = vmatmul.mubr.f32.gmra.mrb[0].mxu0 %v2848
    %v3106 = vpop.f32.mrb[0].mxu0
    %v3107 = vadd.f32 0.0, %v3106
    %v3108 = vpop.f32.mrb[0].mxu0
    %v3109 = vadd.f32 0.0, %v3108
    %3110 = vmatprep.mubr.f32.mxu0 0.0
    %3111 = vmatmul.mubr.f32.gmra.mrb[0].mxu0 %v2851
    %v3112 = vpop.f32.mrb[0].mxu0
    %v3113 = vadd.f32 0.0, %v3112
    %v3114 = vpop.f32.mrb[0].mxu0
    %v3115 = vadd.f32 0.0, %v3114
    %3116 = vmatprep.mubr.f32.mxu0 0.0
    %3117 = vmatmul.mubr.f32.gmra.mrb[0].mxu0 %v2854
    %v3118 = vpop.f32.mrb[0].mxu0
    %v3119 = vadd.f32 0.0, %v3118
    %v3120 = vpop.f32.mrb[0].mxu0
    %v3121 = vadd.f32 0.0, %v3120
    %3122 = vdwg.mxu0
    %3123 = vmatprep.subr.mxu0 %v2723
    %3124 = vmatpush1.msra.mxu0 %v2722
    %3125 = vmatprep.subr.mxu0 %v2731
    %3126 = vmatpush1.msra.mxu0 %v2730
    %3127 = vmatprep.subr.mxu0 %v2739
    %3128 = vmatpush1.msra.mxu0 %v2738
    %3129 = vmatprep.subr.mxu0 %v2747
    %3130 = vmatpush1.msra.mxu0 %v2746
    %3131 = vmatprep.subr.mxu0 %v2755
    %3132 = vmatpush1.msra.mxu0 %v2754
    %3133 = vmatprep.subr.mxu0 %v2763
    %3134 = vmatpush1.msra.mxu0 %v2762
    %3135 = vmatprep.subr.mxu0 %v2771
    %3136 = vmatpush1.msra.mxu0 %v2770
    %3137 = vmatprep.subr.mxu0 %v2779
    %3138 = vmatpush1.msra.mxu0 %v2778
    %3139 = vmatprep.subr.mxu0 0.0
    %3140 = vmatpush1.msra.mxu0 0.0
    %3141 = vmatprep.subr.mxu0 0.0
    %3142 = vmatpush1.msra.mxu0 0.0
    %3143 = vmatprep.subr.mxu0 0.0
    %3144 = vmatpush1.msra.mxu0 0.0
    %3145 = vmatprep.subr.mxu0 0.0
    %3146 = vmatpush1.msra.mxu0 0.0
    %3147 = vmatprep.subr.mxu0 0.0
    %3148 = vmatpush1.msra.mxu0 0.0
    %3149 = vmatprep.subr.mxu0 0.0
    %3150 = vmatpush1.msra.mxu0 0.0
    %3151 = vmatprep.subr.mxu0 0.0
    %3152 = vmatpush1.msra.mxu0 0.0
    %3153 = vmatprep.subr.mxu0 0.0
    %3154 = vmatpush1.msra.mxu0 0.0
    %3155 = vmatprep.subr.mxu0 0.0
    %3156 = vmatpush1.msra.mxu0 0.0
    %3157 = vmatprep.subr.mxu0 0.0
    %3158 = vmatpush1.msra.mxu0 0.0
    %3159 = vmatprep.subr.mxu0 0.0
    %3160 = vmatpush1.msra.mxu0 0.0
    %3161 = vmatprep.subr.mxu0 0.0
    %3162 = vmatpush1.msra.mxu0 0.0
    %3163 = vmatprep.subr.mxu0 0.0
    %3164 = vmatpush1.msra.mxu0 0.0
    %3165 = vmatprep.subr.mxu0 0.0
    %3166 = vmatpush1.msra.mxu0 0.0
    %3167 = vmatprep.subr.mxu0 0.0
    %3168 = vmatpush1.msra.mxu0 0.0
    %3169 = vmatprep.subr.mxu0 0.0
    %3170 = vmatpush1.msra.mxu0 0.0
    %3171 = vmatprep.subr.mxu0 0.0
    %3172 = vmatpush1.msra.mxu0 0.0
    %3173 = vmatprep.subr.mxu0 0.0
    %3174 = vmatpush1.msra.mxu0 0.0
    %3175 = vmatprep.subr.mxu0 0.0
    %3176 = vmatpush1.msra.mxu0 0.0
    %3177 = vmatprep.subr.mxu0 0.0
    %3178 = vmatpush1.msra.mxu0 0.0
    %3179 = vmatprep.subr.mxu0 0.0
    %3180 = vmatpush1.msra.mxu0 0.0
    %3181 = vmatprep.subr.mxu0 0.0
    %3182 = vmatpush1.msra.mxu0 0.0
    %3183 = vmatprep.subr.mxu0 0.0
    %3184 = vmatpush1.msra.mxu0 0.0
    %3185 = vmatprep.subr.mxu0 0.0
    %3186 = vmatpush1.msra.mxu0 0.0
    %3187 = vmatprep.mubr.f32.mxu0 0.0
    %3188 = vmatmul.mubr.f32.gmra.mrb[0].mxu0 %v2845
    %v3189 = vpop.f32.mrb[0].mxu0
    %v3190 = vadd.f32 0.0, %v3189
    %v3191 = vpop.f32.mrb[0].mxu0
    %v3192 = vadd.f32 0.0, %v3191
    %3193 = vmatprep.mubr.f32.mxu0 0.0
    %3194 = vmatmul.mubr.f32.gmra.mrb[0].mxu0 %v2848
    %v3195 = vpop.f32.mrb[0].mxu0
    %v3196 = vadd.f32 0.0, %v3195
    %v3197 = vpop.f32.mrb[0].mxu0
    %v3198 = vadd.f32 0.0, %v3197
    %3199 = vmatprep.mubr.f32.mxu0 0.0
    %3200 = vmatmul.mubr.f32.gmra.mrb[0].mxu0 %v2851
    %v3201 = vpop.f32.mrb[0].mxu0
    %v3202 = vadd.f32 0.0, %v3201
    %v3203 = vpop.f32.mrb[0].mxu0
    %v3204 = vadd.f32 0.0, %v3203
    %3205 = vmatprep.mubr.f32.mxu0 0.0
    %3206 = vmatmul.mubr.f32.gmra.mrb[0].mxu0 %v2854
    %v3207 = vpop.f32.mrb[0].mxu0
    %v3208 = vadd.f32 0.0, %v3207
    %v3209 = vpop.f32.mrb[0].mxu0
    %v3210 = vadd.f32 0.0, %v3209
    %3211 = vdwg.mxu0
    %v3212 = vadd.f32 %v2278, %v2923
    %v3213 = vadd.f32 %v2280, %v2925
    %v3214 = vadd.f32 %v2367, %v3012
    %v3215 = vadd.f32 %v2369, %v3014
    %v3216 = vadd.f32 %v2456, %v3101
    %v3217 = vadd.f32 %v2458, %v3103
    %v3218 = vadd.f32 %v2545, %v3190
    %v3219 = vadd.f32 %v2547, %v3192
    %v3220 = vadd.f32 %v2284, %v2929
    %v3221 = vadd.f32 %v2286, %v2931
    %v3222 = vadd.f32 %v2373, %v3018
    %v3223 = vadd.f32 %v2375, %v3020
    %v3224 = vadd.f32 %v2462, %v3107
    %v3225 = vadd.f32 %v2464, %v3109
    %v3226 = vadd.f32 %v2551, %v3196
    %v3227 = vadd.f32 %v2553, %v3198
    %v3228 = vadd.f32 %v2290, %v2935
    %v3229 = vadd.f32 %v2292, %v2937
    %v3230 = vadd.f32 %v2379, %v3024
    %v3231 = vadd.f32 %v2381, %v3026
    %v3232 = vadd.f32 %v2468, %v3113
    %v3233 = vadd.f32 %v2470, %v3115
    %v3234 = vadd.f32 %v2557, %v3202
    %v3235 = vadd.f32 %v2559, %v3204
    %v3236 = vadd.f32 %v2296, %v2941
    %v3237 = vadd.f32 %v2298, %v2943
    %v3238 = vadd.f32 %v2385, %v3030
    %v3239 = vadd.f32 %v2387, %v3032
    %v3240 = vadd.f32 %v2474, %v3119
    %v3241 = vadd.f32 %v2476, %v3121
    %v3242 = vadd.f32 %v2563, %v3208
    %v3243 = vadd.f32 %v2565, %v3210
    %s3244 = scalar_lea.vmem [#allocation4], 96
    %v3245 = vld [vmem:[%s3244] sm:$0xff]
    %v3246 = vld [vmem:[%s3244 + $0x8] sm:$0xff]
    %v3247 = vld [vmem:[%s3244 + $0x10] sm:$0xff]
    %v3248 = vld [vmem:[%s3244 + $0x18] sm:$0xff]
    %3249 = vrot.lane.b32.xlu0 %v1414, 106
    %v3250 = vpop.permute.xlu0 %3249
    %3251 = vrot.lane.b32.xlu0 %v1415, 106
    %v3252 = vpop.permute.xlu0 %3251
    %3253 = vrot.lane.b32.xlu0 %v1416, 106
    %v3254 = vpop.permute.xlu0 %3253
    %3255 = vrot.lane.b32.xlu0 %v1417, 106
    %v3256 = vpop.permute.xlu0 %3255
    %3257 = vrot.lane.b32.xlu0 %v1418, 106
    %v3258 = vpop.permute.xlu0 %3257
    %3259 = vrot.lane.b32.xlu0 %v1419, 106
    %v3260 = vpop.permute.xlu0 %3259
    %3261 = vrot.lane.b32.xlu0 %v1420, 106
    %v3262 = vpop.permute.xlu0 %3261
    %3263 = vrot.lane.b32.xlu0 %v1421, 106
    %v3264 = vpop.permute.xlu0 %3263
    %3265 = vrot.lane.b32.xlu0 %v1422, 106
    %v3266 = vpop.permute.xlu0 %3265
    %3267 = vrot.lane.b32.xlu0 %v1423, 106
    %v3268 = vpop.permute.xlu0 %3267
    %3269 = vrot.lane.b32.xlu0 %v1424, 106
    %v3270 = vpop.permute.xlu0 %3269
    %3271 = vrot.lane.b32.xlu0 %v1425, 106
    %v3272 = vpop.permute.xlu0 %3271
    %3273 = vrot.lane.b32.xlu0 %v1426, 106
    %v3274 = vpop.permute.xlu0 %3273
    %3275 = vrot.lane.b32.xlu0 %v1427, 106
    %v3276 = vpop.permute.xlu0 %3275
    %3277 = vrot.lane.b32.xlu0 %v1428, 106
    %v3278 = vpop.permute.xlu0 %3277
    %3279 = vrot.lane.b32.xlu0 %v1429, 106
    %v3280 = vpop.permute.xlu0 %3279
    %3281 = vrot.lane.b32.xlu0 %v1430, 106
    %v3282 = vpop.permute.xlu0 %3281
    %3283 = vrot.lane.b32.xlu0 %v1431, 106
    %v3284 = vpop.permute.xlu0 %3283
    %3285 = vrot.lane.b32.xlu0 %v1432, 106
    %v3286 = vpop.permute.xlu0 %3285
    %3287 = vrot.lane.b32.xlu0 %v1433, 106
    %v3288 = vpop.permute.xlu0 %3287
    %3289 = vrot.lane.b32.xlu0 %v1434, 106
    %v3290 = vpop.permute.xlu0 %3289
    %3291 = vrot.lane.b32.xlu0 %v1435, 106
    %v3292 = vpop.permute.xlu0 %3291
    %3293 = vrot.lane.b32.xlu0 %v1436, 106
    %v3294 = vpop.permute.xlu0 %3293
    %3295 = vrot.lane.b32.xlu0 %v1437, 106
    %v3296 = vpop.permute.xlu0 %3295
    %3297 = vrot.lane.b32.xlu0 %v1438, 106
    %v3298 = vpop.permute.xlu0 %3297
    %3299 = vrot.lane.b32.xlu0 %v1439, 106
    %v3300 = vpop.permute.xlu0 %3299
    %3301 = vrot.lane.b32.xlu0 %v1440, 106
    %v3302 = vpop.permute.xlu0 %3301
    %3303 = vrot.lane.b32.xlu0 %v1441, 106
    %v3304 = vpop.permute.xlu0 %3303
    %3305 = vrot.lane.b32.xlu0 %v1442, 106
    %v3306 = vpop.permute.xlu0 %3305
    %3307 = vrot.lane.b32.xlu0 %v1443, 106
    %v3308 = vpop.permute.xlu0 %3307
    %3309 = vrot.lane.b32.xlu0 %v1444, 106
    %v3310 = vpop.permute.xlu0 %3309
    %3311 = vrot.lane.b32.xlu0 %v1445, 106
    %v3312 = vpop.permute.xlu0 %3311
    %3313 = vrot.lane.b32.xlu0 %v1446, 106
    %v3314 = vpop.permute.xlu0 %3313
    %3315 = vrot.lane.b32.xlu0 %v1447, 106
    %v3316 = vpop.permute.xlu0 %3315
    %3317 = vrot.lane.b32.xlu0 %v1448, 106
    %v3318 = vpop.permute.xlu0 %3317
    %3319 = vrot.lane.b32.xlu0 %v1449, 106
    %v3320 = vpop.permute.xlu0 %3319
    %3321 = vrot.lane.b32.xlu0 %v1450, 106
    %v3322 = vpop.permute.xlu0 %3321
    %3323 = vrot.lane.b32.xlu0 %v1451, 106
    %v3324 = vpop.permute.xlu0 %3323
    %3325 = vrot.lane.b32.xlu0 %v1452, 106
    %v3326 = vpop.permute.xlu0 %3325
    %3327 = vrot.lane.b32.xlu0 %v1453, 106
    %v3328 = vpop.permute.xlu0 %3327
    %3329 = vrot.lane.b32.xlu0 %v1454, 106
    %v3330 = vpop.permute.xlu0 %3329
    %3331 = vrot.lane.b32.xlu0 %v1455, 106
    %v3332 = vpop.permute.xlu0 %3331
    %3333 = vrot.lane.b32.xlu0 %v1456, 106
    %v3334 = vpop.permute.xlu0 %3333
    %3335 = vrot.lane.b32.xlu0 %v1457, 106
    %v3336 = vpop.permute.xlu0 %3335
    %3337 = vrot.lane.b32.xlu0 %v1458, 106
    %v3338 = vpop.permute.xlu0 %3337
    %3339 = vrot.lane.b32.xlu0 %v1459, 106
    %v3340 = vpop.permute.xlu0 %3339
    %3341 = vrot.lane.b32.xlu0 %v1460, 106
    %v3342 = vpop.permute.xlu0 %3341
    %3343 = vrot.lane.b32.xlu0 %v1461, 106
    %v3344 = vpop.permute.xlu0 %3343
    %3345 = vrot.lane.b32.xlu0 %v1462, 106
    %v3346 = vpop.permute.xlu0 %3345
    %3347 = vrot.lane.b32.xlu0 %v1463, 106
    %v3348 = vpop.permute.xlu0 %3347
    %3349 = vrot.lane.b32.xlu0 %v1464, 106
    %v3350 = vpop.permute.xlu0 %3349
    %3351 = vrot.lane.b32.xlu0 %v1465, 106
    %v3352 = vpop.permute.xlu0 %3351
    %3353 = vrot.lane.b32.xlu0 %v1466, 106
    %v3354 = vpop.permute.xlu0 %3353
    %3355 = vrot.lane.b32.xlu0 %v1467, 106
    %v3356 = vpop.permute.xlu0 %3355
    %3357 = vrot.lane.b32.xlu0 %v1468, 106
    %v3358 = vpop.permute.xlu0 %3357
    %3359 = vrot.lane.b32.xlu0 %v1469, 106
    %v3360 = vpop.permute.xlu0 %3359
    %3361 = vrot.lane.b32.xlu0 %v1470, 106
    %v3362 = vpop.permute.xlu0 %3361
    %3363 = vrot.lane.b32.xlu0 %v1471, 106
    %v3364 = vpop.permute.xlu0 %3363
    %3365 = vrot.lane.b32.xlu0 %v1472, 106
    %v3366 = vpop.permute.xlu0 %3365
    %3367 = vrot.lane.b32.xlu0 %v1473, 106
    %v3368 = vpop.permute.xlu0 %3367
    %3369 = vrot.lane.b32.xlu0 %v1474, 106
    %v3370 = vpop.permute.xlu0 %3369
    %3371 = vrot.lane.b32.xlu0 %v1475, 106
    %v3372 = vpop.permute.xlu0 %3371
    %3373 = vrot.lane.b32.xlu0 %v1476, 106
    %v3374 = vpop.permute.xlu0 %3373
    %3375 = vrot.lane.b32.xlu0 %v1477, 106
    %v3376 = vpop.permute.xlu0 %3375
    %3377 = vrot.lane.b32.xlu0 %v1478, 106
    %v3378 = vpop.permute.xlu0 %3377
    %3379 = vrot.lane.b32.xlu0 %v1479, 106
    %v3380 = vpop.permute.xlu0 %3379
    %3381 = vrot.lane.b32.xlu0 %v1480, 106
    %v3382 = vpop.permute.xlu0 %3381
    %3383 = vrot.lane.b32.xlu0 %v1481, 106
    %v3384 = vpop.permute.xlu0 %3383
    %3385 = vrot.lane.b32.xlu0 %v1482, 106
    %v3386 = vpop.permute.xlu0 %3385
    %3387 = vrot.lane.b32.xlu0 %v1483, 106
    %v3388 = vpop.permute.xlu0 %3387
    %3389 = vrot.lane.b32.xlu0 %v1484, 106
    %v3390 = vpop.permute.xlu0 %3389
    %3391 = vrot.lane.b32.xlu0 %v1485, 106
    %v3392 = vpop.permute.xlu0 %3391
    %v3393 = vsel %vm150, %v3250, %v3252
    %v3394 = vsel %vm150, %v3252, %v3254
    %v3395 = vsel %vm150, %v3254, %v3256
    %v3396 = vsel %vm150, %v3256, %v3258
    %v3397 = vsel %vm150, %v3258, %v3260
    %v3398 = vsel %vm150, %v3260, %v3262
    %v3399 = vsel %vm150, %v3262, %v3264
    %v3400 = vsel %vm150, %v3264, %v3266
    %v3401 = vsel %vm150, %v3268, %v3270
    %v3402 = vsel %vm150, %v3270, %v3272
    %v3403 = vsel %vm150, %v3272, %v3274
    %v3404 = vsel %vm150, %v3274, %v3276
    %v3405 = vsel %vm150, %v3276, %v3278
    %v3406 = vsel %vm150, %v3278, %v3280
    %v3407 = vsel %vm150, %v3280, %v3282
    %v3408 = vsel %vm150, %v3282, %v3284
    %v3409 = vsel %vm150, %v3286, %v3288
    %v3410 = vsel %vm150, %v3288, %v3290
    %v3411 = vsel %vm150, %v3290, %v3292
    %v3412 = vsel %vm150, %v3292, %v3294
    %v3413 = vsel %vm150, %v3294, %v3296
    %v3414 = vsel %vm150, %v3296, %v3298
    %v3415 = vsel %vm150, %v3298, %v3300
    %v3416 = vsel %vm150, %v3300, %v3302
    %v3417 = vsel %vm150, %v3304, %v3306
    %v3418 = vsel %vm150, %v3306, %v3308
    %v3419 = vsel %vm150, %v3308, %v3310
    %v3420 = vsel %vm150, %v3310, %v3312
    %v3421 = vsel %vm150, %v3312, %v3314
    %v3422 = vsel %vm150, %v3314, %v3316
    %v3423 = vsel %vm150, %v3316, %v3318
    %v3424 = vsel %vm150, %v3318, %v3320
    %v3425 = vsel %vm150, %v3322, %v3324
    %v3426 = vsel %vm150, %v3324, %v3326
    %v3427 = vsel %vm150, %v3326, %v3328
    %v3428 = vsel %vm150, %v3328, %v3330
    %v3429 = vsel %vm150, %v3330, %v3332
    %v3430 = vsel %vm150, %v3332, %v3334
    %v3431 = vsel %vm150, %v3334, %v3336
    %v3432 = vsel %vm150, %v3336, %v3338
    %v3433 = vsel %vm150, %v3340, %v3342
    %v3434 = vsel %vm150, %v3342, %v3344
    %v3435 = vsel %vm150, %v3344, %v3346
    %v3436 = vsel %vm150, %v3346, %v3348
    %v3437 = vsel %vm150, %v3348, %v3350
    %v3438 = vsel %vm150, %v3350, %v3352
    %v3439 = vsel %vm150, %v3352, %v3354
    %v3440 = vsel %vm150, %v3354, %v3356
    %v3441 = vsel %vm150, %v3358, %v3360
    %v3442 = vsel %vm150, %v3360, %v3362
    %v3443 = vsel %vm150, %v3362, %v3364
    %v3444 = vsel %vm150, %v3364, %v3366
    %v3445 = vsel %vm150, %v3366, %v3368
    %v3446 = vsel %vm150, %v3368, %v3370
    %v3447 = vsel %vm150, %v3370, %v3372
    %v3448 = vsel %vm150, %v3372, %v3374
    %v3449 = vsel %vm150, %v3376, %v3378
    %v3450 = vsel %vm150, %v3378, %v3380
    %v3451 = vsel %vm150, %v3380, %v3382
    %v3452 = vsel %vm150, %v3382, %v3384
    %v3453 = vsel %vm150, %v3384, %v3386
    %v3454 = vsel %vm150, %v3386, %v3388
    %v3455 = vsel %vm150, %v3388, %v3390
    %v3456 = vsel %vm150, %v3390, %v3392
    %v3522 = vsel %vm1830, %v3245, 0
    %v3525 = vsel %vm1830, %v3246, 0
    %v3528 = vsel %vm1830, %v3247, 0
    %v3531 = vsel %vm1830, %v3248, 0
    %3533 = vmatprep.subr.mxu0 %v3394
    %3534 = vmatpush1.msra.mxu0 %v3393
    %3535 = vmatprep.subr.mxu0 %v3402
    %3536 = vmatpush1.msra.mxu0 %v3401
    %3537 = vmatprep.subr.mxu0 %v3410
    %3538 = vmatpush1.msra.mxu0 %v3409
    %3539 = vmatprep.subr.mxu0 %v3418
    %3540 = vmatpush1.msra.mxu0 %v3417
    %3541 = vmatprep.subr.mxu0 %v3426
    %3542 = vmatpush1.msra.mxu0 %v3425
    %3543 = vmatprep.subr.mxu0 %v3434
    %3544 = vmatpush1.msra.mxu0 %v3433
    %3545 = vmatprep.subr.mxu0 %v3442
    %3546 = vmatpush1.msra.mxu0 %v3441
    %3547 = vmatprep.subr.mxu0 %v3450
    %3548 = vmatpush1.msra.mxu0 %v3449
    %3549 = vmatprep.subr.mxu0 0.0
    %3550 = vmatpush1.msra.mxu0 0.0
    %3551 = vmatprep.subr.mxu0 0.0
    %3552 = vmatpush1.msra.mxu0 0.0
    %3553 = vmatprep.subr.mxu0 0.0
    %3554 = vmatpush1.msra.mxu0 0.0
    %3555 = vmatprep.subr.mxu0 0.0
    %3556 = vmatpush1.msra.mxu0 0.0
    %3557 = vmatprep.subr.mxu0 0.0
    %3558 = vmatpush1.msra.mxu0 0.0
    %3559 = vmatprep.subr.mxu0 0.0
    %3560 = vmatpush1.msra.mxu0 0.0
    %3561 = vmatprep.subr.mxu0 0.0
    %3562 = vmatpush1.msra.mxu0 0.0
    %3563 = vmatprep.subr.mxu0 0.0
    %3564 = vmatpush1.msra.mxu0 0.0
    %3565 = vmatprep.subr.mxu0 0.0
    %3566 = vmatpush1.msra.mxu0 0.0
    %3567 = vmatprep.subr.mxu0 0.0
    %3568 = vmatpush1.msra.mxu0 0.0
    %3569 = vmatprep.subr.mxu0 0.0
    %3570 = vmatpush1.msra.mxu0 0.0
    %3571 = vmatprep.subr.mxu0 0.0
    %3572 = vmatpush1.msra.mxu0 0.0
    %3573 = vmatprep.subr.mxu0 0.0
    %3574 = vmatpush1.msra.mxu0 0.0
    %3575 = vmatprep.subr.mxu0 0.0
    %3576 = vmatpush1.msra.mxu0 0.0
    %3577 = vmatprep.subr.mxu0 0.0
    %3578 = vmatpush1.msra.mxu0 0.0
    %3579 = vmatprep.subr.mxu0 0.0
    %3580 = vmatpush1.msra.mxu0 0.0
    %3581 = vmatprep.subr.mxu0 0.0
    %3582 = vmatpush1.msra.mxu0 0.0
    %3583 = vmatprep.subr.mxu0 0.0
    %3584 = vmatpush1.msra.mxu0 0.0
    %3585 = vmatprep.subr.mxu0 0.0
    %3586 = vmatpush1.msra.mxu0 0.0
    %3587 = vmatprep.subr.mxu0 0.0
    %3588 = vmatpush1.msra.mxu0 0.0
    %3589 = vmatprep.subr.mxu0 0.0
    %3590 = vmatpush1.msra.mxu0 0.0
    %3591 = vmatprep.subr.mxu0 0.0
    %3592 = vmatpush1.msra.mxu0 0.0
    %3593 = vmatprep.subr.mxu0 0.0
    %3594 = vmatpush1.msra.mxu0 0.0
    %3595 = vmatprep.subr.mxu0 0.0
    %3596 = vmatpush1.msra.mxu0 0.0
    %3597 = vmatprep.mubr.f32.mxu0 0.0
    %3598 = vmatmul.mubr.f32.gmra.mrb[0].mxu0 %v3522
    %v3599 = vpop.f32.mrb[0].mxu0
    %v3600 = vadd.f32 0.0, %v3599
    %v3601 = vpop.f32.mrb[0].mxu0
    %v3602 = vadd.f32 0.0, %v3601
    %3603 = vmatprep.mubr.f32.mxu0 0.0
    %3604 = vmatmul.mubr.f32.gmra.mrb[0].mxu0 %v3525
    %v3605 = vpop.f32.mrb[0].mxu0
    %v3606 = vadd.f32 0.0, %v3605
    %v3607 = vpop.f32.mrb[0].mxu0
    %v3608 = vadd.f32 0.0, %v3607
    %3609 = vmatprep.mubr.f32.mxu0 0.0
    %3610 = vmatmul.mubr.f32.gmra.mrb[0].mxu0 %v3528
    %v3611 = vpop.f32.mrb[0].mxu0
    %v3612 = vadd.f32 0.0, %v3611
    %v3613 = vpop.f32.mrb[0].mxu0
    %v3614 = vadd.f32 0.0, %v3613
    %3615 = vmatprep.mubr.f32.mxu0 0.0
    %3616 = vmatmul.mubr.f32.gmra.mrb[0].mxu0 %v3531
    %v3617 = vpop.f32.mrb[0].mxu0
    %v3618 = vadd.f32 0.0, %v3617
    %v3619 = vpop.f32.mrb[0].mxu0
    %v3620 = vadd.f32 0.0, %v3619
    %3621 = vdwg.mxu0
    %3622 = vmatprep.subr.mxu0 %v3396
    %3623 = vmatpush1.msra.mxu0 %v3395
    %3624 = vmatprep.subr.mxu0 %v3404
    %3625 = vmatpush1.msra.mxu0 %v3403
    %3626 = vmatprep.subr.mxu0 %v3412
    %3627 = vmatpush1.msra.mxu0 %v3411
    %3628 = vmatprep.subr.mxu0 %v3420
    %3629 = vmatpush1.msra.mxu0 %v3419
    %3630 = vmatprep.subr.mxu0 %v3428
    %3631 = vmatpush1.msra.mxu0 %v3427
    %3632 = vmatprep.subr.mxu0 %v3436
    %3633 = vmatpush1.msra.mxu0 %v3435
    %3634 = vmatprep.subr.mxu0 %v3444
    %3635 = vmatpush1.msra.mxu0 %v3443
    %3636 = vmatprep.subr.mxu0 %v3452
    %3637 = vmatpush1.msra.mxu0 %v3451
    %3638 = vmatprep.subr.mxu0 0.0
    %3639 = vmatpush1.msra.mxu0 0.0
    %3640 = vmatprep.subr.mxu0 0.0
    %3641 = vmatpush1.msra.mxu0 0.0
    %3642 = vmatprep.subr.mxu0 0.0
    %3643 = vmatpush1.msra.mxu0 0.0
    %3644 = vmatprep.subr.mxu0 0.0
    %3645 = vmatpush1.msra.mxu0 0.0
    %3646 = vmatprep.subr.mxu0 0.0
    %3647 = vmatpush1.msra.mxu0 0.0
    %3648 = vmatprep.subr.mxu0 0.0
    %3649 = vmatpush1.msra.mxu0 0.0
    %3650 = vmatprep.subr.mxu0 0.0
    %3651 = vmatpush1.msra.mxu0 0.0
    %3652 = vmatprep.subr.mxu0 0.0
    %3653 = vmatpush1.msra.mxu0 0.0
    %3654 = vmatprep.subr.mxu0 0.0
    %3655 = vmatpush1.msra.mxu0 0.0
    %3656 = vmatprep.subr.mxu0 0.0
    %3657 = vmatpush1.msra.mxu0 0.0
    %3658 = vmatprep.subr.mxu0 0.0
    %3659 = vmatpush1.msra.mxu0 0.0
    %3660 = vmatprep.subr.mxu0 0.0
    %3661 = vmatpush1.msra.mxu0 0.0
    %3662 = vmatprep.subr.mxu0 0.0
    %3663 = vmatpush1.msra.mxu0 0.0
    %3664 = vmatprep.subr.mxu0 0.0
    %3665 = vmatpush1.msra.mxu0 0.0
    %3666 = vmatprep.subr.mxu0 0.0
    %3667 = vmatpush1.msra.mxu0 0.0
    %3668 = vmatprep.subr.mxu0 0.0
    %3669 = vmatpush1.msra.mxu0 0.0
    %3670 = vmatprep.subr.mxu0 0.0
    %3671 = vmatpush1.msra.mxu0 0.0
    %3672 = vmatprep.subr.mxu0 0.0
    %3673 = vmatpush1.msra.mxu0 0.0
    %3674 = vmatprep.subr.mxu0 0.0
    %3675 = vmatpush1.msra.mxu0 0.0
    %3676 = vmatprep.subr.mxu0 0.0
    %3677 = vmatpush1.msra.mxu0 0.0
    %3678 = vmatprep.subr.mxu0 0.0
    %3679 = vmatpush1.msra.mxu0 0.0
    %3680 = vmatprep.subr.mxu0 0.0
    %3681 = vmatpush1.msra.mxu0 0.0
    %3682 = vmatprep.subr.mxu0 0.0
    %3683 = vmatpush1.msra.mxu0 0.0
    %3684 = vmatprep.subr.mxu0 0.0
    %3685 = vmatpush1.msra.mxu0 0.0
    %3686 = vmatprep.mubr.f32.mxu0 0.0
    %3687 = vmatmul.mubr.f32.gmra.mrb[0].mxu0 %v3522
    %v3688 = vpop.f32.mrb[0].mxu0
    %v3689 = vadd.f32 0.0, %v3688
    %v3690 = vpop.f32.mrb[0].mxu0
    %v3691 = vadd.f32 0.0, %v3690
    %3692 = vmatprep.mubr.f32.mxu0 0.0
    %3693 = vmatmul.mubr.f32.gmra.mrb[0].mxu0 %v3525
    %v3694 = vpop.f32.mrb[0].mxu0
    %v3695 = vadd.f32 0.0, %v3694
    %v3696 = vpop.f32.mrb[0].mxu0
    %v3697 = vadd.f32 0.0, %v3696
    %3698 = vmatprep.mubr.f32.mxu0 0.0
    %3699 = vmatmul.mubr.f32.gmra.mrb[0].mxu0 %v3528
    %v3700 = vpop.f32.mrb[0].mxu0
    %v3701 = vadd.f32 0.0, %v3700
    %v3702 = vpop.f32.mrb[0].mxu0
    %v3703 = vadd.f32 0.0, %v3702
    %3704 = vmatprep.mubr.f32.mxu0 0.0
    %3705 = vmatmul.mubr.f32.gmra.mrb[0].mxu0 %v3531
    %v3706 = vpop.f32.mrb[0].mxu0
    %v3707 = vadd.f32 0.0, %v3706
    %v3708 = vpop.f32.mrb[0].mxu0
    %v3709 = vadd.f32 0.0, %v3708
    %3710 = vdwg.mxu0
    %3711 = vmatprep.subr.mxu0 %v3398
    %3712 = vmatpush1.msra.mxu0 %v3397
    %3713 = vmatprep.subr.mxu0 %v3406
    %3714 = vmatpush1.msra.mxu0 %v3405
    %3715 = vmatprep.subr.mxu0 %v3414
    %3716 = vmatpush1.msra.mxu0 %v3413
    %3717 = vmatprep.subr.mxu0 %v3422
    %3718 = vmatpush1.msra.mxu0 %v3421
    %3719 = vmatprep.subr.mxu0 %v3430
    %3720 = vmatpush1.msra.mxu0 %v3429
    %3721 = vmatprep.subr.mxu0 %v3438
    %3722 = vmatpush1.msra.mxu0 %v3437
    %3723 = vmatprep.subr.mxu0 %v3446
    %3724 = vmatpush1.msra.mxu0 %v3445
    %3725 = vmatprep.subr.mxu0 %v3454
    %3726 = vmatpush1.msra.mxu0 %v3453
    %3727 = vmatprep.subr.mxu0 0.0
    %3728 = vmatpush1.msra.mxu0 0.0
    %3729 = vmatprep.subr.mxu0 0.0
    %3730 = vmatpush1.msra.mxu0 0.0
    %3731 = vmatprep.subr.mxu0 0.0
    %3732 = vmatpush1.msra.mxu0 0.0
    %3733 = vmatprep.subr.mxu0 0.0
    %3734 = vmatpush1.msra.mxu0 0.0
    %3735 = vmatprep.subr.mxu0 0.0
    %3736 = vmatpush1.msra.mxu0 0.0
    %3737 = vmatprep.subr.mxu0 0.0
    %3738 = vmatpush1.msra.mxu0 0.0
    %3739 = vmatprep.subr.mxu0 0.0
    %3740 = vmatpush1.msra.mxu0 0.0
    %3741 = vmatprep.subr.mxu0 0.0
    %3742 = vmatpush1.msra.mxu0 0.0
    %3743 = vmatprep.subr.mxu0 0.0
    %3744 = vmatpush1.msra.mxu0 0.0
    %3745 = vmatprep.subr.mxu0 0.0
    %3746 = vmatpush1.msra.mxu0 0.0
    %3747 = vmatprep.subr.mxu0 0.0
    %3748 = vmatpush1.msra.mxu0 0.0
    %3749 = vmatprep.subr.mxu0 0.0
    %3750 = vmatpush1.msra.mxu0 0.0
    %3751 = vmatprep.subr.mxu0 0.0
    %3752 = vmatpush1.msra.mxu0 0.0
    %3753 = vmatprep.subr.mxu0 0.0
    %3754 = vmatpush1.msra.mxu0 0.0
    %3755 = vmatprep.subr.mxu0 0.0
    %3756 = vmatpush1.msra.mxu0 0.0
    %3757 = vmatprep.subr.mxu0 0.0
    %3758 = vmatpush1.msra.mxu0 0.0
    %3759 = vmatprep.subr.mxu0 0.0
    %3760 = vmatpush1.msra.mxu0 0.0
    %3761 = vmatprep.subr.mxu0 0.0
    %3762 = vmatpush1.msra.mxu0 0.0
    %3763 = vmatprep.subr.mxu0 0.0
    %3764 = vmatpush1.msra.mxu0 0.0
    %3765 = vmatprep.subr.mxu0 0.0
    %3766 = vmatpush1.msra.mxu0 0.0
    %3767 = vmatprep.subr.mxu0 0.0
    %3768 = vmatpush1.msra.mxu0 0.0
    %3769 = vmatprep.subr.mxu0 0.0
    %3770 = vmatpush1.msra.mxu0 0.0
    %3771 = vmatprep.subr.mxu0 0.0
    %3772 = vmatpush1.msra.mxu0 0.0
    %3773 = vmatprep.subr.mxu0 0.0
    %3774 = vmatpush1.msra.mxu0 0.0
    %3775 = vmatprep.mubr.f32.mxu0 0.0
    %3776 = vmatmul.mubr.f32.gmra.mrb[0].mxu0 %v3522
    %v3777 = vpop.f32.mrb[0].mxu0
    %v3778 = vadd.f32 0.0, %v3777
    %v3779 = vpop.f32.mrb[0].mxu0
    %v3780 = vadd.f32 0.0, %v3779
    %3781 = vmatprep.mubr.f32.mxu0 0.0
    %3782 = vmatmul.mubr.f32.gmra.mrb[0].mxu0 %v3525
    %v3783 = vpop.f32.mrb[0].mxu0
    %v3784 = vadd.f32 0.0, %v3783
    %v3785 = vpop.f32.mrb[0].mxu0
    %v3786 = vadd.f32 0.0, %v3785
    %3787 = vmatprep.mubr.f32.mxu0 0.0
    %3788 = vmatmul.mubr.f32.gmra.mrb[0].mxu0 %v3528
    %v3789 = vpop.f32.mrb[0].mxu0
    %v3790 = vadd.f32 0.0, %v3789
    %v3791 = vpop.f32.mrb[0].mxu0
    %v3792 = vadd.f32 0.0, %v3791
    %3793 = vmatprep.mubr.f32.mxu0 0.0
    %3794 = vmatmul.mubr.f32.gmra.mrb[0].mxu0 %v3531
    %v3795 = vpop.f32.mrb[0].mxu0
    %v3796 = vadd.f32 0.0, %v3795
    %v3797 = vpop.f32.mrb[0].mxu0
    %v3798 = vadd.f32 0.0, %v3797
    %3799 = vdwg.mxu0
    %3800 = vmatprep.subr.mxu0 %v3400
    %3801 = vmatpush1.msra.mxu0 %v3399
    %3802 = vmatprep.subr.mxu0 %v3408
    %3803 = vmatpush1.msra.mxu0 %v3407
    %3804 = vmatprep.subr.mxu0 %v3416
    %3805 = vmatpush1.msra.mxu0 %v3415
    %3806 = vmatprep.subr.mxu0 %v3424
    %3807 = vmatpush1.msra.mxu0 %v3423
    %3808 = vmatprep.subr.mxu0 %v3432
    %3809 = vmatpush1.msra.mxu0 %v3431
    %3810 = vmatprep.subr.mxu0 %v3440
    %3811 = vmatpush1.msra.mxu0 %v3439
    %3812 = vmatprep.subr.mxu0 %v3448
    %3813 = vmatpush1.msra.mxu0 %v3447
    %3814 = vmatprep.subr.mxu0 %v3456
    %3815 = vmatpush1.msra.mxu0 %v3455
    %3816 = vmatprep.subr.mxu0 0.0
    %3817 = vmatpush1.msra.mxu0 0.0
    %3818 = vmatprep.subr.mxu0 0.0
    %3819 = vmatpush1.msra.mxu0 0.0
    %3820 = vmatprep.subr.mxu0 0.0
    %3821 = vmatpush1.msra.mxu0 0.0
    %3822 = vmatprep.subr.mxu0 0.0
    %3823 = vmatpush1.msra.mxu0 0.0
    %3824 = vmatprep.subr.mxu0 0.0
    %3825 = vmatpush1.msra.mxu0 0.0
    %3826 = vmatprep.subr.mxu0 0.0
    %3827 = vmatpush1.msra.mxu0 0.0
    %3828 = vmatprep.subr.mxu0 0.0
    %3829 = vmatpush1.msra.mxu0 0.0
    %3830 = vmatprep.subr.mxu0 0.0
    %3831 = vmatpush1.msra.mxu0 0.0
    %3832 = vmatprep.subr.mxu0 0.0
    %3833 = vmatpush1.msra.mxu0 0.0
    %3834 = vmatprep.subr.mxu0 0.0
    %3835 = vmatpush1.msra.mxu0 0.0
    %3836 = vmatprep.subr.mxu0 0.0
    %3837 = vmatpush1.msra.mxu0 0.0
    %3838 = vmatprep.subr.mxu0 0.0
    %3839 = vmatpush1.msra.mxu0 0.0
    %3840 = vmatprep.subr.mxu0 0.0
    %3841 = vmatpush1.msra.mxu0 0.0
    %3842 = vmatprep.subr.mxu0 0.0
    %3843 = vmatpush1.msra.mxu0 0.0
    %3844 = vmatprep.subr.mxu0 0.0
    %3845 = vmatpush1.msra.mxu0 0.0
    %3846 = vmatprep.subr.mxu0 0.0
    %3847 = vmatpush1.msra.mxu0 0.0
    %3848 = vmatprep.subr.mxu0 0.0
    %3849 = vmatpush1.msra.mxu0 0.0
    %3850 = vmatprep.subr.mxu0 0.0
    %3851 = vmatpush1.msra.mxu0 0.0
    %3852 = vmatprep.subr.mxu0 0.0
    %3853 = vmatpush1.msra.mxu0 0.0
    %3854 = vmatprep.subr.mxu0 0.0
    %3855 = vmatpush1.msra.mxu0 0.0
    %3856 = vmatprep.subr.mxu0 0.0
    %3857 = vmatpush1.msra.mxu0 0.0
    %3858 = vmatprep.subr.mxu0 0.0
    %3859 = vmatpush1.msra.mxu0 0.0
    %3860 = vmatprep.subr.mxu0 0.0
    %3861 = vmatpush1.msra.mxu0 0.0
    %3862 = vmatprep.subr.mxu0 0.0
    %3863 = vmatpush1.msra.mxu0 0.0
    %3864 = vmatprep.mubr.f32.mxu0 0.0
    %3865 = vmatmul.mubr.f32.gmra.mrb[0].mxu0 %v3522
    %v3866 = vpop.f32.mrb[0].mxu0
    %v3867 = vadd.f32 0.0, %v3866
    %v3868 = vpop.f32.mrb[0].mxu0
    %v3869 = vadd.f32 0.0, %v3868
    %3870 = vmatprep.mubr.f32.mxu0 0.0
    %3871 = vmatmul.mubr.f32.gmra.mrb[0].mxu0 %v3525
    %v3872 = vpop.f32.mrb[0].mxu0
    %v3873 = vadd.f32 0.0, %v3872
    %v3874 = vpop.f32.mrb[0].mxu0
    %v3875 = vadd.f32 0.0, %v3874
    %3876 = vmatprep.mubr.f32.mxu0 0.0
    %3877 = vmatmul.mubr.f32.gmra.mrb[0].mxu0 %v3528
    %v3878 = vpop.f32.mrb[0].mxu0
    %v3879 = vadd.f32 0.0, %v3878
    %v3880 = vpop.f32.mrb[0].mxu0
    %v3881 = vadd.f32 0.0, %v3880
    %3882 = vmatprep.mubr.f32.mxu0 0.0
    %3883 = vmatmul.mubr.f32.gmra.mrb[0].mxu0 %v3531
    %v3884 = vpop.f32.mrb[0].mxu0
    %v3885 = vadd.f32 0.0, %v3884
    %v3886 = vpop.f32.mrb[0].mxu0
    %v3887 = vadd.f32 0.0, %v3886
    %3888 = vdwg.mxu0
    %v3889 = vadd.f32 %v3212, %v3600
    %v3890 = vadd.f32 %v3213, %v3602
    %v3891 = vadd.f32 %v3214, %v3689
    %v3892 = vadd.f32 %v3215, %v3691
    %v3893 = vadd.f32 %v3216, %v3778
    %v3894 = vadd.f32 %v3217, %v3780
    %v3895 = vadd.f32 %v3218, %v3867
    %v3896 = vadd.f32 %v3219, %v3869
    %v3897 = vadd.f32 %v3220, %v3606
    %v3898 = vadd.f32 %v3221, %v3608
    %v3899 = vadd.f32 %v3222, %v3695
    %v3900 = vadd.f32 %v3223, %v3697
    %v3901 = vadd.f32 %v3224, %v3784
    %v3902 = vadd.f32 %v3225, %v3786
    %v3903 = vadd.f32 %v3226, %v3873
    %v3904 = vadd.f32 %v3227, %v3875
    %v3905 = vadd.f32 %v3228, %v3612
    %v3906 = vadd.f32 %v3229, %v3614
    %v3907 = vadd.f32 %v3230, %v3701
    %v3908 = vadd.f32 %v3231, %v3703
    %v3909 = vadd.f32 %v3232, %v3790
    %v3910 = vadd.f32 %v3233, %v3792
    %v3911 = vadd.f32 %v3234, %v3879
    %v3912 = vadd.f32 %v3235, %v3881
    %v3913 = vadd.f32 %v3236, %v3618
    %v3914 = vadd.f32 %v3237, %v3620
    %v3915 = vadd.f32 %v3238, %v3707
    %v3916 = vadd.f32 %v3239, %v3709
    %v3917 = vadd.f32 %v3240, %v3796
    %v3918 = vadd.f32 %v3241, %v3798
    %v3919 = vadd.f32 %v3242, %v3885
    %v3920 = vadd.f32 %v3243, %v3887
    %s3921 = scalar_lea.vmem [#allocation4], 128
    %v3922 = vld [vmem:[%s3921] sm:$0xff]
    %v3923 = vld [vmem:[%s3921 + $0x8] sm:$0xff]
    %v3924 = vld [vmem:[%s3921 + $0x10] sm:$0xff]
    %v3925 = vld [vmem:[%s3921 + $0x18] sm:$0xff]
    %3926 = vrot.lane.b32.xlu0 %v1414, 105
    %v3927 = vpop.permute.xlu0 %3926
    %3928 = vrot.lane.b32.xlu0 %v1415, 105
    %v3929 = vpop.permute.xlu0 %3928
    %3930 = vrot.lane.b32.xlu0 %v1416, 105
    %v3931 = vpop.permute.xlu0 %3930
    %3932 = vrot.lane.b32.xlu0 %v1417, 105
    %v3933 = vpop.permute.xlu0 %3932
    %3934 = vrot.lane.b32.xlu0 %v1418, 105
    %v3935 = vpop.permute.xlu0 %3934
    %3936 = vrot.lane.b32.xlu0 %v1419, 105
    %v3937 = vpop.permute.xlu0 %3936
    %3938 = vrot.lane.b32.xlu0 %v1420, 105
    %v3939 = vpop.permute.xlu0 %3938
    %3940 = vrot.lane.b32.xlu0 %v1421, 105
    %v3941 = vpop.permute.xlu0 %3940
    %3942 = vrot.lane.b32.xlu0 %v1422, 105
    %v3943 = vpop.permute.xlu0 %3942
    %3944 = vrot.lane.b32.xlu0 %v1423, 105
    %v3945 = vpop.permute.xlu0 %3944
    %3946 = vrot.lane.b32.xlu0 %v1424, 105
    %v3947 = vpop.permute.xlu0 %3946
    %3948 = vrot.lane.b32.xlu0 %v1425, 105
    %v3949 = vpop.permute.xlu0 %3948
    %3950 = vrot.lane.b32.xlu0 %v1426, 105
    %v3951 = vpop.permute.xlu0 %3950
    %3952 = vrot.lane.b32.xlu0 %v1427, 105
    %v3953 = vpop.permute.xlu0 %3952
    %3954 = vrot.lane.b32.xlu0 %v1428, 105
    %v3955 = vpop.permute.xlu0 %3954
    %3956 = vrot.lane.b32.xlu0 %v1429, 105
    %v3957 = vpop.permute.xlu0 %3956
    %3958 = vrot.lane.b32.xlu0 %v1430, 105
    %v3959 = vpop.permute.xlu0 %3958
    %3960 = vrot.lane.b32.xlu0 %v1431, 105
    %v3961 = vpop.permute.xlu0 %3960
    %3962 = vrot.lane.b32.xlu0 %v1432, 105
    %v3963 = vpop.permute.xlu0 %3962
    %3964 = vrot.lane.b32.xlu0 %v1433, 105
    %v3965 = vpop.permute.xlu0 %3964
    %3966 = vrot.lane.b32.xlu0 %v1434, 105
    %v3967 = vpop.permute.xlu0 %3966
    %3968 = vrot.lane.b32.xlu0 %v1435, 105
    %v3969 = vpop.permute.xlu0 %3968
    %3970 = vrot.lane.b32.xlu0 %v1436, 105
    %v3971 = vpop.permute.xlu0 %3970
    %3972 = vrot.lane.b32.xlu0 %v1437, 105
    %v3973 = vpop.permute.xlu0 %3972
    %3974 = vrot.lane.b32.xlu0 %v1438, 105
    %v3975 = vpop.permute.xlu0 %3974
    %3976 = vrot.lane.b32.xlu0 %v1439, 105
    %v3977 = vpop.permute.xlu0 %3976
    %3978 = vrot.lane.b32.xlu0 %v1440, 105
    %v3979 = vpop.permute.xlu0 %3978
    %3980 = vrot.lane.b32.xlu0 %v1441, 105
    %v3981 = vpop.permute.xlu0 %3980
    %3982 = vrot.lane.b32.xlu0 %v1442, 105
    %v3983 = vpop.permute.xlu0 %3982
    %3984 = vrot.lane.b32.xlu0 %v1443, 105
    %v3985 = vpop.permute.xlu0 %3984
    %3986 = vrot.lane.b32.xlu0 %v1444, 105
    %v3987 = vpop.permute.xlu0 %3986
    %3988 = vrot.lane.b32.xlu0 %v1445, 105
    %v3989 = vpop.permute.xlu0 %3988
    %3990 = vrot.lane.b32.xlu0 %v1446, 105
    %v3991 = vpop.permute.xlu0 %3990
    %3992 = vrot.lane.b32.xlu0 %v1447, 105
    %v3993 = vpop.permute.xlu0 %3992
    %3994 = vrot.lane.b32.xlu0 %v1448, 105
    %v3995 = vpop.permute.xlu0 %3994
    %3996 = vrot.lane.b32.xlu0 %v1449, 105
    %v3997 = vpop.permute.xlu0 %3996
    %3998 = vrot.lane.b32.xlu0 %v1450, 105
    %v3999 = vpop.permute.xlu0 %3998
    %4000 = vrot.lane.b32.xlu0 %v1451, 105
    %v4001 = vpop.permute.xlu0 %4000
    %4002 = vrot.lane.b32.xlu0 %v1452, 105
    %v4003 = vpop.permute.xlu0 %4002
    %4004 = vrot.lane.b32.xlu0 %v1453, 105
    %v4005 = vpop.permute.xlu0 %4004
    %4006 = vrot.lane.b32.xlu0 %v1454, 105
    %v4007 = vpop.permute.xlu0 %4006
    %4008 = vrot.lane.b32.xlu0 %v1455, 105
    %v4009 = vpop.permute.xlu0 %4008
    %4010 = vrot.lane.b32.xlu0 %v1456, 105
    %v4011 = vpop.permute.xlu0 %4010
    %4012 = vrot.lane.b32.xlu0 %v1457, 105
    %v4013 = vpop.permute.xlu0 %4012
    %4014 = vrot.lane.b32.xlu0 %v1458, 105
    %v4015 = vpop.permute.xlu0 %4014
    %4016 = vrot.lane.b32.xlu0 %v1459, 105
    %v4017 = vpop.permute.xlu0 %4016
    %4018 = vrot.lane.b32.xlu0 %v1460, 105
    %v4019 = vpop.permute.xlu0 %4018
    %4020 = vrot.lane.b32.xlu0 %v1461, 105
    %v4021 = vpop.permute.xlu0 %4020
    %4022 = vrot.lane.b32.xlu0 %v1462, 105
    %v4023 = vpop.permute.xlu0 %4022
    %4024 = vrot.lane.b32.xlu0 %v1463, 105
    %v4025 = vpop.permute.xlu0 %4024
    %4026 = vrot.lane.b32.xlu0 %v1464, 105
    %v4027 = vpop.permute.xlu0 %4026
    %4028 = vrot.lane.b32.xlu0 %v1465, 105
    %v4029 = vpop.permute.xlu0 %4028
    %4030 = vrot.lane.b32.xlu0 %v1466, 105
    %v4031 = vpop.permute.xlu0 %4030
    %4032 = vrot.lane.b32.xlu0 %v1467, 105
    %v4033 = vpop.permute.xlu0 %4032
    %4034 = vrot.lane.b32.xlu0 %v1468, 105
    %v4035 = vpop.permute.xlu0 %4034
    %4036 = vrot.lane.b32.xlu0 %v1469, 105
    %v4037 = vpop.permute.xlu0 %4036
    %4038 = vrot.lane.b32.xlu0 %v1470, 105
    %v4039 = vpop.permute.xlu0 %4038
    %4040 = vrot.lane.b32.xlu0 %v1471, 105
    %v4041 = vpop.permute.xlu0 %4040
    %4042 = vrot.lane.b32.xlu0 %v1472, 105
    %v4043 = vpop.permute.xlu0 %4042
    %4044 = vrot.lane.b32.xlu0 %v1473, 105
    %v4045 = vpop.permute.xlu0 %4044
    %4046 = vrot.lane.b32.xlu0 %v1474, 105
    %v4047 = vpop.permute.xlu0 %4046
    %4048 = vrot.lane.b32.xlu0 %v1475, 105
    %v4049 = vpop.permute.xlu0 %4048
    %4050 = vrot.lane.b32.xlu0 %v1476, 105
    %v4051 = vpop.permute.xlu0 %4050
    %4052 = vrot.lane.b32.xlu0 %v1477, 105
    %v4053 = vpop.permute.xlu0 %4052
    %4054 = vrot.lane.b32.xlu0 %v1478, 105
    %v4055 = vpop.permute.xlu0 %4054
    %4056 = vrot.lane.b32.xlu0 %v1479, 105
    %v4057 = vpop.permute.xlu0 %4056
    %4058 = vrot.lane.b32.xlu0 %v1480, 105
    %v4059 = vpop.permute.xlu0 %4058
    %4060 = vrot.lane.b32.xlu0 %v1481, 105
    %v4061 = vpop.permute.xlu0 %4060
    %4062 = vrot.lane.b32.xlu0 %v1482, 105
    %v4063 = vpop.permute.xlu0 %4062
    %4064 = vrot.lane.b32.xlu0 %v1483, 105
    %v4065 = vpop.permute.xlu0 %4064
    %4066 = vrot.lane.b32.xlu0 %v1484, 105
    %v4067 = vpop.permute.xlu0 %4066
    %4068 = vrot.lane.b32.xlu0 %v1485, 105
    %v4069 = vpop.permute.xlu0 %4068
    %v4070 = vsel %vm169, %v3927, %v3929
    %v4071 = vsel %vm169, %v3929, %v3931
    %v4072 = vsel %vm169, %v3931, %v3933
    %v4073 = vsel %vm169, %v3933, %v3935
    %v4074 = vsel %vm169, %v3935, %v3937
    %v4075 = vsel %vm169, %v3937, %v3939
    %v4076 = vsel %vm169, %v3939, %v3941
    %v4077 = vsel %vm169, %v3941, %v3943
    %v4078 = vsel %vm169, %v3945, %v3947
    %v4079 = vsel %vm169, %v3947, %v3949
    %v4080 = vsel %vm169, %v3949, %v3951
    %v4081 = vsel %vm169, %v3951, %v3953
    %v4082 = vsel %vm169, %v3953, %v3955
    %v4083 = vsel %vm169, %v3955, %v3957
    %v4084 = vsel %vm169, %v3957, %v3959
    %v4085 = vsel %vm169, %v3959, %v3961
    %v4086 = vsel %vm169, %v3963, %v3965
    %v4087 = vsel %vm169, %v3965, %v3967
    %v4088 = vsel %vm169, %v3967, %v3969
    %v4089 = vsel %vm169, %v3969, %v3971
    %v4090 = vsel %vm169, %v3971, %v3973
    %v4091 = vsel %vm169, %v3973, %v3975
    %v4092 = vsel %vm169, %v3975, %v3977
    %v4093 = vsel %vm169, %v3977, %v3979
    %v4094 = vsel %vm169, %v3981, %v3983
    %v4095 = vsel %vm169, %v3983, %v3985
    %v4096 = vsel %vm169, %v3985, %v3987
    %v4097 = vsel %vm169, %v3987, %v3989
    %v4098 = vsel %vm169, %v3989, %v3991
    %v4099 = vsel %vm169, %v3991, %v3993
    %v4100 = vsel %vm169, %v3993, %v3995
    %v4101 = vsel %vm169, %v3995, %v3997
    %v4102 = vsel %vm169, %v3999, %v4001
    %v4103 = vsel %vm169, %v4001, %v4003
    %v4104 = vsel %vm169, %v4003, %v4005
    %v4105 = vsel %vm169, %v4005, %v4007
    %v4106 = vsel %vm169, %v4007, %v4009
    %v4107 = vsel %vm169, %v4009, %v4011
    %v4108 = vsel %vm169, %v4011, %v4013
    %v4109 = vsel %vm169, %v4013, %v4015
    %v4110 = vsel %vm169, %v4017, %v4019
    %v4111 = vsel %vm169, %v4019, %v4021
    %v4112 = vsel %vm169, %v4021, %v4023
    %v4113 = vsel %vm169, %v4023, %v4025
    %v4114 = vsel %vm169, %v4025, %v4027
    %v4115 = vsel %vm169, %v4027, %v4029
    %v4116 = vsel %vm169, %v4029, %v4031
    %v4117 = vsel %vm169, %v4031, %v4033
    %v4118 = vsel %vm169, %v4035, %v4037
    %v4119 = vsel %vm169, %v4037, %v4039
    %v4120 = vsel %vm169, %v4039, %v4041
    %v4121 = vsel %vm169, %v4041, %v4043
    %v4122 = vsel %vm169, %v4043, %v4045
    %v4123 = vsel %vm169, %v4045, %v4047
    %v4124 = vsel %vm169, %v4047, %v4049
    %v4125 = vsel %vm169, %v4049, %v4051
    %v4126 = vsel %vm169, %v4053, %v4055
    %v4127 = vsel %vm169, %v4055, %v4057
    %v4128 = vsel %vm169, %v4057, %v4059
    %v4129 = vsel %vm169, %v4059, %v4061
    %v4130 = vsel %vm169, %v4061, %v4063
    %v4131 = vsel %vm169, %v4063, %v4065
    %v4132 = vsel %vm169, %v4065, %v4067
    %v4133 = vsel %vm169, %v4067, %v4069
    %v4199 = vsel %vm1830, %v3922, 0
    %v4202 = vsel %vm1830, %v3923, 0
    %v4205 = vsel %vm1830, %v3924, 0
    %v4208 = vsel %vm1830, %v3925, 0
    %4210 = vmatprep.subr.mxu0 %v4071
    %4211 = vmatpush1.msra.mxu0 %v4070
    %4212 = vmatprep.subr.mxu0 %v4079
    %4213 = vmatpush1.msra.mxu0 %v4078
    %4214 = vmatprep.subr.mxu0 %v4087
    %4215 = vmatpush1.msra.mxu0 %v4086
    %4216 = vmatprep.subr.mxu0 %v4095
    %4217 = vmatpush1.msra.mxu0 %v4094
    %4218 = vmatprep.subr.mxu0 %v4103
    %4219 = vmatpush1.msra.mxu0 %v4102
    %4220 = vmatprep.subr.mxu0 %v4111
    %4221 = vmatpush1.msra.mxu0 %v4110
    %4222 = vmatprep.subr.mxu0 %v4119
    %4223 = vmatpush1.msra.mxu0 %v4118
    %4224 = vmatprep.subr.mxu0 %v4127
    %4225 = vmatpush1.msra.mxu0 %v4126
    %4226 = vmatprep.subr.mxu0 0.0
    %4227 = vmatpush1.msra.mxu0 0.0
    %4228 = vmatprep.subr.mxu0 0.0
    %4229 = vmatpush1.msra.mxu0 0.0
    %4230 = vmatprep.subr.mxu0 0.0
    %4231 = vmatpush1.msra.mxu0 0.0
    %4232 = vmatprep.subr.mxu0 0.0
    %4233 = vmatpush1.msra.mxu0 0.0
    %4234 = vmatprep.subr.mxu0 0.0
    %4235 = vmatpush1.msra.mxu0 0.0
    %4236 = vmatprep.subr.mxu0 0.0
    %4237 = vmatpush1.msra.mxu0 0.0
    %4238 = vmatprep.subr.mxu0 0.0
    %4239 = vmatpush1.msra.mxu0 0.0
    %4240 = vmatprep.subr.mxu0 0.0
    %4241 = vmatpush1.msra.mxu0 0.0
    %4242 = vmatprep.subr.mxu0 0.0
    %4243 = vmatpush1.msra.mxu0 0.0
    %4244 = vmatprep.subr.mxu0 0.0
    %4245 = vmatpush1.msra.mxu0 0.0
    %4246 = vmatprep.subr.mxu0 0.0
    %4247 = vmatpush1.msra.mxu0 0.0
    %4248 = vmatprep.subr.mxu0 0.0
    %4249 = vmatpush1.msra.mxu0 0.0
    %4250 = vmatprep.subr.mxu0 0.0
    %4251 = vmatpush1.msra.mxu0 0.0
    %4252 = vmatprep.subr.mxu0 0.0
    %4253 = vmatpush1.msra.mxu0 0.0
    %4254 = vmatprep.subr.mxu0 0.0
    %4255 = vmatpush1.msra.mxu0 0.0
    %4256 = vmatprep.subr.mxu0 0.0
    %4257 = vmatpush1.msra.mxu0 0.0
    %4258 = vmatprep.subr.mxu0 0.0
    %4259 = vmatpush1.msra.mxu0 0.0
    %4260 = vmatprep.subr.mxu0 0.0
    %4261 = vmatpush1.msra.mxu0 0.0
    %4262 = vmatprep.subr.mxu0 0.0
    %4263 = vmatpush1.msra.mxu0 0.0
    %4264 = vmatprep.subr.mxu0 0.0
    %4265 = vmatpush1.msra.mxu0 0.0
    %4266 = vmatprep.subr.mxu0 0.0
    %4267 = vmatpush1.msra.mxu0 0.0
    %4268 = vmatprep.subr.mxu0 0.0
    %4269 = vmatpush1.msra.mxu0 0.0
    %4270 = vmatprep.subr.mxu0 0.0
    %4271 = vmatpush1.msra.mxu0 0.0
    %4272 = vmatprep.subr.mxu0 0.0
    %4273 = vmatpush1.msra.mxu0 0.0
    %4274 = vmatprep.mubr.f32.mxu0 0.0
    %4275 = vmatmul.mubr.f32.gmra.mrb[0].mxu0 %v4199
    %v4276 = vpop.f32.mrb[0].mxu0
    %v4277 = vadd.f32 0.0, %v4276
    %v4278 = vpop.f32.mrb[0].mxu0
    %v4279 = vadd.f32 0.0, %v4278
    %4280 = vmatprep.mubr.f32.mxu0 0.0
    %4281 = vmatmul.mubr.f32.gmra.mrb[0].mxu0 %v4202
    %v4282 = vpop.f32.mrb[0].mxu0
    %v4283 = vadd.f32 0.0, %v4282
    %v4284 = vpop.f32.mrb[0].mxu0
    %v4285 = vadd.f32 0.0, %v4284
    %4286 = vmatprep.mubr.f32.mxu0 0.0
    %4287 = vmatmul.mubr.f32.gmra.mrb[0].mxu0 %v4205
    %v4288 = vpop.f32.mrb[0].mxu0
    %v4289 = vadd.f32 0.0, %v4288
    %v4290 = vpop.f32.mrb[0].mxu0
    %v4291 = vadd.f32 0.0, %v4290
    %4292 = vmatprep.mubr.f32.mxu0 0.0
    %4293 = vmatmul.mubr.f32.gmra.mrb[0].mxu0 %v4208
    %v4294 = vpop.f32.mrb[0].mxu0
    %v4295 = vadd.f32 0.0, %v4294
    %v4296 = vpop.f32.mrb[0].mxu0
    %v4297 = vadd.f32 0.0, %v4296
    %4298 = vdwg.mxu0
    %4299 = vmatprep.subr.mxu0 %v4073
    %4300 = vmatpush1.msra.mxu0 %v4072
    %4301 = vmatprep.subr.mxu0 %v4081
    %4302 = vmatpush1.msra.mxu0 %v4080
    %4303 = vmatprep.subr.mxu0 %v4089
    %4304 = vmatpush1.msra.mxu0 %v4088
    %4305 = vmatprep.subr.mxu0 %v4097
    %4306 = vmatpush1.msra.mxu0 %v4096
    %4307 = vmatprep.subr.mxu0 %v4105
    %4308 = vmatpush1.msra.mxu0 %v4104
    %4309 = vmatprep.subr.mxu0 %v4113
    %4310 = vmatpush1.msra.mxu0 %v4112
    %4311 = vmatprep.subr.mxu0 %v4121
    %4312 = vmatpush1.msra.mxu0 %v4120
    %4313 = vmatprep.subr.mxu0 %v4129
    %4314 = vmatpush1.msra.mxu0 %v4128
    %4315 = vmatprep.subr.mxu0 0.0
    %4316 = vmatpush1.msra.mxu0 0.0
    %4317 = vmatprep.subr.mxu0 0.0
    %4318 = vmatpush1.msra.mxu0 0.0
    %4319 = vmatprep.subr.mxu0 0.0
    %4320 = vmatpush1.msra.mxu0 0.0
    %4321 = vmatprep.subr.mxu0 0.0
    %4322 = vmatpush1.msra.mxu0 0.0
    %4323 = vmatprep.subr.mxu0 0.0
    %4324 = vmatpush1.msra.mxu0 0.0
    %4325 = vmatprep.subr.mxu0 0.0
    %4326 = vmatpush1.msra.mxu0 0.0
    %4327 = vmatprep.subr.mxu0 0.0
    %4328 = vmatpush1.msra.mxu0 0.0
    %4329 = vmatprep.subr.mxu0 0.0
    %4330 = vmatpush1.msra.mxu0 0.0
    %4331 = vmatprep.subr.mxu0 0.0
    %4332 = vmatpush1.msra.mxu0 0.0
    %4333 = vmatprep.subr.mxu0 0.0
    %4334 = vmatpush1.msra.mxu0 0.0
    %4335 = vmatprep.subr.mxu0 0.0
    %4336 = vmatpush1.msra.mxu0 0.0
    %4337 = vmatprep.subr.mxu0 0.0
    %4338 = vmatpush1.msra.mxu0 0.0
    %4339 = vmatprep.subr.mxu0 0.0
    %4340 = vmatpush1.msra.mxu0 0.0
    %4341 = vmatprep.subr.mxu0 0.0
    %4342 = vmatpush1.msra.mxu0 0.0
    %4343 = vmatprep.subr.mxu0 0.0
    %4344 = vmatpush1.msra.mxu0 0.0
    %4345 = vmatprep.subr.mxu0 0.0
    %4346 = vmatpush1.msra.mxu0 0.0
    %4347 = vmatprep.subr.mxu0 0.0
    %4348 = vmatpush1.msra.mxu0 0.0
    %4349 = vmatprep.subr.mxu0 0.0
    %4350 = vmatpush1.msra.mxu0 0.0
    %4351 = vmatprep.subr.mxu0 0.0
    %4352 = vmatpush1.msra.mxu0 0.0
    %4353 = vmatprep.subr.mxu0 0.0
    %4354 = vmatpush1.msra.mxu0 0.0
    %4355 = vmatprep.subr.mxu0 0.0
    %4356 = vmatpush1.msra.mxu0 0.0
    %4357 = vmatprep.subr.mxu0 0.0
    %4358 = vmatpush1.msra.mxu0 0.0
    %4359 = vmatprep.subr.mxu0 0.0
    %4360 = vmatpush1.msra.mxu0 0.0
    %4361 = vmatprep.subr.mxu0 0.0
    %4362 = vmatpush1.msra.mxu0 0.0
    %4363 = vmatprep.mubr.f32.mxu0 0.0
    %4364 = vmatmul.mubr.f32.gmra.mrb[0].mxu0 %v4199
    %v4365 = vpop.f32.mrb[0].mxu0
    %v4366 = vadd.f32 0.0, %v4365
    %v4367 = vpop.f32.mrb[0].mxu0
    %v4368 = vadd.f32 0.0, %v4367
    %4369 = vmatprep.mubr.f32.mxu0 0.0
    %4370 = vmatmul.mubr.f32.gmra.mrb[0].mxu0 %v4202
    %v4371 = vpop.f32.mrb[0].mxu0
    %v4372 = vadd.f32 0.0, %v4371
    %v4373 = vpop.f32.mrb[0].mxu0
    %v4374 = vadd.f32 0.0, %v4373
    %4375 = vmatprep.mubr.f32.mxu0 0.0
    %4376 = vmatmul.mubr.f32.gmra.mrb[0].mxu0 %v4205
    %v4377 = vpop.f32.mrb[0].mxu0
    %v4378 = vadd.f32 0.0, %v4377
    %v4379 = vpop.f32.mrb[0].mxu0
    %v4380 = vadd.f32 0.0, %v4379
    %4381 = vmatprep.mubr.f32.mxu0 0.0
    %4382 = vmatmul.mubr.f32.gmra.mrb[0].mxu0 %v4208
    %v4383 = vpop.f32.mrb[0].mxu0
    %v4384 = vadd.f32 0.0, %v4383
    %v4385 = vpop.f32.mrb[0].mxu0
    %v4386 = vadd.f32 0.0, %v4385
    %4387 = vdwg.mxu0
    %4388 = vmatprep.subr.mxu0 %v4075
    %4389 = vmatpush1.msra.mxu0 %v4074
    %4390 = vmatprep.subr.mxu0 %v4083
    %4391 = vmatpush1.msra.mxu0 %v4082
    %4392 = vmatprep.subr.mxu0 %v4091
    %4393 = vmatpush1.msra.mxu0 %v4090
    %4394 = vmatprep.subr.mxu0 %v4099
    %4395 = vmatpush1.msra.mxu0 %v4098
    %4396 = vmatprep.subr.mxu0 %v4107
    %4397 = vmatpush1.msra.mxu0 %v4106
    %4398 = vmatprep.subr.mxu0 %v4115
    %4399 = vmatpush1.msra.mxu0 %v4114
    %4400 = vmatprep.subr.mxu0 %v4123
    %4401 = vmatpush1.msra.mxu0 %v4122
    %4402 = vmatprep.subr.mxu0 %v4131
    %4403 = vmatpush1.msra.mxu0 %v4130
    %4404 = vmatprep.subr.mxu0 0.0
    %4405 = vmatpush1.msra.mxu0 0.0
    %4406 = vmatprep.subr.mxu0 0.0
    %4407 = vmatpush1.msra.mxu0 0.0
    %4408 = vmatprep.subr.mxu0 0.0
    %4409 = vmatpush1.msra.mxu0 0.0
    %4410 = vmatprep.subr.mxu0 0.0
    %4411 = vmatpush1.msra.mxu0 0.0
    %4412 = vmatprep.subr.mxu0 0.0
    %4413 = vmatpush1.msra.mxu0 0.0
    %4414 = vmatprep.subr.mxu0 0.0
    %4415 = vmatpush1.msra.mxu0 0.0
    %4416 = vmatprep.subr.mxu0 0.0
    %4417 = vmatpush1.msra.mxu0 0.0
    %4418 = vmatprep.subr.mxu0 0.0
    %4419 = vmatpush1.msra.mxu0 0.0
    %4420 = vmatprep.subr.mxu0 0.0
    %4421 = vmatpush1.msra.mxu0 0.0
    %4422 = vmatprep.subr.mxu0 0.0
    %4423 = vmatpush1.msra.mxu0 0.0
    %4424 = vmatprep.subr.mxu0 0.0
    %4425 = vmatpush1.msra.mxu0 0.0
    %4426 = vmatprep.subr.mxu0 0.0
    %4427 = vmatpush1.msra.mxu0 0.0
    %4428 = vmatprep.subr.mxu0 0.0
    %4429 = vmatpush1.msra.mxu0 0.0
    %4430 = vmatprep.subr.mxu0 0.0
    %4431 = vmatpush1.msra.mxu0 0.0
    %4432 = vmatprep.subr.mxu0 0.0
    %4433 = vmatpush1.msra.mxu0 0.0
    %4434 = vmatprep.subr.mxu0 0.0
    %4435 = vmatpush1.msra.mxu0 0.0
    %4436 = vmatprep.subr.mxu0 0.0
    %4437 = vmatpush1.msra.mxu0 0.0
    %4438 = vmatprep.subr.mxu0 0.0
    %4439 = vmatpush1.msra.mxu0 0.0
    %4440 = vmatprep.subr.mxu0 0.0
    %4441 = vmatpush1.msra.mxu0 0.0
    %4442 = vmatprep.subr.mxu0 0.0
    %4443 = vmatpush1.msra.mxu0 0.0
    %4444 = vmatprep.subr.mxu0 0.0
    %4445 = vmatpush1.msra.mxu0 0.0
    %4446 = vmatprep.subr.mxu0 0.0
    %4447 = vmatpush1.msra.mxu0 0.0
    %4448 = vmatprep.subr.mxu0 0.0
    %4449 = vmatpush1.msra.mxu0 0.0
    %4450 = vmatprep.subr.mxu0 0.0
    %4451 = vmatpush1.msra.mxu0 0.0
    %4452 = vmatprep.mubr.f32.mxu0 0.0
    %4453 = vmatmul.mubr.f32.gmra.mrb[0].mxu0 %v4199
    %v4454 = vpop.f32.mrb[0].mxu0
    %v4455 = vadd.f32 0.0, %v4454
    %v4456 = vpop.f32.mrb[0].mxu0
    %v4457 = vadd.f32 0.0, %v4456
    %4458 = vmatprep.mubr.f32.mxu0 0.0
    %4459 = vmatmul.mubr.f32.gmra.mrb[0].mxu0 %v4202
    %v4460 = vpop.f32.mrb[0].mxu0
    %v4461 = vadd.f32 0.0, %v4460
    %v4462 = vpop.f32.mrb[0].mxu0
    %v4463 = vadd.f32 0.0, %v4462
    %4464 = vmatprep.mubr.f32.mxu0 0.0
    %4465 = vmatmul.mubr.f32.gmra.mrb[0].mxu0 %v4205
    %v4466 = vpop.f32.mrb[0].mxu0
    %v4467 = vadd.f32 0.0, %v4466
    %v4468 = vpop.f32.mrb[0].mxu0
    %v4469 = vadd.f32 0.0, %v4468
    %4470 = vmatprep.mubr.f32.mxu0 0.0
    %4471 = vmatmul.mubr.f32.gmra.mrb[0].mxu0 %v4208
    %v4472 = vpop.f32.mrb[0].mxu0
    %v4473 = vadd.f32 0.0, %v4472
    %v4474 = vpop.f32.mrb[0].mxu0
    %v4475 = vadd.f32 0.0, %v4474
    %4476 = vdwg.mxu0
    %4477 = vmatprep.subr.mxu0 %v4077
    %4478 = vmatpush1.msra.mxu0 %v4076
    %4479 = vmatprep.subr.mxu0 %v4085
    %4480 = vmatpush1.msra.mxu0 %v4084
    %4481 = vmatprep.subr.mxu0 %v4093
    %4482 = vmatpush1.msra.mxu0 %v4092
    %4483 = vmatprep.subr.mxu0 %v4101
    %4484 = vmatpush1.msra.mxu0 %v4100
    %4485 = vmatprep.subr.mxu0 %v4109
    %4486 = vmatpush1.msra.mxu0 %v4108
    %4487 = vmatprep.subr.mxu0 %v4117
    %4488 = vmatpush1.msra.mxu0 %v4116
    %4489 = vmatprep.subr.mxu0 %v4125
    %4490 = vmatpush1.msra.mxu0 %v4124
    %4491 = vmatprep.subr.mxu0 %v4133
    %4492 = vmatpush1.msra.mxu0 %v4132
    %4493 = vmatprep.subr.mxu0 0.0
    %4494 = vmatpush1.msra.mxu0 0.0
    %4495 = vmatprep.subr.mxu0 0.0
    %4496 = vmatpush1.msra.mxu0 0.0
    %4497 = vmatprep.subr.mxu0 0.0
    %4498 = vmatpush1.msra.mxu0 0.0
    %4499 = vmatprep.subr.mxu0 0.0
    %4500 = vmatpush1.msra.mxu0 0.0
    %4501 = vmatprep.subr.mxu0 0.0
    %4502 = vmatpush1.msra.mxu0 0.0
    %4503 = vmatprep.subr.mxu0 0.0
    %4504 = vmatpush1.msra.mxu0 0.0
    %4505 = vmatprep.subr.mxu0 0.0
    %4506 = vmatpush1.msra.mxu0 0.0
    %4507 = vmatprep.subr.mxu0 0.0
    %4508 = vmatpush1.msra.mxu0 0.0
    %4509 = vmatprep.subr.mxu0 0.0
    %4510 = vmatpush1.msra.mxu0 0.0
    %4511 = vmatprep.subr.mxu0 0.0
    %4512 = vmatpush1.msra.mxu0 0.0
    %4513 = vmatprep.subr.mxu0 0.0
    %4514 = vmatpush1.msra.mxu0 0.0
    %4515 = vmatprep.subr.mxu0 0.0
    %4516 = vmatpush1.msra.mxu0 0.0
    %4517 = vmatprep.subr.mxu0 0.0
    %4518 = vmatpush1.msra.mxu0 0.0
    %4519 = vmatprep.subr.mxu0 0.0
    %4520 = vmatpush1.msra.mxu0 0.0
    %4521 = vmatprep.subr.mxu0 0.0
    %4522 = vmatpush1.msra.mxu0 0.0
    %4523 = vmatprep.subr.mxu0 0.0
    %4524 = vmatpush1.msra.mxu0 0.0
    %4525 = vmatprep.subr.mxu0 0.0
    %4526 = vmatpush1.msra.mxu0 0.0
    %4527 = vmatprep.subr.mxu0 0.0
    %4528 = vmatpush1.msra.mxu0 0.0
    %4529 = vmatprep.subr.mxu0 0.0
    %4530 = vmatpush1.msra.mxu0 0.0
    %4531 = vmatprep.subr.mxu0 0.0
    %4532 = vmatpush1.msra.mxu0 0.0
    %4533 = vmatprep.subr.mxu0 0.0
    %4534 = vmatpush1.msra.mxu0 0.0
    %4535 = vmatprep.subr.mxu0 0.0
    %4536 = vmatpush1.msra.mxu0 0.0
    %4537 = vmatprep.subr.mxu0 0.0
    %4538 = vmatpush1.msra.mxu0 0.0
    %4539 = vmatprep.subr.mxu0 0.0
    %4540 = vmatpush1.msra.mxu0 0.0
    %4541 = vmatprep.mubr.f32.mxu0 0.0
    %4542 = vmatmul.mubr.f32.gmra.mrb[0].mxu0 %v4199
    %v4543 = vpop.f32.mrb[0].mxu0
    %v4544 = vadd.f32 0.0, %v4543
    %v4545 = vpop.f32.mrb[0].mxu0
    %v4546 = vadd.f32 0.0, %v4545
    %4547 = vmatprep.mubr.f32.mxu0 0.0
    %4548 = vmatmul.mubr.f32.gmra.mrb[0].mxu0 %v4202
    %v4549 = vpop.f32.mrb[0].mxu0
    %v4550 = vadd.f32 0.0, %v4549
    %v4551 = vpop.f32.mrb[0].mxu0
    %v4552 = vadd.f32 0.0, %v4551
    %4553 = vmatprep.mubr.f32.mxu0 0.0
    %4554 = vmatmul.mubr.f32.gmra.mrb[0].mxu0 %v4205
    %v4555 = vpop.f32.mrb[0].mxu0
    %v4556 = vadd.f32 0.0, %v4555
    %v4557 = vpop.f32.mrb[0].mxu0
    %v4558 = vadd.f32 0.0, %v4557
    %4559 = vmatprep.mubr.f32.mxu0 0.0
    %4560 = vmatmul.mubr.f32.gmra.mrb[0].mxu0 %v4208
    %v4561 = vpop.f32.mrb[0].mxu0
    %v4562 = vadd.f32 0.0, %v4561
    %v4563 = vpop.f32.mrb[0].mxu0
    %v4564 = vadd.f32 0.0, %v4563
    %4565 = vdwg.mxu0
    %v4566 = vadd.f32 %v3889, %v4277
    %v4567 = vadd.f32 %v3890, %v4279
    %v4568 = vadd.f32 %v3891, %v4366
    %v4569 = vadd.f32 %v3892, %v4368
    %v4570 = vadd.f32 %v3893, %v4455
    %v4571 = vadd.f32 %v3894, %v4457
    %v4572 = vadd.f32 %v3895, %v4544
    %v4573 = vadd.f32 %v3896, %v4546
    %v4574 = vadd.f32 %v3897, %v4283
    %v4575 = vadd.f32 %v3898, %v4285
    %v4576 = vadd.f32 %v3899, %v4372
    %v4577 = vadd.f32 %v3900, %v4374
    %v4578 = vadd.f32 %v3901, %v4461
    %v4579 = vadd.f32 %v3902, %v4463
    %v4580 = vadd.f32 %v3903, %v4550
    %v4581 = vadd.f32 %v3904, %v4552
    %v4582 = vadd.f32 %v3905, %v4289
    %v4583 = vadd.f32 %v3906, %v4291
    %v4584 = vadd.f32 %v3907, %v4378
    %v4585 = vadd.f32 %v3908, %v4380
    %v4586 = vadd.f32 %v3909, %v4467
    %v4587 = vadd.f32 %v3910, %v4469
    %v4588 = vadd.f32 %v3911, %v4556
    %v4589 = vadd.f32 %v3912, %v4558
    %v4590 = vadd.f32 %v3913, %v4295
    %v4591 = vadd.f32 %v3914, %v4297
    %v4592 = vadd.f32 %v3915, %v4384
    %v4593 = vadd.f32 %v3916, %v4386
    %v4594 = vadd.f32 %v3917, %v4473
    %v4595 = vadd.f32 %v3918, %v4475
    %v4596 = vadd.f32 %v3919, %v4562
    %v4597 = vadd.f32 %v3920, %v4564
    %s4598 = scalar_lea.vmem [#allocation4], 160
    %v4599 = vld [vmem:[%s4598] sm:$0xff]
    %v4600 = vld [vmem:[%s4598 + $0x8] sm:$0xff]
    %v4601 = vld [vmem:[%s4598 + $0x10] sm:$0xff]
    %v4602 = vld [vmem:[%s4598 + $0x18] sm:$0xff]
    %4603 = vrot.lane.b32.xlu0 %v1414, 104
    %v4604 = vpop.permute.xlu0 %4603
    %4605 = vrot.lane.b32.xlu0 %v1415, 104
    %v4606 = vpop.permute.xlu0 %4605
    %4607 = vrot.lane.b32.xlu0 %v1416, 104
    %v4608 = vpop.permute.xlu0 %4607
    %4609 = vrot.lane.b32.xlu0 %v1417, 104
    %v4610 = vpop.permute.xlu0 %4609
    %4611 = vrot.lane.b32.xlu0 %v1418, 104
    %v4612 = vpop.permute.xlu0 %4611
    %4613 = vrot.lane.b32.xlu0 %v1419, 104
    %v4614 = vpop.permute.xlu0 %4613
    %4615 = vrot.lane.b32.xlu0 %v1420, 104
    %v4616 = vpop.permute.xlu0 %4615
    %4617 = vrot.lane.b32.xlu0 %v1421, 104
    %v4618 = vpop.permute.xlu0 %4617
    %4619 = vrot.lane.b32.xlu0 %v1422, 104
    %v4620 = vpop.permute.xlu0 %4619
    %4621 = vrot.lane.b32.xlu0 %v1423, 104
    %v4622 = vpop.permute.xlu0 %4621
    %4623 = vrot.lane.b32.xlu0 %v1424, 104
    %v4624 = vpop.permute.xlu0 %4623
    %4625 = vrot.lane.b32.xlu0 %v1425, 104
    %v4626 = vpop.permute.xlu0 %4625
    %4627 = vrot.lane.b32.xlu0 %v1426, 104
    %v4628 = vpop.permute.xlu0 %4627
    %4629 = vrot.lane.b32.xlu0 %v1427, 104
    %v4630 = vpop.permute.xlu0 %4629
    %4631 = vrot.lane.b32.xlu0 %v1428, 104
    %v4632 = vpop.permute.xlu0 %4631
    %4633 = vrot.lane.b32.xlu0 %v1429, 104
    %v4634 = vpop.permute.xlu0 %4633
    %4635 = vrot.lane.b32.xlu0 %v1430, 104
    %v4636 = vpop.permute.xlu0 %4635
    %4637 = vrot.lane.b32.xlu0 %v1431, 104
    %v4638 = vpop.permute.xlu0 %4637
    %4639 = vrot.lane.b32.xlu0 %v1432, 104
    %v4640 = vpop.permute.xlu0 %4639
    %4641 = vrot.lane.b32.xlu0 %v1433, 104
    %v4642 = vpop.permute.xlu0 %4641
    %4643 = vrot.lane.b32.xlu0 %v1434, 104
    %v4644 = vpop.permute.xlu0 %4643
    %4645 = vrot.lane.b32.xlu0 %v1435, 104
    %v4646 = vpop.permute.xlu0 %4645
    %4647 = vrot.lane.b32.xlu0 %v1436, 104
    %v4648 = vpop.permute.xlu0 %4647
    %4649 = vrot.lane.b32.xlu0 %v1437, 104
    %v4650 = vpop.permute.xlu0 %4649
    %4651 = vrot.lane.b32.xlu0 %v1438, 104
    %v4652 = vpop.permute.xlu0 %4651
    %4653 = vrot.lane.b32.xlu0 %v1439, 104
    %v4654 = vpop.permute.xlu0 %4653
    %4655 = vrot.lane.b32.xlu0 %v1440, 104
    %v4656 = vpop.permute.xlu0 %4655
    %4657 = vrot.lane.b32.xlu0 %v1441, 104
    %v4658 = vpop.permute.xlu0 %4657
    %4659 = vrot.lane.b32.xlu0 %v1442, 104
    %v4660 = vpop.permute.xlu0 %4659
    %4661 = vrot.lane.b32.xlu0 %v1443, 104
    %v4662 = vpop.permute.xlu0 %4661
    %4663 = vrot.lane.b32.xlu0 %v1444, 104
    %v4664 = vpop.permute.xlu0 %4663
    %4665 = vrot.lane.b32.xlu0 %v1445, 104
    %v4666 = vpop.permute.xlu0 %4665
    %4667 = vrot.lane.b32.xlu0 %v1446, 104
    %v4668 = vpop.permute.xlu0 %4667
    %4669 = vrot.lane.b32.xlu0 %v1447, 104
    %v4670 = vpop.permute.xlu0 %4669
    %4671 = vrot.lane.b32.xlu0 %v1448, 104
    %v4672 = vpop.permute.xlu0 %4671
    %4673 = vrot.lane.b32.xlu0 %v1449, 104
    %v4674 = vpop.permute.xlu0 %4673
    %4675 = vrot.lane.b32.xlu0 %v1450, 104
    %v4676 = vpop.permute.xlu0 %4675
    %4677 = vrot.lane.b32.xlu0 %v1451, 104
    %v4678 = vpop.permute.xlu0 %4677
    %4679 = vrot.lane.b32.xlu0 %v1452, 104
    %v4680 = vpop.permute.xlu0 %4679
    %4681 = vrot.lane.b32.xlu0 %v1453, 104
    %v4682 = vpop.permute.xlu0 %4681
    %4683 = vrot.lane.b32.xlu0 %v1454, 104
    %v4684 = vpop.permute.xlu0 %4683
    %4685 = vrot.lane.b32.xlu0 %v1455, 104
    %v4686 = vpop.permute.xlu0 %4685
    %4687 = vrot.lane.b32.xlu0 %v1456, 104
    %v4688 = vpop.permute.xlu0 %4687
    %4689 = vrot.lane.b32.xlu0 %v1457, 104
    %v4690 = vpop.permute.xlu0 %4689
    %4691 = vrot.lane.b32.xlu0 %v1458, 104
    %v4692 = vpop.permute.xlu0 %4691
    %4693 = vrot.lane.b32.xlu0 %v1459, 104
    %v4694 = vpop.permute.xlu0 %4693
    %4695 = vrot.lane.b32.xlu0 %v1460, 104
    %v4696 = vpop.permute.xlu0 %4695
    %4697 = vrot.lane.b32.xlu0 %v1461, 104
    %v4698 = vpop.permute.xlu0 %4697
    %4699 = vrot.lane.b32.xlu0 %v1462, 104
    %v4700 = vpop.permute.xlu0 %4699
    %4701 = vrot.lane.b32.xlu0 %v1463, 104
    %v4702 = vpop.permute.xlu0 %4701
    %4703 = vrot.lane.b32.xlu0 %v1464, 104
    %v4704 = vpop.permute.xlu0 %4703
    %4705 = vrot.lane.b32.xlu0 %v1465, 104
    %v4706 = vpop.permute.xlu0 %4705
    %4707 = vrot.lane.b32.xlu0 %v1466, 104
    %v4708 = vpop.permute.xlu0 %4707
    %4709 = vrot.lane.b32.xlu0 %v1467, 104
    %v4710 = vpop.permute.xlu0 %4709
    %4711 = vrot.lane.b32.xlu0 %v1468, 104
    %v4712 = vpop.permute.xlu0 %4711
    %4713 = vrot.lane.b32.xlu0 %v1469, 104
    %v4714 = vpop.permute.xlu0 %4713
    %4715 = vrot.lane.b32.xlu0 %v1470, 104
    %v4716 = vpop.permute.xlu0 %4715
    %4717 = vrot.lane.b32.xlu0 %v1471, 104
    %v4718 = vpop.permute.xlu0 %4717
    %4719 = vrot.lane.b32.xlu0 %v1472, 104
    %v4720 = vpop.permute.xlu0 %4719
    %4721 = vrot.lane.b32.xlu0 %v1473, 104
    %v4722 = vpop.permute.xlu0 %4721
    %4723 = vrot.lane.b32.xlu0 %v1474, 104
    %v4724 = vpop.permute.xlu0 %4723
    %4725 = vrot.lane.b32.xlu0 %v1475, 104
    %v4726 = vpop.permute.xlu0 %4725
    %4727 = vrot.lane.b32.xlu0 %v1476, 104
    %v4728 = vpop.permute.xlu0 %4727
    %4729 = vrot.lane.b32.xlu0 %v1477, 104
    %v4730 = vpop.permute.xlu0 %4729
    %4731 = vrot.lane.b32.xlu0 %v1478, 104
    %v4732 = vpop.permute.xlu0 %4731
    %4733 = vrot.lane.b32.xlu0 %v1479, 104
    %v4734 = vpop.permute.xlu0 %4733
    %4735 = vrot.lane.b32.xlu0 %v1480, 104
    %v4736 = vpop.permute.xlu0 %4735
    %4737 = vrot.lane.b32.xlu0 %v1481, 104
    %v4738 = vpop.permute.xlu0 %4737
    %4739 = vrot.lane.b32.xlu0 %v1482, 104
    %v4740 = vpop.permute.xlu0 %4739
    %4741 = vrot.lane.b32.xlu0 %v1483, 104
    %v4742 = vpop.permute.xlu0 %4741
    %4743 = vrot.lane.b32.xlu0 %v1484, 104
    %v4744 = vpop.permute.xlu0 %4743
    %4745 = vrot.lane.b32.xlu0 %v1485, 104
    %v4746 = vpop.permute.xlu0 %4745
    %v4747 = vsel %vm188, %v4604, %v4606
    %v4748 = vsel %vm188, %v4606, %v4608
    %v4749 = vsel %vm188, %v4608, %v4610
    %v4750 = vsel %vm188, %v4610, %v4612
    %v4751 = vsel %vm188, %v4612, %v4614
    %v4752 = vsel %vm188, %v4614, %v4616
    %v4753 = vsel %vm188, %v4616, %v4618
    %v4754 = vsel %vm188, %v4618, %v4620
    %v4755 = vsel %vm188, %v4622, %v4624
    %v4756 = vsel %vm188, %v4624, %v4626
    %v4757 = vsel %vm188, %v4626, %v4628
    %v4758 = vsel %vm188, %v4628, %v4630
    %v4759 = vsel %vm188, %v4630, %v4632
    %v4760 = vsel %vm188, %v4632, %v4634
    %v4761 = vsel %vm188, %v4634, %v4636
    %v4762 = vsel %vm188, %v4636, %v4638
    %v4763 = vsel %vm188, %v4640, %v4642
    %v4764 = vsel %vm188, %v4642, %v4644
    %v4765 = vsel %vm188, %v4644, %v4646
    %v4766 = vsel %vm188, %v4646, %v4648
    %v4767 = vsel %vm188, %v4648, %v4650
    %v4768 = vsel %vm188, %v4650, %v4652
    %v4769 = vsel %vm188, %v4652, %v4654
    %v4770 = vsel %vm188, %v4654, %v4656
    %v4771 = vsel %vm188, %v4658, %v4660
    %v4772 = vsel %vm188, %v4660, %v4662
    %v4773 = vsel %vm188, %v4662, %v4664
    %v4774 = vsel %vm188, %v4664, %v4666
    %v4775 = vsel %vm188, %v4666, %v4668
    %v4776 = vsel %vm188, %v4668, %v4670
    %v4777 = vsel %vm188, %v4670, %v4672
    %v4778 = vsel %vm188, %v4672, %v4674
    %v4779 = vsel %vm188, %v4676, %v4678
    %v4780 = vsel %vm188, %v4678, %v4680
    %v4781 = vsel %vm188, %v4680, %v4682
    %v4782 = vsel %vm188, %v4682, %v4684
    %v4783 = vsel %vm188, %v4684, %v4686
    %v4784 = vsel %vm188, %v4686, %v4688
    %v4785 = vsel %vm188, %v4688, %v4690
    %v4786 = vsel %vm188, %v4690, %v4692
    %v4787 = vsel %vm188, %v4694, %v4696
    %v4788 = vsel %vm188, %v4696, %v4698
    %v4789 = vsel %vm188, %v4698, %v4700
    %v4790 = vsel %vm188, %v4700, %v4702
    %v4791 = vsel %vm188, %v4702, %v4704
    %v4792 = vsel %vm188, %v4704, %v4706
    %v4793 = vsel %vm188, %v4706, %v4708
    %v4794 = vsel %vm188, %v4708, %v4710
    %v4795 = vsel %vm188, %v4712, %v4714
    %v4796 = vsel %vm188, %v4714, %v4716
    %v4797 = vsel %vm188, %v4716, %v4718
    %v4798 = vsel %vm188, %v4718, %v4720
    %v4799 = vsel %vm188, %v4720, %v4722
    %v4800 = vsel %vm188, %v4722, %v4724
    %v4801 = vsel %vm188, %v4724, %v4726
    %v4802 = vsel %vm188, %v4726, %v4728
    %v4803 = vsel %vm188, %v4730, %v4732
    %v4804 = vsel %vm188, %v4732, %v4734
    %v4805 = vsel %vm188, %v4734, %v4736
    %v4806 = vsel %vm188, %v4736, %v4738
    %v4807 = vsel %vm188, %v4738, %v4740
    %v4808 = vsel %vm188, %v4740, %v4742
    %v4809 = vsel %vm188, %v4742, %v4744
    %v4810 = vsel %vm188, %v4744, %v4746
    %v4876 = vsel %vm1830, %v4599, 0
    %v4879 = vsel %vm1830, %v4600, 0
    %v4882 = vsel %vm1830, %v4601, 0
    %v4885 = vsel %vm1830, %v4602, 0
    %4887 = vmatprep.subr.mxu0 %v4748
    %4888 = vmatpush1.msra.mxu0 %v4747
    %4889 = vmatprep.subr.mxu0 %v4756
    %4890 = vmatpush1.msra.mxu0 %v4755
    %4891 = vmatprep.subr.mxu0 %v4764
    %4892 = vmatpush1.msra.mxu0 %v4763
    %4893 = vmatprep.subr.mxu0 %v4772
    %4894 = vmatpush1.msra.mxu0 %v4771
    %4895 = vmatprep.subr.mxu0 %v4780
    %4896 = vmatpush1.msra.mxu0 %v4779
    %4897 = vmatprep.subr.mxu0 %v4788
    %4898 = vmatpush1.msra.mxu0 %v4787
    %4899 = vmatprep.subr.mxu0 %v4796
    %4900 = vmatpush1.msra.mxu0 %v4795
    %4901 = vmatprep.subr.mxu0 %v4804
    %4902 = vmatpush1.msra.mxu0 %v4803
    %4903 = vmatprep.subr.mxu0 0.0
    %4904 = vmatpush1.msra.mxu0 0.0
    %4905 = vmatprep.subr.mxu0 0.0
    %4906 = vmatpush1.msra.mxu0 0.0
    %4907 = vmatprep.subr.mxu0 0.0
    %4908 = vmatpush1.msra.mxu0 0.0
    %4909 = vmatprep.subr.mxu0 0.0
    %4910 = vmatpush1.msra.mxu0 0.0
    %4911 = vmatprep.subr.mxu0 0.0
    %4912 = vmatpush1.msra.mxu0 0.0
    %4913 = vmatprep.subr.mxu0 0.0
    %4914 = vmatpush1.msra.mxu0 0.0
    %4915 = vmatprep.subr.mxu0 0.0
    %4916 = vmatpush1.msra.mxu0 0.0
    %4917 = vmatprep.subr.mxu0 0.0
    %4918 = vmatpush1.msra.mxu0 0.0
    %4919 = vmatprep.subr.mxu0 0.0
    %4920 = vmatpush1.msra.mxu0 0.0
    %4921 = vmatprep.subr.mxu0 0.0
    %4922 = vmatpush1.msra.mxu0 0.0
    %4923 = vmatprep.subr.mxu0 0.0
    %4924 = vmatpush1.msra.mxu0 0.0
    %4925 = vmatprep.subr.mxu0 0.0
    %4926 = vmatpush1.msra.mxu0 0.0
    %4927 = vmatprep.subr.mxu0 0.0
    %4928 = vmatpush1.msra.mxu0 0.0
    %4929 = vmatprep.subr.mxu0 0.0
    %4930 = vmatpush1.msra.mxu0 0.0
    %4931 = vmatprep.subr.mxu0 0.0
    %4932 = vmatpush1.msra.mxu0 0.0
    %4933 = vmatprep.subr.mxu0 0.0
    %4934 = vmatpush1.msra.mxu0 0.0
    %4935 = vmatprep.subr.mxu0 0.0
    %4936 = vmatpush1.msra.mxu0 0.0
    %4937 = vmatprep.subr.mxu0 0.0
    %4938 = vmatpush1.msra.mxu0 0.0
    %4939 = vmatprep.subr.mxu0 0.0
    %4940 = vmatpush1.msra.mxu0 0.0
    %4941 = vmatprep.subr.mxu0 0.0
    %4942 = vmatpush1.msra.mxu0 0.0
    %4943 = vmatprep.subr.mxu0 0.0
    %4944 = vmatpush1.msra.mxu0 0.0
    %4945 = vmatprep.subr.mxu0 0.0
    %4946 = vmatpush1.msra.mxu0 0.0
    %4947 = vmatprep.subr.mxu0 0.0
    %4948 = vmatpush1.msra.mxu0 0.0
    %4949 = vmatprep.subr.mxu0 0.0
    %4950 = vmatpush1.msra.mxu0 0.0
    %4951 = vmatprep.mubr.f32.mxu0 0.0
    %4952 = vmatmul.mubr.f32.gmra.mrb[0].mxu0 %v4876
    %v4953 = vpop.f32.mrb[0].mxu0
    %v4954 = vadd.f32 0.0, %v4953
    %v4955 = vpop.f32.mrb[0].mxu0
    %v4956 = vadd.f32 0.0, %v4955
    %4957 = vmatprep.mubr.f32.mxu0 0.0
    %4958 = vmatmul.mubr.f32.gmra.mrb[0].mxu0 %v4879
    %v4959 = vpop.f32.mrb[0].mxu0
    %v4960 = vadd.f32 0.0, %v4959
    %v4961 = vpop.f32.mrb[0].mxu0
    %v4962 = vadd.f32 0.0, %v4961
    %4963 = vmatprep.mubr.f32.mxu0 0.0
    %4964 = vmatmul.mubr.f32.gmra.mrb[0].mxu0 %v4882
    %v4965 = vpop.f32.mrb[0].mxu0
    %v4966 = vadd.f32 0.0, %v4965
    %v4967 = vpop.f32.mrb[0].mxu0
    %v4968 = vadd.f32 0.0, %v4967
    %4969 = vmatprep.mubr.f32.mxu0 0.0
    %4970 = vmatmul.mubr.f32.gmra.mrb[0].mxu0 %v4885
    %v4971 = vpop.f32.mrb[0].mxu0
    %v4972 = vadd.f32 0.0, %v4971
    %v4973 = vpop.f32.mrb[0].mxu0
    %v4974 = vadd.f32 0.0, %v4973
    %4975 = vdwg.mxu0
    %4976 = vmatprep.subr.mxu0 %v4750
    %4977 = vmatpush1.msra.mxu0 %v4749
    %4978 = vmatprep.subr.mxu0 %v4758
    %4979 = vmatpush1.msra.mxu0 %v4757
    %4980 = vmatprep.subr.mxu0 %v4766
    %4981 = vmatpush1.msra.mxu0 %v4765
    %4982 = vmatprep.subr.mxu0 %v4774
    %4983 = vmatpush1.msra.mxu0 %v4773
    %4984 = vmatprep.subr.mxu0 %v4782
    %4985 = vmatpush1.msra.mxu0 %v4781
    %4986 = vmatprep.subr.mxu0 %v4790
    %4987 = vmatpush1.msra.mxu0 %v4789
    %4988 = vmatprep.subr.mxu0 %v4798
    %4989 = vmatpush1.msra.mxu0 %v4797
    %4990 = vmatprep.subr.mxu0 %v4806
    %4991 = vmatpush1.msra.mxu0 %v4805
    %4992 = vmatprep.subr.mxu0 0.0
    %4993 = vmatpush1.msra.mxu0 0.0
    %4994 = vmatprep.subr.mxu0 0.0
    %4995 = vmatpush1.msra.mxu0 0.0
    %4996 = vmatprep.subr.mxu0 0.0
    %4997 = vmatpush1.msra.mxu0 0.0
    %4998 = vmatprep.subr.mxu0 0.0
    %4999 = vmatpush1.msra.mxu0 0.0
    %5000 = vmatprep.subr.mxu0 0.0
    %5001 = vmatpush1.msra.mxu0 0.0
    %5002 = vmatprep.subr.mxu0 0.0
    %5003 = vmatpush1.msra.mxu0 0.0
    %5004 = vmatprep.subr.mxu0 0.0
    %5005 = vmatpush1.msra.mxu0 0.0
    %5006 = vmatprep.subr.mxu0 0.0
    %5007 = vmatpush1.msra.mxu0 0.0
    %5008 = vmatprep.subr.mxu0 0.0
    %5009 = vmatpush1.msra.mxu0 0.0
    %5010 = vmatprep.subr.mxu0 0.0
    %5011 = vmatpush1.msra.mxu0 0.0
    %5012 = vmatprep.subr.mxu0 0.0
    %5013 = vmatpush1.msra.mxu0 0.0
    %5014 = vmatprep.subr.mxu0 0.0
    %5015 = vmatpush1.msra.mxu0 0.0
    %5016 = vmatprep.subr.mxu0 0.0
    %5017 = vmatpush1.msra.mxu0 0.0
    %5018 = vmatprep.subr.mxu0 0.0
    %5019 = vmatpush1.msra.mxu0 0.0
    %5020 = vmatprep.subr.mxu0 0.0
    %5021 = vmatpush1.msra.mxu0 0.0
    %5022 = vmatprep.subr.mxu0 0.0
    %5023 = vmatpush1.msra.mxu0 0.0
    %5024 = vmatprep.subr.mxu0 0.0
    %5025 = vmatpush1.msra.mxu0 0.0
    %5026 = vmatprep.subr.mxu0 0.0
    %5027 = vmatpush1.msra.mxu0 0.0
    %5028 = vmatprep.subr.mxu0 0.0
    %5029 = vmatpush1.msra.mxu0 0.0
    %5030 = vmatprep.subr.mxu0 0.0
    %5031 = vmatpush1.msra.mxu0 0.0
    %5032 = vmatprep.subr.mxu0 0.0
    %5033 = vmatpush1.msra.mxu0 0.0
    %5034 = vmatprep.subr.mxu0 0.0
    %5035 = vmatpush1.msra.mxu0 0.0
    %5036 = vmatprep.subr.mxu0 0.0
    %5037 = vmatpush1.msra.mxu0 0.0
    %5038 = vmatprep.subr.mxu0 0.0
    %5039 = vmatpush1.msra.mxu0 0.0
    %5040 = vmatprep.mubr.f32.mxu0 0.0
    %5041 = vmatmul.mubr.f32.gmra.mrb[0].mxu0 %v4876
    %v5042 = vpop.f32.mrb[0].mxu0
    %v5043 = vadd.f32 0.0, %v5042
    %v5044 = vpop.f32.mrb[0].mxu0
    %v5045 = vadd.f32 0.0, %v5044
    %5046 = vmatprep.mubr.f32.mxu0 0.0
    %5047 = vmatmul.mubr.f32.gmra.mrb[0].mxu0 %v4879
    %v5048 = vpop.f32.mrb[0].mxu0
    %v5049 = vadd.f32 0.0, %v5048
    %v5050 = vpop.f32.mrb[0].mxu0
    %v5051 = vadd.f32 0.0, %v5050
    %5052 = vmatprep.mubr.f32.mxu0 0.0
    %5053 = vmatmul.mubr.f32.gmra.mrb[0].mxu0 %v4882
    %v5054 = vpop.f32.mrb[0].mxu0
    %v5055 = vadd.f32 0.0, %v5054
    %v5056 = vpop.f32.mrb[0].mxu0
    %v5057 = vadd.f32 0.0, %v5056
    %5058 = vmatprep.mubr.f32.mxu0 0.0
    %5059 = vmatmul.mubr.f32.gmra.mrb[0].mxu0 %v4885
    %v5060 = vpop.f32.mrb[0].mxu0
    %v5061 = vadd.f32 0.0, %v5060
    %v5062 = vpop.f32.mrb[0].mxu0
    %v5063 = vadd.f32 0.0, %v5062
    %5064 = vdwg.mxu0
    %5065 = vmatprep.subr.mxu0 %v4752
    %5066 = vmatpush1.msra.mxu0 %v4751
    %5067 = vmatprep.subr.mxu0 %v4760
    %5068 = vmatpush1.msra.mxu0 %v4759
    %5069 = vmatprep.subr.mxu0 %v4768
    %5070 = vmatpush1.msra.mxu0 %v4767
    %5071 = vmatprep.subr.mxu0 %v4776
    %5072 = vmatpush1.msra.mxu0 %v4775
    %5073 = vmatprep.subr.mxu0 %v4784
    %5074 = vmatpush1.msra.mxu0 %v4783
    %5075 = vmatprep.subr.mxu0 %v4792
    %5076 = vmatpush1.msra.mxu0 %v4791
    %5077 = vmatprep.subr.mxu0 %v4800
    %5078 = vmatpush1.msra.mxu0 %v4799
    %5079 = vmatprep.subr.mxu0 %v4808
    %5080 = vmatpush1.msra.mxu0 %v4807
    %5081 = vmatprep.subr.mxu0 0.0
    %5082 = vmatpush1.msra.mxu0 0.0
    %5083 = vmatprep.subr.mxu0 0.0
    %5084 = vmatpush1.msra.mxu0 0.0
    %5085 = vmatprep.subr.mxu0 0.0
    %5086 = vmatpush1.msra.mxu0 0.0
    %5087 = vmatprep.subr.mxu0 0.0
    %5088 = vmatpush1.msra.mxu0 0.0
    %5089 = vmatprep.subr.mxu0 0.0
    %5090 = vmatpush1.msra.mxu0 0.0
    %5091 = vmatprep.subr.mxu0 0.0
    %5092 = vmatpush1.msra.mxu0 0.0
    %5093 = vmatprep.subr.mxu0 0.0
    %5094 = vmatpush1.msra.mxu0 0.0
    %5095 = vmatprep.subr.mxu0 0.0
    %5096 = vmatpush1.msra.mxu0 0.0
    %5097 = vmatprep.subr.mxu0 0.0
    %5098 = vmatpush1.msra.mxu0 0.0
    %5099 = vmatprep.subr.mxu0 0.0
    %5100 = vmatpush1.msra.mxu0 0.0
    %5101 = vmatprep.subr.mxu0 0.0
    %5102 = vmatpush1.msra.mxu0 0.0
    %5103 = vmatprep.subr.mxu0 0.0
    %5104 = vmatpush1.msra.mxu0 0.0
    %5105 = vmatprep.subr.mxu0 0.0
    %5106 = vmatpush1.msra.mxu0 0.0
    %5107 = vmatprep.subr.mxu0 0.0
    %5108 = vmatpush1.msra.mxu0 0.0
    %5109 = vmatprep.subr.mxu0 0.0
    %5110 = vmatpush1.msra.mxu0 0.0
    %5111 = vmatprep.subr.mxu0 0.0
    %5112 = vmatpush1.msra.mxu0 0.0
    %5113 = vmatprep.subr.mxu0 0.0
    %5114 = vmatpush1.msra.mxu0 0.0
    %5115 = vmatprep.subr.mxu0 0.0
    %5116 = vmatpush1.msra.mxu0 0.0
    %5117 = vmatprep.subr.mxu0 0.0
    %5118 = vmatpush1.msra.mxu0 0.0
    %5119 = vmatprep.subr.mxu0 0.0
    %5120 = vmatpush1.msra.mxu0 0.0
    %5121 = vmatprep.subr.mxu0 0.0
    %5122 = vmatpush1.msra.mxu0 0.0
    %5123 = vmatprep.subr.mxu0 0.0
    %5124 = vmatpush1.msra.mxu0 0.0
    %5125 = vmatprep.subr.mxu0 0.0
    %5126 = vmatpush1.msra.mxu0 0.0
    %5127 = vmatprep.subr.mxu0 0.0
    %5128 = vmatpush1.msra.mxu0 0.0
    %5129 = vmatprep.mubr.f32.mxu0 0.0
    %5130 = vmatmul.mubr.f32.gmra.mrb[0].mxu0 %v4876
    %v5131 = vpop.f32.mrb[0].mxu0
    %v5132 = vadd.f32 0.0, %v5131
    %v5133 = vpop.f32.mrb[0].mxu0
    %v5134 = vadd.f32 0.0, %v5133
    %5135 = vmatprep.mubr.f32.mxu0 0.0
    %5136 = vmatmul.mubr.f32.gmra.mrb[0].mxu0 %v4879
    %v5137 = vpop.f32.mrb[0].mxu0
    %v5138 = vadd.f32 0.0, %v5137
    %v5139 = vpop.f32.mrb[0].mxu0
    %v5140 = vadd.f32 0.0, %v5139
    %5141 = vmatprep.mubr.f32.mxu0 0.0
    %5142 = vmatmul.mubr.f32.gmra.mrb[0].mxu0 %v4882
    %v5143 = vpop.f32.mrb[0].mxu0
    %v5144 = vadd.f32 0.0, %v5143
    %v5145 = vpop.f32.mrb[0].mxu0
    %v5146 = vadd.f32 0.0, %v5145
    %5147 = vmatprep.mubr.f32.mxu0 0.0
    %5148 = vmatmul.mubr.f32.gmra.mrb[0].mxu0 %v4885
    %v5149 = vpop.f32.mrb[0].mxu0
    %v5150 = vadd.f32 0.0, %v5149
    %v5151 = vpop.f32.mrb[0].mxu0
    %v5152 = vadd.f32 0.0, %v5151
    %5153 = vdwg.mxu0
    %5154 = vmatprep.subr.mxu0 %v4754
    %5155 = vmatpush1.msra.mxu0 %v4753
    %5156 = vmatprep.subr.mxu0 %v4762
    %5157 = vmatpush1.msra.mxu0 %v4761
    %5158 = vmatprep.subr.mxu0 %v4770
    %5159 = vmatpush1.msra.mxu0 %v4769
    %5160 = vmatprep.subr.mxu0 %v4778
    %5161 = vmatpush1.msra.mxu0 %v4777
    %5162 = vmatprep.subr.mxu0 %v4786
    %5163 = vmatpush1.msra.mxu0 %v4785
    %5164 = vmatprep.subr.mxu0 %v4794
    %5165 = vmatpush1.msra.mxu0 %v4793
    %5166 = vmatprep.subr.mxu0 %v4802
    %5167 = vmatpush1.msra.mxu0 %v4801
    %5168 = vmatprep.subr.mxu0 %v4810
    %5169 = vmatpush1.msra.mxu0 %v4809
    %5170 = vmatprep.subr.mxu0 0.0
    %5171 = vmatpush1.msra.mxu0 0.0
    %5172 = vmatprep.subr.mxu0 0.0
    %5173 = vmatpush1.msra.mxu0 0.0
    %5174 = vmatprep.subr.mxu0 0.0
    %5175 = vmatpush1.msra.mxu0 0.0
    %5176 = vmatprep.subr.mxu0 0.0
    %5177 = vmatpush1.msra.mxu0 0.0
    %5178 = vmatprep.subr.mxu0 0.0
    %5179 = vmatpush1.msra.mxu0 0.0
    %5180 = vmatprep.subr.mxu0 0.0
    %5181 = vmatpush1.msra.mxu0 0.0
    %5182 = vmatprep.subr.mxu0 0.0
    %5183 = vmatpush1.msra.mxu0 0.0
    %5184 = vmatprep.subr.mxu0 0.0
    %5185 = vmatpush1.msra.mxu0 0.0
    %5186 = vmatprep.subr.mxu0 0.0
    %5187 = vmatpush1.msra.mxu0 0.0
    %5188 = vmatprep.subr.mxu0 0.0
    %5189 = vmatpush1.msra.mxu0 0.0
    %5190 = vmatprep.subr.mxu0 0.0
    %5191 = vmatpush1.msra.mxu0 0.0
    %5192 = vmatprep.subr.mxu0 0.0
    %5193 = vmatpush1.msra.mxu0 0.0
    %5194 = vmatprep.subr.mxu0 0.0
    %5195 = vmatpush1.msra.mxu0 0.0
    %5196 = vmatprep.subr.mxu0 0.0
    %5197 = vmatpush1.msra.mxu0 0.0
    %5198 = vmatprep.subr.mxu0 0.0
    %5199 = vmatpush1.msra.mxu0 0.0
    %5200 = vmatprep.subr.mxu0 0.0
    %5201 = vmatpush1.msra.mxu0 0.0
    %5202 = vmatprep.subr.mxu0 0.0
    %5203 = vmatpush1.msra.mxu0 0.0
    %5204 = vmatprep.subr.mxu0 0.0
    %5205 = vmatpush1.msra.mxu0 0.0
    %5206 = vmatprep.subr.mxu0 0.0
    %5207 = vmatpush1.msra.mxu0 0.0
    %5208 = vmatprep.subr.mxu0 0.0
    %5209 = vmatpush1.msra.mxu0 0.0
    %5210 = vmatprep.subr.mxu0 0.0
    %5211 = vmatpush1.msra.mxu0 0.0
    %5212 = vmatprep.subr.mxu0 0.0
    %5213 = vmatpush1.msra.mxu0 0.0
    %5214 = vmatprep.subr.mxu0 0.0
    %5215 = vmatpush1.msra.mxu0 0.0
    %5216 = vmatprep.subr.mxu0 0.0
    %5217 = vmatpush1.msra.mxu0 0.0
    %5218 = vmatprep.mubr.f32.mxu0 0.0
    %5219 = vmatmul.mubr.f32.gmra.mrb[0].mxu0 %v4876
    %v5220 = vpop.f32.mrb[0].mxu0
    %v5221 = vadd.f32 0.0, %v5220
    %v5222 = vpop.f32.mrb[0].mxu0
    %v5223 = vadd.f32 0.0, %v5222
    %5224 = vmatprep.mubr.f32.mxu0 0.0
    %5225 = vmatmul.mubr.f32.gmra.mrb[0].mxu0 %v4879
    %v5226 = vpop.f32.mrb[0].mxu0
    %v5227 = vadd.f32 0.0, %v5226
    %v5228 = vpop.f32.mrb[0].mxu0
    %v5229 = vadd.f32 0.0, %v5228
    %5230 = vmatprep.mubr.f32.mxu0 0.0
    %5231 = vmatmul.mubr.f32.gmra.mrb[0].mxu0 %v4882
    %v5232 = vpop.f32.mrb[0].mxu0
    %v5233 = vadd.f32 0.0, %v5232
    %v5234 = vpop.f32.mrb[0].mxu0
    %v5235 = vadd.f32 0.0, %v5234
    %5236 = vmatprep.mubr.f32.mxu0 0.0
    %5237 = vmatmul.mubr.f32.gmra.mrb[0].mxu0 %v4885
    %v5238 = vpop.f32.mrb[0].mxu0
    %v5239 = vadd.f32 0.0, %v5238
    %v5240 = vpop.f32.mrb[0].mxu0
    %v5241 = vadd.f32 0.0, %v5240
    %5242 = vdwg.mxu0
    %v5243 = vadd.f32 %v4566, %v4954
    %v5244 = vadd.f32 %v4567, %v4956
    %v5245 = vadd.f32 %v4568, %v5043
    %v5246 = vadd.f32 %v4569, %v5045
    %v5247 = vadd.f32 %v4570, %v5132
    %v5248 = vadd.f32 %v4571, %v5134
    %v5249 = vadd.f32 %v4572, %v5221
    %v5250 = vadd.f32 %v4573, %v5223
    %v5251 = vadd.f32 %v4574, %v4960
    %v5252 = vadd.f32 %v4575, %v4962
    %v5253 = vadd.f32 %v4576, %v5049
    %v5254 = vadd.f32 %v4577, %v5051
    %v5255 = vadd.f32 %v4578, %v5138
    %v5256 = vadd.f32 %v4579, %v5140
    %v5257 = vadd.f32 %v4580, %v5227
    %v5258 = vadd.f32 %v4581, %v5229
    %v5259 = vadd.f32 %v4582, %v4966
    %v5260 = vadd.f32 %v4583, %v4968
    %v5261 = vadd.f32 %v4584, %v5055
    %v5262 = vadd.f32 %v4585, %v5057
    %v5263 = vadd.f32 %v4586, %v5144
    %v5264 = vadd.f32 %v4587, %v5146
    %v5265 = vadd.f32 %v4588, %v5233
    %v5266 = vadd.f32 %v4589, %v5235
    %v5267 = vadd.f32 %v4590, %v4972
    %v5268 = vadd.f32 %v4591, %v4974
    %v5269 = vadd.f32 %v4592, %v5061
    %v5270 = vadd.f32 %v4593, %v5063
    %v5271 = vadd.f32 %v4594, %v5150
    %v5272 = vadd.f32 %v4595, %v5152
    %v5273 = vadd.f32 %v4596, %v5239
    %v5274 = vadd.f32 %v4597, %v5241
    %s5275 = scalar_lea.vmem [#allocation4], 192
    %v5276 = vld [vmem:[%s5275] sm:$0xff]
    %v5277 = vld [vmem:[%s5275 + $0x8] sm:$0xff]
    %v5278 = vld [vmem:[%s5275 + $0x10] sm:$0xff]
    %v5279 = vld [vmem:[%s5275 + $0x18] sm:$0xff]
    %5280 = vrot.lane.b32.xlu0 %v1414, 84
    %v5281 = vpop.permute.xlu0 %5280
    %5282 = vrot.lane.b32.xlu0 %v1415, 84
    %v5283 = vpop.permute.xlu0 %5282
    %5284 = vrot.lane.b32.xlu0 %v1416, 84
    %v5285 = vpop.permute.xlu0 %5284
    %5286 = vrot.lane.b32.xlu0 %v1417, 84
    %v5287 = vpop.permute.xlu0 %5286
    %5288 = vrot.lane.b32.xlu0 %v1418, 84
    %v5289 = vpop.permute.xlu0 %5288
    %5290 = vrot.lane.b32.xlu0 %v1419, 84
    %v5291 = vpop.permute.xlu0 %5290
    %5292 = vrot.lane.b32.xlu0 %v1420, 84
    %v5293 = vpop.permute.xlu0 %5292
    %5294 = vrot.lane.b32.xlu0 %v1421, 84
    %v5295 = vpop.permute.xlu0 %5294
    %5296 = vrot.lane.b32.xlu0 %v1422, 84
    %v5297 = vpop.permute.xlu0 %5296
    %5298 = vrot.lane.b32.xlu0 %v1423, 84
    %v5299 = vpop.permute.xlu0 %5298
    %5300 = vrot.lane.b32.xlu0 %v1424, 84
    %v5301 = vpop.permute.xlu0 %5300
    %5302 = vrot.lane.b32.xlu0 %v1425, 84
    %v5303 = vpop.permute.xlu0 %5302
    %5304 = vrot.lane.b32.xlu0 %v1426, 84
    %v5305 = vpop.permute.xlu0 %5304
    %5306 = vrot.lane.b32.xlu0 %v1427, 84
    %v5307 = vpop.permute.xlu0 %5306
    %5308 = vrot.lane.b32.xlu0 %v1428, 84
    %v5309 = vpop.permute.xlu0 %5308
    %5310 = vrot.lane.b32.xlu0 %v1429, 84
    %v5311 = vpop.permute.xlu0 %5310
    %5312 = vrot.lane.b32.xlu0 %v1430, 84
    %v5313 = vpop.permute.xlu0 %5312
    %5314 = vrot.lane.b32.xlu0 %v1431, 84
    %v5315 = vpop.permute.xlu0 %5314
    %5316 = vrot.lane.b32.xlu0 %v1432, 84
    %v5317 = vpop.permute.xlu0 %5316
    %5318 = vrot.lane.b32.xlu0 %v1433, 84
    %v5319 = vpop.permute.xlu0 %5318
    %5320 = vrot.lane.b32.xlu0 %v1434, 84
    %v5321 = vpop.permute.xlu0 %5320
    %5322 = vrot.lane.b32.xlu0 %v1435, 84
    %v5323 = vpop.permute.xlu0 %5322
    %5324 = vrot.lane.b32.xlu0 %v1436, 84
    %v5325 = vpop.permute.xlu0 %5324
    %5326 = vrot.lane.b32.xlu0 %v1437, 84
    %v5327 = vpop.permute.xlu0 %5326
    %5328 = vrot.lane.b32.xlu0 %v1438, 84
    %v5329 = vpop.permute.xlu0 %5328
    %5330 = vrot.lane.b32.xlu0 %v1439, 84
    %v5331 = vpop.permute.xlu0 %5330
    %5332 = vrot.lane.b32.xlu0 %v1440, 84
    %v5333 = vpop.permute.xlu0 %5332
    %5334 = vrot.lane.b32.xlu0 %v1441, 84
    %v5335 = vpop.permute.xlu0 %5334
    %5336 = vrot.lane.b32.xlu0 %v1442, 84
    %v5337 = vpop.permute.xlu0 %5336
    %5338 = vrot.lane.b32.xlu0 %v1443, 84
    %v5339 = vpop.permute.xlu0 %5338
    %5340 = vrot.lane.b32.xlu0 %v1444, 84
    %v5341 = vpop.permute.xlu0 %5340
    %5342 = vrot.lane.b32.xlu0 %v1445, 84
    %v5343 = vpop.permute.xlu0 %5342
    %5344 = vrot.lane.b32.xlu0 %v1446, 84
    %v5345 = vpop.permute.xlu0 %5344
    %5346 = vrot.lane.b32.xlu0 %v1447, 84
    %v5347 = vpop.permute.xlu0 %5346
    %5348 = vrot.lane.b32.xlu0 %v1448, 84
    %v5349 = vpop.permute.xlu0 %5348
    %5350 = vrot.lane.b32.xlu0 %v1449, 84
    %v5351 = vpop.permute.xlu0 %5350
    %5352 = vrot.lane.b32.xlu0 %v1450, 84
    %v5353 = vpop.permute.xlu0 %5352
    %5354 = vrot.lane.b32.xlu0 %v1451, 84
    %v5355 = vpop.permute.xlu0 %5354
    %5356 = vrot.lane.b32.xlu0 %v1452, 84
    %v5357 = vpop.permute.xlu0 %5356
    %5358 = vrot.lane.b32.xlu0 %v1453, 84
    %v5359 = vpop.permute.xlu0 %5358
    %5360 = vrot.lane.b32.xlu0 %v1454, 84
    %v5361 = vpop.permute.xlu0 %5360
    %5362 = vrot.lane.b32.xlu0 %v1455, 84
    %v5363 = vpop.permute.xlu0 %5362
    %5364 = vrot.lane.b32.xlu0 %v1456, 84
    %v5365 = vpop.permute.xlu0 %5364
    %5366 = vrot.lane.b32.xlu0 %v1457, 84
    %v5367 = vpop.permute.xlu0 %5366
    %5368 = vrot.lane.b32.xlu0 %v1458, 84
    %v5369 = vpop.permute.xlu0 %5368
    %5370 = vrot.lane.b32.xlu0 %v1459, 84
    %v5371 = vpop.permute.xlu0 %5370
    %5372 = vrot.lane.b32.xlu0 %v1460, 84
    %v5373 = vpop.permute.xlu0 %5372
    %5374 = vrot.lane.b32.xlu0 %v1461, 84
    %v5375 = vpop.permute.xlu0 %5374
    %5376 = vrot.lane.b32.xlu0 %v1462, 84
    %v5377 = vpop.permute.xlu0 %5376
    %5378 = vrot.lane.b32.xlu0 %v1463, 84
    %v5379 = vpop.permute.xlu0 %5378
    %5380 = vrot.lane.b32.xlu0 %v1464, 84
    %v5381 = vpop.permute.xlu0 %5380
    %5382 = vrot.lane.b32.xlu0 %v1465, 84
    %v5383 = vpop.permute.xlu0 %5382
    %5384 = vrot.lane.b32.xlu0 %v1466, 84
    %v5385 = vpop.permute.xlu0 %5384
    %5386 = vrot.lane.b32.xlu0 %v1467, 84
    %v5387 = vpop.permute.xlu0 %5386
    %5388 = vrot.lane.b32.xlu0 %v1468, 84
    %v5389 = vpop.permute.xlu0 %5388
    %5390 = vrot.lane.b32.xlu0 %v1469, 84
    %v5391 = vpop.permute.xlu0 %5390
    %5392 = vrot.lane.b32.xlu0 %v1470, 84
    %v5393 = vpop.permute.xlu0 %5392
    %5394 = vrot.lane.b32.xlu0 %v1471, 84
    %v5395 = vpop.permute.xlu0 %5394
    %5396 = vrot.lane.b32.xlu0 %v1472, 84
    %v5397 = vpop.permute.xlu0 %5396
    %5398 = vrot.lane.b32.xlu0 %v1473, 84
    %v5399 = vpop.permute.xlu0 %5398
    %5400 = vrot.lane.b32.xlu0 %v1474, 84
    %v5401 = vpop.permute.xlu0 %5400
    %5402 = vrot.lane.b32.xlu0 %v1475, 84
    %v5403 = vpop.permute.xlu0 %5402
    %5404 = vrot.lane.b32.xlu0 %v1476, 84
    %v5405 = vpop.permute.xlu0 %5404
    %5406 = vrot.lane.b32.xlu0 %v1477, 84
    %v5407 = vpop.permute.xlu0 %5406
    %5408 = vrot.lane.b32.xlu0 %v1478, 84
    %v5409 = vpop.permute.xlu0 %5408
    %5410 = vrot.lane.b32.xlu0 %v1479, 84
    %v5411 = vpop.permute.xlu0 %5410
    %5412 = vrot.lane.b32.xlu0 %v1480, 84
    %v5413 = vpop.permute.xlu0 %5412
    %5414 = vrot.lane.b32.xlu0 %v1481, 84
    %v5415 = vpop.permute.xlu0 %5414
    %5416 = vrot.lane.b32.xlu0 %v1482, 84
    %v5417 = vpop.permute.xlu0 %5416
    %5418 = vrot.lane.b32.xlu0 %v1483, 84
    %v5419 = vpop.permute.xlu0 %5418
    %5420 = vrot.lane.b32.xlu0 %v1484, 84
    %v5421 = vpop.permute.xlu0 %5420
    %5422 = vrot.lane.b32.xlu0 %v1485, 84
    %v5423 = vpop.permute.xlu0 %5422
    %v5424 = vsel %vm245, %v5281, %v5283
    %v5425 = vsel %vm245, %v5283, %v5285
    %v5426 = vsel %vm245, %v5285, %v5287
    %v5427 = vsel %vm245, %v5287, %v5289
    %v5428 = vsel %vm245, %v5289, %v5291
    %v5429 = vsel %vm245, %v5291, %v5293
    %v5430 = vsel %vm245, %v5293, %v5295
    %v5431 = vsel %vm245, %v5295, %v5297
    %v5432 = vsel %vm245, %v5299, %v5301
    %v5433 = vsel %vm245, %v5301, %v5303
    %v5434 = vsel %vm245, %v5303, %v5305
    %v5435 = vsel %vm245, %v5305, %v5307
    %v5436 = vsel %vm245, %v5307, %v5309
    %v5437 = vsel %vm245, %v5309, %v5311
    %v5438 = vsel %vm245, %v5311, %v5313
    %v5439 = vsel %vm245, %v5313, %v5315
    %v5440 = vsel %vm245, %v5317, %v5319
    %v5441 = vsel %vm245, %v5319, %v5321
    %v5442 = vsel %vm245, %v5321, %v5323
    %v5443 = vsel %vm245, %v5323, %v5325
    %v5444 = vsel %vm245, %v5325, %v5327
    %v5445 = vsel %vm245, %v5327, %v5329
    %v5446 = vsel %vm245, %v5329, %v5331
    %v5447 = vsel %vm245, %v5331, %v5333
    %v5448 = vsel %vm245, %v5335, %v5337
    %v5449 = vsel %vm245, %v5337, %v5339
    %v5450 = vsel %vm245, %v5339, %v5341
    %v5451 = vsel %vm245, %v5341, %v5343
    %v5452 = vsel %vm245, %v5343, %v5345
    %v5453 = vsel %vm245, %v5345, %v5347
    %v5454 = vsel %vm245, %v5347, %v5349
    %v5455 = vsel %vm245, %v5349, %v5351
    %v5456 = vsel %vm245, %v5353, %v5355
    %v5457 = vsel %vm245, %v5355, %v5357
    %v5458 = vsel %vm245, %v5357, %v5359
    %v5459 = vsel %vm245, %v5359, %v5361
    %v5460 = vsel %vm245, %v5361, %v5363
    %v5461 = vsel %vm245, %v5363, %v5365
    %v5462 = vsel %vm245, %v5365, %v5367
    %v5463 = vsel %vm245, %v5367, %v5369
    %v5464 = vsel %vm245, %v5371, %v5373
    %v5465 = vsel %vm245, %v5373, %v5375
    %v5466 = vsel %vm245, %v5375, %v5377
    %v5467 = vsel %vm245, %v5377, %v5379
    %v5468 = vsel %vm245, %v5379, %v5381
    %v5469 = vsel %vm245, %v5381, %v5383
    %v5470 = vsel %vm245, %v5383, %v5385
    %v5471 = vsel %vm245, %v5385, %v5387
    %v5472 = vsel %vm245, %v5389, %v5391
    %v5473 = vsel %vm245, %v5391, %v5393
    %v5474 = vsel %vm245, %v5393, %v5395
    %v5475 = vsel %vm245, %v5395, %v5397
    %v5476 = vsel %vm245, %v5397, %v5399
    %v5477 = vsel %vm245, %v5399, %v5401
    %v5478 = vsel %vm245, %v5401, %v5403
    %v5479 = vsel %vm245, %v5403, %v5405
    %v5480 = vsel %vm245, %v5407, %v5409
    %v5481 = vsel %vm245, %v5409, %v5411
    %v5482 = vsel %vm245, %v5411, %v5413
    %v5483 = vsel %vm245, %v5413, %v5415
    %v5484 = vsel %vm245, %v5415, %v5417
    %v5485 = vsel %vm245, %v5417, %v5419
    %v5486 = vsel %vm245, %v5419, %v5421
    %v5487 = vsel %vm245, %v5421, %v5423
    %v5553 = vsel %vm1830, %v5276, 0
    %v5556 = vsel %vm1830, %v5277, 0
    %v5559 = vsel %vm1830, %v5278, 0
    %v5562 = vsel %vm1830, %v5279, 0
    %5564 = vmatprep.subr.mxu0 %v5425
    %5565 = vmatpush1.msra.mxu0 %v5424
    %5566 = vmatprep.subr.mxu0 %v5433
    %5567 = vmatpush1.msra.mxu0 %v5432
    %5568 = vmatprep.subr.mxu0 %v5441
    %5569 = vmatpush1.msra.mxu0 %v5440
    %5570 = vmatprep.subr.mxu0 %v5449
    %5571 = vmatpush1.msra.mxu0 %v5448
    %5572 = vmatprep.subr.mxu0 %v5457
    %5573 = vmatpush1.msra.mxu0 %v5456
    %5574 = vmatprep.subr.mxu0 %v5465
    %5575 = vmatpush1.msra.mxu0 %v5464
    %5576 = vmatprep.subr.mxu0 %v5473
    %5577 = vmatpush1.msra.mxu0 %v5472
    %5578 = vmatprep.subr.mxu0 %v5481
    %5579 = vmatpush1.msra.mxu0 %v5480
    %5580 = vmatprep.subr.mxu0 0.0
    %5581 = vmatpush1.msra.mxu0 0.0
    %5582 = vmatprep.subr.mxu0 0.0
    %5583 = vmatpush1.msra.mxu0 0.0
    %5584 = vmatprep.subr.mxu0 0.0
    %5585 = vmatpush1.msra.mxu0 0.0
    %5586 = vmatprep.subr.mxu0 0.0
    %5587 = vmatpush1.msra.mxu0 0.0
    %5588 = vmatprep.subr.mxu0 0.0
    %5589 = vmatpush1.msra.mxu0 0.0
    %5590 = vmatprep.subr.mxu0 0.0
    %5591 = vmatpush1.msra.mxu0 0.0
    %5592 = vmatprep.subr.mxu0 0.0
    %5593 = vmatpush1.msra.mxu0 0.0
    %5594 = vmatprep.subr.mxu0 0.0
    %5595 = vmatpush1.msra.mxu0 0.0
    %5596 = vmatprep.subr.mxu0 0.0
    %5597 = vmatpush1.msra.mxu0 0.0
    %5598 = vmatprep.subr.mxu0 0.0
    %5599 = vmatpush1.msra.mxu0 0.0
    %5600 = vmatprep.subr.mxu0 0.0
    %5601 = vmatpush1.msra.mxu0 0.0
    %5602 = vmatprep.subr.mxu0 0.0
    %5603 = vmatpush1.msra.mxu0 0.0
    %5604 = vmatprep.subr.mxu0 0.0
    %5605 = vmatpush1.msra.mxu0 0.0
    %5606 = vmatprep.subr.mxu0 0.0
    %5607 = vmatpush1.msra.mxu0 0.0
    %5608 = vmatprep.subr.mxu0 0.0
    %5609 = vmatpush1.msra.mxu0 0.0
    %5610 = vmatprep.subr.mxu0 0.0
    %5611 = vmatpush1.msra.mxu0 0.0
    %5612 = vmatprep.subr.mxu0 0.0
    %5613 = vmatpush1.msra.mxu0 0.0
    %5614 = vmatprep.subr.mxu0 0.0
    %5615 = vmatpush1.msra.mxu0 0.0
    %5616 = vmatprep.subr.mxu0 0.0
    %5617 = vmatpush1.msra.mxu0 0.0
    %5618 = vmatprep.subr.mxu0 0.0
    %5619 = vmatpush1.msra.mxu0 0.0
    %5620 = vmatprep.subr.mxu0 0.0
    %5621 = vmatpush1.msra.mxu0 0.0
    %5622 = vmatprep.subr.mxu0 0.0
    %5623 = vmatpush1.msra.mxu0 0.0
    %5624 = vmatprep.subr.mxu0 0.0
    %5625 = vmatpush1.msra.mxu0 0.0
    %5626 = vmatprep.subr.mxu0 0.0
    %5627 = vmatpush1.msra.mxu0 0.0
    %5628 = vmatprep.mubr.f32.mxu0 0.0
    %5629 = vmatmul.mubr.f32.gmra.mrb[0].mxu0 %v5553
    %v5630 = vpop.f32.mrb[0].mxu0
    %v5631 = vadd.f32 0.0, %v5630
    %v5632 = vpop.f32.mrb[0].mxu0
    %v5633 = vadd.f32 0.0, %v5632
    %5634 = vmatprep.mubr.f32.mxu0 0.0
    %5635 = vmatmul.mubr.f32.gmra.mrb[0].mxu0 %v5556
    %v5636 = vpop.f32.mrb[0].mxu0
    %v5637 = vadd.f32 0.0, %v5636
    %v5638 = vpop.f32.mrb[0].mxu0
    %v5639 = vadd.f32 0.0, %v5638
    %5640 = vmatprep.mubr.f32.mxu0 0.0
    %5641 = vmatmul.mubr.f32.gmra.mrb[0].mxu0 %v5559
    %v5642 = vpop.f32.mrb[0].mxu0
    %v5643 = vadd.f32 0.0, %v5642
    %v5644 = vpop.f32.mrb[0].mxu0
    %v5645 = vadd.f32 0.0, %v5644
    %5646 = vmatprep.mubr.f32.mxu0 0.0
    %5647 = vmatmul.mubr.f32.gmra.mrb[0].mxu0 %v5562
    %v5648 = vpop.f32.mrb[0].mxu0
    %v5649 = vadd.f32 0.0, %v5648
    %v5650 = vpop.f32.mrb[0].mxu0
    %v5651 = vadd.f32 0.0, %v5650
    %5652 = vdwg.mxu0
    %5653 = vmatprep.subr.mxu0 %v5427
    %5654 = vmatpush1.msra.mxu0 %v5426
    %5655 = vmatprep.subr.mxu0 %v5435
    %5656 = vmatpush1.msra.mxu0 %v5434
    %5657 = vmatprep.subr.mxu0 %v5443
    %5658 = vmatpush1.msra.mxu0 %v5442
    %5659 = vmatprep.subr.mxu0 %v5451
    %5660 = vmatpush1.msra.mxu0 %v5450
    %5661 = vmatprep.subr.mxu0 %v5459
    %5662 = vmatpush1.msra.mxu0 %v5458
    %5663 = vmatprep.subr.mxu0 %v5467
    %5664 = vmatpush1.msra.mxu0 %v5466
    %5665 = vmatprep.subr.mxu0 %v5475
    %5666 = vmatpush1.msra.mxu0 %v5474
    %5667 = vmatprep.subr.mxu0 %v5483
    %5668 = vmatpush1.msra.mxu0 %v5482
    %5669 = vmatprep.subr.mxu0 0.0
    %5670 = vmatpush1.msra.mxu0 0.0
    %5671 = vmatprep.subr.mxu0 0.0
    %5672 = vmatpush1.msra.mxu0 0.0
    %5673 = vmatprep.subr.mxu0 0.0
    %5674 = vmatpush1.msra.mxu0 0.0
    %5675 = vmatprep.subr.mxu0 0.0
    %5676 = vmatpush1.msra.mxu0 0.0
    %5677 = vmatprep.subr.mxu0 0.0
    %5678 = vmatpush1.msra.mxu0 0.0
    %5679 = vmatprep.subr.mxu0 0.0
    %5680 = vmatpush1.msra.mxu0 0.0
    %5681 = vmatprep.subr.mxu0 0.0
    %5682 = vmatpush1.msra.mxu0 0.0
    %5683 = vmatprep.subr.mxu0 0.0
    %5684 = vmatpush1.msra.mxu0 0.0
    %5685 = vmatprep.subr.mxu0 0.0
    %5686 = vmatpush1.msra.mxu0 0.0
    %5687 = vmatprep.subr.mxu0 0.0
    %5688 = vmatpush1.msra.mxu0 0.0
    %5689 = vmatprep.subr.mxu0 0.0
    %5690 = vmatpush1.msra.mxu0 0.0
    %5691 = vmatprep.subr.mxu0 0.0
    %5692 = vmatpush1.msra.mxu0 0.0
    %5693 = vmatprep.subr.mxu0 0.0
    %5694 = vmatpush1.msra.mxu0 0.0
    %5695 = vmatprep.subr.mxu0 0.0
    %5696 = vmatpush1.msra.mxu0 0.0
    %5697 = vmatprep.subr.mxu0 0.0
    %5698 = vmatpush1.msra.mxu0 0.0
    %5699 = vmatprep.subr.mxu0 0.0
    %5700 = vmatpush1.msra.mxu0 0.0
    %5701 = vmatprep.subr.mxu0 0.0
    %5702 = vmatpush1.msra.mxu0 0.0
    %5703 = vmatprep.subr.mxu0 0.0
    %5704 = vmatpush1.msra.mxu0 0.0
    %5705 = vmatprep.subr.mxu0 0.0
    %5706 = vmatpush1.msra.mxu0 0.0
    %5707 = vmatprep.subr.mxu0 0.0
    %5708 = vmatpush1.msra.mxu0 0.0
    %5709 = vmatprep.subr.mxu0 0.0
    %5710 = vmatpush1.msra.mxu0 0.0
    %5711 = vmatprep.subr.mxu0 0.0
    %5712 = vmatpush1.msra.mxu0 0.0
    %5713 = vmatprep.subr.mxu0 0.0
    %5714 = vmatpush1.msra.mxu0 0.0
    %5715 = vmatprep.subr.mxu0 0.0
    %5716 = vmatpush1.msra.mxu0 0.0
    %5717 = vmatprep.mubr.f32.mxu0 0.0
    %5718 = vmatmul.mubr.f32.gmra.mrb[0].mxu0 %v5553
    %v5719 = vpop.f32.mrb[0].mxu0
    %v5720 = vadd.f32 0.0, %v5719
    %v5721 = vpop.f32.mrb[0].mxu0
    %v5722 = vadd.f32 0.0, %v5721
    %5723 = vmatprep.mubr.f32.mxu0 0.0
    %5724 = vmatmul.mubr.f32.gmra.mrb[0].mxu0 %v5556
    %v5725 = vpop.f32.mrb[0].mxu0
    %v5726 = vadd.f32 0.0, %v5725
    %v5727 = vpop.f32.mrb[0].mxu0
    %v5728 = vadd.f32 0.0, %v5727
    %5729 = vmatprep.mubr.f32.mxu0 0.0
    %5730 = vmatmul.mubr.f32.gmra.mrb[0].mxu0 %v5559
    %v5731 = vpop.f32.mrb[0].mxu0
    %v5732 = vadd.f32 0.0, %v5731
    %v5733 = vpop.f32.mrb[0].mxu0
    %v5734 = vadd.f32 0.0, %v5733
    %5735 = vmatprep.mubr.f32.mxu0 0.0
    %5736 = vmatmul.mubr.f32.gmra.mrb[0].mxu0 %v5562
    %v5737 = vpop.f32.mrb[0].mxu0
    %v5738 = vadd.f32 0.0, %v5737
    %v5739 = vpop.f32.mrb[0].mxu0
    %v5740 = vadd.f32 0.0, %v5739
    %5741 = vdwg.mxu0
    %5742 = vmatprep.subr.mxu0 %v5429
    %5743 = vmatpush1.msra.mxu0 %v5428
    %5744 = vmatprep.subr.mxu0 %v5437
    %5745 = vmatpush1.msra.mxu0 %v5436
    %5746 = vmatprep.subr.mxu0 %v5445
    %5747 = vmatpush1.msra.mxu0 %v5444
    %5748 = vmatprep.subr.mxu0 %v5453
    %5749 = vmatpush1.msra.mxu0 %v5452
    %5750 = vmatprep.subr.mxu0 %v5461
    %5751 = vmatpush1.msra.mxu0 %v5460
    %5752 = vmatprep.subr.mxu0 %v5469
    %5753 = vmatpush1.msra.mxu0 %v5468
    %5754 = vmatprep.subr.mxu0 %v5477
    %5755 = vmatpush1.msra.mxu0 %v5476
    %5756 = vmatprep.subr.mxu0 %v5485
    %5757 = vmatpush1.msra.mxu0 %v5484
    %5758 = vmatprep.subr.mxu0 0.0
    %5759 = vmatpush1.msra.mxu0 0.0
    %5760 = vmatprep.subr.mxu0 0.0
    %5761 = vmatpush1.msra.mxu0 0.0
    %5762 = vmatprep.subr.mxu0 0.0
    %5763 = vmatpush1.msra.mxu0 0.0
    %5764 = vmatprep.subr.mxu0 0.0
    %5765 = vmatpush1.msra.mxu0 0.0
    %5766 = vmatprep.subr.mxu0 0.0
    %5767 = vmatpush1.msra.mxu0 0.0
    %5768 = vmatprep.subr.mxu0 0.0
    %5769 = vmatpush1.msra.mxu0 0.0
    %5770 = vmatprep.subr.mxu0 0.0
    %5771 = vmatpush1.msra.mxu0 0.0
    %5772 = vmatprep.subr.mxu0 0.0
    %5773 = vmatpush1.msra.mxu0 0.0
    %5774 = vmatprep.subr.mxu0 0.0
    %5775 = vmatpush1.msra.mxu0 0.0
    %5776 = vmatprep.subr.mxu0 0.0
    %5777 = vmatpush1.msra.mxu0 0.0
    %5778 = vmatprep.subr.mxu0 0.0
    %5779 = vmatpush1.msra.mxu0 0.0
    %5780 = vmatprep.subr.mxu0 0.0
    %5781 = vmatpush1.msra.mxu0 0.0
    %5782 = vmatprep.subr.mxu0 0.0
    %5783 = vmatpush1.msra.mxu0 0.0
    %5784 = vmatprep.subr.mxu0 0.0
    %5785 = vmatpush1.msra.mxu0 0.0
    %5786 = vmatprep.subr.mxu0 0.0
    %5787 = vmatpush1.msra.mxu0 0.0
    %5788 = vmatprep.subr.mxu0 0.0
    %5789 = vmatpush1.msra.mxu0 0.0
    %5790 = vmatprep.subr.mxu0 0.0
    %5791 = vmatpush1.msra.mxu0 0.0
    %5792 = vmatprep.subr.mxu0 0.0
    %5793 = vmatpush1.msra.mxu0 0.0
    %5794 = vmatprep.subr.mxu0 0.0
    %5795 = vmatpush1.msra.mxu0 0.0
    %5796 = vmatprep.subr.mxu0 0.0
    %5797 = vmatpush1.msra.mxu0 0.0
    %5798 = vmatprep.subr.mxu0 0.0
    %5799 = vmatpush1.msra.mxu0 0.0
    %5800 = vmatprep.subr.mxu0 0.0
    %5801 = vmatpush1.msra.mxu0 0.0
    %5802 = vmatprep.subr.mxu0 0.0
    %5803 = vmatpush1.msra.mxu0 0.0
    %5804 = vmatprep.subr.mxu0 0.0
    %5805 = vmatpush1.msra.mxu0 0.0
    %5806 = vmatprep.mubr.f32.mxu0 0.0
    %5807 = vmatmul.mubr.f32.gmra.mrb[0].mxu0 %v5553
    %v5808 = vpop.f32.mrb[0].mxu0
    %v5809 = vadd.f32 0.0, %v5808
    %v5810 = vpop.f32.mrb[0].mxu0
    %v5811 = vadd.f32 0.0, %v5810
    %5812 = vmatprep.mubr.f32.mxu0 0.0
    %5813 = vmatmul.mubr.f32.gmra.mrb[0].mxu0 %v5556
    %v5814 = vpop.f32.mrb[0].mxu0
    %v5815 = vadd.f32 0.0, %v5814
    %v5816 = vpop.f32.mrb[0].mxu0
    %v5817 = vadd.f32 0.0, %v5816
    %5818 = vmatprep.mubr.f32.mxu0 0.0
    %5819 = vmatmul.mubr.f32.gmra.mrb[0].mxu0 %v5559
    %v5820 = vpop.f32.mrb[0].mxu0
    %v5821 = vadd.f32 0.0, %v5820
    %v5822 = vpop.f32.mrb[0].mxu0
    %v5823 = vadd.f32 0.0, %v5822
    %5824 = vmatprep.mubr.f32.mxu0 0.0
    %5825 = vmatmul.mubr.f32.gmra.mrb[0].mxu0 %v5562
    %v5826 = vpop.f32.mrb[0].mxu0
    %v5827 = vadd.f32 0.0, %v5826
    %v5828 = vpop.f32.mrb[0].mxu0
    %v5829 = vadd.f32 0.0, %v5828
    %5830 = vdwg.mxu0
    %5831 = vmatprep.subr.mxu0 %v5431
    %5832 = vmatpush1.msra.mxu0 %v5430
    %5833 = vmatprep.subr.mxu0 %v5439
    %5834 = vmatpush1.msra.mxu0 %v5438
    %5835 = vmatprep.subr.mxu0 %v5447
    %5836 = vmatpush1.msra.mxu0 %v5446
    %5837 = vmatprep.subr.mxu0 %v5455
    %5838 = vmatpush1.msra.mxu0 %v5454
    %5839 = vmatprep.subr.mxu0 %v5463
    %5840 = vmatpush1.msra.mxu0 %v5462
    %5841 = vmatprep.subr.mxu0 %v5471
    %5842 = vmatpush1.msra.mxu0 %v5470
    %5843 = vmatprep.subr.mxu0 %v5479
    %5844 = vmatpush1.msra.mxu0 %v5478
    %5845 = vmatprep.subr.mxu0 %v5487
    %5846 = vmatpush1.msra.mxu0 %v5486
    %5847 = vmatprep.subr.mxu0 0.0
    %5848 = vmatpush1.msra.mxu0 0.0
    %5849 = vmatprep.subr.mxu0 0.0
    %5850 = vmatpush1.msra.mxu0 0.0
    %5851 = vmatprep.subr.mxu0 0.0
    %5852 = vmatpush1.msra.mxu0 0.0
    %5853 = vmatprep.subr.mxu0 0.0
    %5854 = vmatpush1.msra.mxu0 0.0
    %5855 = vmatprep.subr.mxu0 0.0
    %5856 = vmatpush1.msra.mxu0 0.0
    %5857 = vmatprep.subr.mxu0 0.0
    %5858 = vmatpush1.msra.mxu0 0.0
    %5859 = vmatprep.subr.mxu0 0.0
    %5860 = vmatpush1.msra.mxu0 0.0
    %5861 = vmatprep.subr.mxu0 0.0
    %5862 = vmatpush1.msra.mxu0 0.0
    %5863 = vmatprep.subr.mxu0 0.0
    %5864 = vmatpush1.msra.mxu0 0.0
    %5865 = vmatprep.subr.mxu0 0.0
    %5866 = vmatpush1.msra.mxu0 0.0
    %5867 = vmatprep.subr.mxu0 0.0
    %5868 = vmatpush1.msra.mxu0 0.0
    %5869 = vmatprep.subr.mxu0 0.0
    %5870 = vmatpush1.msra.mxu0 0.0
    %5871 = vmatprep.subr.mxu0 0.0
    %5872 = vmatpush1.msra.mxu0 0.0
    %5873 = vmatprep.subr.mxu0 0.0
    %5874 = vmatpush1.msra.mxu0 0.0
    %5875 = vmatprep.subr.mxu0 0.0
    %5876 = vmatpush1.msra.mxu0 0.0
    %5877 = vmatprep.subr.mxu0 0.0
    %5878 = vmatpush1.msra.mxu0 0.0
    %5879 = vmatprep.subr.mxu0 0.0
    %5880 = vmatpush1.msra.mxu0 0.0
    %5881 = vmatprep.subr.mxu0 0.0
    %5882 = vmatpush1.msra.mxu0 0.0
    %5883 = vmatprep.subr.mxu0 0.0
    %5884 = vmatpush1.msra.mxu0 0.0
    %5885 = vmatprep.subr.mxu0 0.0
    %5886 = vmatpush1.msra.mxu0 0.0
    %5887 = vmatprep.subr.mxu0 0.0
    %5888 = vmatpush1.msra.mxu0 0.0
    %5889 = vmatprep.subr.mxu0 0.0
    %5890 = vmatpush1.msra.mxu0 0.0
    %5891 = vmatprep.subr.mxu0 0.0
    %5892 = vmatpush1.msra.mxu0 0.0
    %5893 = vmatprep.subr.mxu0 0.0
    %5894 = vmatpush1.msra.mxu0 0.0
    %5895 = vmatprep.mubr.f32.mxu0 0.0
    %5896 = vmatmul.mubr.f32.gmra.mrb[0].mxu0 %v5553
    %v5897 = vpop.f32.mrb[0].mxu0
    %v5898 = vadd.f32 0.0, %v5897
    %v5899 = vpop.f32.mrb[0].mxu0
    %v5900 = vadd.f32 0.0, %v5899
    %5901 = vmatprep.mubr.f32.mxu0 0.0
    %5902 = vmatmul.mubr.f32.gmra.mrb[0].mxu0 %v5556
    %v5903 = vpop.f32.mrb[0].mxu0
    %v5904 = vadd.f32 0.0, %v5903
    %v5905 = vpop.f32.mrb[0].mxu0
    %v5906 = vadd.f32 0.0, %v5905
    %5907 = vmatprep.mubr.f32.mxu0 0.0
    %5908 = vmatmul.mubr.f32.gmra.mrb[0].mxu0 %v5559
    %v5909 = vpop.f32.mrb[0].mxu0
    %v5910 = vadd.f32 0.0, %v5909
    %v5911 = vpop.f32.mrb[0].mxu0
    %v5912 = vadd.f32 0.0, %v5911
    %5913 = vmatprep.mubr.f32.mxu0 0.0
    %5914 = vmatmul.mubr.f32.gmra.mrb[0].mxu0 %v5562
    %v5915 = vpop.f32.mrb[0].mxu0
    %v5916 = vadd.f32 0.0, %v5915
    %v5917 = vpop.f32.mrb[0].mxu0
    %v5918 = vadd.f32 0.0, %v5917
    %5919 = vdwg.mxu0
    %v5920 = vadd.f32 %v5243, %v5631
    %v5921 = vadd.f32 %v5244, %v5633
    %v5922 = vadd.f32 %v5245, %v5720
    %v5923 = vadd.f32 %v5246, %v5722
    %v5924 = vadd.f32 %v5247, %v5809
    %v5925 = vadd.f32 %v5248, %v5811
    %v5926 = vadd.f32 %v5249, %v5898
    %v5927 = vadd.f32 %v5250, %v5900
    %v5928 = vadd.f32 %v5251, %v5637
    %v5929 = vadd.f32 %v5252, %v5639
    %v5930 = vadd.f32 %v5253, %v5726
    %v5931 = vadd.f32 %v5254, %v5728
    %v5932 = vadd.f32 %v5255, %v5815
    %v5933 = vadd.f32 %v5256, %v5817
    %v5934 = vadd.f32 %v5257, %v5904
    %v5935 = vadd.f32 %v5258, %v5906
    %v5936 = vadd.f32 %v5259, %v5643
    %v5937 = vadd.f32 %v5260, %v5645
    %v5938 = vadd.f32 %v5261, %v5732
    %v5939 = vadd.f32 %v5262, %v5734
    %v5940 = vadd.f32 %v5263, %v5821
    %v5941 = vadd.f32 %v5264, %v5823
    %v5942 = vadd.f32 %v5265, %v5910
    %v5943 = vadd.f32 %v5266, %v5912
    %v5944 = vadd.f32 %v5267, %v5649
    %v5945 = vadd.f32 %v5268, %v5651
    %v5946 = vadd.f32 %v5269, %v5738
    %v5947 = vadd.f32 %v5270, %v5740
    %v5948 = vadd.f32 %v5271, %v5827
    %v5949 = vadd.f32 %v5272, %v5829
    %v5950 = vadd.f32 %v5273, %v5916
    %v5951 = vadd.f32 %v5274, %v5918
    %s5952 = scalar_lea.vmem [#allocation4], 224
    %v5953 = vld [vmem:[%s5952] sm:$0xff]
    %v5954 = vld [vmem:[%s5952 + $0x8] sm:$0xff]
    %v5955 = vld [vmem:[%s5952 + $0x10] sm:$0xff]
    %v5956 = vld [vmem:[%s5952 + $0x18] sm:$0xff]
    %5957 = vrot.lane.b32.xlu0 %v1414, 83
    %v5958 = vpop.permute.xlu0 %5957
    %5959 = vrot.lane.b32.xlu0 %v1415, 83
    %v5960 = vpop.permute.xlu0 %5959
    %5961 = vrot.lane.b32.xlu0 %v1416, 83
    %v5962 = vpop.permute.xlu0 %5961
    %5963 = vrot.lane.b32.xlu0 %v1417, 83
    %v5964 = vpop.permute.xlu0 %5963
    %5965 = vrot.lane.b32.xlu0 %v1418, 83
    %v5966 = vpop.permute.xlu0 %5965
    %5967 = vrot.lane.b32.xlu0 %v1419, 83
    %v5968 = vpop.permute.xlu0 %5967
    %5969 = vrot.lane.b32.xlu0 %v1420, 83
    %v5970 = vpop.permute.xlu0 %5969
    %5971 = vrot.lane.b32.xlu0 %v1421, 83
    %v5972 = vpop.permute.xlu0 %5971
    %5973 = vrot.lane.b32.xlu0 %v1422, 83
    %v5974 = vpop.permute.xlu0 %5973
    %5975 = vrot.lane.b32.xlu0 %v1423, 83
    %v5976 = vpop.permute.xlu0 %5975
    %5977 = vrot.lane.b32.xlu0 %v1424, 83
    %v5978 = vpop.permute.xlu0 %5977
    %5979 = vrot.lane.b32.xlu0 %v1425, 83
    %v5980 = vpop.permute.xlu0 %5979
    %5981 = vrot.lane.b32.xlu0 %v1426, 83
    %v5982 = vpop.permute.xlu0 %5981
    %5983 = vrot.lane.b32.xlu0 %v1427, 83
    %v5984 = vpop.permute.xlu0 %5983
    %5985 = vrot.lane.b32.xlu0 %v1428, 83
    %v5986 = vpop.permute.xlu0 %5985
    %5987 = vrot.lane.b32.xlu0 %v1429, 83
    %v5988 = vpop.permute.xlu0 %5987
    %5989 = vrot.lane.b32.xlu0 %v1430, 83
    %v5990 = vpop.permute.xlu0 %5989
    %5991 = vrot.lane.b32.xlu0 %v1431, 83
    %v5992 = vpop.permute.xlu0 %5991
    %5993 = vrot.lane.b32.xlu0 %v1432, 83
    %v5994 = vpop.permute.xlu0 %5993
    %5995 = vrot.lane.b32.xlu0 %v1433, 83
    %v5996 = vpop.permute.xlu0 %5995
    %5997 = vrot.lane.b32.xlu0 %v1434, 83
    %v5998 = vpop.permute.xlu0 %5997
    %5999 = vrot.lane.b32.xlu0 %v1435, 83
    %v6000 = vpop.permute.xlu0 %5999
    %6001 = vrot.lane.b32.xlu0 %v1436, 83
    %v6002 = vpop.permute.xlu0 %6001
    %6003 = vrot.lane.b32.xlu0 %v1437, 83
    %v6004 = vpop.permute.xlu0 %6003
    %6005 = vrot.lane.b32.xlu0 %v1438, 83
    %v6006 = vpop.permute.xlu0 %6005
    %6007 = vrot.lane.b32.xlu0 %v1439, 83
    %v6008 = vpop.permute.xlu0 %6007
    %6009 = vrot.lane.b32.xlu0 %v1440, 83
    %v6010 = vpop.permute.xlu0 %6009
    %6011 = vrot.lane.b32.xlu0 %v1441, 83
    %v6012 = vpop.permute.xlu0 %6011
    %6013 = vrot.lane.b32.xlu0 %v1442, 83
    %v6014 = vpop.permute.xlu0 %6013
    %6015 = vrot.lane.b32.xlu0 %v1443, 83
    %v6016 = vpop.permute.xlu0 %6015
    %6017 = vrot.lane.b32.xlu0 %v1444, 83
    %v6018 = vpop.permute.xlu0 %6017
    %6019 = vrot.lane.b32.xlu0 %v1445, 83
    %v6020 = vpop.permute.xlu0 %6019
    %6021 = vrot.lane.b32.xlu0 %v1446, 83
    %v6022 = vpop.permute.xlu0 %6021
    %6023 = vrot.lane.b32.xlu0 %v1447, 83
    %v6024 = vpop.permute.xlu0 %6023
    %6025 = vrot.lane.b32.xlu0 %v1448, 83
    %v6026 = vpop.permute.xlu0 %6025
    %6027 = vrot.lane.b32.xlu0 %v1449, 83
    %v6028 = vpop.permute.xlu0 %6027
    %6029 = vrot.lane.b32.xlu0 %v1450, 83
    %v6030 = vpop.permute.xlu0 %6029
    %6031 = vrot.lane.b32.xlu0 %v1451, 83
    %v6032 = vpop.permute.xlu0 %6031
    %6033 = vrot.lane.b32.xlu0 %v1452, 83
    %v6034 = vpop.permute.xlu0 %6033
    %6035 = vrot.lane.b32.xlu0 %v1453, 83
    %v6036 = vpop.permute.xlu0 %6035
    %6037 = vrot.lane.b32.xlu0 %v1454, 83
    %v6038 = vpop.permute.xlu0 %6037
    %6039 = vrot.lane.b32.xlu0 %v1455, 83
    %v6040 = vpop.permute.xlu0 %6039
    %6041 = vrot.lane.b32.xlu0 %v1456, 83
    %v6042 = vpop.permute.xlu0 %6041
    %6043 = vrot.lane.b32.xlu0 %v1457, 83
    %v6044 = vpop.permute.xlu0 %6043
    %6045 = vrot.lane.b32.xlu0 %v1458, 83
    %v6046 = vpop.permute.xlu0 %6045
    %6047 = vrot.lane.b32.xlu0 %v1459, 83
    %v6048 = vpop.permute.xlu0 %6047
    %6049 = vrot.lane.b32.xlu0 %v1460, 83
    %v6050 = vpop.permute.xlu0 %6049
    %6051 = vrot.lane.b32.xlu0 %v1461, 83
    %v6052 = vpop.permute.xlu0 %6051
    %6053 = vrot.lane.b32.xlu0 %v1462, 83
    %v6054 = vpop.permute.xlu0 %6053
    %6055 = vrot.lane.b32.xlu0 %v1463, 83
    %v6056 = vpop.permute.xlu0 %6055
    %6057 = vrot.lane.b32.xlu0 %v1464, 83
    %v6058 = vpop.permute.xlu0 %6057
    %6059 = vrot.lane.b32.xlu0 %v1465, 83
    %v6060 = vpop.permute.xlu0 %6059
    %6061 = vrot.lane.b32.xlu0 %v1466, 83
    %v6062 = vpop.permute.xlu0 %6061
    %6063 = vrot.lane.b32.xlu0 %v1467, 83
    %v6064 = vpop.permute.xlu0 %6063
    %6065 = vrot.lane.b32.xlu0 %v1468, 83
    %v6066 = vpop.permute.xlu0 %6065
    %6067 = vrot.lane.b32.xlu0 %v1469, 83
    %v6068 = vpop.permute.xlu0 %6067
    %6069 = vrot.lane.b32.xlu0 %v1470, 83
    %v6070 = vpop.permute.xlu0 %6069
    %6071 = vrot.lane.b32.xlu0 %v1471, 83
    %v6072 = vpop.permute.xlu0 %6071
    %6073 = vrot.lane.b32.xlu0 %v1472, 83
    %v6074 = vpop.permute.xlu0 %6073
    %6075 = vrot.lane.b32.xlu0 %v1473, 83
    %v6076 = vpop.permute.xlu0 %6075
    %6077 = vrot.lane.b32.xlu0 %v1474, 83
    %v6078 = vpop.permute.xlu0 %6077
    %6079 = vrot.lane.b32.xlu0 %v1475, 83
    %v6080 = vpop.permute.xlu0 %6079
    %6081 = vrot.lane.b32.xlu0 %v1476, 83
    %v6082 = vpop.permute.xlu0 %6081
    %6083 = vrot.lane.b32.xlu0 %v1477, 83
    %v6084 = vpop.permute.xlu0 %6083
    %6085 = vrot.lane.b32.xlu0 %v1478, 83
    %v6086 = vpop.permute.xlu0 %6085
    %6087 = vrot.lane.b32.xlu0 %v1479, 83
    %v6088 = vpop.permute.xlu0 %6087
    %6089 = vrot.lane.b32.xlu0 %v1480, 83
    %v6090 = vpop.permute.xlu0 %6089
    %6091 = vrot.lane.b32.xlu0 %v1481, 83
    %v6092 = vpop.permute.xlu0 %6091
    %6093 = vrot.lane.b32.xlu0 %v1482, 83
    %v6094 = vpop.permute.xlu0 %6093
    %6095 = vrot.lane.b32.xlu0 %v1483, 83
    %v6096 = vpop.permute.xlu0 %6095
    %6097 = vrot.lane.b32.xlu0 %v1484, 83
    %v6098 = vpop.permute.xlu0 %6097
    %6099 = vrot.lane.b32.xlu0 %v1485, 83
    %v6100 = vpop.permute.xlu0 %6099
    %v6101 = vsel %vm264, %v5958, %v5960
    %v6102 = vsel %vm264, %v5960, %v5962
    %v6103 = vsel %vm264, %v5962, %v5964
    %v6104 = vsel %vm264, %v5964, %v5966
    %v6105 = vsel %vm264, %v5966, %v5968
    %v6106 = vsel %vm264, %v5968, %v5970
    %v6107 = vsel %vm264, %v5970, %v5972
    %v6108 = vsel %vm264, %v5972, %v5974
    %v6109 = vsel %vm264, %v5976, %v5978
    %v6110 = vsel %vm264, %v5978, %v5980
    %v6111 = vsel %vm264, %v5980, %v5982
    %v6112 = vsel %vm264, %v5982, %v5984
    %v6113 = vsel %vm264, %v5984, %v5986
    %v6114 = vsel %vm264, %v5986, %v5988
    %v6115 = vsel %vm264, %v5988, %v5990
    %v6116 = vsel %vm264, %v5990, %v5992
    %v6117 = vsel %vm264, %v5994, %v5996
    %v6118 = vsel %vm264, %v5996, %v5998
    %v6119 = vsel %vm264, %v5998, %v6000
    %v6120 = vsel %vm264, %v6000, %v6002
    %v6121 = vsel %vm264, %v6002, %v6004
    %v6122 = vsel %vm264, %v6004, %v6006
    %v6123 = vsel %vm264, %v6006, %v6008
    %v6124 = vsel %vm264, %v6008, %v6010
    %v6125 = vsel %vm264, %v6012, %v6014
    %v6126 = vsel %vm264, %v6014, %v6016
    %v6127 = vsel %vm264, %v6016, %v6018
    %v6128 = vsel %vm264, %v6018, %v6020
    %v6129 = vsel %vm264, %v6020, %v6022
    %v6130 = vsel %vm264, %v6022, %v6024
    %v6131 = vsel %vm264, %v6024, %v6026
    %v6132 = vsel %vm264, %v6026, %v6028
    %v6133 = vsel %vm264, %v6030, %v6032
    %v6134 = vsel %vm264, %v6032, %v6034
    %v6135 = vsel %vm264, %v6034, %v6036
    %v6136 = vsel %vm264, %v6036, %v6038
    %v6137 = vsel %vm264, %v6038, %v6040
    %v6138 = vsel %vm264, %v6040, %v6042
    %v6139 = vsel %vm264, %v6042, %v6044
    %v6140 = vsel %vm264, %v6044, %v6046
    %v6141 = vsel %vm264, %v6048, %v6050
    %v6142 = vsel %vm264, %v6050, %v6052
    %v6143 = vsel %vm264, %v6052, %v6054
    %v6144 = vsel %vm264, %v6054, %v6056
    %v6145 = vsel %vm264, %v6056, %v6058
    %v6146 = vsel %vm264, %v6058, %v6060
    %v6147 = vsel %vm264, %v6060, %v6062
    %v6148 = vsel %vm264, %v6062, %v6064
    %v6149 = vsel %vm264, %v6066, %v6068
    %v6150 = vsel %vm264, %v6068, %v6070
    %v6151 = vsel %vm264, %v6070, %v6072
    %v6152 = vsel %vm264, %v6072, %v6074
    %v6153 = vsel %vm264, %v6074, %v6076
    %v6154 = vsel %vm264, %v6076, %v6078
    %v6155 = vsel %vm264, %v6078, %v6080
    %v6156 = vsel %vm264, %v6080, %v6082
    %v6157 = vsel %vm264, %v6084, %v6086
    %v6158 = vsel %vm264, %v6086, %v6088
    %v6159 = vsel %vm264, %v6088, %v6090
    %v6160 = vsel %vm264, %v6090, %v6092
    %v6161 = vsel %vm264, %v6092, %v6094
    %v6162 = vsel %vm264, %v6094, %v6096
    %v6163 = vsel %vm264, %v6096, %v6098
    %v6164 = vsel %vm264, %v6098, %v6100
    %v6230 = vsel %vm1830, %v5953, 0
    %v6233 = vsel %vm1830, %v5954, 0
    %v6236 = vsel %vm1830, %v5955, 0
    %v6239 = vsel %vm1830, %v5956, 0
    %6241 = vmatprep.subr.mxu0 %v6102
    %6242 = vmatpush1.msra.mxu0 %v6101
    %6243 = vmatprep.subr.mxu0 %v6110
    %6244 = vmatpush1.msra.mxu0 %v6109
    %6245 = vmatprep.subr.mxu0 %v6118
    %6246 = vmatpush1.msra.mxu0 %v6117
    %6247 = vmatprep.subr.mxu0 %v6126
    %6248 = vmatpush1.msra.mxu0 %v6125
    %6249 = vmatprep.subr.mxu0 %v6134
    %6250 = vmatpush1.msra.mxu0 %v6133
    %6251 = vmatprep.subr.mxu0 %v6142
    %6252 = vmatpush1.msra.mxu0 %v6141
    %6253 = vmatprep.subr.mxu0 %v6150
    %6254 = vmatpush1.msra.mxu0 %v6149
    %6255 = vmatprep.subr.mxu0 %v6158
    %6256 = vmatpush1.msra.mxu0 %v6157
    %6257 = vmatprep.subr.mxu0 0.0
    %6258 = vmatpush1.msra.mxu0 0.0
    %6259 = vmatprep.subr.mxu0 0.0
    %6260 = vmatpush1.msra.mxu0 0.0
    %6261 = vmatprep.subr.mxu0 0.0
    %6262 = vmatpush1.msra.mxu0 0.0
    %6263 = vmatprep.subr.mxu0 0.0
    %6264 = vmatpush1.msra.mxu0 0.0
    %6265 = vmatprep.subr.mxu0 0.0
    %6266 = vmatpush1.msra.mxu0 0.0
    %6267 = vmatprep.subr.mxu0 0.0
    %6268 = vmatpush1.msra.mxu0 0.0
    %6269 = vmatprep.subr.mxu0 0.0
    %6270 = vmatpush1.msra.mxu0 0.0
    %6271 = vmatprep.subr.mxu0 0.0
    %6272 = vmatpush1.msra.mxu0 0.0
    %6273 = vmatprep.subr.mxu0 0.0
    %6274 = vmatpush1.msra.mxu0 0.0
    %6275 = vmatprep.subr.mxu0 0.0
    %6276 = vmatpush1.msra.mxu0 0.0
    %6277 = vmatprep.subr.mxu0 0.0
    %6278 = vmatpush1.msra.mxu0 0.0
    %6279 = vmatprep.subr.mxu0 0.0
    %6280 = vmatpush1.msra.mxu0 0.0
    %6281 = vmatprep.subr.mxu0 0.0
    %6282 = vmatpush1.msra.mxu0 0.0
    %6283 = vmatprep.subr.mxu0 0.0
    %6284 = vmatpush1.msra.mxu0 0.0
    %6285 = vmatprep.subr.mxu0 0.0
    %6286 = vmatpush1.msra.mxu0 0.0
    %6287 = vmatprep.subr.mxu0 0.0
    %6288 = vmatpush1.msra.mxu0 0.0
    %6289 = vmatprep.subr.mxu0 0.0
    %6290 = vmatpush1.msra.mxu0 0.0
    %6291 = vmatprep.subr.mxu0 0.0
    %6292 = vmatpush1.msra.mxu0 0.0
    %6293 = vmatprep.subr.mxu0 0.0
    %6294 = vmatpush1.msra.mxu0 0.0
    %6295 = vmatprep.subr.mxu0 0.0
    %6296 = vmatpush1.msra.mxu0 0.0
    %6297 = vmatprep.subr.mxu0 0.0
    %6298 = vmatpush1.msra.mxu0 0.0
    %6299 = vmatprep.subr.mxu0 0.0
    %6300 = vmatpush1.msra.mxu0 0.0
    %6301 = vmatprep.subr.mxu0 0.0
    %6302 = vmatpush1.msra.mxu0 0.0
    %6303 = vmatprep.subr.mxu0 0.0
    %6304 = vmatpush1.msra.mxu0 0.0
    %6305 = vmatprep.mubr.f32.mxu0 0.0
    %6306 = vmatmul.mubr.f32.gmra.mrb[0].mxu0 %v6230
    %v6307 = vpop.f32.mrb[0].mxu0
    %v6308 = vadd.f32 0.0, %v6307
    %v6309 = vpop.f32.mrb[0].mxu0
    %v6310 = vadd.f32 0.0, %v6309
    %6311 = vmatprep.mubr.f32.mxu0 0.0
    %6312 = vmatmul.mubr.f32.gmra.mrb[0].mxu0 %v6233
    %v6313 = vpop.f32.mrb[0].mxu0
    %v6314 = vadd.f32 0.0, %v6313
    %v6315 = vpop.f32.mrb[0].mxu0
    %v6316 = vadd.f32 0.0, %v6315
    %6317 = vmatprep.mubr.f32.mxu0 0.0
    %6318 = vmatmul.mubr.f32.gmra.mrb[0].mxu0 %v6236
    %v6319 = vpop.f32.mrb[0].mxu0
    %v6320 = vadd.f32 0.0, %v6319
    %v6321 = vpop.f32.mrb[0].mxu0
    %v6322 = vadd.f32 0.0, %v6321
    %6323 = vmatprep.mubr.f32.mxu0 0.0
    %6324 = vmatmul.mubr.f32.gmra.mrb[0].mxu0 %v6239
    %v6325 = vpop.f32.mrb[0].mxu0
    %v6326 = vadd.f32 0.0, %v6325
    %v6327 = vpop.f32.mrb[0].mxu0
    %v6328 = vadd.f32 0.0, %v6327
    %6329 = vdwg.mxu0
    %6330 = vmatprep.subr.mxu0 %v6104
    %6331 = vmatpush1.msra.mxu0 %v6103
    %6332 = vmatprep.subr.mxu0 %v6112
    %6333 = vmatpush1.msra.mxu0 %v6111
    %6334 = vmatprep.subr.mxu0 %v6120
    %6335 = vmatpush1.msra.mxu0 %v6119
    %6336 = vmatprep.subr.mxu0 %v6128
    %6337 = vmatpush1.msra.mxu0 %v6127
    %6338 = vmatprep.subr.mxu0 %v6136
    %6339 = vmatpush1.msra.mxu0 %v6135
    %6340 = vmatprep.subr.mxu0 %v6144
    %6341 = vmatpush1.msra.mxu0 %v6143
    %6342 = vmatprep.subr.mxu0 %v6152
    %6343 = vmatpush1.msra.mxu0 %v6151
    %6344 = vmatprep.subr.mxu0 %v6160
    %6345 = vmatpush1.msra.mxu0 %v6159
    %6346 = vmatprep.subr.mxu0 0.0
    %6347 = vmatpush1.msra.mxu0 0.0
    %6348 = vmatprep.subr.mxu0 0.0
    %6349 = vmatpush1.msra.mxu0 0.0
    %6350 = vmatprep.subr.mxu0 0.0
    %6351 = vmatpush1.msra.mxu0 0.0
    %6352 = vmatprep.subr.mxu0 0.0
    %6353 = vmatpush1.msra.mxu0 0.0
    %6354 = vmatprep.subr.mxu0 0.0
    %6355 = vmatpush1.msra.mxu0 0.0
    %6356 = vmatprep.subr.mxu0 0.0
    %6357 = vmatpush1.msra.mxu0 0.0
    %6358 = vmatprep.subr.mxu0 0.0
    %6359 = vmatpush1.msra.mxu0 0.0
    %6360 = vmatprep.subr.mxu0 0.0
    %6361 = vmatpush1.msra.mxu0 0.0
    %6362 = vmatprep.subr.mxu0 0.0
    %6363 = vmatpush1.msra.mxu0 0.0
    %6364 = vmatprep.subr.mxu0 0.0
    %6365 = vmatpush1.msra.mxu0 0.0
    %6366 = vmatprep.subr.mxu0 0.0
    %6367 = vmatpush1.msra.mxu0 0.0
    %6368 = vmatprep.subr.mxu0 0.0
    %6369 = vmatpush1.msra.mxu0 0.0
    %6370 = vmatprep.subr.mxu0 0.0
    %6371 = vmatpush1.msra.mxu0 0.0
    %6372 = vmatprep.subr.mxu0 0.0
    %6373 = vmatpush1.msra.mxu0 0.0
    %6374 = vmatprep.subr.mxu0 0.0
    %6375 = vmatpush1.msra.mxu0 0.0
    %6376 = vmatprep.subr.mxu0 0.0
    %6377 = vmatpush1.msra.mxu0 0.0
    %6378 = vmatprep.subr.mxu0 0.0
    %6379 = vmatpush1.msra.mxu0 0.0
    %6380 = vmatprep.subr.mxu0 0.0
    %6381 = vmatpush1.msra.mxu0 0.0
    %6382 = vmatprep.subr.mxu0 0.0
    %6383 = vmatpush1.msra.mxu0 0.0
    %6384 = vmatprep.subr.mxu0 0.0
    %6385 = vmatpush1.msra.mxu0 0.0
    %6386 = vmatprep.subr.mxu0 0.0
    %6387 = vmatpush1.msra.mxu0 0.0
    %6388 = vmatprep.subr.mxu0 0.0
    %6389 = vmatpush1.msra.mxu0 0.0
    %6390 = vmatprep.subr.mxu0 0.0
    %6391 = vmatpush1.msra.mxu0 0.0
    %6392 = vmatprep.subr.mxu0 0.0
    %6393 = vmatpush1.msra.mxu0 0.0
    %6394 = vmatprep.mubr.f32.mxu0 0.0
    %6395 = vmatmul.mubr.f32.gmra.mrb[0].mxu0 %v6230
    %v6396 = vpop.f32.mrb[0].mxu0
    %v6397 = vadd.f32 0.0, %v6396
    %v6398 = vpop.f32.mrb[0].mxu0
    %v6399 = vadd.f32 0.0, %v6398
    %6400 = vmatprep.mubr.f32.mxu0 0.0
    %6401 = vmatmul.mubr.f32.gmra.mrb[0].mxu0 %v6233
    %v6402 = vpop.f32.mrb[0].mxu0
    %v6403 = vadd.f32 0.0, %v6402
    %v6404 = vpop.f32.mrb[0].mxu0
    %v6405 = vadd.f32 0.0, %v6404
    %6406 = vmatprep.mubr.f32.mxu0 0.0
    %6407 = vmatmul.mubr.f32.gmra.mrb[0].mxu0 %v6236
    %v6408 = vpop.f32.mrb[0].mxu0
    %v6409 = vadd.f32 0.0, %v6408
    %v6410 = vpop.f32.mrb[0].mxu0
    %v6411 = vadd.f32 0.0, %v6410
    %6412 = vmatprep.mubr.f32.mxu0 0.0
    %6413 = vmatmul.mubr.f32.gmra.mrb[0].mxu0 %v6239
    %v6414 = vpop.f32.mrb[0].mxu0
    %v6415 = vadd.f32 0.0, %v6414
    %v6416 = vpop.f32.mrb[0].mxu0
    %v6417 = vadd.f32 0.0, %v6416
    %6418 = vdwg.mxu0
    %6419 = vmatprep.subr.mxu0 %v6106
    %6420 = vmatpush1.msra.mxu0 %v6105
    %6421 = vmatprep.subr.mxu0 %v6114
    %6422 = vmatpush1.msra.mxu0 %v6113
    %6423 = vmatprep.subr.mxu0 %v6122
    %6424 = vmatpush1.msra.mxu0 %v6121
    %6425 = vmatprep.subr.mxu0 %v6130
    %6426 = vmatpush1.msra.mxu0 %v6129
    %6427 = vmatprep.subr.mxu0 %v6138
    %6428 = vmatpush1.msra.mxu0 %v6137
    %6429 = vmatprep.subr.mxu0 %v6146
    %6430 = vmatpush1.msra.mxu0 %v6145
    %6431 = vmatprep.subr.mxu0 %v6154
    %6432 = vmatpush1.msra.mxu0 %v6153
    %6433 = vmatprep.subr.mxu0 %v6162
    %6434 = vmatpush1.msra.mxu0 %v6161
    %6435 = vmatprep.subr.mxu0 0.0
    %6436 = vmatpush1.msra.mxu0 0.0
    %6437 = vmatprep.subr.mxu0 0.0
    %6438 = vmatpush1.msra.mxu0 0.0
    %6439 = vmatprep.subr.mxu0 0.0
    %6440 = vmatpush1.msra.mxu0 0.0
    %6441 = vmatprep.subr.mxu0 0.0
    %6442 = vmatpush1.msra.mxu0 0.0
    %6443 = vmatprep.subr.mxu0 0.0
    %6444 = vmatpush1.msra.mxu0 0.0
    %6445 = vmatprep.subr.mxu0 0.0
    %6446 = vmatpush1.msra.mxu0 0.0
    %6447 = vmatprep.subr.mxu0 0.0
    %6448 = vmatpush1.msra.mxu0 0.0
    %6449 = vmatprep.subr.mxu0 0.0
    %6450 = vmatpush1.msra.mxu0 0.0
    %6451 = vmatprep.subr.mxu0 0.0
    %6452 = vmatpush1.msra.mxu0 0.0
    %6453 = vmatprep.subr.mxu0 0.0
    %6454 = vmatpush1.msra.mxu0 0.0
    %6455 = vmatprep.subr.mxu0 0.0
    %6456 = vmatpush1.msra.mxu0 0.0
    %6457 = vmatprep.subr.mxu0 0.0
    %6458 = vmatpush1.msra.mxu0 0.0
    %6459 = vmatprep.subr.mxu0 0.0
    %6460 = vmatpush1.msra.mxu0 0.0
    %6461 = vmatprep.subr.mxu0 0.0
    %6462 = vmatpush1.msra.mxu0 0.0
    %6463 = vmatprep.subr.mxu0 0.0
    %6464 = vmatpush1.msra.mxu0 0.0
    %6465 = vmatprep.subr.mxu0 0.0
    %6466 = vmatpush1.msra.mxu0 0.0
    %6467 = vmatprep.subr.mxu0 0.0
    %6468 = vmatpush1.msra.mxu0 0.0
    %6469 = vmatprep.subr.mxu0 0.0
    %6470 = vmatpush1.msra.mxu0 0.0
    %6471 = vmatprep.subr.mxu0 0.0
    %6472 = vmatpush1.msra.mxu0 0.0
    %6473 = vmatprep.subr.mxu0 0.0
    %6474 = vmatpush1.msra.mxu0 0.0
    %6475 = vmatprep.subr.mxu0 0.0
    %6476 = vmatpush1.msra.mxu0 0.0
    %6477 = vmatprep.subr.mxu0 0.0
    %6478 = vmatpush1.msra.mxu0 0.0
    %6479 = vmatprep.subr.mxu0 0.0
    %6480 = vmatpush1.msra.mxu0 0.0
    %6481 = vmatprep.subr.mxu0 0.0
    %6482 = vmatpush1.msra.mxu0 0.0
    %6483 = vmatprep.mubr.f32.mxu0 0.0
    %6484 = vmatmul.mubr.f32.gmra.mrb[0].mxu0 %v6230
    %v6485 = vpop.f32.mrb[0].mxu0
    %v6486 = vadd.f32 0.0, %v6485
    %v6487 = vpop.f32.mrb[0].mxu0
    %v6488 = vadd.f32 0.0, %v6487
    %6489 = vmatprep.mubr.f32.mxu0 0.0
    %6490 = vmatmul.mubr.f32.gmra.mrb[0].mxu0 %v6233
    %v6491 = vpop.f32.mrb[0].mxu0
    %v6492 = vadd.f32 0.0, %v6491
    %v6493 = vpop.f32.mrb[0].mxu0
    %v6494 = vadd.f32 0.0, %v6493
    %6495 = vmatprep.mubr.f32.mxu0 0.0
    %6496 = vmatmul.mubr.f32.gmra.mrb[0].mxu0 %v6236
    %v6497 = vpop.f32.mrb[0].mxu0
    %v6498 = vadd.f32 0.0, %v6497
    %v6499 = vpop.f32.mrb[0].mxu0
    %v6500 = vadd.f32 0.0, %v6499
    %6501 = vmatprep.mubr.f32.mxu0 0.0
    %6502 = vmatmul.mubr.f32.gmra.mrb[0].mxu0 %v6239
    %v6503 = vpop.f32.mrb[0].mxu0
    %v6504 = vadd.f32 0.0, %v6503
    %v6505 = vpop.f32.mrb[0].mxu0
    %v6506 = vadd.f32 0.0, %v6505
    %6507 = vdwg.mxu0
    %6508 = vmatprep.subr.mxu0 %v6108
    %6509 = vmatpush1.msra.mxu0 %v6107
    %6510 = vmatprep.subr.mxu0 %v6116
    %6511 = vmatpush1.msra.mxu0 %v6115
    %6512 = vmatprep.subr.mxu0 %v6124
    %6513 = vmatpush1.msra.mxu0 %v6123
    %6514 = vmatprep.subr.mxu0 %v6132
    %6515 = vmatpush1.msra.mxu0 %v6131
    %6516 = vmatprep.subr.mxu0 %v6140
    %6517 = vmatpush1.msra.mxu0 %v6139
    %6518 = vmatprep.subr.mxu0 %v6148
    %6519 = vmatpush1.msra.mxu0 %v6147
    %6520 = vmatprep.subr.mxu0 %v6156
    %6521 = vmatpush1.msra.mxu0 %v6155
    %6522 = vmatprep.subr.mxu0 %v6164
    %6523 = vmatpush1.msra.mxu0 %v6163
    %6524 = vmatprep.subr.mxu0 0.0
    %6525 = vmatpush1.msra.mxu0 0.0
    %6526 = vmatprep.subr.mxu0 0.0
    %6527 = vmatpush1.msra.mxu0 0.0
    %6528 = vmatprep.subr.mxu0 0.0
    %6529 = vmatpush1.msra.mxu0 0.0
    %6530 = vmatprep.subr.mxu0 0.0
    %6531 = vmatpush1.msra.mxu0 0.0
    %6532 = vmatprep.subr.mxu0 0.0
    %6533 = vmatpush1.msra.mxu0 0.0
    %6534 = vmatprep.subr.mxu0 0.0
    %6535 = vmatpush1.msra.mxu0 0.0
    %6536 = vmatprep.subr.mxu0 0.0
    %6537 = vmatpush1.msra.mxu0 0.0
    %6538 = vmatprep.subr.mxu0 0.0
    %6539 = vmatpush1.msra.mxu0 0.0
    %6540 = vmatprep.subr.mxu0 0.0
    %6541 = vmatpush1.msra.mxu0 0.0
    %6542 = vmatprep.subr.mxu0 0.0
    %6543 = vmatpush1.msra.mxu0 0.0
    %6544 = vmatprep.subr.mxu0 0.0
    %6545 = vmatpush1.msra.mxu0 0.0
    %6546 = vmatprep.subr.mxu0 0.0
    %6547 = vmatpush1.msra.mxu0 0.0
    %6548 = vmatprep.subr.mxu0 0.0
    %6549 = vmatpush1.msra.mxu0 0.0
    %6550 = vmatprep.subr.mxu0 0.0
    %6551 = vmatpush1.msra.mxu0 0.0
    %6552 = vmatprep.subr.mxu0 0.0
    %6553 = vmatpush1.msra.mxu0 0.0
    %6554 = vmatprep.subr.mxu0 0.0
    %6555 = vmatpush1.msra.mxu0 0.0
    %6556 = vmatprep.subr.mxu0 0.0
    %6557 = vmatpush1.msra.mxu0 0.0
    %6558 = vmatprep.subr.mxu0 0.0
    %6559 = vmatpush1.msra.mxu0 0.0
    %6560 = vmatprep.subr.mxu0 0.0
    %6561 = vmatpush1.msra.mxu0 0.0
    %6562 = vmatprep.subr.mxu0 0.0
    %6563 = vmatpush1.msra.mxu0 0.0
    %6564 = vmatprep.subr.mxu0 0.0
    %6565 = vmatpush1.msra.mxu0 0.0
    %6566 = vmatprep.subr.mxu0 0.0
    %6567 = vmatpush1.msra.mxu0 0.0
    %6568 = vmatprep.subr.mxu0 0.0
    %6569 = vmatpush1.msra.mxu0 0.0
    %6570 = vmatprep.subr.mxu0 0.0
    %6571 = vmatpush1.msra.mxu0 0.0
    %6572 = vmatprep.mubr.f32.mxu0 0.0
    %6573 = vmatmul.mubr.f32.gmra.mrb[0].mxu0 %v6230
    %v6574 = vpop.f32.mrb[0].mxu0
    %v6575 = vadd.f32 0.0, %v6574
    %v6576 = vpop.f32.mrb[0].mxu0
    %v6577 = vadd.f32 0.0, %v6576
    %6578 = vmatprep.mubr.f32.mxu0 0.0
    %6579 = vmatmul.mubr.f32.gmra.mrb[0].mxu0 %v6233
    %v6580 = vpop.f32.mrb[0].mxu0
    %v6581 = vadd.f32 0.0, %v6580
    %v6582 = vpop.f32.mrb[0].mxu0
    %v6583 = vadd.f32 0.0, %v6582
    %6584 = vmatprep.mubr.f32.mxu0 0.0
    %6585 = vmatmul.mubr.f32.gmra.mrb[0].mxu0 %v6236
    %v6586 = vpop.f32.mrb[0].mxu0
    %v6587 = vadd.f32 0.0, %v6586
    %v6588 = vpop.f32.mrb[0].mxu0
    %v6589 = vadd.f32 0.0, %v6588
    %6590 = vmatprep.mubr.f32.mxu0 0.0
    %6591 = vmatmul.mubr.f32.gmra.mrb[0].mxu0 %v6239
    %v6592 = vpop.f32.mrb[0].mxu0
    %v6593 = vadd.f32 0.0, %v6592
    %v6594 = vpop.f32.mrb[0].mxu0
    %v6595 = vadd.f32 0.0, %v6594
    %6596 = vdwg.mxu0
    %v6597 = vadd.f32 %v5920, %v6308
    %v6598 = vadd.f32 %v5921, %v6310
    %v6599 = vadd.f32 %v5922, %v6397
    %v6600 = vadd.f32 %v5923, %v6399
    %v6601 = vadd.f32 %v5924, %v6486
    %v6602 = vadd.f32 %v5925, %v6488
    %v6603 = vadd.f32 %v5926, %v6575
    %v6604 = vadd.f32 %v5927, %v6577
    %v6605 = vadd.f32 %v5928, %v6314
    %v6606 = vadd.f32 %v5929, %v6316
    %v6607 = vadd.f32 %v5930, %v6403
    %v6608 = vadd.f32 %v5931, %v6405
    %v6609 = vadd.f32 %v5932, %v6492
    %v6610 = vadd.f32 %v5933, %v6494
    %v6611 = vadd.f32 %v5934, %v6581
    %v6612 = vadd.f32 %v5935, %v6583
    %v6613 = vadd.f32 %v5936, %v6320
    %v6614 = vadd.f32 %v5937, %v6322
    %v6615 = vadd.f32 %v5938, %v6409
    %v6616 = vadd.f32 %v5939, %v6411
    %v6617 = vadd.f32 %v5940, %v6498
    %v6618 = vadd.f32 %v5941, %v6500
    %v6619 = vadd.f32 %v5942, %v6587
    %v6620 = vadd.f32 %v5943, %v6589
    %v6621 = vadd.f32 %v5944, %v6326
    %v6622 = vadd.f32 %v5945, %v6328
    %v6623 = vadd.f32 %v5946, %v6415
    %v6624 = vadd.f32 %v5947, %v6417
    %v6625 = vadd.f32 %v5948, %v6504
    %v6626 = vadd.f32 %v5949, %v6506
    %v6627 = vadd.f32 %v5950, %v6593
    %v6628 = vadd.f32 %v5951, %v6595
    %s6629 = scalar_lea.vmem [#allocation4], 256
    %v6630 = vld [vmem:[%s6629] sm:$0xff]
    %v6631 = vld [vmem:[%s6629 + $0x8] sm:$0xff]
    %v6632 = vld [vmem:[%s6629 + $0x10] sm:$0xff]
    %v6633 = vld [vmem:[%s6629 + $0x18] sm:$0xff]
    %6634 = vrot.lane.b32.xlu0 %v1414, 82
    %v6635 = vpop.permute.xlu0 %6634
    %6636 = vrot.lane.b32.xlu0 %v1415, 82
    %v6637 = vpop.permute.xlu0 %6636
    %6638 = vrot.lane.b32.xlu0 %v1416, 82
    %v6639 = vpop.permute.xlu0 %6638
    %6640 = vrot.lane.b32.xlu0 %v1417, 82
    %v6641 = vpop.permute.xlu0 %6640
    %6642 = vrot.lane.b32.xlu0 %v1418, 82
    %v6643 = vpop.permute.xlu0 %6642
    %6644 = vrot.lane.b32.xlu0 %v1419, 82
    %v6645 = vpop.permute.xlu0 %6644
    %6646 = vrot.lane.b32.xlu0 %v1420, 82
    %v6647 = vpop.permute.xlu0 %6646
    %6648 = vrot.lane.b32.xlu0 %v1421, 82
    %v6649 = vpop.permute.xlu0 %6648
    %6650 = vrot.lane.b32.xlu0 %v1422, 82
    %v6651 = vpop.permute.xlu0 %6650
    %6652 = vrot.lane.b32.xlu0 %v1423, 82
    %v6653 = vpop.permute.xlu0 %6652
    %6654 = vrot.lane.b32.xlu0 %v1424, 82
    %v6655 = vpop.permute.xlu0 %6654
    %6656 = vrot.lane.b32.xlu0 %v1425, 82
    %v6657 = vpop.permute.xlu0 %6656
    %6658 = vrot.lane.b32.xlu0 %v1426, 82
    %v6659 = vpop.permute.xlu0 %6658
    %6660 = vrot.lane.b32.xlu0 %v1427, 82
    %v6661 = vpop.permute.xlu0 %6660
    %6662 = vrot.lane.b32.xlu0 %v1428, 82
    %v6663 = vpop.permute.xlu0 %6662
    %6664 = vrot.lane.b32.xlu0 %v1429, 82
    %v6665 = vpop.permute.xlu0 %6664
    %6666 = vrot.lane.b32.xlu0 %v1430, 82
    %v6667 = vpop.permute.xlu0 %6666
    %6668 = vrot.lane.b32.xlu0 %v1431, 82
    %v6669 = vpop.permute.xlu0 %6668
    %6670 = vrot.lane.b32.xlu0 %v1432, 82
    %v6671 = vpop.permute.xlu0 %6670
    %6672 = vrot.lane.b32.xlu0 %v1433, 82
    %v6673 = vpop.permute.xlu0 %6672
    %6674 = vrot.lane.b32.xlu0 %v1434, 82
    %v6675 = vpop.permute.xlu0 %6674
    %6676 = vrot.lane.b32.xlu0 %v1435, 82
    %v6677 = vpop.permute.xlu0 %6676
    %6678 = vrot.lane.b32.xlu0 %v1436, 82
    %v6679 = vpop.permute.xlu0 %6678
    %6680 = vrot.lane.b32.xlu0 %v1437, 82
    %v6681 = vpop.permute.xlu0 %6680
    %6682 = vrot.lane.b32.xlu0 %v1438, 82
    %v6683 = vpop.permute.xlu0 %6682
    %6684 = vrot.lane.b32.xlu0 %v1439, 82
    %v6685 = vpop.permute.xlu0 %6684
    %6686 = vrot.lane.b32.xlu0 %v1440, 82
    %v6687 = vpop.permute.xlu0 %6686
    %6688 = vrot.lane.b32.xlu0 %v1441, 82
    %v6689 = vpop.permute.xlu0 %6688
    %6690 = vrot.lane.b32.xlu0 %v1442, 82
    %v6691 = vpop.permute.xlu0 %6690
    %6692 = vrot.lane.b32.xlu0 %v1443, 82
    %v6693 = vpop.permute.xlu0 %6692
    %6694 = vrot.lane.b32.xlu0 %v1444, 82
    %v6695 = vpop.permute.xlu0 %6694
    %6696 = vrot.lane.b32.xlu0 %v1445, 82
    %v6697 = vpop.permute.xlu0 %6696
    %6698 = vrot.lane.b32.xlu0 %v1446, 82
    %v6699 = vpop.permute.xlu0 %6698
    %6700 = vrot.lane.b32.xlu0 %v1447, 82
    %v6701 = vpop.permute.xlu0 %6700
    %6702 = vrot.lane.b32.xlu0 %v1448, 82
    %v6703 = vpop.permute.xlu0 %6702
    %6704 = vrot.lane.b32.xlu0 %v1449, 82
    %v6705 = vpop.permute.xlu0 %6704
    %6706 = vrot.lane.b32.xlu0 %v1450, 82
    %v6707 = vpop.permute.xlu0 %6706
    %6708 = vrot.lane.b32.xlu0 %v1451, 82
    %v6709 = vpop.permute.xlu0 %6708
    %6710 = vrot.lane.b32.xlu0 %v1452, 82
    %v6711 = vpop.permute.xlu0 %6710
    %6712 = vrot.lane.b32.xlu0 %v1453, 82
    %v6713 = vpop.permute.xlu0 %6712
    %6714 = vrot.lane.b32.xlu0 %v1454, 82
    %v6715 = vpop.permute.xlu0 %6714
    %6716 = vrot.lane.b32.xlu0 %v1455, 82
    %v6717 = vpop.permute.xlu0 %6716
    %6718 = vrot.lane.b32.xlu0 %v1456, 82
    %v6719 = vpop.permute.xlu0 %6718
    %6720 = vrot.lane.b32.xlu0 %v1457, 82
    %v6721 = vpop.permute.xlu0 %6720
    %6722 = vrot.lane.b32.xlu0 %v1458, 82
    %v6723 = vpop.permute.xlu0 %6722
    %6724 = vrot.lane.b32.xlu0 %v1459, 82
    %v6725 = vpop.permute.xlu0 %6724
    %6726 = vrot.lane.b32.xlu0 %v1460, 82
    %v6727 = vpop.permute.xlu0 %6726
    %6728 = vrot.lane.b32.xlu0 %v1461, 82
    %v6729 = vpop.permute.xlu0 %6728
    %6730 = vrot.lane.b32.xlu0 %v1462, 82
    %v6731 = vpop.permute.xlu0 %6730
    %6732 = vrot.lane.b32.xlu0 %v1463, 82
    %v6733 = vpop.permute.xlu0 %6732
    %6734 = vrot.lane.b32.xlu0 %v1464, 82
    %v6735 = vpop.permute.xlu0 %6734
    %6736 = vrot.lane.b32.xlu0 %v1465, 82
    %v6737 = vpop.permute.xlu0 %6736
    %6738 = vrot.lane.b32.xlu0 %v1466, 82
    %v6739 = vpop.permute.xlu0 %6738
    %6740 = vrot.lane.b32.xlu0 %v1467, 82
    %v6741 = vpop.permute.xlu0 %6740
    %6742 = vrot.lane.b32.xlu0 %v1468, 82
    %v6743 = vpop.permute.xlu0 %6742
    %6744 = vrot.lane.b32.xlu0 %v1469, 82
    %v6745 = vpop.permute.xlu0 %6744
    %6746 = vrot.lane.b32.xlu0 %v1470, 82
    %v6747 = vpop.permute.xlu0 %6746
    %6748 = vrot.lane.b32.xlu0 %v1471, 82
    %v6749 = vpop.permute.xlu0 %6748
    %6750 = vrot.lane.b32.xlu0 %v1472, 82
    %v6751 = vpop.permute.xlu0 %6750
    %6752 = vrot.lane.b32.xlu0 %v1473, 82
    %v6753 = vpop.permute.xlu0 %6752
    %6754 = vrot.lane.b32.xlu0 %v1474, 82
    %v6755 = vpop.permute.xlu0 %6754
    %6756 = vrot.lane.b32.xlu0 %v1475, 82
    %v6757 = vpop.permute.xlu0 %6756
    %6758 = vrot.lane.b32.xlu0 %v1476, 82
    %v6759 = vpop.permute.xlu0 %6758
    %6760 = vrot.lane.b32.xlu0 %v1477, 82
    %v6761 = vpop.permute.xlu0 %6760
    %6762 = vrot.lane.b32.xlu0 %v1478, 82
    %v6763 = vpop.permute.xlu0 %6762
    %6764 = vrot.lane.b32.xlu0 %v1479, 82
    %v6765 = vpop.permute.xlu0 %6764
    %6766 = vrot.lane.b32.xlu0 %v1480, 82
    %v6767 = vpop.permute.xlu0 %6766
    %6768 = vrot.lane.b32.xlu0 %v1481, 82
    %v6769 = vpop.permute.xlu0 %6768
    %6770 = vrot.lane.b32.xlu0 %v1482, 82
    %v6771 = vpop.permute.xlu0 %6770
    %6772 = vrot.lane.b32.xlu0 %v1483, 82
    %v6773 = vpop.permute.xlu0 %6772
    %6774 = vrot.lane.b32.xlu0 %v1484, 82
    %v6775 = vpop.permute.xlu0 %6774
    %6776 = vrot.lane.b32.xlu0 %v1485, 82
    %v6777 = vpop.permute.xlu0 %6776
    %v6778 = vsel %vm283, %v6635, %v6637
    %v6779 = vsel %vm283, %v6637, %v6639
    %v6780 = vsel %vm283, %v6639, %v6641
    %v6781 = vsel %vm283, %v6641, %v6643
    %v6782 = vsel %vm283, %v6643, %v6645
    %v6783 = vsel %vm283, %v6645, %v6647
    %v6784 = vsel %vm283, %v6647, %v6649
    %v6785 = vsel %vm283, %v6649, %v6651
    %v6786 = vsel %vm283, %v6653, %v6655
    %v6787 = vsel %vm283, %v6655, %v6657
    %v6788 = vsel %vm283, %v6657, %v6659
    %v6789 = vsel %vm283, %v6659, %v6661
    %v6790 = vsel %vm283, %v6661, %v6663
    %v6791 = vsel %vm283, %v6663, %v6665
    %v6792 = vsel %vm283, %v6665, %v6667
    %v6793 = vsel %vm283, %v6667, %v6669
    %v6794 = vsel %vm283, %v6671, %v6673
    %v6795 = vsel %vm283, %v6673, %v6675
    %v6796 = vsel %vm283, %v6675, %v6677
    %v6797 = vsel %vm283, %v6677, %v6679
    %v6798 = vsel %vm283, %v6679, %v6681
    %v6799 = vsel %vm283, %v6681, %v6683
    %v6800 = vsel %vm283, %v6683, %v6685
    %v6801 = vsel %vm283, %v6685, %v6687
    %v6802 = vsel %vm283, %v6689, %v6691
    %v6803 = vsel %vm283, %v6691, %v6693
    %v6804 = vsel %vm283, %v6693, %v6695
    %v6805 = vsel %vm283, %v6695, %v6697
    %v6806 = vsel %vm283, %v6697, %v6699
    %v6807 = vsel %vm283, %v6699, %v6701
    %v6808 = vsel %vm283, %v6701, %v6703
    %v6809 = vsel %vm283, %v6703, %v6705
    %v6810 = vsel %vm283, %v6707, %v6709
    %v6811 = vsel %vm283, %v6709, %v6711
    %v6812 = vsel %vm283, %v6711, %v6713
    %v6813 = vsel %vm283, %v6713, %v6715
    %v6814 = vsel %vm283, %v6715, %v6717
    %v6815 = vsel %vm283, %v6717, %v6719
    %v6816 = vsel %vm283, %v6719, %v6721
    %v6817 = vsel %vm283, %v6721, %v6723
    %v6818 = vsel %vm283, %v6725, %v6727
    %v6819 = vsel %vm283, %v6727, %v6729
    %v6820 = vsel %vm283, %v6729, %v6731
    %v6821 = vsel %vm283, %v6731, %v6733
    %v6822 = vsel %vm283, %v6733, %v6735
    %v6823 = vsel %vm283, %v6735, %v6737
    %v6824 = vsel %vm283, %v6737, %v6739
    %v6825 = vsel %vm283, %v6739, %v6741
    %v6826 = vsel %vm283, %v6743, %v6745
    %v6827 = vsel %vm283, %v6745, %v6747
    %v6828 = vsel %vm283, %v6747, %v6749
    %v6829 = vsel %vm283, %v6749, %v6751
    %v6830 = vsel %vm283, %v6751, %v6753
    %v6831 = vsel %vm283, %v6753, %v6755
    %v6832 = vsel %vm283, %v6755, %v6757
    %v6833 = vsel %vm283, %v6757, %v6759
    %v6834 = vsel %vm283, %v6761, %v6763
    %v6835 = vsel %vm283, %v6763, %v6765
    %v6836 = vsel %vm283, %v6765, %v6767
    %v6837 = vsel %vm283, %v6767, %v6769
    %v6838 = vsel %vm283, %v6769, %v6771
    %v6839 = vsel %vm283, %v6771, %v6773
    %v6840 = vsel %vm283, %v6773, %v6775
    %v6841 = vsel %vm283, %v6775, %v6777
    %v6907 = vsel %vm1830, %v6630, 0
    %v6910 = vsel %vm1830, %v6631, 0
    %v6913 = vsel %vm1830, %v6632, 0
    %v6916 = vsel %vm1830, %v6633, 0
    %6918 = vmatprep.subr.mxu0 %v6779
    %6919 = vmatpush1.msra.mxu0 %v6778
    %6920 = vmatprep.subr.mxu0 %v6787
    %6921 = vmatpush1.msra.mxu0 %v6786
    %6922 = vmatprep.subr.mxu0 %v6795
    %6923 = vmatpush1.msra.mxu0 %v6794
    %6924 = vmatprep.subr.mxu0 %v6803
    %6925 = vmatpush1.msra.mxu0 %v6802
    %6926 = vmatprep.subr.mxu0 %v6811
    %6927 = vmatpush1.msra.mxu0 %v6810
    %6928 = vmatprep.subr.mxu0 %v6819
    %6929 = vmatpush1.msra.mxu0 %v6818
    %6930 = vmatprep.subr.mxu0 %v6827
    %6931 = vmatpush1.msra.mxu0 %v6826
    %6932 = vmatprep.subr.mxu0 %v6835
    %6933 = vmatpush1.msra.mxu0 %v6834
    %6934 = vmatprep.subr.mxu0 0.0
    %6935 = vmatpush1.msra.mxu0 0.0
    %6936 = vmatprep.subr.mxu0 0.0
    %6937 = vmatpush1.msra.mxu0 0.0
    %6938 = vmatprep.subr.mxu0 0.0
    %6939 = vmatpush1.msra.mxu0 0.0
    %6940 = vmatprep.subr.mxu0 0.0
    %6941 = vmatpush1.msra.mxu0 0.0
    %6942 = vmatprep.subr.mxu0 0.0
    %6943 = vmatpush1.msra.mxu0 0.0
    %6944 = vmatprep.subr.mxu0 0.0
    %6945 = vmatpush1.msra.mxu0 0.0
    %6946 = vmatprep.subr.mxu0 0.0
    %6947 = vmatpush1.msra.mxu0 0.0
    %6948 = vmatprep.subr.mxu0 0.0
    %6949 = vmatpush1.msra.mxu0 0.0
    %6950 = vmatprep.subr.mxu0 0.0
    %6951 = vmatpush1.msra.mxu0 0.0
    %6952 = vmatprep.subr.mxu0 0.0
    %6953 = vmatpush1.msra.mxu0 0.0
    %6954 = vmatprep.subr.mxu0 0.0
    %6955 = vmatpush1.msra.mxu0 0.0
    %6956 = vmatprep.subr.mxu0 0.0
    %6957 = vmatpush1.msra.mxu0 0.0
    %6958 = vmatprep.subr.mxu0 0.0
    %6959 = vmatpush1.msra.mxu0 0.0
    %6960 = vmatprep.subr.mxu0 0.0
    %6961 = vmatpush1.msra.mxu0 0.0
    %6962 = vmatprep.subr.mxu0 0.0
    %6963 = vmatpush1.msra.mxu0 0.0
    %6964 = vmatprep.subr.mxu0 0.0
    %6965 = vmatpush1.msra.mxu0 0.0
    %6966 = vmatprep.subr.mxu0 0.0
    %6967 = vmatpush1.msra.mxu0 0.0
    %6968 = vmatprep.subr.mxu0 0.0
    %6969 = vmatpush1.msra.mxu0 0.0
    %6970 = vmatprep.subr.mxu0 0.0
    %6971 = vmatpush1.msra.mxu0 0.0
    %6972 = vmatprep.subr.mxu0 0.0
    %6973 = vmatpush1.msra.mxu0 0.0
    %6974 = vmatprep.subr.mxu0 0.0
    %6975 = vmatpush1.msra.mxu0 0.0
    %6976 = vmatprep.subr.mxu0 0.0
    %6977 = vmatpush1.msra.mxu0 0.0
    %6978 = vmatprep.subr.mxu0 0.0
    %6979 = vmatpush1.msra.mxu0 0.0
    %6980 = vmatprep.subr.mxu0 0.0
    %6981 = vmatpush1.msra.mxu0 0.0
    %6982 = vmatprep.mubr.f32.mxu0 0.0
    %6983 = vmatmul.mubr.f32.gmra.mrb[0].mxu0 %v6907
    %v6984 = vpop.f32.mrb[0].mxu0
    %v6985 = vadd.f32 0.0, %v6984
    %v6986 = vpop.f32.mrb[0].mxu0
    %v6987 = vadd.f32 0.0, %v6986
    %6988 = vmatprep.mubr.f32.mxu0 0.0
    %6989 = vmatmul.mubr.f32.gmra.mrb[0].mxu0 %v6910
    %v6990 = vpop.f32.mrb[0].mxu0
    %v6991 = vadd.f32 0.0, %v6990
    %v6992 = vpop.f32.mrb[0].mxu0
    %v6993 = vadd.f32 0.0, %v6992
    %6994 = vmatprep.mubr.f32.mxu0 0.0
    %6995 = vmatmul.mubr.f32.gmra.mrb[0].mxu0 %v6913
    %v6996 = vpop.f32.mrb[0].mxu0
    %v6997 = vadd.f32 0.0, %v6996
    %v6998 = vpop.f32.mrb[0].mxu0
    %v6999 = vadd.f32 0.0, %v6998
    %7000 = vmatprep.mubr.f32.mxu0 0.0
    %7001 = vmatmul.mubr.f32.gmra.mrb[0].mxu0 %v6916
    %v7002 = vpop.f32.mrb[0].mxu0
    %v7003 = vadd.f32 0.0, %v7002
    %v7004 = vpop.f32.mrb[0].mxu0
    %v7005 = vadd.f32 0.0, %v7004
    %7006 = vdwg.mxu0
    %7007 = vmatprep.subr.mxu0 %v6781
    %7008 = vmatpush1.msra.mxu0 %v6780
    %7009 = vmatprep.subr.mxu0 %v6789
    %7010 = vmatpush1.msra.mxu0 %v6788
    %7011 = vmatprep.subr.mxu0 %v6797
    %7012 = vmatpush1.msra.mxu0 %v6796
    %7013 = vmatprep.subr.mxu0 %v6805
    %7014 = vmatpush1.msra.mxu0 %v6804
    %7015 = vmatprep.subr.mxu0 %v6813
    %7016 = vmatpush1.msra.mxu0 %v6812
    %7017 = vmatprep.subr.mxu0 %v6821
    %7018 = vmatpush1.msra.mxu0 %v6820
    %7019 = vmatprep.subr.mxu0 %v6829
    %7020 = vmatpush1.msra.mxu0 %v6828
    %7021 = vmatprep.subr.mxu0 %v6837
    %7022 = vmatpush1.msra.mxu0 %v6836
    %7023 = vmatprep.subr.mxu0 0.0
    %7024 = vmatpush1.msra.mxu0 0.0
    %7025 = vmatprep.subr.mxu0 0.0
    %7026 = vmatpush1.msra.mxu0 0.0
    %7027 = vmatprep.subr.mxu0 0.0
    %7028 = vmatpush1.msra.mxu0 0.0
    %7029 = vmatprep.subr.mxu0 0.0
    %7030 = vmatpush1.msra.mxu0 0.0
    %7031 = vmatprep.subr.mxu0 0.0
    %7032 = vmatpush1.msra.mxu0 0.0
    %7033 = vmatprep.subr.mxu0 0.0
    %7034 = vmatpush1.msra.mxu0 0.0
    %7035 = vmatprep.subr.mxu0 0.0
    %7036 = vmatpush1.msra.mxu0 0.0
    %7037 = vmatprep.subr.mxu0 0.0
    %7038 = vmatpush1.msra.mxu0 0.0
    %7039 = vmatprep.subr.mxu0 0.0
    %7040 = vmatpush1.msra.mxu0 0.0
    %7041 = vmatprep.subr.mxu0 0.0
    %7042 = vmatpush1.msra.mxu0 0.0
    %7043 = vmatprep.subr.mxu0 0.0
    %7044 = vmatpush1.msra.mxu0 0.0
    %7045 = vmatprep.subr.mxu0 0.0
    %7046 = vmatpush1.msra.mxu0 0.0
    %7047 = vmatprep.subr.mxu0 0.0
    %7048 = vmatpush1.msra.mxu0 0.0
    %7049 = vmatprep.subr.mxu0 0.0
    %7050 = vmatpush1.msra.mxu0 0.0
    %7051 = vmatprep.subr.mxu0 0.0
    %7052 = vmatpush1.msra.mxu0 0.0
    %7053 = vmatprep.subr.mxu0 0.0
    %7054 = vmatpush1.msra.mxu0 0.0
    %7055 = vmatprep.subr.mxu0 0.0
    %7056 = vmatpush1.msra.mxu0 0.0
    %7057 = vmatprep.subr.mxu0 0.0
    %7058 = vmatpush1.msra.mxu0 0.0
    %7059 = vmatprep.subr.mxu0 0.0
    %7060 = vmatpush1.msra.mxu0 0.0
    %7061 = vmatprep.subr.mxu0 0.0
    %7062 = vmatpush1.msra.mxu0 0.0
    %7063 = vmatprep.subr.mxu0 0.0
    %7064 = vmatpush1.msra.mxu0 0.0
    %7065 = vmatprep.subr.mxu0 0.0
    %7066 = vmatpush1.msra.mxu0 0.0
    %7067 = vmatprep.subr.mxu0 0.0
    %7068 = vmatpush1.msra.mxu0 0.0
    %7069 = vmatprep.subr.mxu0 0.0
    %7070 = vmatpush1.msra.mxu0 0.0
    %7071 = vmatprep.mubr.f32.mxu0 0.0
    %7072 = vmatmul.mubr.f32.gmra.mrb[0].mxu0 %v6907
    %v7073 = vpop.f32.mrb[0].mxu0
    %v7074 = vadd.f32 0.0, %v7073
    %v7075 = vpop.f32.mrb[0].mxu0
    %v7076 = vadd.f32 0.0, %v7075
    %7077 = vmatprep.mubr.f32.mxu0 0.0
    %7078 = vmatmul.mubr.f32.gmra.mrb[0].mxu0 %v6910
    %v7079 = vpop.f32.mrb[0].mxu0
    %v7080 = vadd.f32 0.0, %v7079
    %v7081 = vpop.f32.mrb[0].mxu0
    %v7082 = vadd.f32 0.0, %v7081
    %7083 = vmatprep.mubr.f32.mxu0 0.0
    %7084 = vmatmul.mubr.f32.gmra.mrb[0].mxu0 %v6913
    %v7085 = vpop.f32.mrb[0].mxu0
    %v7086 = vadd.f32 0.0, %v7085
    %v7087 = vpop.f32.mrb[0].mxu0
    %v7088 = vadd.f32 0.0, %v7087
    %7089 = vmatprep.mubr.f32.mxu0 0.0
    %7090 = vmatmul.mubr.f32.gmra.mrb[0].mxu0 %v6916
    %v7091 = vpop.f32.mrb[0].mxu0
    %v7092 = vadd.f32 0.0, %v7091
    %v7093 = vpop.f32.mrb[0].mxu0
    %v7094 = vadd.f32 0.0, %v7093
    %7095 = vdwg.mxu0
    %7096 = vmatprep.subr.mxu0 %v6783
    %7097 = vmatpush1.msra.mxu0 %v6782
    %7098 = vmatprep.subr.mxu0 %v6791
    %7099 = vmatpush1.msra.mxu0 %v6790
    %7100 = vmatprep.subr.mxu0 %v6799
    %7101 = vmatpush1.msra.mxu0 %v6798
    %7102 = vmatprep.subr.mxu0 %v6807
    %7103 = vmatpush1.msra.mxu0 %v6806
    %7104 = vmatprep.subr.mxu0 %v6815
    %7105 = vmatpush1.msra.mxu0 %v6814
    %7106 = vmatprep.subr.mxu0 %v6823
    %7107 = vmatpush1.msra.mxu0 %v6822
    %7108 = vmatprep.subr.mxu0 %v6831
    %7109 = vmatpush1.msra.mxu0 %v6830
    %7110 = vmatprep.subr.mxu0 %v6839
    %7111 = vmatpush1.msra.mxu0 %v6838
    %7112 = vmatprep.subr.mxu0 0.0
    %7113 = vmatpush1.msra.mxu0 0.0
    %7114 = vmatprep.subr.mxu0 0.0
    %7115 = vmatpush1.msra.mxu0 0.0
    %7116 = vmatprep.subr.mxu0 0.0
    %7117 = vmatpush1.msra.mxu0 0.0
    %7118 = vmatprep.subr.mxu0 0.0
    %7119 = vmatpush1.msra.mxu0 0.0
    %7120 = vmatprep.subr.mxu0 0.0
    %7121 = vmatpush1.msra.mxu0 0.0
    %7122 = vmatprep.subr.mxu0 0.0
    %7123 = vmatpush1.msra.mxu0 0.0
    %7124 = vmatprep.subr.mxu0 0.0
    %7125 = vmatpush1.msra.mxu0 0.0
    %7126 = vmatprep.subr.mxu0 0.0
    %7127 = vmatpush1.msra.mxu0 0.0
    %7128 = vmatprep.subr.mxu0 0.0
    %7129 = vmatpush1.msra.mxu0 0.0
    %7130 = vmatprep.subr.mxu0 0.0
    %7131 = vmatpush1.msra.mxu0 0.0
    %7132 = vmatprep.subr.mxu0 0.0
    %7133 = vmatpush1.msra.mxu0 0.0
    %7134 = vmatprep.subr.mxu0 0.0
    %7135 = vmatpush1.msra.mxu0 0.0
    %7136 = vmatprep.subr.mxu0 0.0
    %7137 = vmatpush1.msra.mxu0 0.0
    %7138 = vmatprep.subr.mxu0 0.0
    %7139 = vmatpush1.msra.mxu0 0.0
    %7140 = vmatprep.subr.mxu0 0.0
    %7141 = vmatpush1.msra.mxu0 0.0
    %7142 = vmatprep.subr.mxu0 0.0
    %7143 = vmatpush1.msra.mxu0 0.0
    %7144 = vmatprep.subr.mxu0 0.0
    %7145 = vmatpush1.msra.mxu0 0.0
    %7146 = vmatprep.subr.mxu0 0.0
    %7147 = vmatpush1.msra.mxu0 0.0
    %7148 = vmatprep.subr.mxu0 0.0
    %7149 = vmatpush1.msra.mxu0 0.0
    %7150 = vmatprep.subr.mxu0 0.0
    %7151 = vmatpush1.msra.mxu0 0.0
    %7152 = vmatprep.subr.mxu0 0.0
    %7153 = vmatpush1.msra.mxu0 0.0
    %7154 = vmatprep.subr.mxu0 0.0
    %7155 = vmatpush1.msra.mxu0 0.0
    %7156 = vmatprep.subr.mxu0 0.0
    %7157 = vmatpush1.msra.mxu0 0.0
    %7158 = vmatprep.subr.mxu0 0.0
    %7159 = vmatpush1.msra.mxu0 0.0
    %7160 = vmatprep.mubr.f32.mxu0 0.0
    %7161 = vmatmul.mubr.f32.gmra.mrb[0].mxu0 %v6907
    %v7162 = vpop.f32.mrb[0].mxu0
    %v7163 = vadd.f32 0.0, %v7162
    %v7164 = vpop.f32.mrb[0].mxu0
    %v7165 = vadd.f32 0.0, %v7164
    %7166 = vmatprep.mubr.f32.mxu0 0.0
    %7167 = vmatmul.mubr.f32.gmra.mrb[0].mxu0 %v6910
    %v7168 = vpop.f32.mrb[0].mxu0
    %v7169 = vadd.f32 0.0, %v7168
    %v7170 = vpop.f32.mrb[0].mxu0
    %v7171 = vadd.f32 0.0, %v7170
    %7172 = vmatprep.mubr.f32.mxu0 0.0
    %7173 = vmatmul.mubr.f32.gmra.mrb[0].mxu0 %v6913
    %v7174 = vpop.f32.mrb[0].mxu0
    %v7175 = vadd.f32 0.0, %v7174
    %v7176 = vpop.f32.mrb[0].mxu0
    %v7177 = vadd.f32 0.0, %v7176
    %7178 = vmatprep.mubr.f32.mxu0 0.0
    %7179 = vmatmul.mubr.f32.gmra.mrb[0].mxu0 %v6916
    %v7180 = vpop.f32.mrb[0].mxu0
    %v7181 = vadd.f32 0.0, %v7180
    %v7182 = vpop.f32.mrb[0].mxu0
    %v7183 = vadd.f32 0.0, %v7182
    %7184 = vdwg.mxu0
    %7185 = vmatprep.subr.mxu0 %v6785
    %7186 = vmatpush1.msra.mxu0 %v6784
    %7187 = vmatprep.subr.mxu0 %v6793
    %7188 = vmatpush1.msra.mxu0 %v6792
    %7189 = vmatprep.subr.mxu0 %v6801
    %7190 = vmatpush1.msra.mxu0 %v6800
    %7191 = vmatprep.subr.mxu0 %v6809
    %7192 = vmatpush1.msra.mxu0 %v6808
    %7193 = vmatprep.subr.mxu0 %v6817
    %7194 = vmatpush1.msra.mxu0 %v6816
    %7195 = vmatprep.subr.mxu0 %v6825
    %7196 = vmatpush1.msra.mxu0 %v6824
    %7197 = vmatprep.subr.mxu0 %v6833
    %7198 = vmatpush1.msra.mxu0 %v6832
    %7199 = vmatprep.subr.mxu0 %v6841
    %7200 = vmatpush1.msra.mxu0 %v6840
    %7201 = vmatprep.subr.mxu0 0.0
    %7202 = vmatpush1.msra.mxu0 0.0
    %7203 = vmatprep.subr.mxu0 0.0
    %7204 = vmatpush1.msra.mxu0 0.0
    %7205 = vmatprep.subr.mxu0 0.0
    %7206 = vmatpush1.msra.mxu0 0.0
    %7207 = vmatprep.subr.mxu0 0.0
    %7208 = vmatpush1.msra.mxu0 0.0
    %7209 = vmatprep.subr.mxu0 0.0
    %7210 = vmatpush1.msra.mxu0 0.0
    %7211 = vmatprep.subr.mxu0 0.0
    %7212 = vmatpush1.msra.mxu0 0.0
    %7213 = vmatprep.subr.mxu0 0.0
    %7214 = vmatpush1.msra.mxu0 0.0
    %7215 = vmatprep.subr.mxu0 0.0
    %7216 = vmatpush1.msra.mxu0 0.0
    %7217 = vmatprep.subr.mxu0 0.0
    %7218 = vmatpush1.msra.mxu0 0.0
    %7219 = vmatprep.subr.mxu0 0.0
    %7220 = vmatpush1.msra.mxu0 0.0
    %7221 = vmatprep.subr.mxu0 0.0
    %7222 = vmatpush1.msra.mxu0 0.0
    %7223 = vmatprep.subr.mxu0 0.0
    %7224 = vmatpush1.msra.mxu0 0.0
    %7225 = vmatprep.subr.mxu0 0.0
    %7226 = vmatpush1.msra.mxu0 0.0
    %7227 = vmatprep.subr.mxu0 0.0
    %7228 = vmatpush1.msra.mxu0 0.0
    %7229 = vmatprep.subr.mxu0 0.0
    %7230 = vmatpush1.msra.mxu0 0.0
    %7231 = vmatprep.subr.mxu0 0.0
    %7232 = vmatpush1.msra.mxu0 0.0
    %7233 = vmatprep.subr.mxu0 0.0
    %7234 = vmatpush1.msra.mxu0 0.0
    %7235 = vmatprep.subr.mxu0 0.0
    %7236 = vmatpush1.msra.mxu0 0.0
    %7237 = vmatprep.subr.mxu0 0.0
    %7238 = vmatpush1.msra.mxu0 0.0
    %7239 = vmatprep.subr.mxu0 0.0
    %7240 = vmatpush1.msra.mxu0 0.0
    %7241 = vmatprep.subr.mxu0 0.0
    %7242 = vmatpush1.msra.mxu0 0.0
    %7243 = vmatprep.subr.mxu0 0.0
    %7244 = vmatpush1.msra.mxu0 0.0
    %7245 = vmatprep.subr.mxu0 0.0
    %7246 = vmatpush1.msra.mxu0 0.0
    %7247 = vmatprep.subr.mxu0 0.0
    %7248 = vmatpush1.msra.mxu0 0.0
    %7249 = vmatprep.mubr.f32.mxu0 0.0
    %7250 = vmatmul.mubr.f32.gmra.mrb[0].mxu0 %v6907
    %v7251 = vpop.f32.mrb[0].mxu0
    %v7252 = vadd.f32 0.0, %v7251
    %v7253 = vpop.f32.mrb[0].mxu0
    %v7254 = vadd.f32 0.0, %v7253
    %7255 = vmatprep.mubr.f32.mxu0 0.0
    %7256 = vmatmul.mubr.f32.gmra.mrb[0].mxu0 %v6910
    %v7257 = vpop.f32.mrb[0].mxu0
    %v7258 = vadd.f32 0.0, %v7257
    %v7259 = vpop.f32.mrb[0].mxu0
    %v7260 = vadd.f32 0.0, %v7259
    %7261 = vmatprep.mubr.f32.mxu0 0.0
    %7262 = vmatmul.mubr.f32.gmra.mrb[0].mxu0 %v6913
    %v7263 = vpop.f32.mrb[0].mxu0
    %v7264 = vadd.f32 0.0, %v7263
    %v7265 = vpop.f32.mrb[0].mxu0
    %v7266 = vadd.f32 0.0, %v7265
    %7267 = vmatprep.mubr.f32.mxu0 0.0
    %7268 = vmatmul.mubr.f32.gmra.mrb[0].mxu0 %v6916
    %v7269 = vpop.f32.mrb[0].mxu0
    %v7270 = vadd.f32 0.0, %v7269
    %v7271 = vpop.f32.mrb[0].mxu0
    %v7272 = vadd.f32 0.0, %v7271
    %7273 = vdwg.mxu0
    %v7274 = vadd.f32 %v6597, %v6985
    %v7275 = vadd.f32 %v6598, %v6987
    %v7276 = vadd.f32 %v6599, %v7074
    %v7277 = vadd.f32 %v6600, %v7076
    %v7278 = vadd.f32 %v6601, %v7163
    %v7279 = vadd.f32 %v6602, %v7165
    %v7280 = vadd.f32 %v6603, %v7252
    %v7281 = vadd.f32 %v6604, %v7254
    %v7282 = vadd.f32 %v6605, %v6991
    %v7283 = vadd.f32 %v6606, %v6993
    %v7284 = vadd.f32 %v6607, %v7080
    %v7285 = vadd.f32 %v6608, %v7082
    %v7286 = vadd.f32 %v6609, %v7169
    %v7287 = vadd.f32 %v6610, %v7171
    %v7288 = vadd.f32 %v6611, %v7258
    %v7289 = vadd.f32 %v6612, %v7260
    %v7290 = vadd.f32 %v6613, %v6997
    %v7291 = vadd.f32 %v6614, %v6999
    %v7292 = vadd.f32 %v6615, %v7086
    %v7293 = vadd.f32 %v6616, %v7088
    %v7294 = vadd.f32 %v6617, %v7175
    %v7295 = vadd.f32 %v6618, %v7177
    %v7296 = vadd.f32 %v6619, %v7264
    %v7297 = vadd.f32 %v6620, %v7266
    %v7298 = vadd.f32 %v6621, %v7003
    %v7299 = vadd.f32 %v6622, %v7005
    %v7300 = vadd.f32 %v6623, %v7092
    %v7301 = vadd.f32 %v6624, %v7094
    %v7302 = vadd.f32 %v6625, %v7181
    %v7303 = vadd.f32 %v6626, %v7183
    %v7304 = vadd.f32 %v6627, %v7270
    %v7305 = vadd.f32 %v6628, %v7272
    %v7306 = vld [vmem:[%s4] sm:$0xff]
    %v7307 = vld [vmem:[%s4 + $0x8] sm:$0xff]
    %v7308 = vld [vmem:[%s4 + $0x10] sm:$0xff]
    %v7309 = vld [vmem:[%s4 + $0x18] sm:$0xff]
    %7311 = vset.pattern.permute.xlu0 0
    %7312 = vperm.xlu0 %7311, %v7306
    %v7313 = vpop.permute.xlu0 %7312
    %7316 = vset.pattern.permute.xlu0 0
    %7317 = vperm.xlu0 %7316, %v7307
    %v7318 = vpop.permute.xlu0 %7317
    %7321 = vset.pattern.permute.xlu0 0
    %7322 = vperm.xlu0 %7321, %v7308
    %v7323 = vpop.permute.xlu0 %7322
    %7326 = vset.pattern.permute.xlu0 0
    %7327 = vperm.xlu0 %7326, %v7309
    %v7328 = vpop.permute.xlu0 %7327
    %v7330 = vadd.f32 %v7274, %v7313
    %v7331 = vadd.f32 %v7275, %v7313
    %v7332 = vadd.f32 %v7276, %v7313
    %v7333 = vadd.f32 %v7277, %v7313
    %v7334 = vadd.f32 %v7278, %v7313
    %v7335 = vadd.f32 %v7279, %v7313
    %v7336 = vadd.f32 %v7280, %v7313
    %v7337 = vadd.f32 %v7281, %v7313
    %v7338 = vadd.f32 %v7282, %v7318
    %v7339 = vadd.f32 %v7283, %v7318
    %v7340 = vadd.f32 %v7284, %v7318
    %v7341 = vadd.f32 %v7285, %v7318
    %v7342 = vadd.f32 %v7286, %v7318
    %v7343 = vadd.f32 %v7287, %v7318
    %v7344 = vadd.f32 %v7288, %v7318
    %v7345 = vadd.f32 %v7289, %v7318
    %v7346 = vadd.f32 %v7290, %v7323
    %v7347 = vadd.f32 %v7291, %v7323
    %v7348 = vadd.f32 %v7292, %v7323
    %v7349 = vadd.f32 %v7293, %v7323
    %v7350 = vadd.f32 %v7294, %v7323
    %v7351 = vadd.f32 %v7295, %v7323
    %v7352 = vadd.f32 %v7296, %v7323
    %v7353 = vadd.f32 %v7297, %v7323
    %v7354 = vadd.f32 %v7298, %v7328
    %v7355 = vadd.f32 %v7299, %v7328
    %v7356 = vadd.f32 %v7300, %v7328
    %v7357 = vadd.f32 %v7301, %v7328
    %v7358 = vadd.f32 %v7302, %v7328
    %v7359 = vadd.f32 %v7303, %v7328
    %v7360 = vadd.f32 %v7304, %v7328
    %v7361 = vadd.f32 %v7305, %v7328
    %v7362 = vtanh.pop %v7330
    %v7363 = vtanh.pop %v7331
    %v7364 = vtanh.pop %v7332
    %v7365 = vtanh.pop %v7333
    %v7366 = vtanh.pop %v7334
    %v7367 = vtanh.pop %v7335
    %v7368 = vtanh.pop %v7336
    %v7369 = vtanh.pop %v7337
    %v7370 = vtanh.pop %v7338
    %v7371 = vtanh.pop %v7339
    %v7372 = vtanh.pop %v7340
    %v7373 = vtanh.pop %v7341
    %v7374 = vtanh.pop %v7342
    %v7375 = vtanh.pop %v7343
    %v7376 = vtanh.pop %v7344
    %v7377 = vtanh.pop %v7345
    %v7378 = vtanh.pop %v7346
    %v7379 = vtanh.pop %v7347
    %v7380 = vtanh.pop %v7348
    %v7381 = vtanh.pop %v7349
    %v7382 = vtanh.pop %v7350
    %v7383 = vtanh.pop %v7351
    %v7384 = vtanh.pop %v7352
    %v7385 = vtanh.pop %v7353
    %v7386 = vtanh.pop %v7354
    %v7387 = vtanh.pop %v7355
    %v7388 = vtanh.pop %v7356
    %v7389 = vtanh.pop %v7357
    %v7390 = vtanh.pop %v7358
    %v7391 = vtanh.pop %v7359
    %v7392 = vtanh.pop %v7360
    %v7393 = vtanh.pop %v7361
    %s7394 = scalar_lea.vmem %s7, 1
    %v7395 = vld [vmem:[%s7394] ss:$2 sm:$0xff]
    %v7397 = vlaneseq
    %v7398 = vshrl.u32 %v7397, 7
    %v7399 = vsub.s32 0, %v7398
    %v7400 = vrot.slane %v7395, %v7399
    %v7401 = vlaneseq
    %v7402 = vshrl.u32 %v7401, 7
    %v7403 = vsub.s32 1, %v7402
    %v7404 = vrot.slane %v7395, %v7403
    %v7405 = vlaneseq
    %v7406 = vshrl.u32 %v7405, 7
    %v7407 = vsub.s32 2, %v7406
    %v7408 = vrot.slane %v7395, %v7407
    %v7409 = vlaneseq
    %v7410 = vshrl.u32 %v7409, 7
    %v7411 = vsub.s32 3, %v7410
    %v7412 = vrot.slane %v7395, %v7411
    %v7413 = vlaneseq
    %v7414 = vshrl.u32 %v7413, 7
    %v7415 = vsub.s32 4, %v7414
    %v7416 = vrot.slane %v7395, %v7415
    %v7417 = vlaneseq
    %v7418 = vshrl.u32 %v7417, 7
    %v7419 = vsub.s32 5, %v7418
    %v7420 = vrot.slane %v7395, %v7419
    %v7421 = vlaneseq
    %v7422 = vshrl.u32 %v7421, 7
    %v7423 = vsub.s32 6, %v7422
    %v7424 = vrot.slane %v7395, %v7423
    %v7425 = vlaneseq
    %v7426 = vshrl.u32 %v7425, 7
    %v7427 = vsub.s32 7, %v7426
    %v7428 = vrot.slane %v7395, %v7427
    %v7437 = vmul.f32 %v7362, %v7400
    %v7438 = vmul.f32 %v7363, %v7404
    %v7439 = vmul.f32 %v7364, %v7408
    %v7440 = vmul.f32 %v7365, %v7412
    %v7441 = vmul.f32 %v7366, %v7416
    %v7442 = vmul.f32 %v7367, %v7420
    %v7443 = vmul.f32 %v7368, %v7424
    %v7444 = vmul.f32 %v7369, %v7428
    %v7445 = vmul.f32 %v7370, %v7400
    %v7446 = vmul.f32 %v7371, %v7404
    %v7447 = vmul.f32 %v7372, %v7408
    %v7448 = vmul.f32 %v7373, %v7412
    %v7449 = vmul.f32 %v7374, %v7416
    %v7450 = vmul.f32 %v7375, %v7420
    %v7451 = vmul.f32 %v7376, %v7424
    %v7452 = vmul.f32 %v7377, %v7428
    %v7453 = vmul.f32 %v7378, %v7400
    %v7454 = vmul.f32 %v7379, %v7404
    %v7455 = vmul.f32 %v7380, %v7408
    %v7456 = vmul.f32 %v7381, %v7412
    %v7457 = vmul.f32 %v7382, %v7416
    %v7458 = vmul.f32 %v7383, %v7420
    %v7459 = vmul.f32 %v7384, %v7424
    %v7460 = vmul.f32 %v7385, %v7428
    %v7461 = vmul.f32 %v7386, %v7400
    %v7462 = vmul.f32 %v7387, %v7404
    %v7463 = vmul.f32 %v7388, %v7408
    %v7464 = vmul.f32 %v7389, %v7412
    %v7465 = vmul.f32 %v7390, %v7416
    %v7466 = vmul.f32 %v7391, %v7420
    %v7467 = vmul.f32 %v7392, %v7424
    %v7468 = vmul.f32 %v7393, %v7428
    %7469 = vst [vmem:[#allocation2] sm:$0xff] %v7437
    %7470 = vst [vmem:[#allocation2 + $0x8] sm:$0xff] %v7438
    %7471 = vst [vmem:[#allocation2 + $0x10] sm:$0xff] %v7439
    %7472 = vst [vmem:[#allocation2 + $0x18] sm:$0xff] %v7440
    %7473 = vst [vmem:[#allocation2 + $0x20] sm:$0xff] %v7441
    %7474 = vst [vmem:[#allocation2 + $0x28] sm:$0xff] %v7442
    %7475 = vst [vmem:[#allocation2 + $0x30] sm:$0xff] %v7443
    %7476 = vst [vmem:[#allocation2 + $0x38] sm:$0xff] %v7444
    %7477 = vst [vmem:[#allocation2 + $0x48] sm:$0xff] %v7445
    %7478 = vst [vmem:[#allocation2 + $0x50] sm:$0xff] %v7446
    %7479 = vst [vmem:[#allocation2 + $0x58] sm:$0xff] %v7447
    %7480 = vst [vmem:[#allocation2 + $0x60] sm:$0xff] %v7448
    %7481 = vst [vmem:[#allocation2 + $0x68] sm:$0xff] %v7449
    %7482 = vst [vmem:[#allocation2 + $0x70] sm:$0xff] %v7450
    %7483 = vst [vmem:[#allocation2 + $0x78] sm:$0xff] %v7451
    %7484 = vst [vmem:[#allocation2 + $0x80] sm:$0xff] %v7452
    %7485 = vst [vmem:[#allocation2 + $0x90] sm:$0xff] %v7453
    %7486 = vst [vmem:[#allocation2 + $0x98] sm:$0xff] %v7454
    %7487 = vst [vmem:[#allocation2 + $0xa0] sm:$0xff] %v7455
    %7488 = vst [vmem:[#allocation2 + $0xa8] sm:$0xff] %v7456
    %7489 = vst [vmem:[#allocation2 + $0xb0] sm:$0xff] %v7457
    %7490 = vst [vmem:[#allocation2 + $0xb8] sm:$0xff] %v7458
    %7491 = vst [vmem:[#allocation2 + $0xc0] sm:$0xff] %v7459
    %7492 = vst [vmem:[#allocation2 + $0xc8] sm:$0xff] %v7460
    %7493 = vst [vmem:[#allocation2 + $0xd8] sm:$0xff] %v7461
    %7494 = vst [vmem:[#allocation2 + $0xe0] sm:$0xff] %v7462
    %7495 = vst [vmem:[#allocation2 + $0xe8] sm:$0xff] %v7463
    %7496 = vst [vmem:[#allocation2 + $0xf0] sm:$0xff] %v7464
    %7497 = vst [vmem:[#allocation2 + $0xf8] sm:$0xff] %v7465
    %7498 = vst [vmem:[#allocation2 + $0x100] sm:$0xff] %v7466
    %7499 = vst [vmem:[#allocation2 + $0x108] sm:$0xff] %v7467
    %7500 = vst [vmem:[#allocation2 + $0x110] sm:$0xff] %v7468
    %v7501 = vld [vmem:[%s5] sm:$0xff]
    %v7502 = vld [vmem:[%s5 + $0x8] sm:$0x1]
    %v7503 = vld [vmem:[#allocation2] sm:$0xff]
    %v7504 = vld [vmem:[#allocation2 + $0x8] sm:$0xff]
    %v7505 = vld [vmem:[#allocation2 + $0x10] sm:$0xff]
    %v7506 = vld [vmem:[#allocation2 + $0x18] sm:$0xff]
    %v7507 = vld [vmem:[#allocation2 + $0x20] sm:$0xff]
    %v7508 = vld [vmem:[#allocation2 + $0x28] sm:$0xff]
    %v7509 = vld [vmem:[#allocation2 + $0x30] sm:$0xff]
    %v7510 = vld [vmem:[#allocation2 + $0x38] sm:$0xff]
    %v7511 = vld [vmem:[#allocation2 + $0x48] sm:$0xff]
    %v7512 = vld [vmem:[#allocation2 + $0x50] sm:$0xff]
    %v7513 = vld [vmem:[#allocation2 + $0x58] sm:$0xff]
    %v7514 = vld [vmem:[#allocation2 + $0x60] sm:$0xff]
    %v7515 = vld [vmem:[#allocation2 + $0x68] sm:$0xff]
    %v7516 = vld [vmem:[#allocation2 + $0x70] sm:$0xff]
    %v7517 = vld [vmem:[#allocation2 + $0x78] sm:$0xff]
    %v7518 = vld [vmem:[#allocation2 + $0x80] sm:$0xff]
    %v7519 = vld [vmem:[#allocation2 + $0x90] sm:$0xff]
    %v7520 = vld [vmem:[#allocation2 + $0x98] sm:$0xff]
    %v7521 = vld [vmem:[#allocation2 + $0xa0] sm:$0xff]
    %v7522 = vld [vmem:[#allocation2 + $0xa8] sm:$0xff]
    %v7523 = vld [vmem:[#allocation2 + $0xb0] sm:$0xff]
    %v7524 = vld [vmem:[#allocation2 + $0xb8] sm:$0xff]
    %v7525 = vld [vmem:[#allocation2 + $0xc0] sm:$0xff]
    %v7526 = vld [vmem:[#allocation2 + $0xc8] sm:$0xff]
    %v7527 = vld [vmem:[#allocation2 + $0xd8] sm:$0xff]
    %v7528 = vld [vmem:[#allocation2 + $0xe0] sm:$0xff]
    %v7529 = vld [vmem:[#allocation2 + $0xe8] sm:$0xff]
    %v7530 = vld [vmem:[#allocation2 + $0xf0] sm:$0xff]
    %v7531 = vld [vmem:[#allocation2 + $0xf8] sm:$0xff]
    %v7532 = vld [vmem:[#allocation2 + $0x100] sm:$0xff]
    %v7533 = vld [vmem:[#allocation2 + $0x108] sm:$0xff]
    %v7534 = vld [vmem:[#allocation2 + $0x110] sm:$0xff]
    %s7535 = scalar_lea.vmem %s5, 16
    %v7536 = vld [vmem:[%s7535] sm:$0xff]
    %v7537 = vld [vmem:[%s7535 + $0x8] sm:$0x1]
    %v7538 = vld [vmem:[#allocation2 + $0x40] sm:$0xff]
    %v7539 = vld [vmem:[#allocation2 + $0x88] sm:$0xff]
    %v7540 = vld [vmem:[#allocation2 + $0xd0] sm:$0xff]
    %v7541 = vld [vmem:[#allocation2 + $0x118] sm:$0xff]
    %7578 = vrot.lane.b32.xlu0 %v7503, 127
    %v7579 = vpop.permute.xlu0 %7578
    %7580 = vrot.lane.b32.xlu0 %v7504, 127
    %v7581 = vpop.permute.xlu0 %7580
    %7582 = vrot.lane.b32.xlu0 %v7505, 127
    %v7583 = vpop.permute.xlu0 %7582
    %7584 = vrot.lane.b32.xlu0 %v7506, 127
    %v7585 = vpop.permute.xlu0 %7584
    %7586 = vrot.lane.b32.xlu0 %v7507, 127
    %v7587 = vpop.permute.xlu0 %7586
    %7588 = vrot.lane.b32.xlu0 %v7508, 127
    %v7589 = vpop.permute.xlu0 %7588
    %7590 = vrot.lane.b32.xlu0 %v7509, 127
    %v7591 = vpop.permute.xlu0 %7590
    %7592 = vrot.lane.b32.xlu0 %v7510, 127
    %v7593 = vpop.permute.xlu0 %7592
    %7594 = vrot.lane.b32.xlu0 %v7538, 127
    %v7595 = vpop.permute.xlu0 %7594
    %7596 = vrot.lane.b32.xlu0 %v7511, 127
    %v7597 = vpop.permute.xlu0 %7596
    %7598 = vrot.lane.b32.xlu0 %v7512, 127
    %v7599 = vpop.permute.xlu0 %7598
    %7600 = vrot.lane.b32.xlu0 %v7513, 127
    %v7601 = vpop.permute.xlu0 %7600
    %7602 = vrot.lane.b32.xlu0 %v7514, 127
    %v7603 = vpop.permute.xlu0 %7602
    %7604 = vrot.lane.b32.xlu0 %v7515, 127
    %v7605 = vpop.permute.xlu0 %7604
    %7606 = vrot.lane.b32.xlu0 %v7516, 127
    %v7607 = vpop.permute.xlu0 %7606
    %7608 = vrot.lane.b32.xlu0 %v7517, 127
    %v7609 = vpop.permute.xlu0 %7608
    %7610 = vrot.lane.b32.xlu0 %v7518, 127
    %v7611 = vpop.permute.xlu0 %7610
    %7612 = vrot.lane.b32.xlu0 %v7539, 127
    %v7613 = vpop.permute.xlu0 %7612
    %7614 = vrot.lane.b32.xlu0 %v7519, 127
    %v7615 = vpop.permute.xlu0 %7614
    %7616 = vrot.lane.b32.xlu0 %v7520, 127
    %v7617 = vpop.permute.xlu0 %7616
    %7618 = vrot.lane.b32.xlu0 %v7521, 127
    %v7619 = vpop.permute.xlu0 %7618
    %7620 = vrot.lane.b32.xlu0 %v7522, 127
    %v7621 = vpop.permute.xlu0 %7620
    %7622 = vrot.lane.b32.xlu0 %v7523, 127
    %v7623 = vpop.permute.xlu0 %7622
    %7624 = vrot.lane.b32.xlu0 %v7524, 127
    %v7625 = vpop.permute.xlu0 %7624
    %7626 = vrot.lane.b32.xlu0 %v7525, 127
    %v7627 = vpop.permute.xlu0 %7626
    %7628 = vrot.lane.b32.xlu0 %v7526, 127
    %v7629 = vpop.permute.xlu0 %7628
    %7630 = vrot.lane.b32.xlu0 %v7540, 127
    %v7631 = vpop.permute.xlu0 %7630
    %7632 = vrot.lane.b32.xlu0 %v7527, 127
    %v7633 = vpop.permute.xlu0 %7632
    %7634 = vrot.lane.b32.xlu0 %v7528, 127
    %v7635 = vpop.permute.xlu0 %7634
    %7636 = vrot.lane.b32.xlu0 %v7529, 127
    %v7637 = vpop.permute.xlu0 %7636
    %7638 = vrot.lane.b32.xlu0 %v7530, 127
    %v7639 = vpop.permute.xlu0 %7638
    %7640 = vrot.lane.b32.xlu0 %v7531, 127
    %v7641 = vpop.permute.xlu0 %7640
    %7642 = vrot.lane.b32.xlu0 %v7532, 127
    %v7643 = vpop.permute.xlu0 %7642
    %7644 = vrot.lane.b32.xlu0 %v7533, 127
    %v7645 = vpop.permute.xlu0 %7644
    %7646 = vrot.lane.b32.xlu0 %v7534, 127
    %v7647 = vpop.permute.xlu0 %7646
    %7648 = vrot.lane.b32.xlu0 %v7541, 127
    %v7649 = vpop.permute.xlu0 %7648
    %v7650 = vsel %vm74, %v7579, %v7581
    %v7651 = vsel %vm74, %v7581, %v7583
    %v7652 = vsel %vm74, %v7583, %v7585
    %v7653 = vsel %vm74, %v7585, %v7587
    %v7654 = vsel %vm74, %v7587, %v7589
    %v7655 = vsel %vm74, %v7589, %v7591
    %v7656 = vsel %vm74, %v7591, %v7593
    %v7657 = vsel %vm74, %v7593, %v7595
    %v7658 = vsel %vm74, %v7597, %v7599
    %v7659 = vsel %vm74, %v7599, %v7601
    %v7660 = vsel %vm74, %v7601, %v7603
    %v7661 = vsel %vm74, %v7603, %v7605
    %v7662 = vsel %vm74, %v7605, %v7607
    %v7663 = vsel %vm74, %v7607, %v7609
    %v7664 = vsel %vm74, %v7609, %v7611
    %v7665 = vsel %vm74, %v7611, %v7613
    %v7666 = vsel %vm74, %v7615, %v7617
    %v7667 = vsel %vm74, %v7617, %v7619
    %v7668 = vsel %vm74, %v7619, %v7621
    %v7669 = vsel %vm74, %v7621, %v7623
    %v7670 = vsel %vm74, %v7623, %v7625
    %v7671 = vsel %vm74, %v7625, %v7627
    %v7672 = vsel %vm74, %v7627, %v7629
    %v7673 = vsel %vm74, %v7629, %v7631
    %v7674 = vsel %vm74, %v7633, %v7635
    %v7675 = vsel %vm74, %v7635, %v7637
    %v7676 = vsel %vm74, %v7637, %v7639
    %v7677 = vsel %vm74, %v7639, %v7641
    %v7678 = vsel %vm74, %v7641, %v7643
    %v7679 = vsel %vm74, %v7643, %v7645
    %v7680 = vsel %vm74, %v7645, %v7647
    %v7681 = vsel %vm74, %v7647, %v7649
    %vm7714 = vcmask 261120
    %v7716 = vsel %vm7714, %v7536, 0
    %v7719 = vsel %vm7714, %v7537, 0
    %7721 = vmatprep.subr.mxu0 %v7651
    %7722 = vmatpush1.msra.mxu0 %v7650
    %7723 = vmatprep.subr.mxu0 %v7659
    %7724 = vmatpush1.msra.mxu0 %v7658
    %7725 = vmatprep.subr.mxu0 %v7667
    %7726 = vmatpush1.msra.mxu0 %v7666
    %7727 = vmatprep.subr.mxu0 %v7675
    %7728 = vmatpush1.msra.mxu0 %v7674
    %7729 = vmatprep.subr.mxu0 0.0
    %7730 = vmatpush1.msra.mxu0 0.0
    %7731 = vmatprep.subr.mxu0 0.0
    %7732 = vmatpush1.msra.mxu0 0.0
    %7733 = vmatprep.subr.mxu0 0.0
    %7734 = vmatpush1.msra.mxu0 0.0
    %7735 = vmatprep.subr.mxu0 0.0
    %7736 = vmatpush1.msra.mxu0 0.0
    %7737 = vmatprep.subr.mxu0 0.0
    %7738 = vmatpush1.msra.mxu0 0.0
    %7739 = vmatprep.subr.mxu0 0.0
    %7740 = vmatpush1.msra.mxu0 0.0
    %7741 = vmatprep.subr.mxu0 0.0
    %7742 = vmatpush1.msra.mxu0 0.0
    %7743 = vmatprep.subr.mxu0 0.0
    %7744 = vmatpush1.msra.mxu0 0.0
    %7745 = vmatprep.subr.mxu0 0.0
    %7746 = vmatpush1.msra.mxu0 0.0
    %7747 = vmatprep.subr.mxu0 0.0
    %7748 = vmatpush1.msra.mxu0 0.0
    %7749 = vmatprep.subr.mxu0 0.0
    %7750 = vmatpush1.msra.mxu0 0.0
    %7751 = vmatprep.subr.mxu0 0.0
    %7752 = vmatpush1.msra.mxu0 0.0
    %7753 = vmatprep.subr.mxu0 0.0
    %7754 = vmatpush1.msra.mxu0 0.0
    %7755 = vmatprep.subr.mxu0 0.0
    %7756 = vmatpush1.msra.mxu0 0.0
    %7757 = vmatprep.subr.mxu0 0.0
    %7758 = vmatpush1.msra.mxu0 0.0
    %7759 = vmatprep.subr.mxu0 0.0
    %7760 = vmatpush1.msra.mxu0 0.0
    %7761 = vmatprep.subr.mxu0 0.0
    %7762 = vmatpush1.msra.mxu0 0.0
    %7763 = vmatprep.subr.mxu0 0.0
    %7764 = vmatpush1.msra.mxu0 0.0
    %7765 = vmatprep.subr.mxu0 0.0
    %7766 = vmatpush1.msra.mxu0 0.0
    %7767 = vmatprep.subr.mxu0 0.0
    %7768 = vmatpush1.msra.mxu0 0.0
    %7769 = vmatprep.subr.mxu0 0.0
    %7770 = vmatpush1.msra.mxu0 0.0
    %7771 = vmatprep.subr.mxu0 0.0
    %7772 = vmatpush1.msra.mxu0 0.0
    %7773 = vmatprep.subr.mxu0 0.0
    %7774 = vmatpush1.msra.mxu0 0.0
    %7775 = vmatprep.subr.mxu0 0.0
    %7776 = vmatpush1.msra.mxu0 0.0
    %7777 = vmatprep.subr.mxu0 0.0
    %7778 = vmatpush1.msra.mxu0 0.0
    %7779 = vmatprep.subr.mxu0 0.0
    %7780 = vmatpush1.msra.mxu0 0.0
    %7781 = vmatprep.subr.mxu0 0.0
    %7782 = vmatpush1.msra.mxu0 0.0
    %7783 = vmatprep.subr.mxu0 0.0
    %7784 = vmatpush1.msra.mxu0 0.0
    %7785 = vmatprep.mubr.f32.mxu0 0.0
    %7786 = vmatmul.mubr.f32.gmra.mrb[0].mxu0 %v7716
    %v7787 = vpop.f32.mrb[0].mxu0
    %v7788 = vadd.f32 0.0, %v7787
    %v7789 = vpop.f32.mrb[0].mxu0
    %v7790 = vadd.f32 0.0, %v7789
    %7791 = vmatprep.mubr.f32.mxu0 0.0
    %7792 = vmatmul.mubr.f32.gmra.mrb[0].mxu0 %v7719
    %v7793 = vpop.f32.mrb[0].mxu0
    %v7794 = vadd.f32 0.0, %v7793
    %v7795 = vpop.f32.mrb[0].mxu0
    %v7796 = vadd.f32 0.0, %v7795
    %7797 = vdwg.mxu0
    %7798 = vmatprep.subr.mxu0 %v7653
    %7799 = vmatpush1.msra.mxu0 %v7652
    %7800 = vmatprep.subr.mxu0 %v7661
    %7801 = vmatpush1.msra.mxu0 %v7660
    %7802 = vmatprep.subr.mxu0 %v7669
    %7803 = vmatpush1.msra.mxu0 %v7668
    %7804 = vmatprep.subr.mxu0 %v7677
    %7805 = vmatpush1.msra.mxu0 %v7676
    %7806 = vmatprep.subr.mxu0 0.0
    %7807 = vmatpush1.msra.mxu0 0.0
    %7808 = vmatprep.subr.mxu0 0.0
    %7809 = vmatpush1.msra.mxu0 0.0
    %7810 = vmatprep.subr.mxu0 0.0
    %7811 = vmatpush1.msra.mxu0 0.0
    %7812 = vmatprep.subr.mxu0 0.0
    %7813 = vmatpush1.msra.mxu0 0.0
    %7814 = vmatprep.subr.mxu0 0.0
    %7815 = vmatpush1.msra.mxu0 0.0
    %7816 = vmatprep.subr.mxu0 0.0
    %7817 = vmatpush1.msra.mxu0 0.0
    %7818 = vmatprep.subr.mxu0 0.0
    %7819 = vmatpush1.msra.mxu0 0.0
    %7820 = vmatprep.subr.mxu0 0.0
    %7821 = vmatpush1.msra.mxu0 0.0
    %7822 = vmatprep.subr.mxu0 0.0
    %7823 = vmatpush1.msra.mxu0 0.0
    %7824 = vmatprep.subr.mxu0 0.0
    %7825 = vmatpush1.msra.mxu0 0.0
    %7826 = vmatprep.subr.mxu0 0.0
    %7827 = vmatpush1.msra.mxu0 0.0
    %7828 = vmatprep.subr.mxu0 0.0
    %7829 = vmatpush1.msra.mxu0 0.0
    %7830 = vmatprep.subr.mxu0 0.0
    %7831 = vmatpush1.msra.mxu0 0.0
    %7832 = vmatprep.subr.mxu0 0.0
    %7833 = vmatpush1.msra.mxu0 0.0
    %7834 = vmatprep.subr.mxu0 0.0
    %7835 = vmatpush1.msra.mxu0 0.0
    %7836 = vmatprep.subr.mxu0 0.0
    %7837 = vmatpush1.msra.mxu0 0.0
    %7838 = vmatprep.subr.mxu0 0.0
    %7839 = vmatpush1.msra.mxu0 0.0
    %7840 = vmatprep.subr.mxu0 0.0
    %7841 = vmatpush1.msra.mxu0 0.0
    %7842 = vmatprep.subr.mxu0 0.0
    %7843 = vmatpush1.msra.mxu0 0.0
    %7844 = vmatprep.subr.mxu0 0.0
    %7845 = vmatpush1.msra.mxu0 0.0
    %7846 = vmatprep.subr.mxu0 0.0
    %7847 = vmatpush1.msra.mxu0 0.0
    %7848 = vmatprep.subr.mxu0 0.0
    %7849 = vmatpush1.msra.mxu0 0.0
    %7850 = vmatprep.subr.mxu0 0.0
    %7851 = vmatpush1.msra.mxu0 0.0
    %7852 = vmatprep.subr.mxu0 0.0
    %7853 = vmatpush1.msra.mxu0 0.0
    %7854 = vmatprep.subr.mxu0 0.0
    %7855 = vmatpush1.msra.mxu0 0.0
    %7856 = vmatprep.subr.mxu0 0.0
    %7857 = vmatpush1.msra.mxu0 0.0
    %7858 = vmatprep.subr.mxu0 0.0
    %7859 = vmatpush1.msra.mxu0 0.0
    %7860 = vmatprep.subr.mxu0 0.0
    %7861 = vmatpush1.msra.mxu0 0.0
    %7862 = vmatprep.mubr.f32.mxu0 0.0
    %7863 = vmatmul.mubr.f32.gmra.mrb[0].mxu0 %v7716
    %v7864 = vpop.f32.mrb[0].mxu0
    %v7865 = vadd.f32 0.0, %v7864
    %v7866 = vpop.f32.mrb[0].mxu0
    %v7867 = vadd.f32 0.0, %v7866
    %7868 = vmatprep.mubr.f32.mxu0 0.0
    %7869 = vmatmul.mubr.f32.gmra.mrb[0].mxu0 %v7719
    %v7870 = vpop.f32.mrb[0].mxu0
    %v7871 = vadd.f32 0.0, %v7870
    %v7872 = vpop.f32.mrb[0].mxu0
    %v7873 = vadd.f32 0.0, %v7872
    %7874 = vdwg.mxu0
    %7875 = vmatprep.subr.mxu0 %v7655
    %7876 = vmatpush1.msra.mxu0 %v7654
    %7877 = vmatprep.subr.mxu0 %v7663
    %7878 = vmatpush1.msra.mxu0 %v7662
    %7879 = vmatprep.subr.mxu0 %v7671
    %7880 = vmatpush1.msra.mxu0 %v7670
    %7881 = vmatprep.subr.mxu0 %v7679
    %7882 = vmatpush1.msra.mxu0 %v7678
    %7883 = vmatprep.subr.mxu0 0.0
    %7884 = vmatpush1.msra.mxu0 0.0
    %7885 = vmatprep.subr.mxu0 0.0
    %7886 = vmatpush1.msra.mxu0 0.0
    %7887 = vmatprep.subr.mxu0 0.0
    %7888 = vmatpush1.msra.mxu0 0.0
    %7889 = vmatprep.subr.mxu0 0.0
    %7890 = vmatpush1.msra.mxu0 0.0
    %7891 = vmatprep.subr.mxu0 0.0
    %7892 = vmatpush1.msra.mxu0 0.0
    %7893 = vmatprep.subr.mxu0 0.0
    %7894 = vmatpush1.msra.mxu0 0.0
    %7895 = vmatprep.subr.mxu0 0.0
    %7896 = vmatpush1.msra.mxu0 0.0
    %7897 = vmatprep.subr.mxu0 0.0
    %7898 = vmatpush1.msra.mxu0 0.0
    %7899 = vmatprep.subr.mxu0 0.0
    %7900 = vmatpush1.msra.mxu0 0.0
    %7901 = vmatprep.subr.mxu0 0.0
    %7902 = vmatpush1.msra.mxu0 0.0
    %7903 = vmatprep.subr.mxu0 0.0
    %7904 = vmatpush1.msra.mxu0 0.0
    %7905 = vmatprep.subr.mxu0 0.0
    %7906 = vmatpush1.msra.mxu0 0.0
    %7907 = vmatprep.subr.mxu0 0.0
    %7908 = vmatpush1.msra.mxu0 0.0
    %7909 = vmatprep.subr.mxu0 0.0
    %7910 = vmatpush1.msra.mxu0 0.0
    %7911 = vmatprep.subr.mxu0 0.0
    %7912 = vmatpush1.msra.mxu0 0.0
    %7913 = vmatprep.subr.mxu0 0.0
    %7914 = vmatpush1.msra.mxu0 0.0
    %7915 = vmatprep.subr.mxu0 0.0
    %7916 = vmatpush1.msra.mxu0 0.0
    %7917 = vmatprep.subr.mxu0 0.0
    %7918 = vmatpush1.msra.mxu0 0.0
    %7919 = vmatprep.subr.mxu0 0.0
    %7920 = vmatpush1.msra.mxu0 0.0
    %7921 = vmatprep.subr.mxu0 0.0
    %7922 = vmatpush1.msra.mxu0 0.0
    %7923 = vmatprep.subr.mxu0 0.0
    %7924 = vmatpush1.msra.mxu0 0.0
    %7925 = vmatprep.subr.mxu0 0.0
    %7926 = vmatpush1.msra.mxu0 0.0
    %7927 = vmatprep.subr.mxu0 0.0
    %7928 = vmatpush1.msra.mxu0 0.0
    %7929 = vmatprep.subr.mxu0 0.0
    %7930 = vmatpush1.msra.mxu0 0.0
    %7931 = vmatprep.subr.mxu0 0.0
    %7932 = vmatpush1.msra.mxu0 0.0
    %7933 = vmatprep.subr.mxu0 0.0
    %7934 = vmatpush1.msra.mxu0 0.0
    %7935 = vmatprep.subr.mxu0 0.0
    %7936 = vmatpush1.msra.mxu0 0.0
    %7937 = vmatprep.subr.mxu0 0.0
    %7938 = vmatpush1.msra.mxu0 0.0
    %7939 = vmatprep.mubr.f32.mxu0 0.0
    %7940 = vmatmul.mubr.f32.gmra.mrb[0].mxu0 %v7716
    %v7941 = vpop.f32.mrb[0].mxu0
    %v7942 = vadd.f32 0.0, %v7941
    %v7943 = vpop.f32.mrb[0].mxu0
    %v7944 = vadd.f32 0.0, %v7943
    %7945 = vmatprep.mubr.f32.mxu0 0.0
    %7946 = vmatmul.mubr.f32.gmra.mrb[0].mxu0 %v7719
    %v7947 = vpop.f32.mrb[0].mxu0
    %v7948 = vadd.f32 0.0, %v7947
    %v7949 = vpop.f32.mrb[0].mxu0
    %v7950 = vadd.f32 0.0, %v7949
    %7951 = vdwg.mxu0
    %7952 = vmatprep.subr.mxu0 %v7657
    %7953 = vmatpush1.msra.mxu0 %v7656
    %7954 = vmatprep.subr.mxu0 %v7665
    %7955 = vmatpush1.msra.mxu0 %v7664
    %7956 = vmatprep.subr.mxu0 %v7673
    %7957 = vmatpush1.msra.mxu0 %v7672
    %7958 = vmatprep.subr.mxu0 %v7681
    %7959 = vmatpush1.msra.mxu0 %v7680
    %7960 = vmatprep.subr.mxu0 0.0
    %7961 = vmatpush1.msra.mxu0 0.0
    %7962 = vmatprep.subr.mxu0 0.0
    %7963 = vmatpush1.msra.mxu0 0.0
    %7964 = vmatprep.subr.mxu0 0.0
    %7965 = vmatpush1.msra.mxu0 0.0
    %7966 = vmatprep.subr.mxu0 0.0
    %7967 = vmatpush1.msra.mxu0 0.0
    %7968 = vmatprep.subr.mxu0 0.0
    %7969 = vmatpush1.msra.mxu0 0.0
    %7970 = vmatprep.subr.mxu0 0.0
    %7971 = vmatpush1.msra.mxu0 0.0
    %7972 = vmatprep.subr.mxu0 0.0
    %7973 = vmatpush1.msra.mxu0 0.0
    %7974 = vmatprep.subr.mxu0 0.0
    %7975 = vmatpush1.msra.mxu0 0.0
    %7976 = vmatprep.subr.mxu0 0.0
    %7977 = vmatpush1.msra.mxu0 0.0
    %7978 = vmatprep.subr.mxu0 0.0
    %7979 = vmatpush1.msra.mxu0 0.0
    %7980 = vmatprep.subr.mxu0 0.0
    %7981 = vmatpush1.msra.mxu0 0.0
    %7982 = vmatprep.subr.mxu0 0.0
    %7983 = vmatpush1.msra.mxu0 0.0
    %7984 = vmatprep.subr.mxu0 0.0
    %7985 = vmatpush1.msra.mxu0 0.0
    %7986 = vmatprep.subr.mxu0 0.0
    %7987 = vmatpush1.msra.mxu0 0.0
    %7988 = vmatprep.subr.mxu0 0.0
    %7989 = vmatpush1.msra.mxu0 0.0
    %7990 = vmatprep.subr.mxu0 0.0
    %7991 = vmatpush1.msra.mxu0 0.0
    %7992 = vmatprep.subr.mxu0 0.0
    %7993 = vmatpush1.msra.mxu0 0.0
    %7994 = vmatprep.subr.mxu0 0.0
    %7995 = vmatpush1.msra.mxu0 0.0
    %7996 = vmatprep.subr.mxu0 0.0
    %7997 = vmatpush1.msra.mxu0 0.0
    %7998 = vmatprep.subr.mxu0 0.0
    %7999 = vmatpush1.msra.mxu0 0.0
    %8000 = vmatprep.subr.mxu0 0.0
    %8001 = vmatpush1.msra.mxu0 0.0
    %8002 = vmatprep.subr.mxu0 0.0
    %8003 = vmatpush1.msra.mxu0 0.0
    %8004 = vmatprep.subr.mxu0 0.0
    %8005 = vmatpush1.msra.mxu0 0.0
    %8006 = vmatprep.subr.mxu0 0.0
    %8007 = vmatpush1.msra.mxu0 0.0
    %8008 = vmatprep.subr.mxu0 0.0
    %8009 = vmatpush1.msra.mxu0 0.0
    %8010 = vmatprep.subr.mxu0 0.0
    %8011 = vmatpush1.msra.mxu0 0.0
    %8012 = vmatprep.subr.mxu0 0.0
    %8013 = vmatpush1.msra.mxu0 0.0
    %8014 = vmatprep.subr.mxu0 0.0
    %8015 = vmatpush1.msra.mxu0 0.0
    %8016 = vmatprep.mubr.f32.mxu0 0.0
    %8017 = vmatmul.mubr.f32.gmra.mrb[0].mxu0 %v7716
    %v8018 = vpop.f32.mrb[0].mxu0
    %v8019 = vadd.f32 0.0, %v8018
    %v8020 = vpop.f32.mrb[0].mxu0
    %v8021 = vadd.f32 0.0, %v8020
    %8022 = vmatprep.mubr.f32.mxu0 0.0
    %8023 = vmatmul.mubr.f32.gmra.mrb[0].mxu0 %v7719
    %v8024 = vpop.f32.mrb[0].mxu0
    %v8025 = vadd.f32 0.0, %v8024
    %v8026 = vpop.f32.mrb[0].mxu0
    %v8027 = vadd.f32 0.0, %v8026
    %8028 = vdwg.mxu0
    %v8030 = vsel %vm7714, %v7501, 0
    %v8033 = vsel %vm7714, %v7502, 0
    %8035 = vmatprep.subr.mxu0 %v7504
    %8036 = vmatpush1.msra.mxu0 %v7503
    %8037 = vmatprep.subr.mxu0 %v7512
    %8038 = vmatpush1.msra.mxu0 %v7511
    %8039 = vmatprep.subr.mxu0 %v7520
    %8040 = vmatpush1.msra.mxu0 %v7519
    %8041 = vmatprep.subr.mxu0 %v7528
    %8042 = vmatpush1.msra.mxu0 %v7527
    %8043 = vmatprep.subr.mxu0 0.0
    %8044 = vmatpush1.msra.mxu0 0.0
    %8045 = vmatprep.subr.mxu0 0.0
    %8046 = vmatpush1.msra.mxu0 0.0
    %8047 = vmatprep.subr.mxu0 0.0
    %8048 = vmatpush1.msra.mxu0 0.0
    %8049 = vmatprep.subr.mxu0 0.0
    %8050 = vmatpush1.msra.mxu0 0.0
    %8051 = vmatprep.subr.mxu0 0.0
    %8052 = vmatpush1.msra.mxu0 0.0
    %8053 = vmatprep.subr.mxu0 0.0
    %8054 = vmatpush1.msra.mxu0 0.0
    %8055 = vmatprep.subr.mxu0 0.0
    %8056 = vmatpush1.msra.mxu0 0.0
    %8057 = vmatprep.subr.mxu0 0.0
    %8058 = vmatpush1.msra.mxu0 0.0
    %8059 = vmatprep.subr.mxu0 0.0
    %8060 = vmatpush1.msra.mxu0 0.0
    %8061 = vmatprep.subr.mxu0 0.0
    %8062 = vmatpush1.msra.mxu0 0.0
    %8063 = vmatprep.subr.mxu0 0.0
    %8064 = vmatpush1.msra.mxu0 0.0
    %8065 = vmatprep.subr.mxu0 0.0
    %8066 = vmatpush1.msra.mxu0 0.0
    %8067 = vmatprep.subr.mxu0 0.0
    %8068 = vmatpush1.msra.mxu0 0.0
    %8069 = vmatprep.subr.mxu0 0.0
    %8070 = vmatpush1.msra.mxu0 0.0
    %8071 = vmatprep.subr.mxu0 0.0
    %8072 = vmatpush1.msra.mxu0 0.0
    %8073 = vmatprep.subr.mxu0 0.0
    %8074 = vmatpush1.msra.mxu0 0.0
    %8075 = vmatprep.subr.mxu0 0.0
    %8076 = vmatpush1.msra.mxu0 0.0
    %8077 = vmatprep.subr.mxu0 0.0
    %8078 = vmatpush1.msra.mxu0 0.0
    %8079 = vmatprep.subr.mxu0 0.0
    %8080 = vmatpush1.msra.mxu0 0.0
    %8081 = vmatprep.subr.mxu0 0.0
    %8082 = vmatpush1.msra.mxu0 0.0
    %8083 = vmatprep.subr.mxu0 0.0
    %8084 = vmatpush1.msra.mxu0 0.0
    %8085 = vmatprep.subr.mxu0 0.0
    %8086 = vmatpush1.msra.mxu0 0.0
    %8087 = vmatprep.subr.mxu0 0.0
    %8088 = vmatpush1.msra.mxu0 0.0
    %8089 = vmatprep.subr.mxu0 0.0
    %8090 = vmatpush1.msra.mxu0 0.0
    %8091 = vmatprep.subr.mxu0 0.0
    %8092 = vmatpush1.msra.mxu0 0.0
    %8093 = vmatprep.subr.mxu0 0.0
    %8094 = vmatpush1.msra.mxu0 0.0
    %8095 = vmatprep.subr.mxu0 0.0
    %8096 = vmatpush1.msra.mxu0 0.0
    %8097 = vmatprep.subr.mxu0 0.0
    %8098 = vmatpush1.msra.mxu0 0.0
    %8099 = vmatprep.mubr.f32.mxu0 0.0
    %8100 = vmatmul.mubr.f32.gmra.mrb[0].mxu0 %v8030
    %v8101 = vpop.f32.mrb[0].mxu0
    %v8102 = vadd.f32 %v7788, %v8101
    %v8103 = vpop.f32.mrb[0].mxu0
    %v8104 = vadd.f32 %v7790, %v8103
    %8105 = vmatprep.mubr.f32.mxu0 0.0
    %8106 = vmatmul.mubr.f32.gmra.mrb[0].mxu0 %v8033
    %v8107 = vpop.f32.mrb[0].mxu0
    %v8108 = vadd.f32 %v7794, %v8107
    %v8109 = vpop.f32.mrb[0].mxu0
    %v8110 = vadd.f32 %v7796, %v8109
    %8111 = vdwg.mxu0
    %8112 = vmatprep.subr.mxu0 %v7506
    %8113 = vmatpush1.msra.mxu0 %v7505
    %8114 = vmatprep.subr.mxu0 %v7514
    %8115 = vmatpush1.msra.mxu0 %v7513
    %8116 = vmatprep.subr.mxu0 %v7522
    %8117 = vmatpush1.msra.mxu0 %v7521
    %8118 = vmatprep.subr.mxu0 %v7530
    %8119 = vmatpush1.msra.mxu0 %v7529
    %8120 = vmatprep.subr.mxu0 0.0
    %8121 = vmatpush1.msra.mxu0 0.0
    %8122 = vmatprep.subr.mxu0 0.0
    %8123 = vmatpush1.msra.mxu0 0.0
    %8124 = vmatprep.subr.mxu0 0.0
    %8125 = vmatpush1.msra.mxu0 0.0
    %8126 = vmatprep.subr.mxu0 0.0
    %8127 = vmatpush1.msra.mxu0 0.0
    %8128 = vmatprep.subr.mxu0 0.0
    %8129 = vmatpush1.msra.mxu0 0.0
    %8130 = vmatprep.subr.mxu0 0.0
    %8131 = vmatpush1.msra.mxu0 0.0
    %8132 = vmatprep.subr.mxu0 0.0
    %8133 = vmatpush1.msra.mxu0 0.0
    %8134 = vmatprep.subr.mxu0 0.0
    %8135 = vmatpush1.msra.mxu0 0.0
    %8136 = vmatprep.subr.mxu0 0.0
    %8137 = vmatpush1.msra.mxu0 0.0
    %8138 = vmatprep.subr.mxu0 0.0
    %8139 = vmatpush1.msra.mxu0 0.0
    %8140 = vmatprep.subr.mxu0 0.0
    %8141 = vmatpush1.msra.mxu0 0.0
    %8142 = vmatprep.subr.mxu0 0.0
    %8143 = vmatpush1.msra.mxu0 0.0
    %8144 = vmatprep.subr.mxu0 0.0
    %8145 = vmatpush1.msra.mxu0 0.0
    %8146 = vmatprep.subr.mxu0 0.0
    %8147 = vmatpush1.msra.mxu0 0.0
    %8148 = vmatprep.subr.mxu0 0.0
    %8149 = vmatpush1.msra.mxu0 0.0
    %8150 = vmatprep.subr.mxu0 0.0
    %8151 = vmatpush1.msra.mxu0 0.0
    %8152 = vmatprep.subr.mxu0 0.0
    %8153 = vmatpush1.msra.mxu0 0.0
    %8154 = vmatprep.subr.mxu0 0.0
    %8155 = vmatpush1.msra.mxu0 0.0
    %8156 = vmatprep.subr.mxu0 0.0
    %8157 = vmatpush1.msra.mxu0 0.0
    %8158 = vmatprep.subr.mxu0 0.0
    %8159 = vmatpush1.msra.mxu0 0.0
    %8160 = vmatprep.subr.mxu0 0.0
    %8161 = vmatpush1.msra.mxu0 0.0
    %8162 = vmatprep.subr.mxu0 0.0
    %8163 = vmatpush1.msra.mxu0 0.0
    %8164 = vmatprep.subr.mxu0 0.0
    %8165 = vmatpush1.msra.mxu0 0.0
    %8166 = vmatprep.subr.mxu0 0.0
    %8167 = vmatpush1.msra.mxu0 0.0
    %8168 = vmatprep.subr.mxu0 0.0
    %8169 = vmatpush1.msra.mxu0 0.0
    %8170 = vmatprep.subr.mxu0 0.0
    %8171 = vmatpush1.msra.mxu0 0.0
    %8172 = vmatprep.subr.mxu0 0.0
    %8173 = vmatpush1.msra.mxu0 0.0
    %8174 = vmatprep.subr.mxu0 0.0
    %8175 = vmatpush1.msra.mxu0 0.0
    %8176 = vmatprep.mubr.f32.mxu0 0.0
    %8177 = vmatmul.mubr.f32.gmra.mrb[0].mxu0 %v8030
    %v8178 = vpop.f32.mrb[0].mxu0
    %v8179 = vadd.f32 %v7865, %v8178
    %v8180 = vpop.f32.mrb[0].mxu0
    %v8181 = vadd.f32 %v7867, %v8180
    %8182 = vmatprep.mubr.f32.mxu0 0.0
    %8183 = vmatmul.mubr.f32.gmra.mrb[0].mxu0 %v8033
    %v8184 = vpop.f32.mrb[0].mxu0
    %v8185 = vadd.f32 %v7871, %v8184
    %v8186 = vpop.f32.mrb[0].mxu0
    %v8187 = vadd.f32 %v7873, %v8186
    %8188 = vdwg.mxu0
    %8189 = vmatprep.subr.mxu0 %v7508
    %8190 = vmatpush1.msra.mxu0 %v7507
    %8191 = vmatprep.subr.mxu0 %v7516
    %8192 = vmatpush1.msra.mxu0 %v7515
    %8193 = vmatprep.subr.mxu0 %v7524
    %8194 = vmatpush1.msra.mxu0 %v7523
    %8195 = vmatprep.subr.mxu0 %v7532
    %8196 = vmatpush1.msra.mxu0 %v7531
    %8197 = vmatprep.subr.mxu0 0.0
    %8198 = vmatpush1.msra.mxu0 0.0
    %8199 = vmatprep.subr.mxu0 0.0
    %8200 = vmatpush1.msra.mxu0 0.0
    %8201 = vmatprep.subr.mxu0 0.0
    %8202 = vmatpush1.msra.mxu0 0.0
    %8203 = vmatprep.subr.mxu0 0.0
    %8204 = vmatpush1.msra.mxu0 0.0
    %8205 = vmatprep.subr.mxu0 0.0
    %8206 = vmatpush1.msra.mxu0 0.0
    %8207 = vmatprep.subr.mxu0 0.0
    %8208 = vmatpush1.msra.mxu0 0.0
    %8209 = vmatprep.subr.mxu0 0.0
    %8210 = vmatpush1.msra.mxu0 0.0
    %8211 = vmatprep.subr.mxu0 0.0
    %8212 = vmatpush1.msra.mxu0 0.0
    %8213 = vmatprep.subr.mxu0 0.0
    %8214 = vmatpush1.msra.mxu0 0.0
    %8215 = vmatprep.subr.mxu0 0.0
    %8216 = vmatpush1.msra.mxu0 0.0
    %8217 = vmatprep.subr.mxu0 0.0
    %8218 = vmatpush1.msra.mxu0 0.0
    %8219 = vmatprep.subr.mxu0 0.0
    %8220 = vmatpush1.msra.mxu0 0.0
    %8221 = vmatprep.subr.mxu0 0.0
    %8222 = vmatpush1.msra.mxu0 0.0
    %8223 = vmatprep.subr.mxu0 0.0
    %8224 = vmatpush1.msra.mxu0 0.0
    %8225 = vmatprep.subr.mxu0 0.0
    %8226 = vmatpush1.msra.mxu0 0.0
    %8227 = vmatprep.subr.mxu0 0.0
    %8228 = vmatpush1.msra.mxu0 0.0
    %8229 = vmatprep.subr.mxu0 0.0
    %8230 = vmatpush1.msra.mxu0 0.0
    %8231 = vmatprep.subr.mxu0 0.0
    %8232 = vmatpush1.msra.mxu0 0.0
    %8233 = vmatprep.subr.mxu0 0.0
    %8234 = vmatpush1.msra.mxu0 0.0
    %8235 = vmatprep.subr.mxu0 0.0
    %8236 = vmatpush1.msra.mxu0 0.0
    %8237 = vmatprep.subr.mxu0 0.0
    %8238 = vmatpush1.msra.mxu0 0.0
    %8239 = vmatprep.subr.mxu0 0.0
    %8240 = vmatpush1.msra.mxu0 0.0
    %8241 = vmatprep.subr.mxu0 0.0
    %8242 = vmatpush1.msra.mxu0 0.0
    %8243 = vmatprep.subr.mxu0 0.0
    %8244 = vmatpush1.msra.mxu0 0.0
    %8245 = vmatprep.subr.mxu0 0.0
    %8246 = vmatpush1.msra.mxu0 0.0
    %8247 = vmatprep.subr.mxu0 0.0
    %8248 = vmatpush1.msra.mxu0 0.0
    %8249 = vmatprep.subr.mxu0 0.0
    %8250 = vmatpush1.msra.mxu0 0.0
    %8251 = vmatprep.subr.mxu0 0.0
    %8252 = vmatpush1.msra.mxu0 0.0
    %8253 = vmatprep.mubr.f32.mxu0 0.0
    %8254 = vmatmul.mubr.f32.gmra.mrb[0].mxu0 %v8030
    %v8255 = vpop.f32.mrb[0].mxu0
    %v8256 = vadd.f32 %v7942, %v8255
    %v8257 = vpop.f32.mrb[0].mxu0
    %v8258 = vadd.f32 %v7944, %v8257
    %8259 = vmatprep.mubr.f32.mxu0 0.0
    %8260 = vmatmul.mubr.f32.gmra.mrb[0].mxu0 %v8033
    %v8261 = vpop.f32.mrb[0].mxu0
    %v8262 = vadd.f32 %v7948, %v8261
    %v8263 = vpop.f32.mrb[0].mxu0
    %v8264 = vadd.f32 %v7950, %v8263
    %8265 = vdwg.mxu0
    %8266 = vmatprep.subr.mxu0 %v7510
    %8267 = vmatpush1.msra.mxu0 %v7509
    %8268 = vmatprep.subr.mxu0 %v7518
    %8269 = vmatpush1.msra.mxu0 %v7517
    %8270 = vmatprep.subr.mxu0 %v7526
    %8271 = vmatpush1.msra.mxu0 %v7525
    %8272 = vmatprep.subr.mxu0 %v7534
    %8273 = vmatpush1.msra.mxu0 %v7533
    %8274 = vmatprep.subr.mxu0 0.0
    %8275 = vmatpush1.msra.mxu0 0.0
    %8276 = vmatprep.subr.mxu0 0.0
    %8277 = vmatpush1.msra.mxu0 0.0
    %8278 = vmatprep.subr.mxu0 0.0
    %8279 = vmatpush1.msra.mxu0 0.0
    %8280 = vmatprep.subr.mxu0 0.0
    %8281 = vmatpush1.msra.mxu0 0.0
    %8282 = vmatprep.subr.mxu0 0.0
    %8283 = vmatpush1.msra.mxu0 0.0
    %8284 = vmatprep.subr.mxu0 0.0
    %8285 = vmatpush1.msra.mxu0 0.0
    %8286 = vmatprep.subr.mxu0 0.0
    %8287 = vmatpush1.msra.mxu0 0.0
    %8288 = vmatprep.subr.mxu0 0.0
    %8289 = vmatpush1.msra.mxu0 0.0
    %8290 = vmatprep.subr.mxu0 0.0
    %8291 = vmatpush1.msra.mxu0 0.0
    %8292 = vmatprep.subr.mxu0 0.0
    %8293 = vmatpush1.msra.mxu0 0.0
    %8294 = vmatprep.subr.mxu0 0.0
    %8295 = vmatpush1.msra.mxu0 0.0
    %8296 = vmatprep.subr.mxu0 0.0
    %8297 = vmatpush1.msra.mxu0 0.0
    %8298 = vmatprep.subr.mxu0 0.0
    %8299 = vmatpush1.msra.mxu0 0.0
    %8300 = vmatprep.subr.mxu0 0.0
    %8301 = vmatpush1.msra.mxu0 0.0
    %8302 = vmatprep.subr.mxu0 0.0
    %8303 = vmatpush1.msra.mxu0 0.0
    %8304 = vmatprep.subr.mxu0 0.0
    %8305 = vmatpush1.msra.mxu0 0.0
    %8306 = vmatprep.subr.mxu0 0.0
    %8307 = vmatpush1.msra.mxu0 0.0
    %8308 = vmatprep.subr.mxu0 0.0
    %8309 = vmatpush1.msra.mxu0 0.0
    %8310 = vmatprep.subr.mxu0 0.0
    %8311 = vmatpush1.msra.mxu0 0.0
    %8312 = vmatprep.subr.mxu0 0.0
    %8313 = vmatpush1.msra.mxu0 0.0
    %8314 = vmatprep.subr.mxu0 0.0
    %8315 = vmatpush1.msra.mxu0 0.0
    %8316 = vmatprep.subr.mxu0 0.0
    %8317 = vmatpush1.msra.mxu0 0.0
    %8318 = vmatprep.subr.mxu0 0.0
    %8319 = vmatpush1.msra.mxu0 0.0
    %8320 = vmatprep.subr.mxu0 0.0
    %8321 = vmatpush1.msra.mxu0 0.0
    %8322 = vmatprep.subr.mxu0 0.0
    %8323 = vmatpush1.msra.mxu0 0.0
    %8324 = vmatprep.subr.mxu0 0.0
    %8325 = vmatpush1.msra.mxu0 0.0
    %8326 = vmatprep.subr.mxu0 0.0
    %8327 = vmatpush1.msra.mxu0 0.0
    %8328 = vmatprep.subr.mxu0 0.0
    %8329 = vmatpush1.msra.mxu0 0.0
    %8330 = vmatprep.mubr.f32.mxu0 0.0
    %8331 = vmatmul.mubr.f32.gmra.mrb[0].mxu0 %v8030
    %v8332 = vpop.f32.mrb[0].mxu0
    %v8333 = vadd.f32 %v8019, %v8332
    %v8334 = vpop.f32.mrb[0].mxu0
    %v8335 = vadd.f32 %v8021, %v8334
    %8336 = vmatprep.mubr.f32.mxu0 0.0
    %8337 = vmatmul.mubr.f32.gmra.mrb[0].mxu0 %v8033
    %v8338 = vpop.f32.mrb[0].mxu0
    %v8339 = vadd.f32 %v8025, %v8338
    %v8340 = vpop.f32.mrb[0].mxu0
    %v8341 = vadd.f32 %v8027, %v8340
    %8342 = vdwg.mxu0
    %s8343 = scalar_lea.vmem %s5, 32
    %v8344 = vld [vmem:[%s8343] sm:$0xff]
    %v8345 = vld [vmem:[%s8343 + $0x8] sm:$0x1]
    %8346 = vrot.lane.b32.xlu0 %v7503, 126
    %v8347 = vpop.permute.xlu0 %8346
    %8348 = vrot.lane.b32.xlu0 %v7504, 126
    %v8349 = vpop.permute.xlu0 %8348
    %8350 = vrot.lane.b32.xlu0 %v7505, 126
    %v8351 = vpop.permute.xlu0 %8350
    %8352 = vrot.lane.b32.xlu0 %v7506, 126
    %v8353 = vpop.permute.xlu0 %8352
    %8354 = vrot.lane.b32.xlu0 %v7507, 126
    %v8355 = vpop.permute.xlu0 %8354
    %8356 = vrot.lane.b32.xlu0 %v7508, 126
    %v8357 = vpop.permute.xlu0 %8356
    %8358 = vrot.lane.b32.xlu0 %v7509, 126
    %v8359 = vpop.permute.xlu0 %8358
    %8360 = vrot.lane.b32.xlu0 %v7510, 126
    %v8361 = vpop.permute.xlu0 %8360
    %8362 = vrot.lane.b32.xlu0 %v7538, 126
    %v8363 = vpop.permute.xlu0 %8362
    %8364 = vrot.lane.b32.xlu0 %v7511, 126
    %v8365 = vpop.permute.xlu0 %8364
    %8366 = vrot.lane.b32.xlu0 %v7512, 126
    %v8367 = vpop.permute.xlu0 %8366
    %8368 = vrot.lane.b32.xlu0 %v7513, 126
    %v8369 = vpop.permute.xlu0 %8368
    %8370 = vrot.lane.b32.xlu0 %v7514, 126
    %v8371 = vpop.permute.xlu0 %8370
    %8372 = vrot.lane.b32.xlu0 %v7515, 126
    %v8373 = vpop.permute.xlu0 %8372
    %8374 = vrot.lane.b32.xlu0 %v7516, 126
    %v8375 = vpop.permute.xlu0 %8374
    %8376 = vrot.lane.b32.xlu0 %v7517, 126
    %v8377 = vpop.permute.xlu0 %8376
    %8378 = vrot.lane.b32.xlu0 %v7518, 126
    %v8379 = vpop.permute.xlu0 %8378
    %8380 = vrot.lane.b32.xlu0 %v7539, 126
    %v8381 = vpop.permute.xlu0 %8380
    %8382 = vrot.lane.b32.xlu0 %v7519, 126
    %v8383 = vpop.permute.xlu0 %8382
    %8384 = vrot.lane.b32.xlu0 %v7520, 126
    %v8385 = vpop.permute.xlu0 %8384
    %8386 = vrot.lane.b32.xlu0 %v7521, 126
    %v8387 = vpop.permute.xlu0 %8386
    %8388 = vrot.lane.b32.xlu0 %v7522, 126
    %v8389 = vpop.permute.xlu0 %8388
    %8390 = vrot.lane.b32.xlu0 %v7523, 126
    %v8391 = vpop.permute.xlu0 %8390
    %8392 = vrot.lane.b32.xlu0 %v7524, 126
    %v8393 = vpop.permute.xlu0 %8392
    %8394 = vrot.lane.b32.xlu0 %v7525, 126
    %v8395 = vpop.permute.xlu0 %8394
    %8396 = vrot.lane.b32.xlu0 %v7526, 126
    %v8397 = vpop.permute.xlu0 %8396
    %8398 = vrot.lane.b32.xlu0 %v7540, 126
    %v8399 = vpop.permute.xlu0 %8398
    %8400 = vrot.lane.b32.xlu0 %v7527, 126
    %v8401 = vpop.permute.xlu0 %8400
    %8402 = vrot.lane.b32.xlu0 %v7528, 126
    %v8403 = vpop.permute.xlu0 %8402
    %8404 = vrot.lane.b32.xlu0 %v7529, 126
    %v8405 = vpop.permute.xlu0 %8404
    %8406 = vrot.lane.b32.xlu0 %v7530, 126
    %v8407 = vpop.permute.xlu0 %8406
    %8408 = vrot.lane.b32.xlu0 %v7531, 126
    %v8409 = vpop.permute.xlu0 %8408
    %8410 = vrot.lane.b32.xlu0 %v7532, 126
    %v8411 = vpop.permute.xlu0 %8410
    %8412 = vrot.lane.b32.xlu0 %v7533, 126
    %v8413 = vpop.permute.xlu0 %8412
    %8414 = vrot.lane.b32.xlu0 %v7534, 126
    %v8415 = vpop.permute.xlu0 %8414
    %8416 = vrot.lane.b32.xlu0 %v7541, 126
    %v8417 = vpop.permute.xlu0 %8416
    %v8418 = vsel %vm93, %v8347, %v8349
    %v8419 = vsel %vm93, %v8349, %v8351
    %v8420 = vsel %vm93, %v8351, %v8353
    %v8421 = vsel %vm93, %v8353, %v8355
    %v8422 = vsel %vm93, %v8355, %v8357
    %v8423 = vsel %vm93, %v8357, %v8359
    %v8424 = vsel %vm93, %v8359, %v8361
    %v8425 = vsel %vm93, %v8361, %v8363
    %v8426 = vsel %vm93, %v8365, %v8367
    %v8427 = vsel %vm93, %v8367, %v8369
    %v8428 = vsel %vm93, %v8369, %v8371
    %v8429 = vsel %vm93, %v8371, %v8373
    %v8430 = vsel %vm93, %v8373, %v8375
    %v8431 = vsel %vm93, %v8375, %v8377
    %v8432 = vsel %vm93, %v8377, %v8379
    %v8433 = vsel %vm93, %v8379, %v8381
    %v8434 = vsel %vm93, %v8383, %v8385
    %v8435 = vsel %vm93, %v8385, %v8387
    %v8436 = vsel %vm93, %v8387, %v8389
    %v8437 = vsel %vm93, %v8389, %v8391
    %v8438 = vsel %vm93, %v8391, %v8393
    %v8439 = vsel %vm93, %v8393, %v8395
    %v8440 = vsel %vm93, %v8395, %v8397
    %v8441 = vsel %vm93, %v8397, %v8399
    %v8442 = vsel %vm93, %v8401, %v8403
    %v8443 = vsel %vm93, %v8403, %v8405
    %v8444 = vsel %vm93, %v8405, %v8407
    %v8445 = vsel %vm93, %v8407, %v8409
    %v8446 = vsel %vm93, %v8409, %v8411
    %v8447 = vsel %vm93, %v8411, %v8413
    %v8448 = vsel %vm93, %v8413, %v8415
    %v8449 = vsel %vm93, %v8415, %v8417
    %v8483 = vsel %vm7714, %v8344, 0
    %v8486 = vsel %vm7714, %v8345, 0
    %8488 = vmatprep.subr.mxu0 %v8419
    %8489 = vmatpush1.msra.mxu0 %v8418
    %8490 = vmatprep.subr.mxu0 %v8427
    %8491 = vmatpush1.msra.mxu0 %v8426
    %8492 = vmatprep.subr.mxu0 %v8435
    %8493 = vmatpush1.msra.mxu0 %v8434
    %8494 = vmatprep.subr.mxu0 %v8443
    %8495 = vmatpush1.msra.mxu0 %v8442
    %8496 = vmatprep.subr.mxu0 0.0
    %8497 = vmatpush1.msra.mxu0 0.0
    %8498 = vmatprep.subr.mxu0 0.0
    %8499 = vmatpush1.msra.mxu0 0.0
    %8500 = vmatprep.subr.mxu0 0.0
    %8501 = vmatpush1.msra.mxu0 0.0
    %8502 = vmatprep.subr.mxu0 0.0
    %8503 = vmatpush1.msra.mxu0 0.0
    %8504 = vmatprep.subr.mxu0 0.0
    %8505 = vmatpush1.msra.mxu0 0.0
    %8506 = vmatprep.subr.mxu0 0.0
    %8507 = vmatpush1.msra.mxu0 0.0
    %8508 = vmatprep.subr.mxu0 0.0
    %8509 = vmatpush1.msra.mxu0 0.0
    %8510 = vmatprep.subr.mxu0 0.0
    %8511 = vmatpush1.msra.mxu0 0.0
    %8512 = vmatprep.subr.mxu0 0.0
    %8513 = vmatpush1.msra.mxu0 0.0
    %8514 = vmatprep.subr.mxu0 0.0
    %8515 = vmatpush1.msra.mxu0 0.0
    %8516 = vmatprep.subr.mxu0 0.0
    %8517 = vmatpush1.msra.mxu0 0.0
    %8518 = vmatprep.subr.mxu0 0.0
    %8519 = vmatpush1.msra.mxu0 0.0
    %8520 = vmatprep.subr.mxu0 0.0
    %8521 = vmatpush1.msra.mxu0 0.0
    %8522 = vmatprep.subr.mxu0 0.0
    %8523 = vmatpush1.msra.mxu0 0.0
    %8524 = vmatprep.subr.mxu0 0.0
    %8525 = vmatpush1.msra.mxu0 0.0
    %8526 = vmatprep.subr.mxu0 0.0
    %8527 = vmatpush1.msra.mxu0 0.0
    %8528 = vmatprep.subr.mxu0 0.0
    %8529 = vmatpush1.msra.mxu0 0.0
    %8530 = vmatprep.subr.mxu0 0.0
    %8531 = vmatpush1.msra.mxu0 0.0
    %8532 = vmatprep.subr.mxu0 0.0
    %8533 = vmatpush1.msra.mxu0 0.0
    %8534 = vmatprep.subr.mxu0 0.0
    %8535 = vmatpush1.msra.mxu0 0.0
    %8536 = vmatprep.subr.mxu0 0.0
    %8537 = vmatpush1.msra.mxu0 0.0
    %8538 = vmatprep.subr.mxu0 0.0
    %8539 = vmatpush1.msra.mxu0 0.0
    %8540 = vmatprep.subr.mxu0 0.0
    %8541 = vmatpush1.msra.mxu0 0.0
    %8542 = vmatprep.subr.mxu0 0.0
    %8543 = vmatpush1.msra.mxu0 0.0
    %8544 = vmatprep.subr.mxu0 0.0
    %8545 = vmatpush1.msra.mxu0 0.0
    %8546 = vmatprep.subr.mxu0 0.0
    %8547 = vmatpush1.msra.mxu0 0.0
    %8548 = vmatprep.subr.mxu0 0.0
    %8549 = vmatpush1.msra.mxu0 0.0
    %8550 = vmatprep.subr.mxu0 0.0
    %8551 = vmatpush1.msra.mxu0 0.0
    %8552 = vmatprep.mubr.f32.mxu0 0.0
    %8553 = vmatmul.mubr.f32.gmra.mrb[0].mxu0 %v8483
    %v8554 = vpop.f32.mrb[0].mxu0
    %v8555 = vadd.f32 0.0, %v8554
    %v8556 = vpop.f32.mrb[0].mxu0
    %v8557 = vadd.f32 0.0, %v8556
    %8558 = vmatprep.mubr.f32.mxu0 0.0
    %8559 = vmatmul.mubr.f32.gmra.mrb[0].mxu0 %v8486
    %v8560 = vpop.f32.mrb[0].mxu0
    %v8561 = vadd.f32 0.0, %v8560
    %v8562 = vpop.f32.mrb[0].mxu0
    %v8563 = vadd.f32 0.0, %v8562
    %8564 = vdwg.mxu0
    %8565 = vmatprep.subr.mxu0 %v8421
    %8566 = vmatpush1.msra.mxu0 %v8420
    %8567 = vmatprep.subr.mxu0 %v8429
    %8568 = vmatpush1.msra.mxu0 %v8428
    %8569 = vmatprep.subr.mxu0 %v8437
    %8570 = vmatpush1.msra.mxu0 %v8436
    %8571 = vmatprep.subr.mxu0 %v8445
    %8572 = vmatpush1.msra.mxu0 %v8444
    %8573 = vmatprep.subr.mxu0 0.0
    %8574 = vmatpush1.msra.mxu0 0.0
    %8575 = vmatprep.subr.mxu0 0.0
    %8576 = vmatpush1.msra.mxu0 0.0
    %8577 = vmatprep.subr.mxu0 0.0
    %8578 = vmatpush1.msra.mxu0 0.0
    %8579 = vmatprep.subr.mxu0 0.0
    %8580 = vmatpush1.msra.mxu0 0.0
    %8581 = vmatprep.subr.mxu0 0.0
    %8582 = vmatpush1.msra.mxu0 0.0
    %8583 = vmatprep.subr.mxu0 0.0
    %8584 = vmatpush1.msra.mxu0 0.0
    %8585 = vmatprep.subr.mxu0 0.0
    %8586 = vmatpush1.msra.mxu0 0.0
    %8587 = vmatprep.subr.mxu0 0.0
    %8588 = vmatpush1.msra.mxu0 0.0
    %8589 = vmatprep.subr.mxu0 0.0
    %8590 = vmatpush1.msra.mxu0 0.0
    %8591 = vmatprep.subr.mxu0 0.0
    %8592 = vmatpush1.msra.mxu0 0.0
    %8593 = vmatprep.subr.mxu0 0.0
    %8594 = vmatpush1.msra.mxu0 0.0
    %8595 = vmatprep.subr.mxu0 0.0
    %8596 = vmatpush1.msra.mxu0 0.0
    %8597 = vmatprep.subr.mxu0 0.0
    %8598 = vmatpush1.msra.mxu0 0.0
    %8599 = vmatprep.subr.mxu0 0.0
    %8600 = vmatpush1.msra.mxu0 0.0
    %8601 = vmatprep.subr.mxu0 0.0
    %8602 = vmatpush1.msra.mxu0 0.0
    %8603 = vmatprep.subr.mxu0 0.0
    %8604 = vmatpush1.msra.mxu0 0.0
    %8605 = vmatprep.subr.mxu0 0.0
    %8606 = vmatpush1.msra.mxu0 0.0
    %8607 = vmatprep.subr.mxu0 0.0
    %8608 = vmatpush1.msra.mxu0 0.0
    %8609 = vmatprep.subr.mxu0 0.0
    %8610 = vmatpush1.msra.mxu0 0.0
    %8611 = vmatprep.subr.mxu0 0.0
    %8612 = vmatpush1.msra.mxu0 0.0
    %8613 = vmatprep.subr.mxu0 0.0
    %8614 = vmatpush1.msra.mxu0 0.0
    %8615 = vmatprep.subr.mxu0 0.0
    %8616 = vmatpush1.msra.mxu0 0.0
    %8617 = vmatprep.subr.mxu0 0.0
    %8618 = vmatpush1.msra.mxu0 0.0
    %8619 = vmatprep.subr.mxu0 0.0
    %8620 = vmatpush1.msra.mxu0 0.0
    %8621 = vmatprep.subr.mxu0 0.0
    %8622 = vmatpush1.msra.mxu0 0.0
    %8623 = vmatprep.subr.mxu0 0.0
    %8624 = vmatpush1.msra.mxu0 0.0
    %8625 = vmatprep.subr.mxu0 0.0
    %8626 = vmatpush1.msra.mxu0 0.0
    %8627 = vmatprep.subr.mxu0 0.0
    %8628 = vmatpush1.msra.mxu0 0.0
    %8629 = vmatprep.mubr.f32.mxu0 0.0
    %8630 = vmatmul.mubr.f32.gmra.mrb[0].mxu0 %v8483
    %v8631 = vpop.f32.mrb[0].mxu0
    %v8632 = vadd.f32 0.0, %v8631
    %v8633 = vpop.f32.mrb[0].mxu0
    %v8634 = vadd.f32 0.0, %v8633
    %8635 = vmatprep.mubr.f32.mxu0 0.0
    %8636 = vmatmul.mubr.f32.gmra.mrb[0].mxu0 %v8486
    %v8637 = vpop.f32.mrb[0].mxu0
    %v8638 = vadd.f32 0.0, %v8637
    %v8639 = vpop.f32.mrb[0].mxu0
    %v8640 = vadd.f32 0.0, %v8639
    %8641 = vdwg.mxu0
    %8642 = vmatprep.subr.mxu0 %v8423
    %8643 = vmatpush1.msra.mxu0 %v8422
    %8644 = vmatprep.subr.mxu0 %v8431
    %8645 = vmatpush1.msra.mxu0 %v8430
    %8646 = vmatprep.subr.mxu0 %v8439
    %8647 = vmatpush1.msra.mxu0 %v8438
    %8648 = vmatprep.subr.mxu0 %v8447
    %8649 = vmatpush1.msra.mxu0 %v8446
    %8650 = vmatprep.subr.mxu0 0.0
    %8651 = vmatpush1.msra.mxu0 0.0
    %8652 = vmatprep.subr.mxu0 0.0
    %8653 = vmatpush1.msra.mxu0 0.0
    %8654 = vmatprep.subr.mxu0 0.0
    %8655 = vmatpush1.msra.mxu0 0.0
    %8656 = vmatprep.subr.mxu0 0.0
    %8657 = vmatpush1.msra.mxu0 0.0
    %8658 = vmatprep.subr.mxu0 0.0
    %8659 = vmatpush1.msra.mxu0 0.0
    %8660 = vmatprep.subr.mxu0 0.0
    %8661 = vmatpush1.msra.mxu0 0.0
    %8662 = vmatprep.subr.mxu0 0.0
    %8663 = vmatpush1.msra.mxu0 0.0
    %8664 = vmatprep.subr.mxu0 0.0
    %8665 = vmatpush1.msra.mxu0 0.0
    %8666 = vmatprep.subr.mxu0 0.0
    %8667 = vmatpush1.msra.mxu0 0.0
    %8668 = vmatprep.subr.mxu0 0.0
    %8669 = vmatpush1.msra.mxu0 0.0
    %8670 = vmatprep.subr.mxu0 0.0
    %8671 = vmatpush1.msra.mxu0 0.0
    %8672 = vmatprep.subr.mxu0 0.0
    %8673 = vmatpush1.msra.mxu0 0.0
    %8674 = vmatprep.subr.mxu0 0.0
    %8675 = vmatpush1.msra.mxu0 0.0
    %8676 = vmatprep.subr.mxu0 0.0
    %8677 = vmatpush1.msra.mxu0 0.0
    %8678 = vmatprep.subr.mxu0 0.0
    %8679 = vmatpush1.msra.mxu0 0.0
    %8680 = vmatprep.subr.mxu0 0.0
    %8681 = vmatpush1.msra.mxu0 0.0
    %8682 = vmatprep.subr.mxu0 0.0
    %8683 = vmatpush1.msra.mxu0 0.0
    %8684 = vmatprep.subr.mxu0 0.0
    %8685 = vmatpush1.msra.mxu0 0.0
    %8686 = vmatprep.subr.mxu0 0.0
    %8687 = vmatpush1.msra.mxu0 0.0
    %8688 = vmatprep.subr.mxu0 0.0
    %8689 = vmatpush1.msra.mxu0 0.0
    %8690 = vmatprep.subr.mxu0 0.0
    %8691 = vmatpush1.msra.mxu0 0.0
    %8692 = vmatprep.subr.mxu0 0.0
    %8693 = vmatpush1.msra.mxu0 0.0
    %8694 = vmatprep.subr.mxu0 0.0
    %8695 = vmatpush1.msra.mxu0 0.0
    %8696 = vmatprep.subr.mxu0 0.0
    %8697 = vmatpush1.msra.mxu0 0.0
    %8698 = vmatprep.subr.mxu0 0.0
    %8699 = vmatpush1.msra.mxu0 0.0
    %8700 = vmatprep.subr.mxu0 0.0
    %8701 = vmatpush1.msra.mxu0 0.0
    %8702 = vmatprep.subr.mxu0 0.0
    %8703 = vmatpush1.msra.mxu0 0.0
    %8704 = vmatprep.subr.mxu0 0.0
    %8705 = vmatpush1.msra.mxu0 0.0
    %8706 = vmatprep.mubr.f32.mxu0 0.0
    %8707 = vmatmul.mubr.f32.gmra.mrb[0].mxu0 %v8483
    %v8708 = vpop.f32.mrb[0].mxu0
    %v8709 = vadd.f32 0.0, %v8708
    %v8710 = vpop.f32.mrb[0].mxu0
    %v8711 = vadd.f32 0.0, %v8710
    %8712 = vmatprep.mubr.f32.mxu0 0.0
    %8713 = vmatmul.mubr.f32.gmra.mrb[0].mxu0 %v8486
    %v8714 = vpop.f32.mrb[0].mxu0
    %v8715 = vadd.f32 0.0, %v8714
    %v8716 = vpop.f32.mrb[0].mxu0
    %v8717 = vadd.f32 0.0, %v8716
    %8718 = vdwg.mxu0
    %8719 = vmatprep.subr.mxu0 %v8425
    %8720 = vmatpush1.msra.mxu0 %v8424
    %8721 = vmatprep.subr.mxu0 %v8433
    %8722 = vmatpush1.msra.mxu0 %v8432
    %8723 = vmatprep.subr.mxu0 %v8441
    %8724 = vmatpush1.msra.mxu0 %v8440
    %8725 = vmatprep.subr.mxu0 %v8449
    %8726 = vmatpush1.msra.mxu0 %v8448
    %8727 = vmatprep.subr.mxu0 0.0
    %8728 = vmatpush1.msra.mxu0 0.0
    %8729 = vmatprep.subr.mxu0 0.0
    %8730 = vmatpush1.msra.mxu0 0.0
    %8731 = vmatprep.subr.mxu0 0.0
    %8732 = vmatpush1.msra.mxu0 0.0
    %8733 = vmatprep.subr.mxu0 0.0
    %8734 = vmatpush1.msra.mxu0 0.0
    %8735 = vmatprep.subr.mxu0 0.0
    %8736 = vmatpush1.msra.mxu0 0.0
    %8737 = vmatprep.subr.mxu0 0.0
    %8738 = vmatpush1.msra.mxu0 0.0
    %8739 = vmatprep.subr.mxu0 0.0
    %8740 = vmatpush1.msra.mxu0 0.0
    %8741 = vmatprep.subr.mxu0 0.0
    %8742 = vmatpush1.msra.mxu0 0.0
    %8743 = vmatprep.subr.mxu0 0.0
    %8744 = vmatpush1.msra.mxu0 0.0
    %8745 = vmatprep.subr.mxu0 0.0
    %8746 = vmatpush1.msra.mxu0 0.0
    %8747 = vmatprep.subr.mxu0 0.0
    %8748 = vmatpush1.msra.mxu0 0.0
    %8749 = vmatprep.subr.mxu0 0.0
    %8750 = vmatpush1.msra.mxu0 0.0
    %8751 = vmatprep.subr.mxu0 0.0
    %8752 = vmatpush1.msra.mxu0 0.0
    %8753 = vmatprep.subr.mxu0 0.0
    %8754 = vmatpush1.msra.mxu0 0.0
    %8755 = vmatprep.subr.mxu0 0.0
    %8756 = vmatpush1.msra.mxu0 0.0
    %8757 = vmatprep.subr.mxu0 0.0
    %8758 = vmatpush1.msra.mxu0 0.0
    %8759 = vmatprep.subr.mxu0 0.0
    %8760 = vmatpush1.msra.mxu0 0.0
    %8761 = vmatprep.subr.mxu0 0.0
    %8762 = vmatpush1.msra.mxu0 0.0
    %8763 = vmatprep.subr.mxu0 0.0
    %8764 = vmatpush1.msra.mxu0 0.0
    %8765 = vmatprep.subr.mxu0 0.0
    %8766 = vmatpush1.msra.mxu0 0.0
    %8767 = vmatprep.subr.mxu0 0.0
    %8768 = vmatpush1.msra.mxu0 0.0
    %8769 = vmatprep.subr.mxu0 0.0
    %8770 = vmatpush1.msra.mxu0 0.0
    %8771 = vmatprep.subr.mxu0 0.0
    %8772 = vmatpush1.msra.mxu0 0.0
    %8773 = vmatprep.subr.mxu0 0.0
    %8774 = vmatpush1.msra.mxu0 0.0
    %8775 = vmatprep.subr.mxu0 0.0
    %8776 = vmatpush1.msra.mxu0 0.0
    %8777 = vmatprep.subr.mxu0 0.0
    %8778 = vmatpush1.msra.mxu0 0.0
    %8779 = vmatprep.subr.mxu0 0.0
    %8780 = vmatpush1.msra.mxu0 0.0
    %8781 = vmatprep.subr.mxu0 0.0
    %8782 = vmatpush1.msra.mxu0 0.0
    %8783 = vmatprep.mubr.f32.mxu0 0.0
    %8784 = vmatmul.mubr.f32.gmra.mrb[0].mxu0 %v8483
    %v8785 = vpop.f32.mrb[0].mxu0
    %v8786 = vadd.f32 0.0, %v8785
    %v8787 = vpop.f32.mrb[0].mxu0
    %v8788 = vadd.f32 0.0, %v8787
    %8789 = vmatprep.mubr.f32.mxu0 0.0
    %8790 = vmatmul.mubr.f32.gmra.mrb[0].mxu0 %v8486
    %v8791 = vpop.f32.mrb[0].mxu0
    %v8792 = vadd.f32 0.0, %v8791
    %v8793 = vpop.f32.mrb[0].mxu0
    %v8794 = vadd.f32 0.0, %v8793
    %8795 = vdwg.mxu0
    %v8796 = vadd.f32 %v8102, %v8555
    %v8797 = vadd.f32 %v8104, %v8557
    %v8798 = vadd.f32 %v8179, %v8632
    %v8799 = vadd.f32 %v8181, %v8634
    %v8800 = vadd.f32 %v8256, %v8709
    %v8801 = vadd.f32 %v8258, %v8711
    %v8802 = vadd.f32 %v8333, %v8786
    %v8803 = vadd.f32 %v8335, %v8788
    %v8804 = vadd.f32 %v8108, %v8561
    %v8805 = vadd.f32 %v8110, %v8563
    %v8806 = vadd.f32 %v8185, %v8638
    %v8807 = vadd.f32 %v8187, %v8640
    %v8808 = vadd.f32 %v8262, %v8715
    %v8809 = vadd.f32 %v8264, %v8717
    %v8810 = vadd.f32 %v8339, %v8792
    %v8811 = vadd.f32 %v8341, %v8794
    %s8812 = scalar_lea.vmem %s5, 48
    %v8813 = vld [vmem:[%s8812] sm:$0xff]
    %v8814 = vld [vmem:[%s8812 + $0x8] sm:$0x1]
    %8815 = vrot.lane.b32.xlu0 %v7503, 106
    %v8816 = vpop.permute.xlu0 %8815
    %8817 = vrot.lane.b32.xlu0 %v7504, 106
    %v8818 = vpop.permute.xlu0 %8817
    %8819 = vrot.lane.b32.xlu0 %v7505, 106
    %v8820 = vpop.permute.xlu0 %8819
    %8821 = vrot.lane.b32.xlu0 %v7506, 106
    %v8822 = vpop.permute.xlu0 %8821
    %8823 = vrot.lane.b32.xlu0 %v7507, 106
    %v8824 = vpop.permute.xlu0 %8823
    %8825 = vrot.lane.b32.xlu0 %v7508, 106
    %v8826 = vpop.permute.xlu0 %8825
    %8827 = vrot.lane.b32.xlu0 %v7509, 106
    %v8828 = vpop.permute.xlu0 %8827
    %8829 = vrot.lane.b32.xlu0 %v7510, 106
    %v8830 = vpop.permute.xlu0 %8829
    %8831 = vrot.lane.b32.xlu0 %v7538, 106
    %v8832 = vpop.permute.xlu0 %8831
    %8833 = vrot.lane.b32.xlu0 %v7511, 106
    %v8834 = vpop.permute.xlu0 %8833
    %8835 = vrot.lane.b32.xlu0 %v7512, 106
    %v8836 = vpop.permute.xlu0 %8835
    %8837 = vrot.lane.b32.xlu0 %v7513, 106
    %v8838 = vpop.permute.xlu0 %8837
    %8839 = vrot.lane.b32.xlu0 %v7514, 106
    %v8840 = vpop.permute.xlu0 %8839
    %8841 = vrot.lane.b32.xlu0 %v7515, 106
    %v8842 = vpop.permute.xlu0 %8841
    %8843 = vrot.lane.b32.xlu0 %v7516, 106
    %v8844 = vpop.permute.xlu0 %8843
    %8845 = vrot.lane.b32.xlu0 %v7517, 106
    %v8846 = vpop.permute.xlu0 %8845
    %8847 = vrot.lane.b32.xlu0 %v7518, 106
    %v8848 = vpop.permute.xlu0 %8847
    %8849 = vrot.lane.b32.xlu0 %v7539, 106
    %v8850 = vpop.permute.xlu0 %8849
    %8851 = vrot.lane.b32.xlu0 %v7519, 106
    %v8852 = vpop.permute.xlu0 %8851
    %8853 = vrot.lane.b32.xlu0 %v7520, 106
    %v8854 = vpop.permute.xlu0 %8853
    %8855 = vrot.lane.b32.xlu0 %v7521, 106
    %v8856 = vpop.permute.xlu0 %8855
    %8857 = vrot.lane.b32.xlu0 %v7522, 106
    %v8858 = vpop.permute.xlu0 %8857
    %8859 = vrot.lane.b32.xlu0 %v7523, 106
    %v8860 = vpop.permute.xlu0 %8859
    %8861 = vrot.lane.b32.xlu0 %v7524, 106
    %v8862 = vpop.permute.xlu0 %8861
    %8863 = vrot.lane.b32.xlu0 %v7525, 106
    %v8864 = vpop.permute.xlu0 %8863
    %8865 = vrot.lane.b32.xlu0 %v7526, 106
    %v8866 = vpop.permute.xlu0 %8865
    %8867 = vrot.lane.b32.xlu0 %v7540, 106
    %v8868 = vpop.permute.xlu0 %8867
    %8869 = vrot.lane.b32.xlu0 %v7527, 106
    %v8870 = vpop.permute.xlu0 %8869
    %8871 = vrot.lane.b32.xlu0 %v7528, 106
    %v8872 = vpop.permute.xlu0 %8871
    %8873 = vrot.lane.b32.xlu0 %v7529, 106
    %v8874 = vpop.permute.xlu0 %8873
    %8875 = vrot.lane.b32.xlu0 %v7530, 106
    %v8876 = vpop.permute.xlu0 %8875
    %8877 = vrot.lane.b32.xlu0 %v7531, 106
    %v8878 = vpop.permute.xlu0 %8877
    %8879 = vrot.lane.b32.xlu0 %v7532, 106
    %v8880 = vpop.permute.xlu0 %8879
    %8881 = vrot.lane.b32.xlu0 %v7533, 106
    %v8882 = vpop.permute.xlu0 %8881
    %8883 = vrot.lane.b32.xlu0 %v7534, 106
    %v8884 = vpop.permute.xlu0 %8883
    %8885 = vrot.lane.b32.xlu0 %v7541, 106
    %v8886 = vpop.permute.xlu0 %8885
    %v8887 = vsel %vm150, %v8816, %v8818
    %v8888 = vsel %vm150, %v8818, %v8820
    %v8889 = vsel %vm150, %v8820, %v8822
    %v8890 = vsel %vm150, %v8822, %v8824
    %v8891 = vsel %vm150, %v8824, %v8826
    %v8892 = vsel %vm150, %v8826, %v8828
    %v8893 = vsel %vm150, %v8828, %v8830
    %v8894 = vsel %vm150, %v8830, %v8832
    %v8895 = vsel %vm150, %v8834, %v8836
    %v8896 = vsel %vm150, %v8836, %v8838
    %v8897 = vsel %vm150, %v8838, %v8840
    %v8898 = vsel %vm150, %v8840, %v8842
    %v8899 = vsel %vm150, %v8842, %v8844
    %v8900 = vsel %vm150, %v8844, %v8846
    %v8901 = vsel %vm150, %v8846, %v8848
    %v8902 = vsel %vm150, %v8848, %v8850
    %v8903 = vsel %vm150, %v8852, %v8854
    %v8904 = vsel %vm150, %v8854, %v8856
    %v8905 = vsel %vm150, %v8856, %v8858
    %v8906 = vsel %vm150, %v8858, %v8860
    %v8907 = vsel %vm150, %v8860, %v8862
    %v8908 = vsel %vm150, %v8862, %v8864
    %v8909 = vsel %vm150, %v8864, %v8866
    %v8910 = vsel %vm150, %v8866, %v8868
    %v8911 = vsel %vm150, %v8870, %v8872
    %v8912 = vsel %vm150, %v8872, %v8874
    %v8913 = vsel %vm150, %v8874, %v8876
    %v8914 = vsel %vm150, %v8876, %v8878
    %v8915 = vsel %vm150, %v8878, %v8880
    %v8916 = vsel %vm150, %v8880, %v8882
    %v8917 = vsel %vm150, %v8882, %v8884
    %v8918 = vsel %vm150, %v8884, %v8886
    %v8952 = vsel %vm7714, %v8813, 0
    %v8955 = vsel %vm7714, %v8814, 0
    %8957 = vmatprep.subr.mxu0 %v8888
    %8958 = vmatpush1.msra.mxu0 %v8887
    %8959 = vmatprep.subr.mxu0 %v8896
    %8960 = vmatpush1.msra.mxu0 %v8895
    %8961 = vmatprep.subr.mxu0 %v8904
    %8962 = vmatpush1.msra.mxu0 %v8903
    %8963 = vmatprep.subr.mxu0 %v8912
    %8964 = vmatpush1.msra.mxu0 %v8911
    %8965 = vmatprep.subr.mxu0 0.0
    %8966 = vmatpush1.msra.mxu0 0.0
    %8967 = vmatprep.subr.mxu0 0.0
    %8968 = vmatpush1.msra.mxu0 0.0
    %8969 = vmatprep.subr.mxu0 0.0
    %8970 = vmatpush1.msra.mxu0 0.0
    %8971 = vmatprep.subr.mxu0 0.0
    %8972 = vmatpush1.msra.mxu0 0.0
    %8973 = vmatprep.subr.mxu0 0.0
    %8974 = vmatpush1.msra.mxu0 0.0
    %8975 = vmatprep.subr.mxu0 0.0
    %8976 = vmatpush1.msra.mxu0 0.0
    %8977 = vmatprep.subr.mxu0 0.0
    %8978 = vmatpush1.msra.mxu0 0.0
    %8979 = vmatprep.subr.mxu0 0.0
    %8980 = vmatpush1.msra.mxu0 0.0
    %8981 = vmatprep.subr.mxu0 0.0
    %8982 = vmatpush1.msra.mxu0 0.0
    %8983 = vmatprep.subr.mxu0 0.0
    %8984 = vmatpush1.msra.mxu0 0.0
    %8985 = vmatprep.subr.mxu0 0.0
    %8986 = vmatpush1.msra.mxu0 0.0
    %8987 = vmatprep.subr.mxu0 0.0
    %8988 = vmatpush1.msra.mxu0 0.0
    %8989 = vmatprep.subr.mxu0 0.0
    %8990 = vmatpush1.msra.mxu0 0.0
    %8991 = vmatprep.subr.mxu0 0.0
    %8992 = vmatpush1.msra.mxu0 0.0
    %8993 = vmatprep.subr.mxu0 0.0
    %8994 = vmatpush1.msra.mxu0 0.0
    %8995 = vmatprep.subr.mxu0 0.0
    %8996 = vmatpush1.msra.mxu0 0.0
    %8997 = vmatprep.subr.mxu0 0.0
    %8998 = vmatpush1.msra.mxu0 0.0
    %8999 = vmatprep.subr.mxu0 0.0
    %9000 = vmatpush1.msra.mxu0 0.0
    %9001 = vmatprep.subr.mxu0 0.0
    %9002 = vmatpush1.msra.mxu0 0.0
    %9003 = vmatprep.subr.mxu0 0.0
    %9004 = vmatpush1.msra.mxu0 0.0
    %9005 = vmatprep.subr.mxu0 0.0
    %9006 = vmatpush1.msra.mxu0 0.0
    %9007 = vmatprep.subr.mxu0 0.0
    %9008 = vmatpush1.msra.mxu0 0.0
    %9009 = vmatprep.subr.mxu0 0.0
    %9010 = vmatpush1.msra.mxu0 0.0
    %9011 = vmatprep.subr.mxu0 0.0
    %9012 = vmatpush1.msra.mxu0 0.0
    %9013 = vmatprep.subr.mxu0 0.0
    %9014 = vmatpush1.msra.mxu0 0.0
    %9015 = vmatprep.subr.mxu0 0.0
    %9016 = vmatpush1.msra.mxu0 0.0
    %9017 = vmatprep.subr.mxu0 0.0
    %9018 = vmatpush1.msra.mxu0 0.0
    %9019 = vmatprep.subr.mxu0 0.0
    %9020 = vmatpush1.msra.mxu0 0.0
    %9021 = vmatprep.mubr.f32.mxu0 0.0
    %9022 = vmatmul.mubr.f32.gmra.mrb[0].mxu0 %v8952
    %v9023 = vpop.f32.mrb[0].mxu0
    %v9024 = vadd.f32 0.0, %v9023
    %v9025 = vpop.f32.mrb[0].mxu0
    %v9026 = vadd.f32 0.0, %v9025
    %9027 = vmatprep.mubr.f32.mxu0 0.0
    %9028 = vmatmul.mubr.f32.gmra.mrb[0].mxu0 %v8955
    %v9029 = vpop.f32.mrb[0].mxu0
    %v9030 = vadd.f32 0.0, %v9029
    %v9031 = vpop.f32.mrb[0].mxu0
    %v9032 = vadd.f32 0.0, %v9031
    %9033 = vdwg.mxu0
    %9034 = vmatprep.subr.mxu0 %v8890
    %9035 = vmatpush1.msra.mxu0 %v8889
    %9036 = vmatprep.subr.mxu0 %v8898
    %9037 = vmatpush1.msra.mxu0 %v8897
    %9038 = vmatprep.subr.mxu0 %v8906
    %9039 = vmatpush1.msra.mxu0 %v8905
    %9040 = vmatprep.subr.mxu0 %v8914
    %9041 = vmatpush1.msra.mxu0 %v8913
    %9042 = vmatprep.subr.mxu0 0.0
    %9043 = vmatpush1.msra.mxu0 0.0
    %9044 = vmatprep.subr.mxu0 0.0
    %9045 = vmatpush1.msra.mxu0 0.0
    %9046 = vmatprep.subr.mxu0 0.0
    %9047 = vmatpush1.msra.mxu0 0.0
    %9048 = vmatprep.subr.mxu0 0.0
    %9049 = vmatpush1.msra.mxu0 0.0
    %9050 = vmatprep.subr.mxu0 0.0
    %9051 = vmatpush1.msra.mxu0 0.0
    %9052 = vmatprep.subr.mxu0 0.0
    %9053 = vmatpush1.msra.mxu0 0.0
    %9054 = vmatprep.subr.mxu0 0.0
    %9055 = vmatpush1.msra.mxu0 0.0
    %9056 = vmatprep.subr.mxu0 0.0
    %9057 = vmatpush1.msra.mxu0 0.0
    %9058 = vmatprep.subr.mxu0 0.0
    %9059 = vmatpush1.msra.mxu0 0.0
    %9060 = vmatprep.subr.mxu0 0.0
    %9061 = vmatpush1.msra.mxu0 0.0
    %9062 = vmatprep.subr.mxu0 0.0
    %9063 = vmatpush1.msra.mxu0 0.0
    %9064 = vmatprep.subr.mxu0 0.0
    %9065 = vmatpush1.msra.mxu0 0.0
    %9066 = vmatprep.subr.mxu0 0.0
    %9067 = vmatpush1.msra.mxu0 0.0
    %9068 = vmatprep.subr.mxu0 0.0
    %9069 = vmatpush1.msra.mxu0 0.0
    %9070 = vmatprep.subr.mxu0 0.0
    %9071 = vmatpush1.msra.mxu0 0.0
    %9072 = vmatprep.subr.mxu0 0.0
    %9073 = vmatpush1.msra.mxu0 0.0
    %9074 = vmatprep.subr.mxu0 0.0
    %9075 = vmatpush1.msra.mxu0 0.0
    %9076 = vmatprep.subr.mxu0 0.0
    %9077 = vmatpush1.msra.mxu0 0.0
    %9078 = vmatprep.subr.mxu0 0.0
    %9079 = vmatpush1.msra.mxu0 0.0
    %9080 = vmatprep.subr.mxu0 0.0
    %9081 = vmatpush1.msra.mxu0 0.0
    %9082 = vmatprep.subr.mxu0 0.0
    %9083 = vmatpush1.msra.mxu0 0.0
    %9084 = vmatprep.subr.mxu0 0.0
    %9085 = vmatpush1.msra.mxu0 0.0
    %9086 = vmatprep.subr.mxu0 0.0
    %9087 = vmatpush1.msra.mxu0 0.0
    %9088 = vmatprep.subr.mxu0 0.0
    %9089 = vmatpush1.msra.mxu0 0.0
    %9090 = vmatprep.subr.mxu0 0.0
    %9091 = vmatpush1.msra.mxu0 0.0
    %9092 = vmatprep.subr.mxu0 0.0
    %9093 = vmatpush1.msra.mxu0 0.0
    %9094 = vmatprep.subr.mxu0 0.0
    %9095 = vmatpush1.msra.mxu0 0.0
    %9096 = vmatprep.subr.mxu0 0.0
    %9097 = vmatpush1.msra.mxu0 0.0
    %9098 = vmatprep.mubr.f32.mxu0 0.0
    %9099 = vmatmul.mubr.f32.gmra.mrb[0].mxu0 %v8952
    %v9100 = vpop.f32.mrb[0].mxu0
    %v9101 = vadd.f32 0.0, %v9100
    %v9102 = vpop.f32.mrb[0].mxu0
    %v9103 = vadd.f32 0.0, %v9102
    %9104 = vmatprep.mubr.f32.mxu0 0.0
    %9105 = vmatmul.mubr.f32.gmra.mrb[0].mxu0 %v8955
    %v9106 = vpop.f32.mrb[0].mxu0
    %v9107 = vadd.f32 0.0, %v9106
    %v9108 = vpop.f32.mrb[0].mxu0
    %v9109 = vadd.f32 0.0, %v9108
    %9110 = vdwg.mxu0
    %9111 = vmatprep.subr.mxu0 %v8892
    %9112 = vmatpush1.msra.mxu0 %v8891
    %9113 = vmatprep.subr.mxu0 %v8900
    %9114 = vmatpush1.msra.mxu0 %v8899
    %9115 = vmatprep.subr.mxu0 %v8908
    %9116 = vmatpush1.msra.mxu0 %v8907
    %9117 = vmatprep.subr.mxu0 %v8916
    %9118 = vmatpush1.msra.mxu0 %v8915
    %9119 = vmatprep.subr.mxu0 0.0
    %9120 = vmatpush1.msra.mxu0 0.0
    %9121 = vmatprep.subr.mxu0 0.0
    %9122 = vmatpush1.msra.mxu0 0.0
    %9123 = vmatprep.subr.mxu0 0.0
    %9124 = vmatpush1.msra.mxu0 0.0
    %9125 = vmatprep.subr.mxu0 0.0
    %9126 = vmatpush1.msra.mxu0 0.0
    %9127 = vmatprep.subr.mxu0 0.0
    %9128 = vmatpush1.msra.mxu0 0.0
    %9129 = vmatprep.subr.mxu0 0.0
    %9130 = vmatpush1.msra.mxu0 0.0
    %9131 = vmatprep.subr.mxu0 0.0
    %9132 = vmatpush1.msra.mxu0 0.0
    %9133 = vmatprep.subr.mxu0 0.0
    %9134 = vmatpush1.msra.mxu0 0.0
    %9135 = vmatprep.subr.mxu0 0.0
    %9136 = vmatpush1.msra.mxu0 0.0
    %9137 = vmatprep.subr.mxu0 0.0
    %9138 = vmatpush1.msra.mxu0 0.0
    %9139 = vmatprep.subr.mxu0 0.0
    %9140 = vmatpush1.msra.mxu0 0.0
    %9141 = vmatprep.subr.mxu0 0.0
    %9142 = vmatpush1.msra.mxu0 0.0
    %9143 = vmatprep.subr.mxu0 0.0
    %9144 = vmatpush1.msra.mxu0 0.0
    %9145 = vmatprep.subr.mxu0 0.0
    %9146 = vmatpush1.msra.mxu0 0.0
    %9147 = vmatprep.subr.mxu0 0.0
    %9148 = vmatpush1.msra.mxu0 0.0
    %9149 = vmatprep.subr.mxu0 0.0
    %9150 = vmatpush1.msra.mxu0 0.0
    %9151 = vmatprep.subr.mxu0 0.0
    %9152 = vmatpush1.msra.mxu0 0.0
    %9153 = vmatprep.subr.mxu0 0.0
    %9154 = vmatpush1.msra.mxu0 0.0
    %9155 = vmatprep.subr.mxu0 0.0
    %9156 = vmatpush1.msra.mxu0 0.0
    %9157 = vmatprep.subr.mxu0 0.0
    %9158 = vmatpush1.msra.mxu0 0.0
    %9159 = vmatprep.subr.mxu0 0.0
    %9160 = vmatpush1.msra.mxu0 0.0
    %9161 = vmatprep.subr.mxu0 0.0
    %9162 = vmatpush1.msra.mxu0 0.0
    %9163 = vmatprep.subr.mxu0 0.0
    %9164 = vmatpush1.msra.mxu0 0.0
    %9165 = vmatprep.subr.mxu0 0.0
    %9166 = vmatpush1.msra.mxu0 0.0
    %9167 = vmatprep.subr.mxu0 0.0
    %9168 = vmatpush1.msra.mxu0 0.0
    %9169 = vmatprep.subr.mxu0 0.0
    %9170 = vmatpush1.msra.mxu0 0.0
    %9171 = vmatprep.subr.mxu0 0.0
    %9172 = vmatpush1.msra.mxu0 0.0
    %9173 = vmatprep.subr.mxu0 0.0
    %9174 = vmatpush1.msra.mxu0 0.0
    %9175 = vmatprep.mubr.f32.mxu0 0.0
    %9176 = vmatmul.mubr.f32.gmra.mrb[0].mxu0 %v8952
    %v9177 = vpop.f32.mrb[0].mxu0
    %v9178 = vadd.f32 0.0, %v9177
    %v9179 = vpop.f32.mrb[0].mxu0
    %v9180 = vadd.f32 0.0, %v9179
    %9181 = vmatprep.mubr.f32.mxu0 0.0
    %9182 = vmatmul.mubr.f32.gmra.mrb[0].mxu0 %v8955
    %v9183 = vpop.f32.mrb[0].mxu0
    %v9184 = vadd.f32 0.0, %v9183
    %v9185 = vpop.f32.mrb[0].mxu0
    %v9186 = vadd.f32 0.0, %v9185
    %9187 = vdwg.mxu0
    %9188 = vmatprep.subr.mxu0 %v8894
    %9189 = vmatpush1.msra.mxu0 %v8893
    %9190 = vmatprep.subr.mxu0 %v8902
    %9191 = vmatpush1.msra.mxu0 %v8901
    %9192 = vmatprep.subr.mxu0 %v8910
    %9193 = vmatpush1.msra.mxu0 %v8909
    %9194 = vmatprep.subr.mxu0 %v8918
    %9195 = vmatpush1.msra.mxu0 %v8917
    %9196 = vmatprep.subr.mxu0 0.0
    %9197 = vmatpush1.msra.mxu0 0.0
    %9198 = vmatprep.subr.mxu0 0.0
    %9199 = vmatpush1.msra.mxu0 0.0
    %9200 = vmatprep.subr.mxu0 0.0
    %9201 = vmatpush1.msra.mxu0 0.0
    %9202 = vmatprep.subr.mxu0 0.0
    %9203 = vmatpush1.msra.mxu0 0.0
    %9204 = vmatprep.subr.mxu0 0.0
    %9205 = vmatpush1.msra.mxu0 0.0
    %9206 = vmatprep.subr.mxu0 0.0
    %9207 = vmatpush1.msra.mxu0 0.0
    %9208 = vmatprep.subr.mxu0 0.0
    %9209 = vmatpush1.msra.mxu0 0.0
    %9210 = vmatprep.subr.mxu0 0.0
    %9211 = vmatpush1.msra.mxu0 0.0
    %9212 = vmatprep.subr.mxu0 0.0
    %9213 = vmatpush1.msra.mxu0 0.0
    %9214 = vmatprep.subr.mxu0 0.0
    %9215 = vmatpush1.msra.mxu0 0.0
    %9216 = vmatprep.subr.mxu0 0.0
    %9217 = vmatpush1.msra.mxu0 0.0
    %9218 = vmatprep.subr.mxu0 0.0
    %9219 = vmatpush1.msra.mxu0 0.0
    %9220 = vmatprep.subr.mxu0 0.0
    %9221 = vmatpush1.msra.mxu0 0.0
    %9222 = vmatprep.subr.mxu0 0.0
    %9223 = vmatpush1.msra.mxu0 0.0
    %9224 = vmatprep.subr.mxu0 0.0
    %9225 = vmatpush1.msra.mxu0 0.0
    %9226 = vmatprep.subr.mxu0 0.0
    %9227 = vmatpush1.msra.mxu0 0.0
    %9228 = vmatprep.subr.mxu0 0.0
    %9229 = vmatpush1.msra.mxu0 0.0
    %9230 = vmatprep.subr.mxu0 0.0
    %9231 = vmatpush1.msra.mxu0 0.0
    %9232 = vmatprep.subr.mxu0 0.0
    %9233 = vmatpush1.msra.mxu0 0.0
    %9234 = vmatprep.subr.mxu0 0.0
    %9235 = vmatpush1.msra.mxu0 0.0
    %9236 = vmatprep.subr.mxu0 0.0
    %9237 = vmatpush1.msra.mxu0 0.0
    %9238 = vmatprep.subr.mxu0 0.0
    %9239 = vmatpush1.msra.mxu0 0.0
    %9240 = vmatprep.subr.mxu0 0.0
    %9241 = vmatpush1.msra.mxu0 0.0
    %9242 = vmatprep.subr.mxu0 0.0
    %9243 = vmatpush1.msra.mxu0 0.0
    %9244 = vmatprep.subr.mxu0 0.0
    %9245 = vmatpush1.msra.mxu0 0.0
    %9246 = vmatprep.subr.mxu0 0.0
    %9247 = vmatpush1.msra.mxu0 0.0
    %9248 = vmatprep.subr.mxu0 0.0
    %9249 = vmatpush1.msra.mxu0 0.0
    %9250 = vmatprep.subr.mxu0 0.0
    %9251 = vmatpush1.msra.mxu0 0.0
    %9252 = vmatprep.mubr.f32.mxu0 0.0
    %9253 = vmatmul.mubr.f32.gmra.mrb[0].mxu0 %v8952
    %v9254 = vpop.f32.mrb[0].mxu0
    %v9255 = vadd.f32 0.0, %v9254
    %v9256 = vpop.f32.mrb[0].mxu0
    %v9257 = vadd.f32 0.0, %v9256
    %9258 = vmatprep.mubr.f32.mxu0 0.0
    %9259 = vmatmul.mubr.f32.gmra.mrb[0].mxu0 %v8955
    %v9260 = vpop.f32.mrb[0].mxu0
    %v9261 = vadd.f32 0.0, %v9260
    %v9262 = vpop.f32.mrb[0].mxu0
    %v9263 = vadd.f32 0.0, %v9262
    %9264 = vdwg.mxu0
    %v9265 = vadd.f32 %v8796, %v9024
    %v9266 = vadd.f32 %v8797, %v9026
    %v9267 = vadd.f32 %v8798, %v9101
    %v9268 = vadd.f32 %v8799, %v9103
    %v9269 = vadd.f32 %v8800, %v9178
    %v9270 = vadd.f32 %v8801, %v9180
    %v9271 = vadd.f32 %v8802, %v9255
    %v9272 = vadd.f32 %v8803, %v9257
    %v9273 = vadd.f32 %v8804, %v9030
    %v9274 = vadd.f32 %v8805, %v9032
    %v9275 = vadd.f32 %v8806, %v9107
    %v9276 = vadd.f32 %v8807, %v9109
    %v9277 = vadd.f32 %v8808, %v9184
    %v9278 = vadd.f32 %v8809, %v9186
    %v9279 = vadd.f32 %v8810, %v9261
    %v9280 = vadd.f32 %v8811, %v9263
    %s9281 = scalar_lea.vmem %s5, 64
    %v9282 = vld [vmem:[%s9281] sm:$0xff]
    %v9283 = vld [vmem:[%s9281 + $0x8] sm:$0x1]
    %9284 = vrot.lane.b32.xlu0 %v7503, 105
    %v9285 = vpop.permute.xlu0 %9284
    %9286 = vrot.lane.b32.xlu0 %v7504, 105
    %v9287 = vpop.permute.xlu0 %9286
    %9288 = vrot.lane.b32.xlu0 %v7505, 105
    %v9289 = vpop.permute.xlu0 %9288
    %9290 = vrot.lane.b32.xlu0 %v7506, 105
    %v9291 = vpop.permute.xlu0 %9290
    %9292 = vrot.lane.b32.xlu0 %v7507, 105
    %v9293 = vpop.permute.xlu0 %9292
    %9294 = vrot.lane.b32.xlu0 %v7508, 105
    %v9295 = vpop.permute.xlu0 %9294
    %9296 = vrot.lane.b32.xlu0 %v7509, 105
    %v9297 = vpop.permute.xlu0 %9296
    %9298 = vrot.lane.b32.xlu0 %v7510, 105
    %v9299 = vpop.permute.xlu0 %9298
    %9300 = vrot.lane.b32.xlu0 %v7538, 105
    %v9301 = vpop.permute.xlu0 %9300
    %9302 = vrot.lane.b32.xlu0 %v7511, 105
    %v9303 = vpop.permute.xlu0 %9302
    %9304 = vrot.lane.b32.xlu0 %v7512, 105
    %v9305 = vpop.permute.xlu0 %9304
    %9306 = vrot.lane.b32.xlu0 %v7513, 105
    %v9307 = vpop.permute.xlu0 %9306
    %9308 = vrot.lane.b32.xlu0 %v7514, 105
    %v9309 = vpop.permute.xlu0 %9308
    %9310 = vrot.lane.b32.xlu0 %v7515, 105
    %v9311 = vpop.permute.xlu0 %9310
    %9312 = vrot.lane.b32.xlu0 %v7516, 105
    %v9313 = vpop.permute.xlu0 %9312
    %9314 = vrot.lane.b32.xlu0 %v7517, 105
    %v9315 = vpop.permute.xlu0 %9314
    %9316 = vrot.lane.b32.xlu0 %v7518, 105
    %v9317 = vpop.permute.xlu0 %9316
    %9318 = vrot.lane.b32.xlu0 %v7539, 105
    %v9319 = vpop.permute.xlu0 %9318
    %9320 = vrot.lane.b32.xlu0 %v7519, 105
    %v9321 = vpop.permute.xlu0 %9320
    %9322 = vrot.lane.b32.xlu0 %v7520, 105
    %v9323 = vpop.permute.xlu0 %9322
    %9324 = vrot.lane.b32.xlu0 %v7521, 105
    %v9325 = vpop.permute.xlu0 %9324
    %9326 = vrot.lane.b32.xlu0 %v7522, 105
    %v9327 = vpop.permute.xlu0 %9326
    %9328 = vrot.lane.b32.xlu0 %v7523, 105
    %v9329 = vpop.permute.xlu0 %9328
    %9330 = vrot.lane.b32.xlu0 %v7524, 105
    %v9331 = vpop.permute.xlu0 %9330
    %9332 = vrot.lane.b32.xlu0 %v7525, 105
    %v9333 = vpop.permute.xlu0 %9332
    %9334 = vrot.lane.b32.xlu0 %v7526, 105
    %v9335 = vpop.permute.xlu0 %9334
    %9336 = vrot.lane.b32.xlu0 %v7540, 105
    %v9337 = vpop.permute.xlu0 %9336
    %9338 = vrot.lane.b32.xlu0 %v7527, 105
    %v9339 = vpop.permute.xlu0 %9338
    %9340 = vrot.lane.b32.xlu0 %v7528, 105
    %v9341 = vpop.permute.xlu0 %9340
    %9342 = vrot.lane.b32.xlu0 %v7529, 105
    %v9343 = vpop.permute.xlu0 %9342
    %9344 = vrot.lane.b32.xlu0 %v7530, 105
    %v9345 = vpop.permute.xlu0 %9344
    %9346 = vrot.lane.b32.xlu0 %v7531, 105
    %v9347 = vpop.permute.xlu0 %9346
    %9348 = vrot.lane.b32.xlu0 %v7532, 105
    %v9349 = vpop.permute.xlu0 %9348
    %9350 = vrot.lane.b32.xlu0 %v7533, 105
    %v9351 = vpop.permute.xlu0 %9350
    %9352 = vrot.lane.b32.xlu0 %v7534, 105
    %v9353 = vpop.permute.xlu0 %9352
    %9354 = vrot.lane.b32.xlu0 %v7541, 105
    %v9355 = vpop.permute.xlu0 %9354
    %v9356 = vsel %vm169, %v9285, %v9287
    %v9357 = vsel %vm169, %v9287, %v9289
    %v9358 = vsel %vm169, %v9289, %v9291
    %v9359 = vsel %vm169, %v9291, %v9293
    %v9360 = vsel %vm169, %v9293, %v9295
    %v9361 = vsel %vm169, %v9295, %v9297
    %v9362 = vsel %vm169, %v9297, %v9299
    %v9363 = vsel %vm169, %v9299, %v9301
    %v9364 = vsel %vm169, %v9303, %v9305
    %v9365 = vsel %vm169, %v9305, %v9307
    %v9366 = vsel %vm169, %v9307, %v9309
    %v9367 = vsel %vm169, %v9309, %v9311
    %v9368 = vsel %vm169, %v9311, %v9313
    %v9369 = vsel %vm169, %v9313, %v9315
    %v9370 = vsel %vm169, %v9315, %v9317
    %v9371 = vsel %vm169, %v9317, %v9319
    %v9372 = vsel %vm169, %v9321, %v9323
    %v9373 = vsel %vm169, %v9323, %v9325
    %v9374 = vsel %vm169, %v9325, %v9327
    %v9375 = vsel %vm169, %v9327, %v9329
    %v9376 = vsel %vm169, %v9329, %v9331
    %v9377 = vsel %vm169, %v9331, %v9333
    %v9378 = vsel %vm169, %v9333, %v9335
    %v9379 = vsel %vm169, %v9335, %v9337
    %v9380 = vsel %vm169, %v9339, %v9341
    %v9381 = vsel %vm169, %v9341, %v9343
    %v9382 = vsel %vm169, %v9343, %v9345
    %v9383 = vsel %vm169, %v9345, %v9347
    %v9384 = vsel %vm169, %v9347, %v9349
    %v9385 = vsel %vm169, %v9349, %v9351
    %v9386 = vsel %vm169, %v9351, %v9353
    %v9387 = vsel %vm169, %v9353, %v9355
    %v9421 = vsel %vm7714, %v9282, 0
    %v9424 = vsel %vm7714, %v9283, 0
    %9426 = vmatprep.subr.mxu0 %v9357
    %9427 = vmatpush1.msra.mxu0 %v9356
    %9428 = vmatprep.subr.mxu0 %v9365
    %9429 = vmatpush1.msra.mxu0 %v9364
    %9430 = vmatprep.subr.mxu0 %v9373
    %9431 = vmatpush1.msra.mxu0 %v9372
    %9432 = vmatprep.subr.mxu0 %v9381
    %9433 = vmatpush1.msra.mxu0 %v9380
    %9434 = vmatprep.subr.mxu0 0.0
    %9435 = vmatpush1.msra.mxu0 0.0
    %9436 = vmatprep.subr.mxu0 0.0
    %9437 = vmatpush1.msra.mxu0 0.0
    %9438 = vmatprep.subr.mxu0 0.0
    %9439 = vmatpush1.msra.mxu0 0.0
    %9440 = vmatprep.subr.mxu0 0.0
    %9441 = vmatpush1.msra.mxu0 0.0
    %9442 = vmatprep.subr.mxu0 0.0
    %9443 = vmatpush1.msra.mxu0 0.0
    %9444 = vmatprep.subr.mxu0 0.0
    %9445 = vmatpush1.msra.mxu0 0.0
    %9446 = vmatprep.subr.mxu0 0.0
    %9447 = vmatpush1.msra.mxu0 0.0
    %9448 = vmatprep.subr.mxu0 0.0
    %9449 = vmatpush1.msra.mxu0 0.0
    %9450 = vmatprep.subr.mxu0 0.0
    %9451 = vmatpush1.msra.mxu0 0.0
    %9452 = vmatprep.subr.mxu0 0.0
    %9453 = vmatpush1.msra.mxu0 0.0
    %9454 = vmatprep.subr.mxu0 0.0
    %9455 = vmatpush1.msra.mxu0 0.0
    %9456 = vmatprep.subr.mxu0 0.0
    %9457 = vmatpush1.msra.mxu0 0.0
    %9458 = vmatprep.subr.mxu0 0.0
    %9459 = vmatpush1.msra.mxu0 0.0
    %9460 = vmatprep.subr.mxu0 0.0
    %9461 = vmatpush1.msra.mxu0 0.0
    %9462 = vmatprep.subr.mxu0 0.0
    %9463 = vmatpush1.msra.mxu0 0.0
    %9464 = vmatprep.subr.mxu0 0.0
    %9465 = vmatpush1.msra.mxu0 0.0
    %9466 = vmatprep.subr.mxu0 0.0
    %9467 = vmatpush1.msra.mxu0 0.0
    %9468 = vmatprep.subr.mxu0 0.0
    %9469 = vmatpush1.msra.mxu0 0.0
    %9470 = vmatprep.subr.mxu0 0.0
    %9471 = vmatpush1.msra.mxu0 0.0
    %9472 = vmatprep.subr.mxu0 0.0
    %9473 = vmatpush1.msra.mxu0 0.0
    %9474 = vmatprep.subr.mxu0 0.0
    %9475 = vmatpush1.msra.mxu0 0.0
    %9476 = vmatprep.subr.mxu0 0.0
    %9477 = vmatpush1.msra.mxu0 0.0
    %9478 = vmatprep.subr.mxu0 0.0
    %9479 = vmatpush1.msra.mxu0 0.0
    %9480 = vmatprep.subr.mxu0 0.0
    %9481 = vmatpush1.msra.mxu0 0.0
    %9482 = vmatprep.subr.mxu0 0.0
    %9483 = vmatpush1.msra.mxu0 0.0
    %9484 = vmatprep.subr.mxu0 0.0
    %9485 = vmatpush1.msra.mxu0 0.0
    %9486 = vmatprep.subr.mxu0 0.0
    %9487 = vmatpush1.msra.mxu0 0.0
    %9488 = vmatprep.subr.mxu0 0.0
    %9489 = vmatpush1.msra.mxu0 0.0
    %9490 = vmatprep.mubr.f32.mxu0 0.0
    %9491 = vmatmul.mubr.f32.gmra.mrb[0].mxu0 %v9421
    %v9492 = vpop.f32.mrb[0].mxu0
    %v9493 = vadd.f32 0.0, %v9492
    %v9494 = vpop.f32.mrb[0].mxu0
    %v9495 = vadd.f32 0.0, %v9494
    %9496 = vmatprep.mubr.f32.mxu0 0.0
    %9497 = vmatmul.mubr.f32.gmra.mrb[0].mxu0 %v9424
    %v9498 = vpop.f32.mrb[0].mxu0
    %v9499 = vadd.f32 0.0, %v9498
    %v9500 = vpop.f32.mrb[0].mxu0
    %v9501 = vadd.f32 0.0, %v9500
    %9502 = vdwg.mxu0
    %9503 = vmatprep.subr.mxu0 %v9359
    %9504 = vmatpush1.msra.mxu0 %v9358
    %9505 = vmatprep.subr.mxu0 %v9367
    %9506 = vmatpush1.msra.mxu0 %v9366
    %9507 = vmatprep.subr.mxu0 %v9375
    %9508 = vmatpush1.msra.mxu0 %v9374
    %9509 = vmatprep.subr.mxu0 %v9383
    %9510 = vmatpush1.msra.mxu0 %v9382
    %9511 = vmatprep.subr.mxu0 0.0
    %9512 = vmatpush1.msra.mxu0 0.0
    %9513 = vmatprep.subr.mxu0 0.0
    %9514 = vmatpush1.msra.mxu0 0.0
    %9515 = vmatprep.subr.mxu0 0.0
    %9516 = vmatpush1.msra.mxu0 0.0
    %9517 = vmatprep.subr.mxu0 0.0
    %9518 = vmatpush1.msra.mxu0 0.0
    %9519 = vmatprep.subr.mxu0 0.0
    %9520 = vmatpush1.msra.mxu0 0.0
    %9521 = vmatprep.subr.mxu0 0.0
    %9522 = vmatpush1.msra.mxu0 0.0
    %9523 = vmatprep.subr.mxu0 0.0
    %9524 = vmatpush1.msra.mxu0 0.0
    %9525 = vmatprep.subr.mxu0 0.0
    %9526 = vmatpush1.msra.mxu0 0.0
    %9527 = vmatprep.subr.mxu0 0.0
    %9528 = vmatpush1.msra.mxu0 0.0
    %9529 = vmatprep.subr.mxu0 0.0
    %9530 = vmatpush1.msra.mxu0 0.0
    %9531 = vmatprep.subr.mxu0 0.0
    %9532 = vmatpush1.msra.mxu0 0.0
    %9533 = vmatprep.subr.mxu0 0.0
    %9534 = vmatpush1.msra.mxu0 0.0
    %9535 = vmatprep.subr.mxu0 0.0
    %9536 = vmatpush1.msra.mxu0 0.0
    %9537 = vmatprep.subr.mxu0 0.0
    %9538 = vmatpush1.msra.mxu0 0.0
    %9539 = vmatprep.subr.mxu0 0.0
    %9540 = vmatpush1.msra.mxu0 0.0
    %9541 = vmatprep.subr.mxu0 0.0
    %9542 = vmatpush1.msra.mxu0 0.0
    %9543 = vmatprep.subr.mxu0 0.0
    %9544 = vmatpush1.msra.mxu0 0.0
    %9545 = vmatprep.subr.mxu0 0.0
    %9546 = vmatpush1.msra.mxu0 0.0
    %9547 = vmatprep.subr.mxu0 0.0
    %9548 = vmatpush1.msra.mxu0 0.0
    %9549 = vmatprep.subr.mxu0 0.0
    %9550 = vmatpush1.msra.mxu0 0.0
    %9551 = vmatprep.subr.mxu0 0.0
    %9552 = vmatpush1.msra.mxu0 0.0
    %9553 = vmatprep.subr.mxu0 0.0
    %9554 = vmatpush1.msra.mxu0 0.0
    %9555 = vmatprep.subr.mxu0 0.0
    %9556 = vmatpush1.msra.mxu0 0.0
    %9557 = vmatprep.subr.mxu0 0.0
    %9558 = vmatpush1.msra.mxu0 0.0
    %9559 = vmatprep.subr.mxu0 0.0
    %9560 = vmatpush1.msra.mxu0 0.0
    %9561 = vmatprep.subr.mxu0 0.0
    %9562 = vmatpush1.msra.mxu0 0.0
    %9563 = vmatprep.subr.mxu0 0.0
    %9564 = vmatpush1.msra.mxu0 0.0
    %9565 = vmatprep.subr.mxu0 0.0
    %9566 = vmatpush1.msra.mxu0 0.0
    %9567 = vmatprep.mubr.f32.mxu0 0.0
    %9568 = vmatmul.mubr.f32.gmra.mrb[0].mxu0 %v9421
    %v9569 = vpop.f32.mrb[0].mxu0
    %v9570 = vadd.f32 0.0, %v9569
    %v9571 = vpop.f32.mrb[0].mxu0
    %v9572 = vadd.f32 0.0, %v9571
    %9573 = vmatprep.mubr.f32.mxu0 0.0
    %9574 = vmatmul.mubr.f32.gmra.mrb[0].mxu0 %v9424
    %v9575 = vpop.f32.mrb[0].mxu0
    %v9576 = vadd.f32 0.0, %v9575
    %v9577 = vpop.f32.mrb[0].mxu0
    %v9578 = vadd.f32 0.0, %v9577
    %9579 = vdwg.mxu0
    %9580 = vmatprep.subr.mxu0 %v9361
    %9581 = vmatpush1.msra.mxu0 %v9360
    %9582 = vmatprep.subr.mxu0 %v9369
    %9583 = vmatpush1.msra.mxu0 %v9368
    %9584 = vmatprep.subr.mxu0 %v9377
    %9585 = vmatpush1.msra.mxu0 %v9376
    %9586 = vmatprep.subr.mxu0 %v9385
    %9587 = vmatpush1.msra.mxu0 %v9384
    %9588 = vmatprep.subr.mxu0 0.0
    %9589 = vmatpush1.msra.mxu0 0.0
    %9590 = vmatprep.subr.mxu0 0.0
    %9591 = vmatpush1.msra.mxu0 0.0
    %9592 = vmatprep.subr.mxu0 0.0
    %9593 = vmatpush1.msra.mxu0 0.0
    %9594 = vmatprep.subr.mxu0 0.0
    %9595 = vmatpush1.msra.mxu0 0.0
    %9596 = vmatprep.subr.mxu0 0.0
    %9597 = vmatpush1.msra.mxu0 0.0
    %9598 = vmatprep.subr.mxu0 0.0
    %9599 = vmatpush1.msra.mxu0 0.0
    %9600 = vmatprep.subr.mxu0 0.0
    %9601 = vmatpush1.msra.mxu0 0.0
    %9602 = vmatprep.subr.mxu0 0.0
    %9603 = vmatpush1.msra.mxu0 0.0
    %9604 = vmatprep.subr.mxu0 0.0
    %9605 = vmatpush1.msra.mxu0 0.0
    %9606 = vmatprep.subr.mxu0 0.0
    %9607 = vmatpush1.msra.mxu0 0.0
    %9608 = vmatprep.subr.mxu0 0.0
    %9609 = vmatpush1.msra.mxu0 0.0
    %9610 = vmatprep.subr.mxu0 0.0
    %9611 = vmatpush1.msra.mxu0 0.0
    %9612 = vmatprep.subr.mxu0 0.0
    %9613 = vmatpush1.msra.mxu0 0.0
    %9614 = vmatprep.subr.mxu0 0.0
    %9615 = vmatpush1.msra.mxu0 0.0
    %9616 = vmatprep.subr.mxu0 0.0
    %9617 = vmatpush1.msra.mxu0 0.0
    %9618 = vmatprep.subr.mxu0 0.0
    %9619 = vmatpush1.msra.mxu0 0.0
    %9620 = vmatprep.subr.mxu0 0.0
    %9621 = vmatpush1.msra.mxu0 0.0
    %9622 = vmatprep.subr.mxu0 0.0
    %9623 = vmatpush1.msra.mxu0 0.0
    %9624 = vmatprep.subr.mxu0 0.0
    %9625 = vmatpush1.msra.mxu0 0.0
    %9626 = vmatprep.subr.mxu0 0.0
    %9627 = vmatpush1.msra.mxu0 0.0
    %9628 = vmatprep.subr.mxu0 0.0
    %9629 = vmatpush1.msra.mxu0 0.0
    %9630 = vmatprep.subr.mxu0 0.0
    %9631 = vmatpush1.msra.mxu0 0.0
    %9632 = vmatprep.subr.mxu0 0.0
    %9633 = vmatpush1.msra.mxu0 0.0
    %9634 = vmatprep.subr.mxu0 0.0
    %9635 = vmatpush1.msra.mxu0 0.0
    %9636 = vmatprep.subr.mxu0 0.0
    %9637 = vmatpush1.msra.mxu0 0.0
    %9638 = vmatprep.subr.mxu0 0.0
    %9639 = vmatpush1.msra.mxu0 0.0
    %9640 = vmatprep.subr.mxu0 0.0
    %9641 = vmatpush1.msra.mxu0 0.0
    %9642 = vmatprep.subr.mxu0 0.0
    %9643 = vmatpush1.msra.mxu0 0.0
    %9644 = vmatprep.mubr.f32.mxu0 0.0
    %9645 = vmatmul.mubr.f32.gmra.mrb[0].mxu0 %v9421
    %v9646 = vpop.f32.mrb[0].mxu0
    %v9647 = vadd.f32 0.0, %v9646
    %v9648 = vpop.f32.mrb[0].mxu0
    %v9649 = vadd.f32 0.0, %v9648
    %9650 = vmatprep.mubr.f32.mxu0 0.0
    %9651 = vmatmul.mubr.f32.gmra.mrb[0].mxu0 %v9424
    %v9652 = vpop.f32.mrb[0].mxu0
    %v9653 = vadd.f32 0.0, %v9652
    %v9654 = vpop.f32.mrb[0].mxu0
    %v9655 = vadd.f32 0.0, %v9654
    %9656 = vdwg.mxu0
    %9657 = vmatprep.subr.mxu0 %v9363
    %9658 = vmatpush1.msra.mxu0 %v9362
    %9659 = vmatprep.subr.mxu0 %v9371
    %9660 = vmatpush1.msra.mxu0 %v9370
    %9661 = vmatprep.subr.mxu0 %v9379
    %9662 = vmatpush1.msra.mxu0 %v9378
    %9663 = vmatprep.subr.mxu0 %v9387
    %9664 = vmatpush1.msra.mxu0 %v9386
    %9665 = vmatprep.subr.mxu0 0.0
    %9666 = vmatpush1.msra.mxu0 0.0
    %9667 = vmatprep.subr.mxu0 0.0
    %9668 = vmatpush1.msra.mxu0 0.0
    %9669 = vmatprep.subr.mxu0 0.0
    %9670 = vmatpush1.msra.mxu0 0.0
    %9671 = vmatprep.subr.mxu0 0.0
    %9672 = vmatpush1.msra.mxu0 0.0
    %9673 = vmatprep.subr.mxu0 0.0
    %9674 = vmatpush1.msra.mxu0 0.0
    %9675 = vmatprep.subr.mxu0 0.0
    %9676 = vmatpush1.msra.mxu0 0.0
    %9677 = vmatprep.subr.mxu0 0.0
    %9678 = vmatpush1.msra.mxu0 0.0
    %9679 = vmatprep.subr.mxu0 0.0
    %9680 = vmatpush1.msra.mxu0 0.0
    %9681 = vmatprep.subr.mxu0 0.0
    %9682 = vmatpush1.msra.mxu0 0.0
    %9683 = vmatprep.subr.mxu0 0.0
    %9684 = vmatpush1.msra.mxu0 0.0
    %9685 = vmatprep.subr.mxu0 0.0
    %9686 = vmatpush1.msra.mxu0 0.0
    %9687 = vmatprep.subr.mxu0 0.0
    %9688 = vmatpush1.msra.mxu0 0.0
    %9689 = vmatprep.subr.mxu0 0.0
    %9690 = vmatpush1.msra.mxu0 0.0
    %9691 = vmatprep.subr.mxu0 0.0
    %9692 = vmatpush1.msra.mxu0 0.0
    %9693 = vmatprep.subr.mxu0 0.0
    %9694 = vmatpush1.msra.mxu0 0.0
    %9695 = vmatprep.subr.mxu0 0.0
    %9696 = vmatpush1.msra.mxu0 0.0
    %9697 = vmatprep.subr.mxu0 0.0
    %9698 = vmatpush1.msra.mxu0 0.0
    %9699 = vmatprep.subr.mxu0 0.0
    %9700 = vmatpush1.msra.mxu0 0.0
    %9701 = vmatprep.subr.mxu0 0.0
    %9702 = vmatpush1.msra.mxu0 0.0
    %9703 = vmatprep.subr.mxu0 0.0
    %9704 = vmatpush1.msra.mxu0 0.0
    %9705 = vmatprep.subr.mxu0 0.0
    %9706 = vmatpush1.msra.mxu0 0.0
    %9707 = vmatprep.subr.mxu0 0.0
    %9708 = vmatpush1.msra.mxu0 0.0
    %9709 = vmatprep.subr.mxu0 0.0
    %9710 = vmatpush1.msra.mxu0 0.0
    %9711 = vmatprep.subr.mxu0 0.0
    %9712 = vmatpush1.msra.mxu0 0.0
    %9713 = vmatprep.subr.mxu0 0.0
    %9714 = vmatpush1.msra.mxu0 0.0
    %9715 = vmatprep.subr.mxu0 0.0
    %9716 = vmatpush1.msra.mxu0 0.0
    %9717 = vmatprep.subr.mxu0 0.0
    %9718 = vmatpush1.msra.mxu0 0.0
    %9719 = vmatprep.subr.mxu0 0.0
    %9720 = vmatpush1.msra.mxu0 0.0
    %9721 = vmatprep.mubr.f32.mxu0 0.0
    %9722 = vmatmul.mubr.f32.gmra.mrb[0].mxu0 %v9421
    %v9723 = vpop.f32.mrb[0].mxu0
    %v9724 = vadd.f32 0.0, %v9723
    %v9725 = vpop.f32.mrb[0].mxu0
    %v9726 = vadd.f32 0.0, %v9725
    %9727 = vmatprep.mubr.f32.mxu0 0.0
    %9728 = vmatmul.mubr.f32.gmra.mrb[0].mxu0 %v9424
    %v9729 = vpop.f32.mrb[0].mxu0
    %v9730 = vadd.f32 0.0, %v9729
    %v9731 = vpop.f32.mrb[0].mxu0
    %v9732 = vadd.f32 0.0, %v9731
    %9733 = vdwg.mxu0
    %v9734 = vadd.f32 %v9265, %v9493
    %v9735 = vadd.f32 %v9266, %v9495
    %v9736 = vadd.f32 %v9267, %v9570
    %v9737 = vadd.f32 %v9268, %v9572
    %v9738 = vadd.f32 %v9269, %v9647
    %v9739 = vadd.f32 %v9270, %v9649
    %v9740 = vadd.f32 %v9271, %v9724
    %v9741 = vadd.f32 %v9272, %v9726
    %v9742 = vadd.f32 %v9273, %v9499
    %v9743 = vadd.f32 %v9274, %v9501
    %v9744 = vadd.f32 %v9275, %v9576
    %v9745 = vadd.f32 %v9276, %v9578
    %v9746 = vadd.f32 %v9277, %v9653
    %v9747 = vadd.f32 %v9278, %v9655
    %v9748 = vadd.f32 %v9279, %v9730
    %v9749 = vadd.f32 %v9280, %v9732
    %s9750 = scalar_lea.vmem %s5, 80
    %v9751 = vld [vmem:[%s9750] sm:$0xff]
    %v9752 = vld [vmem:[%s9750 + $0x8] sm:$0x1]
    %9753 = vrot.lane.b32.xlu0 %v7503, 104
    %v9754 = vpop.permute.xlu0 %9753
    %9755 = vrot.lane.b32.xlu0 %v7504, 104
    %v9756 = vpop.permute.xlu0 %9755
    %9757 = vrot.lane.b32.xlu0 %v7505, 104
    %v9758 = vpop.permute.xlu0 %9757
    %9759 = vrot.lane.b32.xlu0 %v7506, 104
    %v9760 = vpop.permute.xlu0 %9759
    %9761 = vrot.lane.b32.xlu0 %v7507, 104
    %v9762 = vpop.permute.xlu0 %9761
    %9763 = vrot.lane.b32.xlu0 %v7508, 104
    %v9764 = vpop.permute.xlu0 %9763
    %9765 = vrot.lane.b32.xlu0 %v7509, 104
    %v9766 = vpop.permute.xlu0 %9765
    %9767 = vrot.lane.b32.xlu0 %v7510, 104
    %v9768 = vpop.permute.xlu0 %9767
    %9769 = vrot.lane.b32.xlu0 %v7538, 104
    %v9770 = vpop.permute.xlu0 %9769
    %9771 = vrot.lane.b32.xlu0 %v7511, 104
    %v9772 = vpop.permute.xlu0 %9771
    %9773 = vrot.lane.b32.xlu0 %v7512, 104
    %v9774 = vpop.permute.xlu0 %9773
    %9775 = vrot.lane.b32.xlu0 %v7513, 104
    %v9776 = vpop.permute.xlu0 %9775
    %9777 = vrot.lane.b32.xlu0 %v7514, 104
    %v9778 = vpop.permute.xlu0 %9777
    %9779 = vrot.lane.b32.xlu0 %v7515, 104
    %v9780 = vpop.permute.xlu0 %9779
    %9781 = vrot.lane.b32.xlu0 %v7516, 104
    %v9782 = vpop.permute.xlu0 %9781
    %9783 = vrot.lane.b32.xlu0 %v7517, 104
    %v9784 = vpop.permute.xlu0 %9783
    %9785 = vrot.lane.b32.xlu0 %v7518, 104
    %v9786 = vpop.permute.xlu0 %9785
    %9787 = vrot.lane.b32.xlu0 %v7539, 104
    %v9788 = vpop.permute.xlu0 %9787
    %9789 = vrot.lane.b32.xlu0 %v7519, 104
    %v9790 = vpop.permute.xlu0 %9789
    %9791 = vrot.lane.b32.xlu0 %v7520, 104
    %v9792 = vpop.permute.xlu0 %9791
    %9793 = vrot.lane.b32.xlu0 %v7521, 104
    %v9794 = vpop.permute.xlu0 %9793
    %9795 = vrot.lane.b32.xlu0 %v7522, 104
    %v9796 = vpop.permute.xlu0 %9795
    %9797 = vrot.lane.b32.xlu0 %v7523, 104
    %v9798 = vpop.permute.xlu0 %9797
    %9799 = vrot.lane.b32.xlu0 %v7524, 104
    %v9800 = vpop.permute.xlu0 %9799
    %9801 = vrot.lane.b32.xlu0 %v7525, 104
    %v9802 = vpop.permute.xlu0 %9801
    %9803 = vrot.lane.b32.xlu0 %v7526, 104
    %v9804 = vpop.permute.xlu0 %9803
    %9805 = vrot.lane.b32.xlu0 %v7540, 104
    %v9806 = vpop.permute.xlu0 %9805
    %9807 = vrot.lane.b32.xlu0 %v7527, 104
    %v9808 = vpop.permute.xlu0 %9807
    %9809 = vrot.lane.b32.xlu0 %v7528, 104
    %v9810 = vpop.permute.xlu0 %9809
    %9811 = vrot.lane.b32.xlu0 %v7529, 104
    %v9812 = vpop.permute.xlu0 %9811
    %9813 = vrot.lane.b32.xlu0 %v7530, 104
    %v9814 = vpop.permute.xlu0 %9813
    %9815 = vrot.lane.b32.xlu0 %v7531, 104
    %v9816 = vpop.permute.xlu0 %9815
    %9817 = vrot.lane.b32.xlu0 %v7532, 104
    %v9818 = vpop.permute.xlu0 %9817
    %9819 = vrot.lane.b32.xlu0 %v7533, 104
    %v9820 = vpop.permute.xlu0 %9819
    %9821 = vrot.lane.b32.xlu0 %v7534, 104
    %v9822 = vpop.permute.xlu0 %9821
    %9823 = vrot.lane.b32.xlu0 %v7541, 104
    %v9824 = vpop.permute.xlu0 %9823
    %v9825 = vsel %vm188, %v9754, %v9756
    %v9826 = vsel %vm188, %v9756, %v9758
    %v9827 = vsel %vm188, %v9758, %v9760
    %v9828 = vsel %vm188, %v9760, %v9762
    %v9829 = vsel %vm188, %v9762, %v9764
    %v9830 = vsel %vm188, %v9764, %v9766
    %v9831 = vsel %vm188, %v9766, %v9768
    %v9832 = vsel %vm188, %v9768, %v9770
    %v9833 = vsel %vm188, %v9772, %v9774
    %v9834 = vsel %vm188, %v9774, %v9776
    %v9835 = vsel %vm188, %v9776, %v9778
    %v9836 = vsel %vm188, %v9778, %v9780
    %v9837 = vsel %vm188, %v9780, %v9782
    %v9838 = vsel %vm188, %v9782, %v9784
    %v9839 = vsel %vm188, %v9784, %v9786
    %v9840 = vsel %vm188, %v9786, %v9788
    %v9841 = vsel %vm188, %v9790, %v9792
    %v9842 = vsel %vm188, %v9792, %v9794
    %v9843 = vsel %vm188, %v9794, %v9796
    %v9844 = vsel %vm188, %v9796, %v9798
    %v9845 = vsel %vm188, %v9798, %v9800
    %v9846 = vsel %vm188, %v9800, %v9802
    %v9847 = vsel %vm188, %v9802, %v9804
    %v9848 = vsel %vm188, %v9804, %v9806
    %v9849 = vsel %vm188, %v9808, %v9810
    %v9850 = vsel %vm188, %v9810, %v9812
    %v9851 = vsel %vm188, %v9812, %v9814
    %v9852 = vsel %vm188, %v9814, %v9816
    %v9853 = vsel %vm188, %v9816, %v9818
    %v9854 = vsel %vm188, %v9818, %v9820
    %v9855 = vsel %vm188, %v9820, %v9822
    %v9856 = vsel %vm188, %v9822, %v9824
    %v9890 = vsel %vm7714, %v9751, 0
    %v9893 = vsel %vm7714, %v9752, 0
    %9895 = vmatprep.subr.mxu0 %v9826
    %9896 = vmatpush1.msra.mxu0 %v9825
    %9897 = vmatprep.subr.mxu0 %v9834
    %9898 = vmatpush1.msra.mxu0 %v9833
    %9899 = vmatprep.subr.mxu0 %v9842
    %9900 = vmatpush1.msra.mxu0 %v9841
    %9901 = vmatprep.subr.mxu0 %v9850
    %9902 = vmatpush1.msra.mxu0 %v9849
    %9903 = vmatprep.subr.mxu0 0.0
    %9904 = vmatpush1.msra.mxu0 0.0
    %9905 = vmatprep.subr.mxu0 0.0
    %9906 = vmatpush1.msra.mxu0 0.0
    %9907 = vmatprep.subr.mxu0 0.0
    %9908 = vmatpush1.msra.mxu0 0.0
    %9909 = vmatprep.subr.mxu0 0.0
    %9910 = vmatpush1.msra.mxu0 0.0
    %9911 = vmatprep.subr.mxu0 0.0
    %9912 = vmatpush1.msra.mxu0 0.0
    %9913 = vmatprep.subr.mxu0 0.0
    %9914 = vmatpush1.msra.mxu0 0.0
    %9915 = vmatprep.subr.mxu0 0.0
    %9916 = vmatpush1.msra.mxu0 0.0
    %9917 = vmatprep.subr.mxu0 0.0
    %9918 = vmatpush1.msra.mxu0 0.0
    %9919 = vmatprep.subr.mxu0 0.0
    %9920 = vmatpush1.msra.mxu0 0.0
    %9921 = vmatprep.subr.mxu0 0.0
    %9922 = vmatpush1.msra.mxu0 0.0
    %9923 = vmatprep.subr.mxu0 0.0
    %9924 = vmatpush1.msra.mxu0 0.0
    %9925 = vmatprep.subr.mxu0 0.0
    %9926 = vmatpush1.msra.mxu0 0.0
    %9927 = vmatprep.subr.mxu0 0.0
    %9928 = vmatpush1.msra.mxu0 0.0
    %9929 = vmatprep.subr.mxu0 0.0
    %9930 = vmatpush1.msra.mxu0 0.0
    %9931 = vmatprep.subr.mxu0 0.0
    %9932 = vmatpush1.msra.mxu0 0.0
    %9933 = vmatprep.subr.mxu0 0.0
    %9934 = vmatpush1.msra.mxu0 0.0
    %9935 = vmatprep.subr.mxu0 0.0
    %9936 = vmatpush1.msra.mxu0 0.0
    %9937 = vmatprep.subr.mxu0 0.0
    %9938 = vmatpush1.msra.mxu0 0.0
    %9939 = vmatprep.subr.mxu0 0.0
    %9940 = vmatpush1.msra.mxu0 0.0
    %9941 = vmatprep.subr.mxu0 0.0
    %9942 = vmatpush1.msra.mxu0 0.0
    %9943 = vmatprep.subr.mxu0 0.0
    %9944 = vmatpush1.msra.mxu0 0.0
    %9945 = vmatprep.subr.mxu0 0.0
    %9946 = vmatpush1.msra.mxu0 0.0
    %9947 = vmatprep.subr.mxu0 0.0
    %9948 = vmatpush1.msra.mxu0 0.0
    %9949 = vmatprep.subr.mxu0 0.0
    %9950 = vmatpush1.msra.mxu0 0.0
    %9951 = vmatprep.subr.mxu0 0.0
    %9952 = vmatpush1.msra.mxu0 0.0
    %9953 = vmatprep.subr.mxu0 0.0
    %9954 = vmatpush1.msra.mxu0 0.0
    %9955 = vmatprep.subr.mxu0 0.0
    %9956 = vmatpush1.msra.mxu0 0.0
    %9957 = vmatprep.subr.mxu0 0.0
    %9958 = vmatpush1.msra.mxu0 0.0
    %9959 = vmatprep.mubr.f32.mxu0 0.0
    %9960 = vmatmul.mubr.f32.gmra.mrb[0].mxu0 %v9890
    %v9961 = vpop.f32.mrb[0].mxu0
    %v9962 = vadd.f32 0.0, %v9961
    %v9963 = vpop.f32.mrb[0].mxu0
    %v9964 = vadd.f32 0.0, %v9963
    %9965 = vmatprep.mubr.f32.mxu0 0.0
    %9966 = vmatmul.mubr.f32.gmra.mrb[0].mxu0 %v9893
    %v9967 = vpop.f32.mrb[0].mxu0
    %v9968 = vadd.f32 0.0, %v9967
    %v9969 = vpop.f32.mrb[0].mxu0
    %v9970 = vadd.f32 0.0, %v9969
    %9971 = vdwg.mxu0
    %9972 = vmatprep.subr.mxu0 %v9828
    %9973 = vmatpush1.msra.mxu0 %v9827
    %9974 = vmatprep.subr.mxu0 %v9836
    %9975 = vmatpush1.msra.mxu0 %v9835
    %9976 = vmatprep.subr.mxu0 %v9844
    %9977 = vmatpush1.msra.mxu0 %v9843
    %9978 = vmatprep.subr.mxu0 %v9852
    %9979 = vmatpush1.msra.mxu0 %v9851
    %9980 = vmatprep.subr.mxu0 0.0
    %9981 = vmatpush1.msra.mxu0 0.0
    %9982 = vmatprep.subr.mxu0 0.0
    %9983 = vmatpush1.msra.mxu0 0.0
    %9984 = vmatprep.subr.mxu0 0.0
    %9985 = vmatpush1.msra.mxu0 0.0
    %9986 = vmatprep.subr.mxu0 0.0
    %9987 = vmatpush1.msra.mxu0 0.0
    %9988 = vmatprep.subr.mxu0 0.0
    %9989 = vmatpush1.msra.mxu0 0.0
    %9990 = vmatprep.subr.mxu0 0.0
    %9991 = vmatpush1.msra.mxu0 0.0
    %9992 = vmatprep.subr.mxu0 0.0
    %9993 = vmatpush1.msra.mxu0 0.0
    %9994 = vmatprep.subr.mxu0 0.0
    %9995 = vmatpush1.msra.mxu0 0.0
    %9996 = vmatprep.subr.mxu0 0.0
    %9997 = vmatpush1.msra.mxu0 0.0
    %9998 = vmatprep.subr.mxu0 0.0
    %9999 = vmatpush1.msra.mxu0 0.0
    %10000 = vmatprep.subr.mxu0 0.0
    %10001 = vmatpush1.msra.mxu0 0.0
    %10002 = vmatprep.subr.mxu0 0.0
    %10003 = vmatpush1.msra.mxu0 0.0
    %10004 = vmatprep.subr.mxu0 0.0
    %10005 = vmatpush1.msra.mxu0 0.0
    %10006 = vmatprep.subr.mxu0 0.0
    %10007 = vmatpush1.msra.mxu0 0.0
    %10008 = vmatprep.subr.mxu0 0.0
    %10009 = vmatpush1.msra.mxu0 0.0
    %10010 = vmatprep.subr.mxu0 0.0
    %10011 = vmatpush1.msra.mxu0 0.0
    %10012 = vmatprep.subr.mxu0 0.0
    %10013 = vmatpush1.msra.mxu0 0.0
    %10014 = vmatprep.subr.mxu0 0.0
    %10015 = vmatpush1.msra.mxu0 0.0
    %10016 = vmatprep.subr.mxu0 0.0
    %10017 = vmatpush1.msra.mxu0 0.0
    %10018 = vmatprep.subr.mxu0 0.0
    %10019 = vmatpush1.msra.mxu0 0.0
    %10020 = vmatprep.subr.mxu0 0.0
    %10021 = vmatpush1.msra.mxu0 0.0
    %10022 = vmatprep.subr.mxu0 0.0
    %10023 = vmatpush1.msra.mxu0 0.0
    %10024 = vmatprep.subr.mxu0 0.0
    %10025 = vmatpush1.msra.mxu0 0.0
    %10026 = vmatprep.subr.mxu0 0.0
    %10027 = vmatpush1.msra.mxu0 0.0
    %10028 = vmatprep.subr.mxu0 0.0
    %10029 = vmatpush1.msra.mxu0 0.0
    %10030 = vmatprep.subr.mxu0 0.0
    %10031 = vmatpush1.msra.mxu0 0.0
    %10032 = vmatprep.subr.mxu0 0.0
    %10033 = vmatpush1.msra.mxu0 0.0
    %10034 = vmatprep.subr.mxu0 0.0
    %10035 = vmatpush1.msra.mxu0 0.0
    %10036 = vmatprep.mubr.f32.mxu0 0.0
    %10037 = vmatmul.mubr.f32.gmra.mrb[0].mxu0 %v9890
    %v10038 = vpop.f32.mrb[0].mxu0
    %v10039 = vadd.f32 0.0, %v10038
    %v10040 = vpop.f32.mrb[0].mxu0
    %v10041 = vadd.f32 0.0, %v10040
    %10042 = vmatprep.mubr.f32.mxu0 0.0
    %10043 = vmatmul.mubr.f32.gmra.mrb[0].mxu0 %v9893
    %v10044 = vpop.f32.mrb[0].mxu0
    %v10045 = vadd.f32 0.0, %v10044
    %v10046 = vpop.f32.mrb[0].mxu0
    %v10047 = vadd.f32 0.0, %v10046
    %10048 = vdwg.mxu0
    %10049 = vmatprep.subr.mxu0 %v9830
    %10050 = vmatpush1.msra.mxu0 %v9829
    %10051 = vmatprep.subr.mxu0 %v9838
    %10052 = vmatpush1.msra.mxu0 %v9837
    %10053 = vmatprep.subr.mxu0 %v9846
    %10054 = vmatpush1.msra.mxu0 %v9845
    %10055 = vmatprep.subr.mxu0 %v9854
    %10056 = vmatpush1.msra.mxu0 %v9853
    %10057 = vmatprep.subr.mxu0 0.0
    %10058 = vmatpush1.msra.mxu0 0.0
    %10059 = vmatprep.subr.mxu0 0.0
    %10060 = vmatpush1.msra.mxu0 0.0
    %10061 = vmatprep.subr.mxu0 0.0
    %10062 = vmatpush1.msra.mxu0 0.0
    %10063 = vmatprep.subr.mxu0 0.0
    %10064 = vmatpush1.msra.mxu0 0.0
    %10065 = vmatprep.subr.mxu0 0.0
    %10066 = vmatpush1.msra.mxu0 0.0
    %10067 = vmatprep.subr.mxu0 0.0
    %10068 = vmatpush1.msra.mxu0 0.0
    %10069 = vmatprep.subr.mxu0 0.0
    %10070 = vmatpush1.msra.mxu0 0.0
    %10071 = vmatprep.subr.mxu0 0.0
    %10072 = vmatpush1.msra.mxu0 0.0
    %10073 = vmatprep.subr.mxu0 0.0
    %10074 = vmatpush1.msra.mxu0 0.0
    %10075 = vmatprep.subr.mxu0 0.0
    %10076 = vmatpush1.msra.mxu0 0.0
    %10077 = vmatprep.subr.mxu0 0.0
    %10078 = vmatpush1.msra.mxu0 0.0
    %10079 = vmatprep.subr.mxu0 0.0
    %10080 = vmatpush1.msra.mxu0 0.0
    %10081 = vmatprep.subr.mxu0 0.0
    %10082 = vmatpush1.msra.mxu0 0.0
    %10083 = vmatprep.subr.mxu0 0.0
    %10084 = vmatpush1.msra.mxu0 0.0
    %10085 = vmatprep.subr.mxu0 0.0
    %10086 = vmatpush1.msra.mxu0 0.0
    %10087 = vmatprep.subr.mxu0 0.0
    %10088 = vmatpush1.msra.mxu0 0.0
    %10089 = vmatprep.subr.mxu0 0.0
    %10090 = vmatpush1.msra.mxu0 0.0
    %10091 = vmatprep.subr.mxu0 0.0
    %10092 = vmatpush1.msra.mxu0 0.0
    %10093 = vmatprep.subr.mxu0 0.0
    %10094 = vmatpush1.msra.mxu0 0.0
    %10095 = vmatprep.subr.mxu0 0.0
    %10096 = vmatpush1.msra.mxu0 0.0
    %10097 = vmatprep.subr.mxu0 0.0
    %10098 = vmatpush1.msra.mxu0 0.0
    %10099 = vmatprep.subr.mxu0 0.0
    %10100 = vmatpush1.msra.mxu0 0.0
    %10101 = vmatprep.subr.mxu0 0.0
    %10102 = vmatpush1.msra.mxu0 0.0
    %10103 = vmatprep.subr.mxu0 0.0
    %10104 = vmatpush1.msra.mxu0 0.0
    %10105 = vmatprep.subr.mxu0 0.0
    %10106 = vmatpush1.msra.mxu0 0.0
    %10107 = vmatprep.subr.mxu0 0.0
    %10108 = vmatpush1.msra.mxu0 0.0
    %10109 = vmatprep.subr.mxu0 0.0
    %10110 = vmatpush1.msra.mxu0 0.0
    %10111 = vmatprep.subr.mxu0 0.0
    %10112 = vmatpush1.msra.mxu0 0.0
    %10113 = vmatprep.mubr.f32.mxu0 0.0
    %10114 = vmatmul.mubr.f32.gmra.mrb[0].mxu0 %v9890
    %v10115 = vpop.f32.mrb[0].mxu0
    %v10116 = vadd.f32 0.0, %v10115
    %v10117 = vpop.f32.mrb[0].mxu0
    %v10118 = vadd.f32 0.0, %v10117
    %10119 = vmatprep.mubr.f32.mxu0 0.0
    %10120 = vmatmul.mubr.f32.gmra.mrb[0].mxu0 %v9893
    %v10121 = vpop.f32.mrb[0].mxu0
    %v10122 = vadd.f32 0.0, %v10121
    %v10123 = vpop.f32.mrb[0].mxu0
    %v10124 = vadd.f32 0.0, %v10123
    %10125 = vdwg.mxu0
    %10126 = vmatprep.subr.mxu0 %v9832
    %10127 = vmatpush1.msra.mxu0 %v9831
    %10128 = vmatprep.subr.mxu0 %v9840
    %10129 = vmatpush1.msra.mxu0 %v9839
    %10130 = vmatprep.subr.mxu0 %v9848
    %10131 = vmatpush1.msra.mxu0 %v9847
    %10132 = vmatprep.subr.mxu0 %v9856
    %10133 = vmatpush1.msra.mxu0 %v9855
    %10134 = vmatprep.subr.mxu0 0.0
    %10135 = vmatpush1.msra.mxu0 0.0
    %10136 = vmatprep.subr.mxu0 0.0
    %10137 = vmatpush1.msra.mxu0 0.0
    %10138 = vmatprep.subr.mxu0 0.0
    %10139 = vmatpush1.msra.mxu0 0.0
    %10140 = vmatprep.subr.mxu0 0.0
    %10141 = vmatpush1.msra.mxu0 0.0
    %10142 = vmatprep.subr.mxu0 0.0
    %10143 = vmatpush1.msra.mxu0 0.0
    %10144 = vmatprep.subr.mxu0 0.0
    %10145 = vmatpush1.msra.mxu0 0.0
    %10146 = vmatprep.subr.mxu0 0.0
    %10147 = vmatpush1.msra.mxu0 0.0
    %10148 = vmatprep.subr.mxu0 0.0
    %10149 = vmatpush1.msra.mxu0 0.0
    %10150 = vmatprep.subr.mxu0 0.0
    %10151 = vmatpush1.msra.mxu0 0.0
    %10152 = vmatprep.subr.mxu0 0.0
    %10153 = vmatpush1.msra.mxu0 0.0
    %10154 = vmatprep.subr.mxu0 0.0
    %10155 = vmatpush1.msra.mxu0 0.0
    %10156 = vmatprep.subr.mxu0 0.0
    %10157 = vmatpush1.msra.mxu0 0.0
    %10158 = vmatprep.subr.mxu0 0.0
    %10159 = vmatpush1.msra.mxu0 0.0
    %10160 = vmatprep.subr.mxu0 0.0
    %10161 = vmatpush1.msra.mxu0 0.0
    %10162 = vmatprep.subr.mxu0 0.0
    %10163 = vmatpush1.msra.mxu0 0.0
    %10164 = vmatprep.subr.mxu0 0.0
    %10165 = vmatpush1.msra.mxu0 0.0
    %10166 = vmatprep.subr.mxu0 0.0
    %10167 = vmatpush1.msra.mxu0 0.0
    %10168 = vmatprep.subr.mxu0 0.0
    %10169 = vmatpush1.msra.mxu0 0.0
    %10170 = vmatprep.subr.mxu0 0.0
    %10171 = vmatpush1.msra.mxu0 0.0
    %10172 = vmatprep.subr.mxu0 0.0
    %10173 = vmatpush1.msra.mxu0 0.0
    %10174 = vmatprep.subr.mxu0 0.0
    %10175 = vmatpush1.msra.mxu0 0.0
    %10176 = vmatprep.subr.mxu0 0.0
    %10177 = vmatpush1.msra.mxu0 0.0
    %10178 = vmatprep.subr.mxu0 0.0
    %10179 = vmatpush1.msra.mxu0 0.0
    %10180 = vmatprep.subr.mxu0 0.0
    %10181 = vmatpush1.msra.mxu0 0.0
    %10182 = vmatprep.subr.mxu0 0.0
    %10183 = vmatpush1.msra.mxu0 0.0
    %10184 = vmatprep.subr.mxu0 0.0
    %10185 = vmatpush1.msra.mxu0 0.0
    %10186 = vmatprep.subr.mxu0 0.0
    %10187 = vmatpush1.msra.mxu0 0.0
    %10188 = vmatprep.subr.mxu0 0.0
    %10189 = vmatpush1.msra.mxu0 0.0
    %10190 = vmatprep.mubr.f32.mxu0 0.0
    %10191 = vmatmul.mubr.f32.gmra.mrb[0].mxu0 %v9890
    %v10192 = vpop.f32.mrb[0].mxu0
    %v10193 = vadd.f32 0.0, %v10192
    %v10194 = vpop.f32.mrb[0].mxu0
    %v10195 = vadd.f32 0.0, %v10194
    %10196 = vmatprep.mubr.f32.mxu0 0.0
    %10197 = vmatmul.mubr.f32.gmra.mrb[0].mxu0 %v9893
    %v10198 = vpop.f32.mrb[0].mxu0
    %v10199 = vadd.f32 0.0, %v10198
    %v10200 = vpop.f32.mrb[0].mxu0
    %v10201 = vadd.f32 0.0, %v10200
    %10202 = vdwg.mxu0
    %v10203 = vadd.f32 %v9734, %v9962
    %v10204 = vadd.f32 %v9735, %v9964
    %v10205 = vadd.f32 %v9736, %v10039
    %v10206 = vadd.f32 %v9737, %v10041
    %v10207 = vadd.f32 %v9738, %v10116
    %v10208 = vadd.f32 %v9739, %v10118
    %v10209 = vadd.f32 %v9740, %v10193
    %v10210 = vadd.f32 %v9741, %v10195
    %v10211 = vadd.f32 %v9742, %v9968
    %v10212 = vadd.f32 %v9743, %v9970
    %v10213 = vadd.f32 %v9744, %v10045
    %v10214 = vadd.f32 %v9745, %v10047
    %v10215 = vadd.f32 %v9746, %v10122
    %v10216 = vadd.f32 %v9747, %v10124
    %v10217 = vadd.f32 %v9748, %v10199
    %v10218 = vadd.f32 %v9749, %v10201
    %s10219 = scalar_lea.vmem %s5, 96
    %v10220 = vld [vmem:[%s10219] sm:$0xff]
    %v10221 = vld [vmem:[%s10219 + $0x8] sm:$0x1]
    %10222 = vrot.lane.b32.xlu0 %v7503, 84
    %v10223 = vpop.permute.xlu0 %10222
    %10224 = vrot.lane.b32.xlu0 %v7504, 84
    %v10225 = vpop.permute.xlu0 %10224
    %10226 = vrot.lane.b32.xlu0 %v7505, 84
    %v10227 = vpop.permute.xlu0 %10226
    %10228 = vrot.lane.b32.xlu0 %v7506, 84
    %v10229 = vpop.permute.xlu0 %10228
    %10230 = vrot.lane.b32.xlu0 %v7507, 84
    %v10231 = vpop.permute.xlu0 %10230
    %10232 = vrot.lane.b32.xlu0 %v7508, 84
    %v10233 = vpop.permute.xlu0 %10232
    %10234 = vrot.lane.b32.xlu0 %v7509, 84
    %v10235 = vpop.permute.xlu0 %10234
    %10236 = vrot.lane.b32.xlu0 %v7510, 84
    %v10237 = vpop.permute.xlu0 %10236
    %10238 = vrot.lane.b32.xlu0 %v7538, 84
    %v10239 = vpop.permute.xlu0 %10238
    %10240 = vrot.lane.b32.xlu0 %v7511, 84
    %v10241 = vpop.permute.xlu0 %10240
    %10242 = vrot.lane.b32.xlu0 %v7512, 84
    %v10243 = vpop.permute.xlu0 %10242
    %10244 = vrot.lane.b32.xlu0 %v7513, 84
    %v10245 = vpop.permute.xlu0 %10244
    %10246 = vrot.lane.b32.xlu0 %v7514, 84
    %v10247 = vpop.permute.xlu0 %10246
    %10248 = vrot.lane.b32.xlu0 %v7515, 84
    %v10249 = vpop.permute.xlu0 %10248
    %10250 = vrot.lane.b32.xlu0 %v7516, 84
    %v10251 = vpop.permute.xlu0 %10250
    %10252 = vrot.lane.b32.xlu0 %v7517, 84
    %v10253 = vpop.permute.xlu0 %10252
    %10254 = vrot.lane.b32.xlu0 %v7518, 84
    %v10255 = vpop.permute.xlu0 %10254
    %10256 = vrot.lane.b32.xlu0 %v7539, 84
    %v10257 = vpop.permute.xlu0 %10256
    %10258 = vrot.lane.b32.xlu0 %v7519, 84
    %v10259 = vpop.permute.xlu0 %10258
    %10260 = vrot.lane.b32.xlu0 %v7520, 84
    %v10261 = vpop.permute.xlu0 %10260
    %10262 = vrot.lane.b32.xlu0 %v7521, 84
    %v10263 = vpop.permute.xlu0 %10262
    %10264 = vrot.lane.b32.xlu0 %v7522, 84
    %v10265 = vpop.permute.xlu0 %10264
    %10266 = vrot.lane.b32.xlu0 %v7523, 84
    %v10267 = vpop.permute.xlu0 %10266
    %10268 = vrot.lane.b32.xlu0 %v7524, 84
    %v10269 = vpop.permute.xlu0 %10268
    %10270 = vrot.lane.b32.xlu0 %v7525, 84
    %v10271 = vpop.permute.xlu0 %10270
    %10272 = vrot.lane.b32.xlu0 %v7526, 84
    %v10273 = vpop.permute.xlu0 %10272
    %10274 = vrot.lane.b32.xlu0 %v7540, 84
    %v10275 = vpop.permute.xlu0 %10274
    %10276 = vrot.lane.b32.xlu0 %v7527, 84
    %v10277 = vpop.permute.xlu0 %10276
    %10278 = vrot.lane.b32.xlu0 %v7528, 84
    %v10279 = vpop.permute.xlu0 %10278
    %10280 = vrot.lane.b32.xlu0 %v7529, 84
    %v10281 = vpop.permute.xlu0 %10280
    %10282 = vrot.lane.b32.xlu0 %v7530, 84
    %v10283 = vpop.permute.xlu0 %10282
    %10284 = vrot.lane.b32.xlu0 %v7531, 84
    %v10285 = vpop.permute.xlu0 %10284
    %10286 = vrot.lane.b32.xlu0 %v7532, 84
    %v10287 = vpop.permute.xlu0 %10286
    %10288 = vrot.lane.b32.xlu0 %v7533, 84
    %v10289 = vpop.permute.xlu0 %10288
    %10290 = vrot.lane.b32.xlu0 %v7534, 84
    %v10291 = vpop.permute.xlu0 %10290
    %10292 = vrot.lane.b32.xlu0 %v7541, 84
    %v10293 = vpop.permute.xlu0 %10292
    %v10294 = vsel %vm245, %v10223, %v10225
    %v10295 = vsel %vm245, %v10225, %v10227
    %v10296 = vsel %vm245, %v10227, %v10229
    %v10297 = vsel %vm245, %v10229, %v10231
    %v10298 = vsel %vm245, %v10231, %v10233
    %v10299 = vsel %vm245, %v10233, %v10235
    %v10300 = vsel %vm245, %v10235, %v10237
    %v10301 = vsel %vm245, %v10237, %v10239
    %v10302 = vsel %vm245, %v10241, %v10243
    %v10303 = vsel %vm245, %v10243, %v10245
    %v10304 = vsel %vm245, %v10245, %v10247
    %v10305 = vsel %vm245, %v10247, %v10249
    %v10306 = vsel %vm245, %v10249, %v10251
    %v10307 = vsel %vm245, %v10251, %v10253
    %v10308 = vsel %vm245, %v10253, %v10255
    %v10309 = vsel %vm245, %v10255, %v10257
    %v10310 = vsel %vm245, %v10259, %v10261
    %v10311 = vsel %vm245, %v10261, %v10263
    %v10312 = vsel %vm245, %v10263, %v10265
    %v10313 = vsel %vm245, %v10265, %v10267
    %v10314 = vsel %vm245, %v10267, %v10269
    %v10315 = vsel %vm245, %v10269, %v10271
    %v10316 = vsel %vm245, %v10271, %v10273
    %v10317 = vsel %vm245, %v10273, %v10275
    %v10318 = vsel %vm245, %v10277, %v10279
    %v10319 = vsel %vm245, %v10279, %v10281
    %v10320 = vsel %vm245, %v10281, %v10283
    %v10321 = vsel %vm245, %v10283, %v10285
    %v10322 = vsel %vm245, %v10285, %v10287
    %v10323 = vsel %vm245, %v10287, %v10289
    %v10324 = vsel %vm245, %v10289, %v10291
    %v10325 = vsel %vm245, %v10291, %v10293
    %v10359 = vsel %vm7714, %v10220, 0
    %v10362 = vsel %vm7714, %v10221, 0
    %10364 = vmatprep.subr.mxu0 %v10295
    %10365 = vmatpush1.msra.mxu0 %v10294
    %10366 = vmatprep.subr.mxu0 %v10303
    %10367 = vmatpush1.msra.mxu0 %v10302
    %10368 = vmatprep.subr.mxu0 %v10311
    %10369 = vmatpush1.msra.mxu0 %v10310
    %10370 = vmatprep.subr.mxu0 %v10319
    %10371 = vmatpush1.msra.mxu0 %v10318
    %10372 = vmatprep.subr.mxu0 0.0
    %10373 = vmatpush1.msra.mxu0 0.0
    %10374 = vmatprep.subr.mxu0 0.0
    %10375 = vmatpush1.msra.mxu0 0.0
    %10376 = vmatprep.subr.mxu0 0.0
    %10377 = vmatpush1.msra.mxu0 0.0
    %10378 = vmatprep.subr.mxu0 0.0
    %10379 = vmatpush1.msra.mxu0 0.0
    %10380 = vmatprep.subr.mxu0 0.0
    %10381 = vmatpush1.msra.mxu0 0.0
    %10382 = vmatprep.subr.mxu0 0.0
    %10383 = vmatpush1.msra.mxu0 0.0
    %10384 = vmatprep.subr.mxu0 0.0
    %10385 = vmatpush1.msra.mxu0 0.0
    %10386 = vmatprep.subr.mxu0 0.0
    %10387 = vmatpush1.msra.mxu0 0.0
    %10388 = vmatprep.subr.mxu0 0.0
    %10389 = vmatpush1.msra.mxu0 0.0
    %10390 = vmatprep.subr.mxu0 0.0
    %10391 = vmatpush1.msra.mxu0 0.0
    %10392 = vmatprep.subr.mxu0 0.0
    %10393 = vmatpush1.msra.mxu0 0.0
    %10394 = vmatprep.subr.mxu0 0.0
    %10395 = vmatpush1.msra.mxu0 0.0
    %10396 = vmatprep.subr.mxu0 0.0
    %10397 = vmatpush1.msra.mxu0 0.0
    %10398 = vmatprep.subr.mxu0 0.0
    %10399 = vmatpush1.msra.mxu0 0.0
    %10400 = vmatprep.subr.mxu0 0.0
    %10401 = vmatpush1.msra.mxu0 0.0
    %10402 = vmatprep.subr.mxu0 0.0
    %10403 = vmatpush1.msra.mxu0 0.0
    %10404 = vmatprep.subr.mxu0 0.0
    %10405 = vmatpush1.msra.mxu0 0.0
    %10406 = vmatprep.subr.mxu0 0.0
    %10407 = vmatpush1.msra.mxu0 0.0
    %10408 = vmatprep.subr.mxu0 0.0
    %10409 = vmatpush1.msra.mxu0 0.0
    %10410 = vmatprep.subr.mxu0 0.0
    %10411 = vmatpush1.msra.mxu0 0.0
    %10412 = vmatprep.subr.mxu0 0.0
    %10413 = vmatpush1.msra.mxu0 0.0
    %10414 = vmatprep.subr.mxu0 0.0
    %10415 = vmatpush1.msra.mxu0 0.0
    %10416 = vmatprep.subr.mxu0 0.0
    %10417 = vmatpush1.msra.mxu0 0.0
    %10418 = vmatprep.subr.mxu0 0.0
    %10419 = vmatpush1.msra.mxu0 0.0
    %10420 = vmatprep.subr.mxu0 0.0
    %10421 = vmatpush1.msra.mxu0 0.0
    %10422 = vmatprep.subr.mxu0 0.0
    %10423 = vmatpush1.msra.mxu0 0.0
    %10424 = vmatprep.subr.mxu0 0.0
    %10425 = vmatpush1.msra.mxu0 0.0
    %10426 = vmatprep.subr.mxu0 0.0
    %10427 = vmatpush1.msra.mxu0 0.0
    %10428 = vmatprep.mubr.f32.mxu0 0.0
    %10429 = vmatmul.mubr.f32.gmra.mrb[0].mxu0 %v10359
    %v10430 = vpop.f32.mrb[0].mxu0
    %v10431 = vadd.f32 0.0, %v10430
    %v10432 = vpop.f32.mrb[0].mxu0
    %v10433 = vadd.f32 0.0, %v10432
    %10434 = vmatprep.mubr.f32.mxu0 0.0
    %10435 = vmatmul.mubr.f32.gmra.mrb[0].mxu0 %v10362
    %v10436 = vpop.f32.mrb[0].mxu0
    %v10437 = vadd.f32 0.0, %v10436
    %v10438 = vpop.f32.mrb[0].mxu0
    %v10439 = vadd.f32 0.0, %v10438
    %10440 = vdwg.mxu0
    %10441 = vmatprep.subr.mxu0 %v10297
    %10442 = vmatpush1.msra.mxu0 %v10296
    %10443 = vmatprep.subr.mxu0 %v10305
    %10444 = vmatpush1.msra.mxu0 %v10304
    %10445 = vmatprep.subr.mxu0 %v10313
    %10446 = vmatpush1.msra.mxu0 %v10312
    %10447 = vmatprep.subr.mxu0 %v10321
    %10448 = vmatpush1.msra.mxu0 %v10320
    %10449 = vmatprep.subr.mxu0 0.0
    %10450 = vmatpush1.msra.mxu0 0.0
    %10451 = vmatprep.subr.mxu0 0.0
    %10452 = vmatpush1.msra.mxu0 0.0
    %10453 = vmatprep.subr.mxu0 0.0
    %10454 = vmatpush1.msra.mxu0 0.0
    %10455 = vmatprep.subr.mxu0 0.0
    %10456 = vmatpush1.msra.mxu0 0.0
    %10457 = vmatprep.subr.mxu0 0.0
    %10458 = vmatpush1.msra.mxu0 0.0
    %10459 = vmatprep.subr.mxu0 0.0
    %10460 = vmatpush1.msra.mxu0 0.0
    %10461 = vmatprep.subr.mxu0 0.0
    %10462 = vmatpush1.msra.mxu0 0.0
    %10463 = vmatprep.subr.mxu0 0.0
    %10464 = vmatpush1.msra.mxu0 0.0
    %10465 = vmatprep.subr.mxu0 0.0
    %10466 = vmatpush1.msra.mxu0 0.0
    %10467 = vmatprep.subr.mxu0 0.0
    %10468 = vmatpush1.msra.mxu0 0.0
    %10469 = vmatprep.subr.mxu0 0.0
    %10470 = vmatpush1.msra.mxu0 0.0
    %10471 = vmatprep.subr.mxu0 0.0
    %10472 = vmatpush1.msra.mxu0 0.0
    %10473 = vmatprep.subr.mxu0 0.0
    %10474 = vmatpush1.msra.mxu0 0.0
    %10475 = vmatprep.subr.mxu0 0.0
    %10476 = vmatpush1.msra.mxu0 0.0
    %10477 = vmatprep.subr.mxu0 0.0
    %10478 = vmatpush1.msra.mxu0 0.0
    %10479 = vmatprep.subr.mxu0 0.0
    %10480 = vmatpush1.msra.mxu0 0.0
    %10481 = vmatprep.subr.mxu0 0.0
    %10482 = vmatpush1.msra.mxu0 0.0
    %10483 = vmatprep.subr.mxu0 0.0
    %10484 = vmatpush1.msra.mxu0 0.0
    %10485 = vmatprep.subr.mxu0 0.0
    %10486 = vmatpush1.msra.mxu0 0.0
    %10487 = vmatprep.subr.mxu0 0.0
    %10488 = vmatpush1.msra.mxu0 0.0
    %10489 = vmatprep.subr.mxu0 0.0
    %10490 = vmatpush1.msra.mxu0 0.0
    %10491 = vmatprep.subr.mxu0 0.0
    %10492 = vmatpush1.msra.mxu0 0.0
    %10493 = vmatprep.subr.mxu0 0.0
    %10494 = vmatpush1.msra.mxu0 0.0
    %10495 = vmatprep.subr.mxu0 0.0
    %10496 = vmatpush1.msra.mxu0 0.0
    %10497 = vmatprep.subr.mxu0 0.0
    %10498 = vmatpush1.msra.mxu0 0.0
    %10499 = vmatprep.subr.mxu0 0.0
    %10500 = vmatpush1.msra.mxu0 0.0
    %10501 = vmatprep.subr.mxu0 0.0
    %10502 = vmatpush1.msra.mxu0 0.0
    %10503 = vmatprep.subr.mxu0 0.0
    %10504 = vmatpush1.msra.mxu0 0.0
    %10505 = vmatprep.mubr.f32.mxu0 0.0
    %10506 = vmatmul.mubr.f32.gmra.mrb[0].mxu0 %v10359
    %v10507 = vpop.f32.mrb[0].mxu0
    %v10508 = vadd.f32 0.0, %v10507
    %v10509 = vpop.f32.mrb[0].mxu0
    %v10510 = vadd.f32 0.0, %v10509
    %10511 = vmatprep.mubr.f32.mxu0 0.0
    %10512 = vmatmul.mubr.f32.gmra.mrb[0].mxu0 %v10362
    %v10513 = vpop.f32.mrb[0].mxu0
    %v10514 = vadd.f32 0.0, %v10513
    %v10515 = vpop.f32.mrb[0].mxu0
    %v10516 = vadd.f32 0.0, %v10515
    %10517 = vdwg.mxu0
    %10518 = vmatprep.subr.mxu0 %v10299
    %10519 = vmatpush1.msra.mxu0 %v10298
    %10520 = vmatprep.subr.mxu0 %v10307
    %10521 = vmatpush1.msra.mxu0 %v10306
    %10522 = vmatprep.subr.mxu0 %v10315
    %10523 = vmatpush1.msra.mxu0 %v10314
    %10524 = vmatprep.subr.mxu0 %v10323
    %10525 = vmatpush1.msra.mxu0 %v10322
    %10526 = vmatprep.subr.mxu0 0.0
    %10527 = vmatpush1.msra.mxu0 0.0
    %10528 = vmatprep.subr.mxu0 0.0
    %10529 = vmatpush1.msra.mxu0 0.0
    %10530 = vmatprep.subr.mxu0 0.0
    %10531 = vmatpush1.msra.mxu0 0.0
    %10532 = vmatprep.subr.mxu0 0.0
    %10533 = vmatpush1.msra.mxu0 0.0
    %10534 = vmatprep.subr.mxu0 0.0
    %10535 = vmatpush1.msra.mxu0 0.0
    %10536 = vmatprep.subr.mxu0 0.0
    %10537 = vmatpush1.msra.mxu0 0.0
    %10538 = vmatprep.subr.mxu0 0.0
    %10539 = vmatpush1.msra.mxu0 0.0
    %10540 = vmatprep.subr.mxu0 0.0
    %10541 = vmatpush1.msra.mxu0 0.0
    %10542 = vmatprep.subr.mxu0 0.0
    %10543 = vmatpush1.msra.mxu0 0.0
    %10544 = vmatprep.subr.mxu0 0.0
    %10545 = vmatpush1.msra.mxu0 0.0
    %10546 = vmatprep.subr.mxu0 0.0
    %10547 = vmatpush1.msra.mxu0 0.0
    %10548 = vmatprep.subr.mxu0 0.0
    %10549 = vmatpush1.msra.mxu0 0.0
    %10550 = vmatprep.subr.mxu0 0.0
    %10551 = vmatpush1.msra.mxu0 0.0
    %10552 = vmatprep.subr.mxu0 0.0
    %10553 = vmatpush1.msra.mxu0 0.0
    %10554 = vmatprep.subr.mxu0 0.0
    %10555 = vmatpush1.msra.mxu0 0.0
    %10556 = vmatprep.subr.mxu0 0.0
    %10557 = vmatpush1.msra.mxu0 0.0
    %10558 = vmatprep.subr.mxu0 0.0
    %10559 = vmatpush1.msra.mxu0 0.0
    %10560 = vmatprep.subr.mxu0 0.0
    %10561 = vmatpush1.msra.mxu0 0.0
    %10562 = vmatprep.subr.mxu0 0.0
    %10563 = vmatpush1.msra.mxu0 0.0
    %10564 = vmatprep.subr.mxu0 0.0
    %10565 = vmatpush1.msra.mxu0 0.0
    %10566 = vmatprep.subr.mxu0 0.0
    %10567 = vmatpush1.msra.mxu0 0.0
    %10568 = vmatprep.subr.mxu0 0.0
    %10569 = vmatpush1.msra.mxu0 0.0
    %10570 = vmatprep.subr.mxu0 0.0
    %10571 = vmatpush1.msra.mxu0 0.0
    %10572 = vmatprep.subr.mxu0 0.0
    %10573 = vmatpush1.msra.mxu0 0.0
    %10574 = vmatprep.subr.mxu0 0.0
    %10575 = vmatpush1.msra.mxu0 0.0
    %10576 = vmatprep.subr.mxu0 0.0
    %10577 = vmatpush1.msra.mxu0 0.0
    %10578 = vmatprep.subr.mxu0 0.0
    %10579 = vmatpush1.msra.mxu0 0.0
    %10580 = vmatprep.subr.mxu0 0.0
    %10581 = vmatpush1.msra.mxu0 0.0
    %10582 = vmatprep.mubr.f32.mxu0 0.0
    %10583 = vmatmul.mubr.f32.gmra.mrb[0].mxu0 %v10359
    %v10584 = vpop.f32.mrb[0].mxu0
    %v10585 = vadd.f32 0.0, %v10584
    %v10586 = vpop.f32.mrb[0].mxu0
    %v10587 = vadd.f32 0.0, %v10586
    %10588 = vmatprep.mubr.f32.mxu0 0.0
    %10589 = vmatmul.mubr.f32.gmra.mrb[0].mxu0 %v10362
    %v10590 = vpop.f32.mrb[0].mxu0
    %v10591 = vadd.f32 0.0, %v10590
    %v10592 = vpop.f32.mrb[0].mxu0
    %v10593 = vadd.f32 0.0, %v10592
    %10594 = vdwg.mxu0
    %10595 = vmatprep.subr.mxu0 %v10301
    %10596 = vmatpush1.msra.mxu0 %v10300
    %10597 = vmatprep.subr.mxu0 %v10309
    %10598 = vmatpush1.msra.mxu0 %v10308
    %10599 = vmatprep.subr.mxu0 %v10317
    %10600 = vmatpush1.msra.mxu0 %v10316
    %10601 = vmatprep.subr.mxu0 %v10325
    %10602 = vmatpush1.msra.mxu0 %v10324
    %10603 = vmatprep.subr.mxu0 0.0
    %10604 = vmatpush1.msra.mxu0 0.0
    %10605 = vmatprep.subr.mxu0 0.0
    %10606 = vmatpush1.msra.mxu0 0.0
    %10607 = vmatprep.subr.mxu0 0.0
    %10608 = vmatpush1.msra.mxu0 0.0
    %10609 = vmatprep.subr.mxu0 0.0
    %10610 = vmatpush1.msra.mxu0 0.0
    %10611 = vmatprep.subr.mxu0 0.0
    %10612 = vmatpush1.msra.mxu0 0.0
    %10613 = vmatprep.subr.mxu0 0.0
    %10614 = vmatpush1.msra.mxu0 0.0
    %10615 = vmatprep.subr.mxu0 0.0
    %10616 = vmatpush1.msra.mxu0 0.0
    %10617 = vmatprep.subr.mxu0 0.0
    %10618 = vmatpush1.msra.mxu0 0.0
    %10619 = vmatprep.subr.mxu0 0.0
    %10620 = vmatpush1.msra.mxu0 0.0
    %10621 = vmatprep.subr.mxu0 0.0
    %10622 = vmatpush1.msra.mxu0 0.0
    %10623 = vmatprep.subr.mxu0 0.0
    %10624 = vmatpush1.msra.mxu0 0.0
    %10625 = vmatprep.subr.mxu0 0.0
    %10626 = vmatpush1.msra.mxu0 0.0
    %10627 = vmatprep.subr.mxu0 0.0
    %10628 = vmatpush1.msra.mxu0 0.0
    %10629 = vmatprep.subr.mxu0 0.0
    %10630 = vmatpush1.msra.mxu0 0.0
    %10631 = vmatprep.subr.mxu0 0.0
    %10632 = vmatpush1.msra.mxu0 0.0
    %10633 = vmatprep.subr.mxu0 0.0
    %10634 = vmatpush1.msra.mxu0 0.0
    %10635 = vmatprep.subr.mxu0 0.0
    %10636 = vmatpush1.msra.mxu0 0.0
    %10637 = vmatprep.subr.mxu0 0.0
    %10638 = vmatpush1.msra.mxu0 0.0
    %10639 = vmatprep.subr.mxu0 0.0
    %10640 = vmatpush1.msra.mxu0 0.0
    %10641 = vmatprep.subr.mxu0 0.0
    %10642 = vmatpush1.msra.mxu0 0.0
    %10643 = vmatprep.subr.mxu0 0.0
    %10644 = vmatpush1.msra.mxu0 0.0
    %10645 = vmatprep.subr.mxu0 0.0
    %10646 = vmatpush1.msra.mxu0 0.0
    %10647 = vmatprep.subr.mxu0 0.0
    %10648 = vmatpush1.msra.mxu0 0.0
    %10649 = vmatprep.subr.mxu0 0.0
    %10650 = vmatpush1.msra.mxu0 0.0
    %10651 = vmatprep.subr.mxu0 0.0
    %10652 = vmatpush1.msra.mxu0 0.0
    %10653 = vmatprep.subr.mxu0 0.0
    %10654 = vmatpush1.msra.mxu0 0.0
    %10655 = vmatprep.subr.mxu0 0.0
    %10656 = vmatpush1.msra.mxu0 0.0
    %10657 = vmatprep.subr.mxu0 0.0
    %10658 = vmatpush1.msra.mxu0 0.0
    %10659 = vmatprep.mubr.f32.mxu0 0.0
    %10660 = vmatmul.mubr.f32.gmra.mrb[0].mxu0 %v10359
    %v10661 = vpop.f32.mrb[0].mxu0
    %v10662 = vadd.f32 0.0, %v10661
    %v10663 = vpop.f32.mrb[0].mxu0
    %v10664 = vadd.f32 0.0, %v10663
    %10665 = vmatprep.mubr.f32.mxu0 0.0
    %10666 = vmatmul.mubr.f32.gmra.mrb[0].mxu0 %v10362
    %v10667 = vpop.f32.mrb[0].mxu0
    %v10668 = vadd.f32 0.0, %v10667
    %v10669 = vpop.f32.mrb[0].mxu0
    %v10670 = vadd.f32 0.0, %v10669
    %10671 = vdwg.mxu0
    %v10672 = vadd.f32 %v10203, %v10431
    %v10673 = vadd.f32 %v10204, %v10433
    %v10674 = vadd.f32 %v10205, %v10508
    %v10675 = vadd.f32 %v10206, %v10510
    %v10676 = vadd.f32 %v10207, %v10585
    %v10677 = vadd.f32 %v10208, %v10587
    %v10678 = vadd.f32 %v10209, %v10662
    %v10679 = vadd.f32 %v10210, %v10664
    %v10680 = vadd.f32 %v10211, %v10437
    %v10681 = vadd.f32 %v10212, %v10439
    %v10682 = vadd.f32 %v10213, %v10514
    %v10683 = vadd.f32 %v10214, %v10516
    %v10684 = vadd.f32 %v10215, %v10591
    %v10685 = vadd.f32 %v10216, %v10593
    %v10686 = vadd.f32 %v10217, %v10668
    %v10687 = vadd.f32 %v10218, %v10670
    %s10688 = scalar_lea.vmem %s5, 112
    %v10689 = vld [vmem:[%s10688] sm:$0xff]
    %v10690 = vld [vmem:[%s10688 + $0x8] sm:$0x1]
    %10691 = vrot.lane.b32.xlu0 %v7503, 83
    %v10692 = vpop.permute.xlu0 %10691
    %10693 = vrot.lane.b32.xlu0 %v7504, 83
    %v10694 = vpop.permute.xlu0 %10693
    %10695 = vrot.lane.b32.xlu0 %v7505, 83
    %v10696 = vpop.permute.xlu0 %10695
    %10697 = vrot.lane.b32.xlu0 %v7506, 83
    %v10698 = vpop.permute.xlu0 %10697
    %10699 = vrot.lane.b32.xlu0 %v7507, 83
    %v10700 = vpop.permute.xlu0 %10699
    %10701 = vrot.lane.b32.xlu0 %v7508, 83
    %v10702 = vpop.permute.xlu0 %10701
    %10703 = vrot.lane.b32.xlu0 %v7509, 83
    %v10704 = vpop.permute.xlu0 %10703
    %10705 = vrot.lane.b32.xlu0 %v7510, 83
    %v10706 = vpop.permute.xlu0 %10705
    %10707 = vrot.lane.b32.xlu0 %v7538, 83
    %v10708 = vpop.permute.xlu0 %10707
    %10709 = vrot.lane.b32.xlu0 %v7511, 83
    %v10710 = vpop.permute.xlu0 %10709
    %10711 = vrot.lane.b32.xlu0 %v7512, 83
    %v10712 = vpop.permute.xlu0 %10711
    %10713 = vrot.lane.b32.xlu0 %v7513, 83
    %v10714 = vpop.permute.xlu0 %10713
    %10715 = vrot.lane.b32.xlu0 %v7514, 83
    %v10716 = vpop.permute.xlu0 %10715
    %10717 = vrot.lane.b32.xlu0 %v7515, 83
    %v10718 = vpop.permute.xlu0 %10717
    %10719 = vrot.lane.b32.xlu0 %v7516, 83
    %v10720 = vpop.permute.xlu0 %10719
    %10721 = vrot.lane.b32.xlu0 %v7517, 83
    %v10722 = vpop.permute.xlu0 %10721
    %10723 = vrot.lane.b32.xlu0 %v7518, 83
    %v10724 = vpop.permute.xlu0 %10723
    %10725 = vrot.lane.b32.xlu0 %v7539, 83
    %v10726 = vpop.permute.xlu0 %10725
    %10727 = vrot.lane.b32.xlu0 %v7519, 83
    %v10728 = vpop.permute.xlu0 %10727
    %10729 = vrot.lane.b32.xlu0 %v7520, 83
    %v10730 = vpop.permute.xlu0 %10729
    %10731 = vrot.lane.b32.xlu0 %v7521, 83
    %v10732 = vpop.permute.xlu0 %10731
    %10733 = vrot.lane.b32.xlu0 %v7522, 83
    %v10734 = vpop.permute.xlu0 %10733
    %10735 = vrot.lane.b32.xlu0 %v7523, 83
    %v10736 = vpop.permute.xlu0 %10735
    %10737 = vrot.lane.b32.xlu0 %v7524, 83
    %v10738 = vpop.permute.xlu0 %10737
    %10739 = vrot.lane.b32.xlu0 %v7525, 83
    %v10740 = vpop.permute.xlu0 %10739
    %10741 = vrot.lane.b32.xlu0 %v7526, 83
    %v10742 = vpop.permute.xlu0 %10741
    %10743 = vrot.lane.b32.xlu0 %v7540, 83
    %v10744 = vpop.permute.xlu0 %10743
    %10745 = vrot.lane.b32.xlu0 %v7527, 83
    %v10746 = vpop.permute.xlu0 %10745
    %10747 = vrot.lane.b32.xlu0 %v7528, 83
    %v10748 = vpop.permute.xlu0 %10747
    %10749 = vrot.lane.b32.xlu0 %v7529, 83
    %v10750 = vpop.permute.xlu0 %10749
    %10751 = vrot.lane.b32.xlu0 %v7530, 83
    %v10752 = vpop.permute.xlu0 %10751
    %10753 = vrot.lane.b32.xlu0 %v7531, 83
    %v10754 = vpop.permute.xlu0 %10753
    %10755 = vrot.lane.b32.xlu0 %v7532, 83
    %v10756 = vpop.permute.xlu0 %10755
    %10757 = vrot.lane.b32.xlu0 %v7533, 83
    %v10758 = vpop.permute.xlu0 %10757
    %10759 = vrot.lane.b32.xlu0 %v7534, 83
    %v10760 = vpop.permute.xlu0 %10759
    %10761 = vrot.lane.b32.xlu0 %v7541, 83
    %v10762 = vpop.permute.xlu0 %10761
    %v10763 = vsel %vm264, %v10692, %v10694
    %v10764 = vsel %vm264, %v10694, %v10696
    %v10765 = vsel %vm264, %v10696, %v10698
    %v10766 = vsel %vm264, %v10698, %v10700
    %v10767 = vsel %vm264, %v10700, %v10702
    %v10768 = vsel %vm264, %v10702, %v10704
    %v10769 = vsel %vm264, %v10704, %v10706
    %v10770 = vsel %vm264, %v10706, %v10708
    %v10771 = vsel %vm264, %v10710, %v10712
    %v10772 = vsel %vm264, %v10712, %v10714
    %v10773 = vsel %vm264, %v10714, %v10716
    %v10774 = vsel %vm264, %v10716, %v10718
    %v10775 = vsel %vm264, %v10718, %v10720
    %v10776 = vsel %vm264, %v10720, %v10722
    %v10777 = vsel %vm264, %v10722, %v10724
    %v10778 = vsel %vm264, %v10724, %v10726
    %v10779 = vsel %vm264, %v10728, %v10730
    %v10780 = vsel %vm264, %v10730, %v10732
    %v10781 = vsel %vm264, %v10732, %v10734
    %v10782 = vsel %vm264, %v10734, %v10736
    %v10783 = vsel %vm264, %v10736, %v10738
    %v10784 = vsel %vm264, %v10738, %v10740
    %v10785 = vsel %vm264, %v10740, %v10742
    %v10786 = vsel %vm264, %v10742, %v10744
    %v10787 = vsel %vm264, %v10746, %v10748
    %v10788 = vsel %vm264, %v10748, %v10750
    %v10789 = vsel %vm264, %v10750, %v10752
    %v10790 = vsel %vm264, %v10752, %v10754
    %v10791 = vsel %vm264, %v10754, %v10756
    %v10792 = vsel %vm264, %v10756, %v10758
    %v10793 = vsel %vm264, %v10758, %v10760
    %v10794 = vsel %vm264, %v10760, %v10762
    %v10828 = vsel %vm7714, %v10689, 0
    %v10831 = vsel %vm7714, %v10690, 0
    %10833 = vmatprep.subr.mxu0 %v10764
    %10834 = vmatpush1.msra.mxu0 %v10763
    %10835 = vmatprep.subr.mxu0 %v10772
    %10836 = vmatpush1.msra.mxu0 %v10771
    %10837 = vmatprep.subr.mxu0 %v10780
    %10838 = vmatpush1.msra.mxu0 %v10779
    %10839 = vmatprep.subr.mxu0 %v10788
    %10840 = vmatpush1.msra.mxu0 %v10787
    %10841 = vmatprep.subr.mxu0 0.0
    %10842 = vmatpush1.msra.mxu0 0.0
    %10843 = vmatprep.subr.mxu0 0.0
    %10844 = vmatpush1.msra.mxu0 0.0
    %10845 = vmatprep.subr.mxu0 0.0
    %10846 = vmatpush1.msra.mxu0 0.0
    %10847 = vmatprep.subr.mxu0 0.0
    %10848 = vmatpush1.msra.mxu0 0.0
    %10849 = vmatprep.subr.mxu0 0.0
    %10850 = vmatpush1.msra.mxu0 0.0
    %10851 = vmatprep.subr.mxu0 0.0
    %10852 = vmatpush1.msra.mxu0 0.0
    %10853 = vmatprep.subr.mxu0 0.0
    %10854 = vmatpush1.msra.mxu0 0.0
    %10855 = vmatprep.subr.mxu0 0.0
    %10856 = vmatpush1.msra.mxu0 0.0
    %10857 = vmatprep.subr.mxu0 0.0
    %10858 = vmatpush1.msra.mxu0 0.0
    %10859 = vmatprep.subr.mxu0 0.0
    %10860 = vmatpush1.msra.mxu0 0.0
    %10861 = vmatprep.subr.mxu0 0.0
    %10862 = vmatpush1.msra.mxu0 0.0
    %10863 = vmatprep.subr.mxu0 0.0
    %10864 = vmatpush1.msra.mxu0 0.0
    %10865 = vmatprep.subr.mxu0 0.0
    %10866 = vmatpush1.msra.mxu0 0.0
    %10867 = vmatprep.subr.mxu0 0.0
    %10868 = vmatpush1.msra.mxu0 0.0
    %10869 = vmatprep.subr.mxu0 0.0
    %10870 = vmatpush1.msra.mxu0 0.0
    %10871 = vmatprep.subr.mxu0 0.0
    %10872 = vmatpush1.msra.mxu0 0.0
    %10873 = vmatprep.subr.mxu0 0.0
    %10874 = vmatpush1.msra.mxu0 0.0
    %10875 = vmatprep.subr.mxu0 0.0
    %10876 = vmatpush1.msra.mxu0 0.0
    %10877 = vmatprep.subr.mxu0 0.0
    %10878 = vmatpush1.msra.mxu0 0.0
    %10879 = vmatprep.subr.mxu0 0.0
    %10880 = vmatpush1.msra.mxu0 0.0
    %10881 = vmatprep.subr.mxu0 0.0
    %10882 = vmatpush1.msra.mxu0 0.0
    %10883 = vmatprep.subr.mxu0 0.0
    %10884 = vmatpush1.msra.mxu0 0.0
    %10885 = vmatprep.subr.mxu0 0.0
    %10886 = vmatpush1.msra.mxu0 0.0
    %10887 = vmatprep.subr.mxu0 0.0
    %10888 = vmatpush1.msra.mxu0 0.0
    %10889 = vmatprep.subr.mxu0 0.0
    %10890 = vmatpush1.msra.mxu0 0.0
    %10891 = vmatprep.subr.mxu0 0.0
    %10892 = vmatpush1.msra.mxu0 0.0
    %10893 = vmatprep.subr.mxu0 0.0
    %10894 = vmatpush1.msra.mxu0 0.0
    %10895 = vmatprep.subr.mxu0 0.0
    %10896 = vmatpush1.msra.mxu0 0.0
    %10897 = vmatprep.mubr.f32.mxu0 0.0
    %10898 = vmatmul.mubr.f32.gmra.mrb[0].mxu0 %v10828
    %v10899 = vpop.f32.mrb[0].mxu0
    %v10900 = vadd.f32 0.0, %v10899
    %v10901 = vpop.f32.mrb[0].mxu0
    %v10902 = vadd.f32 0.0, %v10901
    %10903 = vmatprep.mubr.f32.mxu0 0.0
    %10904 = vmatmul.mubr.f32.gmra.mrb[0].mxu0 %v10831
    %v10905 = vpop.f32.mrb[0].mxu0
    %v10906 = vadd.f32 0.0, %v10905
    %v10907 = vpop.f32.mrb[0].mxu0
    %v10908 = vadd.f32 0.0, %v10907
    %10909 = vdwg.mxu0
    %10910 = vmatprep.subr.mxu0 %v10766
    %10911 = vmatpush1.msra.mxu0 %v10765
    %10912 = vmatprep.subr.mxu0 %v10774
    %10913 = vmatpush1.msra.mxu0 %v10773
    %10914 = vmatprep.subr.mxu0 %v10782
    %10915 = vmatpush1.msra.mxu0 %v10781
    %10916 = vmatprep.subr.mxu0 %v10790
    %10917 = vmatpush1.msra.mxu0 %v10789
    %10918 = vmatprep.subr.mxu0 0.0
    %10919 = vmatpush1.msra.mxu0 0.0
    %10920 = vmatprep.subr.mxu0 0.0
    %10921 = vmatpush1.msra.mxu0 0.0
    %10922 = vmatprep.subr.mxu0 0.0
    %10923 = vmatpush1.msra.mxu0 0.0
    %10924 = vmatprep.subr.mxu0 0.0
    %10925 = vmatpush1.msra.mxu0 0.0
    %10926 = vmatprep.subr.mxu0 0.0
    %10927 = vmatpush1.msra.mxu0 0.0
    %10928 = vmatprep.subr.mxu0 0.0
    %10929 = vmatpush1.msra.mxu0 0.0
    %10930 = vmatprep.subr.mxu0 0.0
    %10931 = vmatpush1.msra.mxu0 0.0
    %10932 = vmatprep.subr.mxu0 0.0
    %10933 = vmatpush1.msra.mxu0 0.0
    %10934 = vmatprep.subr.mxu0 0.0
    %10935 = vmatpush1.msra.mxu0 0.0
    %10936 = vmatprep.subr.mxu0 0.0
    %10937 = vmatpush1.msra.mxu0 0.0
    %10938 = vmatprep.subr.mxu0 0.0
    %10939 = vmatpush1.msra.mxu0 0.0
    %10940 = vmatprep.subr.mxu0 0.0
    %10941 = vmatpush1.msra.mxu0 0.0
    %10942 = vmatprep.subr.mxu0 0.0
    %10943 = vmatpush1.msra.mxu0 0.0
    %10944 = vmatprep.subr.mxu0 0.0
    %10945 = vmatpush1.msra.mxu0 0.0
    %10946 = vmatprep.subr.mxu0 0.0
    %10947 = vmatpush1.msra.mxu0 0.0
    %10948 = vmatprep.subr.mxu0 0.0
    %10949 = vmatpush1.msra.mxu0 0.0
    %10950 = vmatprep.subr.mxu0 0.0
    %10951 = vmatpush1.msra.mxu0 0.0
    %10952 = vmatprep.subr.mxu0 0.0
    %10953 = vmatpush1.msra.mxu0 0.0
    %10954 = vmatprep.subr.mxu0 0.0
    %10955 = vmatpush1.msra.mxu0 0.0
    %10956 = vmatprep.subr.mxu0 0.0
    %10957 = vmatpush1.msra.mxu0 0.0
    %10958 = vmatprep.subr.mxu0 0.0
    %10959 = vmatpush1.msra.mxu0 0.0
    %10960 = vmatprep.subr.mxu0 0.0
    %10961 = vmatpush1.msra.mxu0 0.0
    %10962 = vmatprep.subr.mxu0 0.0
    %10963 = vmatpush1.msra.mxu0 0.0
    %10964 = vmatprep.subr.mxu0 0.0
    %10965 = vmatpush1.msra.mxu0 0.0
    %10966 = vmatprep.subr.mxu0 0.0
    %10967 = vmatpush1.msra.mxu0 0.0
    %10968 = vmatprep.subr.mxu0 0.0
    %10969 = vmatpush1.msra.mxu0 0.0
    %10970 = vmatprep.subr.mxu0 0.0
    %10971 = vmatpush1.msra.mxu0 0.0
    %10972 = vmatprep.subr.mxu0 0.0
    %10973 = vmatpush1.msra.mxu0 0.0
    %10974 = vmatprep.mubr.f32.mxu0 0.0
    %10975 = vmatmul.mubr.f32.gmra.mrb[0].mxu0 %v10828
    %v10976 = vpop.f32.mrb[0].mxu0
    %v10977 = vadd.f32 0.0, %v10976
    %v10978 = vpop.f32.mrb[0].mxu0
    %v10979 = vadd.f32 0.0, %v10978
    %10980 = vmatprep.mubr.f32.mxu0 0.0
    %10981 = vmatmul.mubr.f32.gmra.mrb[0].mxu0 %v10831
    %v10982 = vpop.f32.mrb[0].mxu0
    %v10983 = vadd.f32 0.0, %v10982
    %v10984 = vpop.f32.mrb[0].mxu0
    %v10985 = vadd.f32 0.0, %v10984
    %10986 = vdwg.mxu0
    %10987 = vmatprep.subr.mxu0 %v10768
    %10988 = vmatpush1.msra.mxu0 %v10767
    %10989 = vmatprep.subr.mxu0 %v10776
    %10990 = vmatpush1.msra.mxu0 %v10775
    %10991 = vmatprep.subr.mxu0 %v10784
    %10992 = vmatpush1.msra.mxu0 %v10783
    %10993 = vmatprep.subr.mxu0 %v10792
    %10994 = vmatpush1.msra.mxu0 %v10791
    %10995 = vmatprep.subr.mxu0 0.0
    %10996 = vmatpush1.msra.mxu0 0.0
    %10997 = vmatprep.subr.mxu0 0.0
    %10998 = vmatpush1.msra.mxu0 0.0
    %10999 = vmatprep.subr.mxu0 0.0
    %11000 = vmatpush1.msra.mxu0 0.0
    %11001 = vmatprep.subr.mxu0 0.0
    %11002 = vmatpush1.msra.mxu0 0.0
    %11003 = vmatprep.subr.mxu0 0.0
    %11004 = vmatpush1.msra.mxu0 0.0
    %11005 = vmatprep.subr.mxu0 0.0
    %11006 = vmatpush1.msra.mxu0 0.0
    %11007 = vmatprep.subr.mxu0 0.0
    %11008 = vmatpush1.msra.mxu0 0.0
    %11009 = vmatprep.subr.mxu0 0.0
    %11010 = vmatpush1.msra.mxu0 0.0
    %11011 = vmatprep.subr.mxu0 0.0
    %11012 = vmatpush1.msra.mxu0 0.0
    %11013 = vmatprep.subr.mxu0 0.0
    %11014 = vmatpush1.msra.mxu0 0.0
    %11015 = vmatprep.subr.mxu0 0.0
    %11016 = vmatpush1.msra.mxu0 0.0
    %11017 = vmatprep.subr.mxu0 0.0
    %11018 = vmatpush1.msra.mxu0 0.0
    %11019 = vmatprep.subr.mxu0 0.0
    %11020 = vmatpush1.msra.mxu0 0.0
    %11021 = vmatprep.subr.mxu0 0.0
    %11022 = vmatpush1.msra.mxu0 0.0
    %11023 = vmatprep.subr.mxu0 0.0
    %11024 = vmatpush1.msra.mxu0 0.0
    %11025 = vmatprep.subr.mxu0 0.0
    %11026 = vmatpush1.msra.mxu0 0.0
    %11027 = vmatprep.subr.mxu0 0.0
    %11028 = vmatpush1.msra.mxu0 0.0
    %11029 = vmatprep.subr.mxu0 0.0
    %11030 = vmatpush1.msra.mxu0 0.0
    %11031 = vmatprep.subr.mxu0 0.0
    %11032 = vmatpush1.msra.mxu0 0.0
    %11033 = vmatprep.subr.mxu0 0.0
    %11034 = vmatpush1.msra.mxu0 0.0
    %11035 = vmatprep.subr.mxu0 0.0
    %11036 = vmatpush1.msra.mxu0 0.0
    %11037 = vmatprep.subr.mxu0 0.0
    %11038 = vmatpush1.msra.mxu0 0.0
    %11039 = vmatprep.subr.mxu0 0.0
    %11040 = vmatpush1.msra.mxu0 0.0
    %11041 = vmatprep.subr.mxu0 0.0
    %11042 = vmatpush1.msra.mxu0 0.0
    %11043 = vmatprep.subr.mxu0 0.0
    %11044 = vmatpush1.msra.mxu0 0.0
    %11045 = vmatprep.subr.mxu0 0.0
    %11046 = vmatpush1.msra.mxu0 0.0
    %11047 = vmatprep.subr.mxu0 0.0
    %11048 = vmatpush1.msra.mxu0 0.0
    %11049 = vmatprep.subr.mxu0 0.0
    %11050 = vmatpush1.msra.mxu0 0.0
    %11051 = vmatprep.mubr.f32.mxu0 0.0
    %11052 = vmatmul.mubr.f32.gmra.mrb[0].mxu0 %v10828
    %v11053 = vpop.f32.mrb[0].mxu0
    %v11054 = vadd.f32 0.0, %v11053
    %v11055 = vpop.f32.mrb[0].mxu0
    %v11056 = vadd.f32 0.0, %v11055
    %11057 = vmatprep.mubr.f32.mxu0 0.0
    %11058 = vmatmul.mubr.f32.gmra.mrb[0].mxu0 %v10831
    %v11059 = vpop.f32.mrb[0].mxu0
    %v11060 = vadd.f32 0.0, %v11059
    %v11061 = vpop.f32.mrb[0].mxu0
    %v11062 = vadd.f32 0.0, %v11061
    %11063 = vdwg.mxu0
    %11064 = vmatprep.subr.mxu0 %v10770
    %11065 = vmatpush1.msra.mxu0 %v10769
    %11066 = vmatprep.subr.mxu0 %v10778
    %11067 = vmatpush1.msra.mxu0 %v10777
    %11068 = vmatprep.subr.mxu0 %v10786
    %11069 = vmatpush1.msra.mxu0 %v10785
    %11070 = vmatprep.subr.mxu0 %v10794
    %11071 = vmatpush1.msra.mxu0 %v10793
    %11072 = vmatprep.subr.mxu0 0.0
    %11073 = vmatpush1.msra.mxu0 0.0
    %11074 = vmatprep.subr.mxu0 0.0
    %11075 = vmatpush1.msra.mxu0 0.0
    %11076 = vmatprep.subr.mxu0 0.0
    %11077 = vmatpush1.msra.mxu0 0.0
    %11078 = vmatprep.subr.mxu0 0.0
    %11079 = vmatpush1.msra.mxu0 0.0
    %11080 = vmatprep.subr.mxu0 0.0
    %11081 = vmatpush1.msra.mxu0 0.0
    %11082 = vmatprep.subr.mxu0 0.0
    %11083 = vmatpush1.msra.mxu0 0.0
    %11084 = vmatprep.subr.mxu0 0.0
    %11085 = vmatpush1.msra.mxu0 0.0
    %11086 = vmatprep.subr.mxu0 0.0
    %11087 = vmatpush1.msra.mxu0 0.0
    %11088 = vmatprep.subr.mxu0 0.0
    %11089 = vmatpush1.msra.mxu0 0.0
    %11090 = vmatprep.subr.mxu0 0.0
    %11091 = vmatpush1.msra.mxu0 0.0
    %11092 = vmatprep.subr.mxu0 0.0
    %11093 = vmatpush1.msra.mxu0 0.0
    %11094 = vmatprep.subr.mxu0 0.0
    %11095 = vmatpush1.msra.mxu0 0.0
    %11096 = vmatprep.subr.mxu0 0.0
    %11097 = vmatpush1.msra.mxu0 0.0
    %11098 = vmatprep.subr.mxu0 0.0
    %11099 = vmatpush1.msra.mxu0 0.0
    %11100 = vmatprep.subr.mxu0 0.0
    %11101 = vmatpush1.msra.mxu0 0.0
    %11102 = vmatprep.subr.mxu0 0.0
    %11103 = vmatpush1.msra.mxu0 0.0
    %11104 = vmatprep.subr.mxu0 0.0
    %11105 = vmatpush1.msra.mxu0 0.0
    %11106 = vmatprep.subr.mxu0 0.0
    %11107 = vmatpush1.msra.mxu0 0.0
    %11108 = vmatprep.subr.mxu0 0.0
    %11109 = vmatpush1.msra.mxu0 0.0
    %11110 = vmatprep.subr.mxu0 0.0
    %11111 = vmatpush1.msra.mxu0 0.0
    %11112 = vmatprep.subr.mxu0 0.0
    %11113 = vmatpush1.msra.mxu0 0.0
    %11114 = vmatprep.subr.mxu0 0.0
    %11115 = vmatpush1.msra.mxu0 0.0
    %11116 = vmatprep.subr.mxu0 0.0
    %11117 = vmatpush1.msra.mxu0 0.0
    %11118 = vmatprep.subr.mxu0 0.0
    %11119 = vmatpush1.msra.mxu0 0.0
    %11120 = vmatprep.subr.mxu0 0.0
    %11121 = vmatpush1.msra.mxu0 0.0
    %11122 = vmatprep.subr.mxu0 0.0
    %11123 = vmatpush1.msra.mxu0 0.0
    %11124 = vmatprep.subr.mxu0 0.0
    %11125 = vmatpush1.msra.mxu0 0.0
    %11126 = vmatprep.subr.mxu0 0.0
    %11127 = vmatpush1.msra.mxu0 0.0
    %11128 = vmatprep.mubr.f32.mxu0 0.0
    %11129 = vmatmul.mubr.f32.gmra.mrb[0].mxu0 %v10828
    %v11130 = vpop.f32.mrb[0].mxu0
    %v11131 = vadd.f32 0.0, %v11130
    %v11132 = vpop.f32.mrb[0].mxu0
    %v11133 = vadd.f32 0.0, %v11132
    %11134 = vmatprep.mubr.f32.mxu0 0.0
    %11135 = vmatmul.mubr.f32.gmra.mrb[0].mxu0 %v10831
    %v11136 = vpop.f32.mrb[0].mxu0
    %v11137 = vadd.f32 0.0, %v11136
    %v11138 = vpop.f32.mrb[0].mxu0
    %v11139 = vadd.f32 0.0, %v11138
    %11140 = vdwg.mxu0
    %v11141 = vadd.f32 %v10672, %v10900
    %v11142 = vadd.f32 %v10673, %v10902
    %v11143 = vadd.f32 %v10674, %v10977
    %v11144 = vadd.f32 %v10675, %v10979
    %v11145 = vadd.f32 %v10676, %v11054
    %v11146 = vadd.f32 %v10677, %v11056
    %v11147 = vadd.f32 %v10678, %v11131
    %v11148 = vadd.f32 %v10679, %v11133
    %v11149 = vadd.f32 %v10680, %v10906
    %v11150 = vadd.f32 %v10681, %v10908
    %v11151 = vadd.f32 %v10682, %v10983
    %v11152 = vadd.f32 %v10683, %v10985
    %v11153 = vadd.f32 %v10684, %v11060
    %v11154 = vadd.f32 %v10685, %v11062
    %v11155 = vadd.f32 %v10686, %v11137
    %v11156 = vadd.f32 %v10687, %v11139
    %s11157 = scalar_lea.vmem %s5, 128
    %v11158 = vld [vmem:[%s11157] sm:$0xff]
    %v11159 = vld [vmem:[%s11157 + $0x8] sm:$0x1]
    %11160 = vrot.lane.b32.xlu0 %v7503, 82
    %v11161 = vpop.permute.xlu0 %11160
    %11162 = vrot.lane.b32.xlu0 %v7504, 82
    %v11163 = vpop.permute.xlu0 %11162
    %11164 = vrot.lane.b32.xlu0 %v7505, 82
    %v11165 = vpop.permute.xlu0 %11164
    %11166 = vrot.lane.b32.xlu0 %v7506, 82
    %v11167 = vpop.permute.xlu0 %11166
    %11168 = vrot.lane.b32.xlu0 %v7507, 82
    %v11169 = vpop.permute.xlu0 %11168
    %11170 = vrot.lane.b32.xlu0 %v7508, 82
    %v11171 = vpop.permute.xlu0 %11170
    %11172 = vrot.lane.b32.xlu0 %v7509, 82
    %v11173 = vpop.permute.xlu0 %11172
    %11174 = vrot.lane.b32.xlu0 %v7510, 82
    %v11175 = vpop.permute.xlu0 %11174
    %11176 = vrot.lane.b32.xlu0 %v7538, 82
    %v11177 = vpop.permute.xlu0 %11176
    %11178 = vrot.lane.b32.xlu0 %v7511, 82
    %v11179 = vpop.permute.xlu0 %11178
    %11180 = vrot.lane.b32.xlu0 %v7512, 82
    %v11181 = vpop.permute.xlu0 %11180
    %11182 = vrot.lane.b32.xlu0 %v7513, 82
    %v11183 = vpop.permute.xlu0 %11182
    %11184 = vrot.lane.b32.xlu0 %v7514, 82
    %v11185 = vpop.permute.xlu0 %11184
    %11186 = vrot.lane.b32.xlu0 %v7515, 82
    %v11187 = vpop.permute.xlu0 %11186
    %11188 = vrot.lane.b32.xlu0 %v7516, 82
    %v11189 = vpop.permute.xlu0 %11188
    %11190 = vrot.lane.b32.xlu0 %v7517, 82
    %v11191 = vpop.permute.xlu0 %11190
    %11192 = vrot.lane.b32.xlu0 %v7518, 82
    %v11193 = vpop.permute.xlu0 %11192
    %11194 = vrot.lane.b32.xlu0 %v7539, 82
    %v11195 = vpop.permute.xlu0 %11194
    %11196 = vrot.lane.b32.xlu0 %v7519, 82
    %v11197 = vpop.permute.xlu0 %11196
    %11198 = vrot.lane.b32.xlu0 %v7520, 82
    %v11199 = vpop.permute.xlu0 %11198
    %11200 = vrot.lane.b32.xlu0 %v7521, 82
    %v11201 = vpop.permute.xlu0 %11200
    %11202 = vrot.lane.b32.xlu0 %v7522, 82
    %v11203 = vpop.permute.xlu0 %11202
    %11204 = vrot.lane.b32.xlu0 %v7523, 82
    %v11205 = vpop.permute.xlu0 %11204
    %11206 = vrot.lane.b32.xlu0 %v7524, 82
    %v11207 = vpop.permute.xlu0 %11206
    %11208 = vrot.lane.b32.xlu0 %v7525, 82
    %v11209 = vpop.permute.xlu0 %11208
    %11210 = vrot.lane.b32.xlu0 %v7526, 82
    %v11211 = vpop.permute.xlu0 %11210
    %11212 = vrot.lane.b32.xlu0 %v7540, 82
    %v11213 = vpop.permute.xlu0 %11212
    %11214 = vrot.lane.b32.xlu0 %v7527, 82
    %v11215 = vpop.permute.xlu0 %11214
    %11216 = vrot.lane.b32.xlu0 %v7528, 82
    %v11217 = vpop.permute.xlu0 %11216
    %11218 = vrot.lane.b32.xlu0 %v7529, 82
    %v11219 = vpop.permute.xlu0 %11218
    %11220 = vrot.lane.b32.xlu0 %v7530, 82
    %v11221 = vpop.permute.xlu0 %11220
    %11222 = vrot.lane.b32.xlu0 %v7531, 82
    %v11223 = vpop.permute.xlu0 %11222
    %11224 = vrot.lane.b32.xlu0 %v7532, 82
    %v11225 = vpop.permute.xlu0 %11224
    %11226 = vrot.lane.b32.xlu0 %v7533, 82
    %v11227 = vpop.permute.xlu0 %11226
    %11228 = vrot.lane.b32.xlu0 %v7534, 82
    %v11229 = vpop.permute.xlu0 %11228
    %11230 = vrot.lane.b32.xlu0 %v7541, 82
    %v11231 = vpop.permute.xlu0 %11230
    %v11232 = vsel %vm283, %v11161, %v11163
    %v11233 = vsel %vm283, %v11163, %v11165
    %v11234 = vsel %vm283, %v11165, %v11167
    %v11235 = vsel %vm283, %v11167, %v11169
    %v11236 = vsel %vm283, %v11169, %v11171
    %v11237 = vsel %vm283, %v11171, %v11173
    %v11238 = vsel %vm283, %v11173, %v11175
    %v11239 = vsel %vm283, %v11175, %v11177
    %v11240 = vsel %vm283, %v11179, %v11181
    %v11241 = vsel %vm283, %v11181, %v11183
    %v11242 = vsel %vm283, %v11183, %v11185
    %v11243 = vsel %vm283, %v11185, %v11187
    %v11244 = vsel %vm283, %v11187, %v11189
    %v11245 = vsel %vm283, %v11189, %v11191
    %v11246 = vsel %vm283, %v11191, %v11193
    %v11247 = vsel %vm283, %v11193, %v11195
    %v11248 = vsel %vm283, %v11197, %v11199
    %v11249 = vsel %vm283, %v11199, %v11201
    %v11250 = vsel %vm283, %v11201, %v11203
    %v11251 = vsel %vm283, %v11203, %v11205
    %v11252 = vsel %vm283, %v11205, %v11207
    %v11253 = vsel %vm283, %v11207, %v11209
    %v11254 = vsel %vm283, %v11209, %v11211
    %v11255 = vsel %vm283, %v11211, %v11213
    %v11256 = vsel %vm283, %v11215, %v11217
    %v11257 = vsel %vm283, %v11217, %v11219
    %v11258 = vsel %vm283, %v11219, %v11221
    %v11259 = vsel %vm283, %v11221, %v11223
    %v11260 = vsel %vm283, %v11223, %v11225
    %v11261 = vsel %vm283, %v11225, %v11227
    %v11262 = vsel %vm283, %v11227, %v11229
    %v11263 = vsel %vm283, %v11229, %v11231
    %v11297 = vsel %vm7714, %v11158, 0
    %v11300 = vsel %vm7714, %v11159, 0
    %11302 = vmatprep.subr.mxu0 %v11233
    %11303 = vmatpush1.msra.mxu0 %v11232
    %11304 = vmatprep.subr.mxu0 %v11241
    %11305 = vmatpush1.msra.mxu0 %v11240
    %11306 = vmatprep.subr.mxu0 %v11249
    %11307 = vmatpush1.msra.mxu0 %v11248
    %11308 = vmatprep.subr.mxu0 %v11257
    %11309 = vmatpush1.msra.mxu0 %v11256
    %11310 = vmatprep.subr.mxu0 0.0
    %11311 = vmatpush1.msra.mxu0 0.0
    %11312 = vmatprep.subr.mxu0 0.0
    %11313 = vmatpush1.msra.mxu0 0.0
    %11314 = vmatprep.subr.mxu0 0.0
    %11315 = vmatpush1.msra.mxu0 0.0
    %11316 = vmatprep.subr.mxu0 0.0
    %11317 = vmatpush1.msra.mxu0 0.0
    %11318 = vmatprep.subr.mxu0 0.0
    %11319 = vmatpush1.msra.mxu0 0.0
    %11320 = vmatprep.subr.mxu0 0.0
    %11321 = vmatpush1.msra.mxu0 0.0
    %11322 = vmatprep.subr.mxu0 0.0
    %11323 = vmatpush1.msra.mxu0 0.0
    %11324 = vmatprep.subr.mxu0 0.0
    %11325 = vmatpush1.msra.mxu0 0.0
    %11326 = vmatprep.subr.mxu0 0.0
    %11327 = vmatpush1.msra.mxu0 0.0
    %11328 = vmatprep.subr.mxu0 0.0
    %11329 = vmatpush1.msra.mxu0 0.0
    %11330 = vmatprep.subr.mxu0 0.0
    %11331 = vmatpush1.msra.mxu0 0.0
    %11332 = vmatprep.subr.mxu0 0.0
    %11333 = vmatpush1.msra.mxu0 0.0
    %11334 = vmatprep.subr.mxu0 0.0
    %11335 = vmatpush1.msra.mxu0 0.0
    %11336 = vmatprep.subr.mxu0 0.0
    %11337 = vmatpush1.msra.mxu0 0.0
    %11338 = vmatprep.subr.mxu0 0.0
    %11339 = vmatpush1.msra.mxu0 0.0
    %11340 = vmatprep.subr.mxu0 0.0
    %11341 = vmatpush1.msra.mxu0 0.0
    %11342 = vmatprep.subr.mxu0 0.0
    %11343 = vmatpush1.msra.mxu0 0.0
    %11344 = vmatprep.subr.mxu0 0.0
    %11345 = vmatpush1.msra.mxu0 0.0
    %11346 = vmatprep.subr.mxu0 0.0
    %11347 = vmatpush1.msra.mxu0 0.0
    %11348 = vmatprep.subr.mxu0 0.0
    %11349 = vmatpush1.msra.mxu0 0.0
    %11350 = vmatprep.subr.mxu0 0.0
    %11351 = vmatpush1.msra.mxu0 0.0
    %11352 = vmatprep.subr.mxu0 0.0
    %11353 = vmatpush1.msra.mxu0 0.0
    %11354 = vmatprep.subr.mxu0 0.0
    %11355 = vmatpush1.msra.mxu0 0.0
    %11356 = vmatprep.subr.mxu0 0.0
    %11357 = vmatpush1.msra.mxu0 0.0
    %11358 = vmatprep.subr.mxu0 0.0
    %11359 = vmatpush1.msra.mxu0 0.0
    %11360 = vmatprep.subr.mxu0 0.0
    %11361 = vmatpush1.msra.mxu0 0.0
    %11362 = vmatprep.subr.mxu0 0.0
    %11363 = vmatpush1.msra.mxu0 0.0
    %11364 = vmatprep.subr.mxu0 0.0
    %11365 = vmatpush1.msra.mxu0 0.0
    %11366 = vmatprep.mubr.f32.mxu0 0.0
    %11367 = vmatmul.mubr.f32.gmra.mrb[0].mxu0 %v11297
    %v11368 = vpop.f32.mrb[0].mxu0
    %v11369 = vadd.f32 0.0, %v11368
    %v11370 = vpop.f32.mrb[0].mxu0
    %v11371 = vadd.f32 0.0, %v11370
    %11372 = vmatprep.mubr.f32.mxu0 0.0
    %11373 = vmatmul.mubr.f32.gmra.mrb[0].mxu0 %v11300
    %v11374 = vpop.f32.mrb[0].mxu0
    %v11375 = vadd.f32 0.0, %v11374
    %v11376 = vpop.f32.mrb[0].mxu0
    %v11377 = vadd.f32 0.0, %v11376
    %11378 = vdwg.mxu0
    %11379 = vmatprep.subr.mxu0 %v11235
    %11380 = vmatpush1.msra.mxu0 %v11234
    %11381 = vmatprep.subr.mxu0 %v11243
    %11382 = vmatpush1.msra.mxu0 %v11242
    %11383 = vmatprep.subr.mxu0 %v11251
    %11384 = vmatpush1.msra.mxu0 %v11250
    %11385 = vmatprep.subr.mxu0 %v11259
    %11386 = vmatpush1.msra.mxu0 %v11258
    %11387 = vmatprep.subr.mxu0 0.0
    %11388 = vmatpush1.msra.mxu0 0.0
    %11389 = vmatprep.subr.mxu0 0.0
    %11390 = vmatpush1.msra.mxu0 0.0
    %11391 = vmatprep.subr.mxu0 0.0
    %11392 = vmatpush1.msra.mxu0 0.0
    %11393 = vmatprep.subr.mxu0 0.0
    %11394 = vmatpush1.msra.mxu0 0.0
    %11395 = vmatprep.subr.mxu0 0.0
    %11396 = vmatpush1.msra.mxu0 0.0
    %11397 = vmatprep.subr.mxu0 0.0
    %11398 = vmatpush1.msra.mxu0 0.0
    %11399 = vmatprep.subr.mxu0 0.0
    %11400 = vmatpush1.msra.mxu0 0.0
    %11401 = vmatprep.subr.mxu0 0.0
    %11402 = vmatpush1.msra.mxu0 0.0
    %11403 = vmatprep.subr.mxu0 0.0
    %11404 = vmatpush1.msra.mxu0 0.0
    %11405 = vmatprep.subr.mxu0 0.0
    %11406 = vmatpush1.msra.mxu0 0.0
    %11407 = vmatprep.subr.mxu0 0.0
    %11408 = vmatpush1.msra.mxu0 0.0
    %11409 = vmatprep.subr.mxu0 0.0
    %11410 = vmatpush1.msra.mxu0 0.0
    %11411 = vmatprep.subr.mxu0 0.0
    %11412 = vmatpush1.msra.mxu0 0.0
    %11413 = vmatprep.subr.mxu0 0.0
    %11414 = vmatpush1.msra.mxu0 0.0
    %11415 = vmatprep.subr.mxu0 0.0
    %11416 = vmatpush1.msra.mxu0 0.0
    %11417 = vmatprep.subr.mxu0 0.0
    %11418 = vmatpush1.msra.mxu0 0.0
    %11419 = vmatprep.subr.mxu0 0.0
    %11420 = vmatpush1.msra.mxu0 0.0
    %11421 = vmatprep.subr.mxu0 0.0
    %11422 = vmatpush1.msra.mxu0 0.0
    %11423 = vmatprep.subr.mxu0 0.0
    %11424 = vmatpush1.msra.mxu0 0.0
    %11425 = vmatprep.subr.mxu0 0.0
    %11426 = vmatpush1.msra.mxu0 0.0
    %11427 = vmatprep.subr.mxu0 0.0
    %11428 = vmatpush1.msra.mxu0 0.0
    %11429 = vmatprep.subr.mxu0 0.0
    %11430 = vmatpush1.msra.mxu0 0.0
    %11431 = vmatprep.subr.mxu0 0.0
    %11432 = vmatpush1.msra.mxu0 0.0
    %11433 = vmatprep.subr.mxu0 0.0
    %11434 = vmatpush1.msra.mxu0 0.0
    %11435 = vmatprep.subr.mxu0 0.0
    %11436 = vmatpush1.msra.mxu0 0.0
    %11437 = vmatprep.subr.mxu0 0.0
    %11438 = vmatpush1.msra.mxu0 0.0
    %11439 = vmatprep.subr.mxu0 0.0
    %11440 = vmatpush1.msra.mxu0 0.0
    %11441 = vmatprep.subr.mxu0 0.0
    %11442 = vmatpush1.msra.mxu0 0.0
    %11443 = vmatprep.mubr.f32.mxu0 0.0
    %11444 = vmatmul.mubr.f32.gmra.mrb[0].mxu0 %v11297
    %v11445 = vpop.f32.mrb[0].mxu0
    %v11446 = vadd.f32 0.0, %v11445
    %v11447 = vpop.f32.mrb[0].mxu0
    %v11448 = vadd.f32 0.0, %v11447
    %11449 = vmatprep.mubr.f32.mxu0 0.0
    %11450 = vmatmul.mubr.f32.gmra.mrb[0].mxu0 %v11300
    %v11451 = vpop.f32.mrb[0].mxu0
    %v11452 = vadd.f32 0.0, %v11451
    %v11453 = vpop.f32.mrb[0].mxu0
    %v11454 = vadd.f32 0.0, %v11453
    %11455 = vdwg.mxu0
    %11456 = vmatprep.subr.mxu0 %v11237
    %11457 = vmatpush1.msra.mxu0 %v11236
    %11458 = vmatprep.subr.mxu0 %v11245
    %11459 = vmatpush1.msra.mxu0 %v11244
    %11460 = vmatprep.subr.mxu0 %v11253
    %11461 = vmatpush1.msra.mxu0 %v11252
    %11462 = vmatprep.subr.mxu0 %v11261
    %11463 = vmatpush1.msra.mxu0 %v11260
    %11464 = vmatprep.subr.mxu0 0.0
    %11465 = vmatpush1.msra.mxu0 0.0
    %11466 = vmatprep.subr.mxu0 0.0
    %11467 = vmatpush1.msra.mxu0 0.0
    %11468 = vmatprep.subr.mxu0 0.0
    %11469 = vmatpush1.msra.mxu0 0.0
    %11470 = vmatprep.subr.mxu0 0.0
    %11471 = vmatpush1.msra.mxu0 0.0
    %11472 = vmatprep.subr.mxu0 0.0
    %11473 = vmatpush1.msra.mxu0 0.0
    %11474 = vmatprep.subr.mxu0 0.0
    %11475 = vmatpush1.msra.mxu0 0.0
    %11476 = vmatprep.subr.mxu0 0.0
    %11477 = vmatpush1.msra.mxu0 0.0
    %11478 = vmatprep.subr.mxu0 0.0
    %11479 = vmatpush1.msra.mxu0 0.0
    %11480 = vmatprep.subr.mxu0 0.0
    %11481 = vmatpush1.msra.mxu0 0.0
    %11482 = vmatprep.subr.mxu0 0.0
    %11483 = vmatpush1.msra.mxu0 0.0
    %11484 = vmatprep.subr.mxu0 0.0
    %11485 = vmatpush1.msra.mxu0 0.0
    %11486 = vmatprep.subr.mxu0 0.0
    %11487 = vmatpush1.msra.mxu0 0.0
    %11488 = vmatprep.subr.mxu0 0.0
    %11489 = vmatpush1.msra.mxu0 0.0
    %11490 = vmatprep.subr.mxu0 0.0
    %11491 = vmatpush1.msra.mxu0 0.0
    %11492 = vmatprep.subr.mxu0 0.0
    %11493 = vmatpush1.msra.mxu0 0.0
    %11494 = vmatprep.subr.mxu0 0.0
    %11495 = vmatpush1.msra.mxu0 0.0
    %11496 = vmatprep.subr.mxu0 0.0
    %11497 = vmatpush1.msra.mxu0 0.0
    %11498 = vmatprep.subr.mxu0 0.0
    %11499 = vmatpush1.msra.mxu0 0.0
    %11500 = vmatprep.subr.mxu0 0.0
    %11501 = vmatpush1.msra.mxu0 0.0
    %11502 = vmatprep.subr.mxu0 0.0
    %11503 = vmatpush1.msra.mxu0 0.0
    %11504 = vmatprep.subr.mxu0 0.0
    %11505 = vmatpush1.msra.mxu0 0.0
    %11506 = vmatprep.subr.mxu0 0.0
    %11507 = vmatpush1.msra.mxu0 0.0
    %11508 = vmatprep.subr.mxu0 0.0
    %11509 = vmatpush1.msra.mxu0 0.0
    %11510 = vmatprep.subr.mxu0 0.0
    %11511 = vmatpush1.msra.mxu0 0.0
    %11512 = vmatprep.subr.mxu0 0.0
    %11513 = vmatpush1.msra.mxu0 0.0
    %11514 = vmatprep.subr.mxu0 0.0
    %11515 = vmatpush1.msra.mxu0 0.0
    %11516 = vmatprep.subr.mxu0 0.0
    %11517 = vmatpush1.msra.mxu0 0.0
    %11518 = vmatprep.subr.mxu0 0.0
    %11519 = vmatpush1.msra.mxu0 0.0
    %11520 = vmatprep.mubr.f32.mxu0 0.0
    %11521 = vmatmul.mubr.f32.gmra.mrb[0].mxu0 %v11297
    %v11522 = vpop.f32.mrb[0].mxu0
    %v11523 = vadd.f32 0.0, %v11522
    %v11524 = vpop.f32.mrb[0].mxu0
    %v11525 = vadd.f32 0.0, %v11524
    %11526 = vmatprep.mubr.f32.mxu0 0.0
    %11527 = vmatmul.mubr.f32.gmra.mrb[0].mxu0 %v11300
    %v11528 = vpop.f32.mrb[0].mxu0
    %v11529 = vadd.f32 0.0, %v11528
    %v11530 = vpop.f32.mrb[0].mxu0
    %v11531 = vadd.f32 0.0, %v11530
    %11532 = vdwg.mxu0
    %11533 = vmatprep.subr.mxu0 %v11239
    %11534 = vmatpush1.msra.mxu0 %v11238
    %11535 = vmatprep.subr.mxu0 %v11247
    %11536 = vmatpush1.msra.mxu0 %v11246
    %11537 = vmatprep.subr.mxu0 %v11255
    %11538 = vmatpush1.msra.mxu0 %v11254
    %11539 = vmatprep.subr.mxu0 %v11263
    %11540 = vmatpush1.msra.mxu0 %v11262
    %11541 = vmatprep.subr.mxu0 0.0
    %11542 = vmatpush1.msra.mxu0 0.0
    %11543 = vmatprep.subr.mxu0 0.0
    %11544 = vmatpush1.msra.mxu0 0.0
    %11545 = vmatprep.subr.mxu0 0.0
    %11546 = vmatpush1.msra.mxu0 0.0
    %11547 = vmatprep.subr.mxu0 0.0
    %11548 = vmatpush1.msra.mxu0 0.0
    %11549 = vmatprep.subr.mxu0 0.0
    %11550 = vmatpush1.msra.mxu0 0.0
    %11551 = vmatprep.subr.mxu0 0.0
    %11552 = vmatpush1.msra.mxu0 0.0
    %11553 = vmatprep.subr.mxu0 0.0
    %11554 = vmatpush1.msra.mxu0 0.0
    %11555 = vmatprep.subr.mxu0 0.0
    %11556 = vmatpush1.msra.mxu0 0.0
    %11557 = vmatprep.subr.mxu0 0.0
    %11558 = vmatpush1.msra.mxu0 0.0
    %11559 = vmatprep.subr.mxu0 0.0
    %11560 = vmatpush1.msra.mxu0 0.0
    %11561 = vmatprep.subr.mxu0 0.0
    %11562 = vmatpush1.msra.mxu0 0.0
    %11563 = vmatprep.subr.mxu0 0.0
    %11564 = vmatpush1.msra.mxu0 0.0
    %11565 = vmatprep.subr.mxu0 0.0
    %11566 = vmatpush1.msra.mxu0 0.0
    %11567 = vmatprep.subr.mxu0 0.0
    %11568 = vmatpush1.msra.mxu0 0.0
    %11569 = vmatprep.subr.mxu0 0.0
    %11570 = vmatpush1.msra.mxu0 0.0
    %11571 = vmatprep.subr.mxu0 0.0
    %11572 = vmatpush1.msra.mxu0 0.0
    %11573 = vmatprep.subr.mxu0 0.0
    %11574 = vmatpush1.msra.mxu0 0.0
    %11575 = vmatprep.subr.mxu0 0.0
    %11576 = vmatpush1.msra.mxu0 0.0
    %11577 = vmatprep.subr.mxu0 0.0
    %11578 = vmatpush1.msra.mxu0 0.0
    %11579 = vmatprep.subr.mxu0 0.0
    %11580 = vmatpush1.msra.mxu0 0.0
    %11581 = vmatprep.subr.mxu0 0.0
    %11582 = vmatpush1.msra.mxu0 0.0
    %11583 = vmatprep.subr.mxu0 0.0
    %11584 = vmatpush1.msra.mxu0 0.0
    %11585 = vmatprep.subr.mxu0 0.0
    %11586 = vmatpush1.msra.mxu0 0.0
    %11587 = vmatprep.subr.mxu0 0.0
    %11588 = vmatpush1.msra.mxu0 0.0
    %11589 = vmatprep.subr.mxu0 0.0
    %11590 = vmatpush1.msra.mxu0 0.0
    %11591 = vmatprep.subr.mxu0 0.0
    %11592 = vmatpush1.msra.mxu0 0.0
    %11593 = vmatprep.subr.mxu0 0.0
    %11594 = vmatpush1.msra.mxu0 0.0
    %11595 = vmatprep.subr.mxu0 0.0
    %11596 = vmatpush1.msra.mxu0 0.0
    %11597 = vmatprep.mubr.f32.mxu0 0.0
    %11598 = vmatmul.mubr.f32.gmra.mrb[0].mxu0 %v11297
    %v11599 = vpop.f32.mrb[0].mxu0
    %v11600 = vadd.f32 0.0, %v11599
    %v11601 = vpop.f32.mrb[0].mxu0
    %v11602 = vadd.f32 0.0, %v11601
    %11603 = vmatprep.mubr.f32.mxu0 0.0
    %11604 = vmatmul.mubr.f32.gmra.mrb[0].mxu0 %v11300
    %v11605 = vpop.f32.mrb[0].mxu0
    %v11606 = vadd.f32 0.0, %v11605
    %v11607 = vpop.f32.mrb[0].mxu0
    %v11608 = vadd.f32 0.0, %v11607
    %11609 = vdwg.mxu0
    %v11610 = vadd.f32 %v11141, %v11369
    %v11611 = vadd.f32 %v11142, %v11371
    %v11612 = vadd.f32 %v11143, %v11446
    %v11613 = vadd.f32 %v11144, %v11448
    %v11614 = vadd.f32 %v11145, %v11523
    %v11615 = vadd.f32 %v11146, %v11525
    %v11616 = vadd.f32 %v11147, %v11600
    %v11617 = vadd.f32 %v11148, %v11602
    %v11618 = vadd.f32 %v11149, %v11375
    %v11619 = vadd.f32 %v11150, %v11377
    %v11620 = vadd.f32 %v11151, %v11452
    %v11621 = vadd.f32 %v11152, %v11454
    %v11622 = vadd.f32 %v11153, %v11529
    %v11623 = vadd.f32 %v11154, %v11531
    %v11624 = vadd.f32 %v11155, %v11606
    %v11625 = vadd.f32 %v11156, %v11608
    %v11626 = vld [vmem:[%s6] sm:$0xff]
    %v11627 = vld [vmem:[%s6 + $0x8] sm:$0x1]
    %11629 = vset.pattern.permute.xlu0 0
    %11630 = vperm.xlu0 %11629, %v11626
    %v11631 = vpop.permute.xlu0 %11630
    %11634 = vset.pattern.permute.xlu0 0
    %11635 = vperm.xlu0 %11634, %v11627
    %v11636 = vpop.permute.xlu0 %11635
    %v11638 = vadd.f32 %v11610, %v11631
    %v11639 = vadd.f32 %v11611, %v11631
    %v11640 = vadd.f32 %v11612, %v11631
    %v11641 = vadd.f32 %v11613, %v11631
    %v11642 = vadd.f32 %v11614, %v11631
    %v11643 = vadd.f32 %v11615, %v11631
    %v11644 = vadd.f32 %v11616, %v11631
    %v11645 = vadd.f32 %v11617, %v11631
    %v11646 = vadd.f32 %v11618, %v11636
    %v11647 = vadd.f32 %v11619, %v11636
    %v11648 = vadd.f32 %v11620, %v11636
    %v11649 = vadd.f32 %v11621, %v11636
    %v11650 = vadd.f32 %v11622, %v11636
    %v11651 = vadd.f32 %v11623, %v11636
    %v11652 = vadd.f32 %v11624, %v11636
    %v11653 = vadd.f32 %v11625, %v11636
    %11654 = vst [vmem:[%s8] sm:$0xff] %v11638
    %11655 = vst [vmem:[%s8 + $0x8] sm:$0xff] %v11639
    %11656 = vst [vmem:[%s8 + $0x10] sm:$0xff] %v11640
    %11657 = vst [vmem:[%s8 + $0x18] sm:$0xff] %v11641
    %11658 = vst [vmem:[%s8 + $0x20] sm:$0xff] %v11642
    %11659 = vst [vmem:[%s8 + $0x28] sm:$0xff] %v11643
    %11660 = vst [vmem:[%s8 + $0x30] sm:$0xff] %v11644
    %11661 = vst [vmem:[%s8 + $0x38] sm:$0xff] %v11645
    %11662 = vst [vmem:[%s8 + $0x40] sm:$0x1] %v11646
    %11663 = vst [vmem:[%s8 + $0x48] sm:$0x1] %v11647
    %11664 = vst [vmem:[%s8 + $0x50] sm:$0x1] %v11648
    %11665 = vst [vmem:[%s8 + $0x58] sm:$0x1] %v11649
    %11666 = vst [vmem:[%s8 + $0x60] sm:$0x1] %v11650
    %11667 = vst [vmem:[%s8 + $0x68] sm:$0x1] %v11651
    %11668 = vst [vmem:[%s8 + $0x70] sm:$0x1] %v11652
    %11669 = vst [vmem:[%s8 + $0x78] sm:$0x1] %v11653
    // Predicated region
    $region38: #{tpu_custom_call.1} parent=1 // pred_check
      _
    $region39: #{tpu_custom_call.1} parent=1 // pred_check_branch
      %11671 = sbr.rel (0) target = $region41
    $region40: #{tpu_custom_call.1} parent=1 // pred_region
      _
    $region41: #{tpu_custom_call.1} parent=1 // pred_fallthru
      _
    // Predicated region
    $region42: #{tpu_custom_call.1} parent=1 // pred_check
      _
    $region43: #{tpu_custom_call.1} parent=1 // pred_check_branch
      %11673 = sbr.rel (0) target = $region45
    $region44: #{tpu_custom_call.1} parent=1 // pred_region
      _
    $region45: #{tpu_custom_call.1} parent=1 // pred_fallthru
      _
    %11674 = vsyncpa [#allocation5], 1

</llo_original>
